<compile_context>
chip_gen: v7x
topology: tpu7x:2x2x1
jax: 0.10.0
libtpu: 0.0.40
codegen_flags: <defaults>
</compile_context>

<pallas_src>
import functools

import jax
import jax.numpy as jnp
import numpy as np
from jax import lax
from jax.experimental import pallas as pl
from jax.experimental.pallas import tpu as pltpu


# ---------------------------------------------------------------------------
# Device introspection / tiling policy
# ---------------------------------------------------------------------------
@functools.lru_cache(maxsize=None)
def _num_tensorcores():
    """2 for megacore-style chips (grid 'parallel' axes shard across TCs)."""
    try:
        kind = jax.devices()[0].device_kind.lower()
    except Exception:
        return 1
    return 2 if any(t in kind for t in ("v7", "7x", "v4", "v5p")) else 1


def _choose_tm(m, n_split):
    """Lane-tile per grid step: a 2-way 128-aligned split on megacore chips for
    the one big layer, otherwise the whole array as a single VMEM block."""
    if n_split > 1 and m >= 2048 and m % (n_split * 128) == 0:
        return m // n_split
    return m


# ---------------------------------------------------------------------------
# Pallas kernel: fused  W(Cout,K) @ patches(K,TM)  + bias + activation
# ---------------------------------------------------------------------------
def _gemm_bias_act_kernel(w_ref, p_ref, b_ref, o_ref, *, activation, alpha):
    acc = jnp.dot(w_ref[...], p_ref[...], preferred_element_type=jnp.float32)
    acc = acc + b_ref[...]                     # (Cout, 1) broadcast over lanes
    if activation == "leaky_relu":
        acc = jnp.where(acc >= 0.0, acc, alpha * acc)
    elif activation == "sigmoid":
        acc = 1.0 / (1.0 + jnp.exp(-acc))
    o_ref[...] = acc.astype(o_ref.dtype)


def gemm_bias_act(w_mat, patches, bias2d, activation, *, out_dtype,
                  alpha=0.1, use_input_fusion=True):
    """w_mat: (Cout,K) bf16, patches: (K,M) bf16, bias2d: (Cout,1) f32."""
    cout, k = w_mat.shape
    k2, m = patches.shape
    assert k == k2
    tm = _choose_tm(m, _num_tensorcores())
    grid = m // tm

    kernel = functools.partial(_gemm_bias_act_kernel,
                               activation=activation, alpha=alpha)
    out_bytes = cout * m * jnp.dtype(out_dtype).itemsize
    cost = pl.CostEstimate(
        flops=int(2 * cout * k * m),
        transcendentals=int(cout * m if activation == "sigmoid" else 0),
        bytes_accessed=int(w_mat.size * 2 + patches.size * 2
                           + bias2d.size * 4 + out_bytes))
    cparams = pltpu.CompilerParams(
        dimension_semantics=("parallel",),
        allow_input_fusion=[False, True, False] if use_input_fusion else None)

    return pl.pallas_call(
        kernel,
        out_shape=jax.ShapeDtypeStruct((cout, m), out_dtype),
        grid=(grid,),
        in_specs=[
            pl.BlockSpec((cout, k), lambda i: (0, 0)),   # weight, resident
            pl.BlockSpec((k, tm), lambda i: (0, i)),     # patch tile (lane-dense)
            pl.BlockSpec((cout, 1), lambda i: (0, 0)),   # bias
        ],
        out_specs=pl.BlockSpec((cout, tm), lambda i: (0, i)),
        compiler_params=cparams,
        cost_estimate=cost,
    )(w_mat, patches, bias2d)


# ---------------------------------------------------------------------------
# Pallas kernel: fused tail = penultimate conv (GEMM+bias+leaky) kept in VMEM
# and the final full-window conv + bias + sigmoid.
# ---------------------------------------------------------------------------
def _tail_kernel(w5_ref, p5_ref, b5_ref, w6t_ref, b6_ref, o_ref, *, alpha, taps):
    # penultimate layer: GEMM + bias + leaky-relu; activation stays in VMEM.
    a = jnp.dot(w5_ref[...], p5_ref[...], preferred_element_type=jnp.float32)
    a = a + b5_ref[...]
    a = jnp.where(a >= 0.0, a, alpha * a)
    # round to bf16 exactly as the unfused path / reference conv input would.
    a = a.astype(jnp.bfloat16).astype(jnp.float32)           # (C5, taps*N)

    # final conv: its kh x kw window covers the whole spatial extent, so it is
    # a full contraction against the batch-tiled weight matrix.
    prod = a * w6t_ref[...].astype(jnp.float32)               # (C5, taps*N)
    colsum = jnp.sum(prod, axis=0, keepdims=True)             # (1, taps*N)
    m = colsum.shape[1]
    nb = m // taps
    # segment-sum over contiguous groups of `taps` lanes via a tiny 0/1 matmul.
    r = lax.broadcasted_iota(jnp.int32, (m, nb), 0)
    c = lax.broadcasted_iota(jnp.int32, (m, nb), 1)
    seg = ((r >= c * taps) & (r < c * taps + taps)).astype(jnp.float32)
    logits = jnp.dot(colsum, seg, preferred_element_type=jnp.float32)
    logits = logits + b6_ref[...]                              # (1, N)
    o_ref[...] = 1.0 / (1.0 + jnp.exp(-logits))


def fused_tail(x_cnhw, p_prev, p_last, kh5, kw5, s5, pad5, taps, *,
               alpha=0.1, use_input_fusion=True):
    n = x_cnhw.shape[1]
    patches, h5, w5 = _im2col_km(x_cnhw, kh5, kw5, s5, pad5)
    w5_mat, b5 = p_prev["w_mat"], p_prev["b2"]
    cout5, k5 = w5_mat.shape
    m5 = patches.shape[1]
    assert m5 == taps * n and h5 * w5 == taps

    w6t = jnp.tile(p_last["w_tail"], (1, n))      # (C5, taps*N) bf16, tiny op
    b6 = p_last["b2"]                             # (1, 1) f32

    kernel = functools.partial(_tail_kernel, alpha=alpha, taps=taps)
    cost = pl.CostEstimate(
        flops=int(2 * cout5 * k5 * m5 + 2 * cout5 * m5),
        transcendentals=int(n),
        bytes_accessed=int(w5_mat.size * 2 + patches.size * 2 + b5.size * 4
                           + w6t.size * 2 + 4 + n * 4))
    cparams = pltpu.CompilerParams(
        dimension_semantics=("arbitrary",),
        allow_input_fusion=([False, True, False, False, False]
                            if use_input_fusion else None))

    out = pl.pallas_call(
        kernel,
        out_shape=jax.ShapeDtypeStruct((1, n), jnp.float32),
        grid=(1,),
        in_specs=[
            pl.BlockSpec((cout5, k5), lambda i: (0, 0)),
            pl.BlockSpec((k5, m5), lambda i: (0, 0)),
            pl.BlockSpec((cout5, 1), lambda i: (0, 0)),
            pl.BlockSpec((cout5, taps * n), lambda i: (0, 0)),
            pl.BlockSpec((1, 1), lambda i: (0, 0)),
        ],
        out_specs=pl.BlockSpec((1, n), lambda i: (0, 0)),
        compiler_params=cparams,
        cost_estimate=cost,
    )(w5_mat, patches, b5, w6t, b6)
    return out.reshape(1, n, 1, 1)


# ---------------------------------------------------------------------------
# Glue: im2col (K-major), conv layer, layer defs, spectral norm, params
# ---------------------------------------------------------------------------
def _im2col_km(x_cnhw, kh, kw, stride, pad):
    """(C,N,H,W) -> patches (K=C*kh*kw, M=N*Hout*Wout); K ordered (C, kh, kw)."""
    c, n, h, w = x_cnhw.shape
    xp = jnp.pad(x_cnhw, ((0, 0), (0, 0), (pad, pad), (pad, pad)))
    hout = (h + 2 * pad - kh) // stride + 1
    wout = (w + 2 * pad - kw) // stride + 1
    taps = [
        xp[:, :, i:i + stride * hout:stride, j:j + stride * wout:stride]
        for i in range(kh) for j in range(kw)
    ]
    patches = jnp.stack(taps, axis=1)             # (C, kh*kw, N, Hout, Wout)
    patches = patches.reshape(c * kh * kw, n * hout * wout)
    return patches, hout, wout


def conv_layer(x_cnhw, lp, kh, kw, stride, pad, activation, *, out_dtype,
               alpha=0.1, use_input_fusion=True):
    cout = lp["w_mat"].shape[0]
    n = x_cnhw.shape[1]
    patches, hout, wout = _im2col_km(x_cnhw, kh, kw, stride, pad)
    out = gemm_bias_act(lp["w_mat"], patches, lp["b2"], activation,
                        out_dtype=out_dtype, alpha=alpha,
                        use_input_fusion=use_input_fusion)
    return out.reshape(cout, n, hout, wout)


def make_layer_defs(ndf, nc):
    # (Cin, Cout, (kh, kw), stride, pad) -- mirrors the nn.Sequential in __init__
    return (
        (nc,       ndf,       (3, 3), 2, 1),
        (ndf,      ndf * 2,   (3, 4), 2, 1),
        (ndf * 2,  ndf * 4,   (3, 4), 2, 1),
        (ndf * 4,  ndf * 8,   (3, 3), 2, 1),
        (ndf * 8,  ndf * 16,  (3, 4), 2, 1),
        (ndf * 16, 1,         (3, 3), 1, 0),
    )


def spectral_normalize(w, u, n_iters=1, eps=1e-12):
    # matches torch.nn.utils.spectral_norm: reshape along dim 0, 1 power iter
    cout = w.shape[0]
    w_mat = w.reshape(cout, -1)
    norm = lambda v: v / (jnp.linalg.norm(v) + eps)
    v = None
    for _ in range(n_iters):
        v = norm(w_mat.T @ u)
        u = norm(w_mat @ v)
    sigma = u @ (w_mat @ v)
    return w / sigma


def init_params(key, layer_defs):
    params = []
    n_layers = len(layer_defs)
    for idx, (cin, cout, (kh, kw), _, _) in enumerate(layer_defs):
        key, kwk, kbk, kuk = jax.random.split(key, 4)
        w = jax.random.normal(kwk, (cout, cin, kh, kw), jnp.float32) * 0.05
        b = jax.random.normal(kbk, (cout,), jnp.float32) * 0.01
        u = jax.random.normal(kuk, (cout,), jnp.float32)
        u = u / (jnp.linalg.norm(u) + 1e-12)
        # TODO(synk): spectral-norm power iteration stays in plain JAX (tiny
        # init-time glue; torch also updates a persistent `u` buffer per call).
        w = spectral_normalize(w, u)
        p = dict(
            w=w, b=b,                                               # for reference
            w_mat=w.reshape(cout, cin * kh * kw).astype(jnp.bfloat16),
            b2=b.reshape(cout, 1).astype(jnp.float32),
        )
        if idx == n_layers - 1 and cout == 1:
            # final layer folded in-kernel: weight as (Cin, kh*kw) bf16
            p["w_tail"] = w.reshape(cout, cin, kh * kw)[0].astype(jnp.bfloat16)
        params.append(p)
    return params


def discriminator_forward(x_nchw, params, layer_defs, *, use_input_fusion=True):
    x = jnp.transpose(x_nchw, (1, 0, 2, 3)).astype(jnp.bfloat16)  # (C,N,H,W) bf16
    n_layers = len(layer_defs)

    for idx in range(n_layers - 2):
        _, _, (kh, kw), stride, pad = layer_defs[idx]
        x = conv_layer(x, params[idx], kh, kw, stride, pad, "leaky_relu",
                       out_dtype=jnp.bfloat16, use_input_fusion=use_input_fusion)

    _, _, (kh5, kw5), s5, pad5 = layer_defs[-2]
    _, _, (kh6, kw6), s6, pad6 = layer_defs[-1]
    h_in, w_in = x.shape[2], x.shape[3]
    h5 = (h_in + 2 * pad5 - kh5) // s5 + 1
    w5 = (w_in + 2 * pad5 - kw5) // s5 + 1
    fuse = (pad6 == 0 and h5 == kh6 and w5 == kw6 and "w_tail" in params[-1])

    if fuse:
        out = fused_tail(x, params[-2], params[-1], kh5, kw5, s5, pad5,
                         taps=kh6 * kw6, use_input_fusion=use_input_fusion)
    else:
        x = conv_layer(x, params[-2], kh5, kw5, s5, pad5, "leaky_relu",
                       out_dtype=jnp.bfloat16, use_input_fusion=use_input_fusion)
        out = conv_layer(x, params[-1], kh6, kw6, s6, pad6, "sigmoid",
                         out_dtype=jnp.float32, use_input_fusion=use_input_fusion)

    return jnp.transpose(out, (1, 0, 2, 3))        # (C,N,H,W) -> NCHW


# ---------------------------------------------------------------------------
# Reference (lax.conv at matching bf16-input / f32-accumulate precision)
# ---------------------------------------------------------------------------
def reference_forward(x_nchw, params, layer_defs):
    x = x_nchw
    for idx, (p, (_, _, _, stride, pad)) in enumerate(zip(params, layer_defs)):
        y = jax.lax.conv_general_dilated(
            x.astype(jnp.bfloat16), p["w"].astype(jnp.bfloat16),
            (stride, stride), [(pad, pad), (pad, pad)],
            dimension_numbers=("NCHW", "OIHW", "NCHW"),
            preferred_element_type=jnp.float32)
        y = y + p["b"].reshape(1, -1, 1, 1)
        if idx == len(params) - 1:
            y = 1.0 / (1.0 + jnp.exp(-y))
        else:
            y = jnp.where(y >= 0.0, y, 0.1 * y)
        x = y
    return x


if __name__ == "__main__":
    key = jax.random.PRNGKey(0)
    k_in, k_par = jax.random.split(key)

    ndf, nc = 8, 3
    defs = make_layer_defs(ndf, nc)
    # 96x96 input: five stride-2 convs -> 3x3, final 3x3 valid conv -> 1x1
    x = jax.random.normal(k_in, (2, nc, 96, 96), jnp.float32)
    params = init_params(k_par, defs)

    ref = np.asarray(reference_forward(x, params, defs))

    def run(use_input_fusion):
        fwd = jax.jit(functools.partial(discriminator_forward, layer_defs=defs,
                                        use_input_fusion=use_input_fusion))
        out = jax.block_until_ready(fwd(x, params))
        np.testing.assert_allclose(np.asarray(out), ref, rtol=1e-2, atol=1e-3)
        return out

    try:
        out = run(True)
    except Exception:
        # allow_input_fusion is advisory; fall back to plain (materialized)
        # patch operands if the installed XLA/Mosaic build rejects it.
        out = run(False)

    assert out.shape == (2, 1, 1, 1), out.shape
    print("KERNEL_OK")
</pallas_src>

<mosaic_0001>
module attributes {stable_mosaic.version = 11 : i64} {
  func.func @_gemm_bias_act_kernel(%arg0: i32, %arg1: memref<8x27xbf16, #tpu.memory_space<vmem>>, %arg2: memref<27x4608xbf16, #tpu.memory_space<vmem>>, %arg3: memref<8x1xf32, #tpu.memory_space<vmem>>, %arg4: memref<8x4608xbf16, #tpu.memory_space<vmem>>) attributes {dimension_semantics = [#tpu.dimension_semantics<parallel>], iteration_bounds = array<i64: 1>, scalar_prefetch = 0 : i64, scratch_operands = 0 : i64, tpu.core_type = #tpu.core_type<tc>, window_params = [{pipeline_mode = #tpu.pipeline_mode<synchronous>, transform_indices = @transform_0, window_bounds = array<i64: 8, 27>}, {transform_indices = @transform_1, window_bounds = array<i64: 27, 4608>}, {pipeline_mode = #tpu.pipeline_mode<synchronous>, transform_indices = @transform_2, window_bounds = array<i64: 8, 1>}, {transform_indices = @transform_3, window_bounds = array<i64: 8, 4608>}]} {
    %c0 = arith.constant 0 : index
    %c0_0 = arith.constant 0 : index
    %0 = vector.load %arg1[%c0, %c0_0] : memref<8x27xbf16, #tpu.memory_space<vmem>>, vector<8x27xbf16>
    %c0_1 = arith.constant 0 : index
    %c0_2 = arith.constant 0 : index
    %1 = vector.load %arg2[%c0_1, %c0_2] : memref<27x4608xbf16, #tpu.memory_space<vmem>>, vector<27x4608xbf16>
    %cst = arith.constant dense<0.000000e+00> : vector<8x4608xf32>
    %2 = tpu.matmul %0, %1, %cst {dimension_numbers = #tpu.dot_dimension_numbers<[1], [0], [0], [1], [0, 0, 1, 1], [], []>} : vector<8x27xbf16>, vector<27x4608xbf16>, vector<8x4608xf32> -> vector<8x4608xf32>
    %c0_3 = arith.constant 0 : index
    %c0_4 = arith.constant 0 : index
    %3 = vector.load %arg3[%c0_3, %c0_4] : memref<8x1xf32, #tpu.memory_space<vmem>>, vector<8x1xf32>
    %4 = vector.broadcast %3 : vector<8x1xf32> to vector<8x4608xf32>
    %5 = arith.addf %2, %4 : vector<8x4608xf32>
    %cst_5 = arith.constant 0.000000e+00 : f32
    %6 = vector.broadcast %cst_5 : f32 to vector<8x4608xf32>
    %7 = arith.cmpf oge, %5, %6 : vector<8x4608xf32>
    %cst_6 = arith.constant 1.000000e-01 : f32
    %8 = vector.broadcast %cst_6 : f32 to vector<8x4608xf32>
    %9 = arith.mulf %8, %5 : vector<8x4608xf32>
    %10 = arith.select %7, %5, %9 : vector<8x4608xi1>, vector<8x4608xf32>
    %11 = arith.truncf %10 : vector<8x4608xf32> to vector<8x4608xbf16>
    %c0_7 = arith.constant 0 : index
    %c0_8 = arith.constant 0 : index
    %12 = vector.load %arg4[%c0_7, %c0_8] : memref<8x4608xbf16, #tpu.memory_space<vmem>>, vector<8x4608xbf16>
    tpu.vector_store %arg4[%c0_7, %c0_8], %11 {strides = array<i32>} : memref<8x4608xbf16, #tpu.memory_space<vmem>>, vector<8x4608xbf16>,
    return
  }
  func.func @transform_0(%arg0: i32) -> (i32, i32) {
    %c0_i32 = arith.constant 0 : i32
    %c0_i32_0 = arith.constant 0 : i32
    %c0_i32_1 = arith.constant 0 : i32
    return %c0_i32, %c0_i32_0 : i32, i32
  }
  func.func @transform_1(%arg0: i32) -> (i32, i32) {
    %c0_i32 = arith.constant 0 : i32
    %c0_i32_0 = arith.constant 0 : i32
    return %c0_i32, %arg0 : i32, i32
  }
  func.func @transform_2(%arg0: i32) -> (i32, i32) {
    %c0_i32 = arith.constant 0 : i32
    %c0_i32_0 = arith.constant 0 : i32
    %c0_i32_1 = arith.constant 0 : i32
    return %c0_i32, %c0_i32_0 : i32, i32
  }
  func.func @transform_3(%arg0: i32) -> (i32, i32) {
    %c0_i32 = arith.constant 0 : i32
    %c0_i32_0 = arith.constant 0 : i32
    return %c0_i32, %arg0 : i32, i32
  }
}

module attributes {stable_mosaic.version = 11 : i64} {
  func.func @_gemm_bias_act_kernel(%arg0: i32, %arg1: memref<16x96xbf16, #tpu.memory_space<vmem>>, %arg2: memref<96x1152xbf16, #tpu.memory_space<vmem>>, %arg3: memref<16x1xf32, #tpu.memory_space<vmem>>, %arg4: memref<16x1152xbf16, #tpu.memory_space<vmem>>) attributes {dimension_semantics = [#tpu.dimension_semantics<parallel>], iteration_bounds = array<i64: 1>, scalar_prefetch = 0 : i64, scratch_operands = 0 : i64, tpu.core_type = #tpu.core_type<tc>, window_params = [{pipeline_mode = #tpu.pipeline_mode<synchronous>, transform_indices = @transform_0, window_bounds = array<i64: 16, 96>}, {transform_indices = @transform_1, window_bounds = array<i64: 96, 1152>}, {pipeline_mode = #tpu.pipeline_mode<synchronous>, transform_indices = @transform_2, window_bounds = array<i64: 16, 1>}, {transform_indices = @transform_3, window_bounds = array<i64: 16, 1152>}]} {
    %c0 = arith.constant 0 : index
    %c0_0 = arith.constant 0 : index
    %0 = vector.load %arg1[%c0, %c0_0] : memref<16x96xbf16, #tpu.memory_space<vmem>>, vector<16x96xbf16>
    %c0_1 = arith.constant 0 : index
    %c0_2 = arith.constant 0 : index
    %1 = vector.load %arg2[%c0_1, %c0_2] : memref<96x1152xbf16, #tpu.memory_space<vmem>>, vector<96x1152xbf16>
    %cst = arith.constant dense<0.000000e+00> : vector<16x1152xf32>
    %2 = tpu.matmul %0, %1, %cst {dimension_numbers = #tpu.dot_dimension_numbers<[1], [0], [0], [1], [0, 0, 1, 1], [], []>} : vector<16x96xbf16>, vector<96x1152xbf16>, vector<16x1152xf32> -> vector<16x1152xf32>
    %c0_3 = arith.constant 0 : index
    %c0_4 = arith.constant 0 : index
    %3 = vector.load %arg3[%c0_3, %c0_4] : memref<16x1xf32, #tpu.memory_space<vmem>>, vector<16x1xf32>
    %4 = vector.broadcast %3 : vector<16x1xf32> to vector<16x1152xf32>
    %5 = arith.addf %2, %4 : vector<16x1152xf32>
    %cst_5 = arith.constant 0.000000e+00 : f32
    %6 = vector.broadcast %cst_5 : f32 to vector<16x1152xf32>
    %7 = arith.cmpf oge, %5, %6 : vector<16x1152xf32>
    %cst_6 = arith.constant 1.000000e-01 : f32
    %8 = vector.broadcast %cst_6 : f32 to vector<16x1152xf32>
    %9 = arith.mulf %8, %5 : vector<16x1152xf32>
    %10 = arith.select %7, %5, %9 : vector<16x1152xi1>, vector<16x1152xf32>
    %11 = arith.truncf %10 : vector<16x1152xf32> to vector<16x1152xbf16>
    %c0_7 = arith.constant 0 : index
    %c0_8 = arith.constant 0 : index
    %12 = vector.load %arg4[%c0_7, %c0_8] : memref<16x1152xbf16, #tpu.memory_space<vmem>>, vector<16x1152xbf16>
    tpu.vector_store %arg4[%c0_7, %c0_8], %11 {strides = array<i32>} : memref<16x1152xbf16, #tpu.memory_space<vmem>>, vector<16x1152xbf16>,
    return
  }
  func.func @transform_0(%arg0: i32) -> (i32, i32) {
    %c0_i32 = arith.constant 0 : i32
    %c0_i32_0 = arith.constant 0 : i32
    %c0_i32_1 = arith.constant 0 : i32
    return %c0_i32, %c0_i32_0 : i32, i32
  }
  func.func @transform_1(%arg0: i32) -> (i32, i32) {
    %c0_i32 = arith.constant 0 : i32
    %c0_i32_0 = arith.constant 0 : i32
    return %c0_i32, %arg0 : i32, i32
  }
  func.func @transform_2(%arg0: i32) -> (i32, i32) {
    %c0_i32 = arith.constant 0 : i32
    %c0_i32_0 = arith.constant 0 : i32
    %c0_i32_1 = arith.constant 0 : i32
    return %c0_i32, %c0_i32_0 : i32, i32
  }
  func.func @transform_3(%arg0: i32) -> (i32, i32) {
    %c0_i32 = arith.constant 0 : i32
    %c0_i32_0 = arith.constant 0 : i32
    return %c0_i32, %arg0 : i32, i32
  }
}

module attributes {stable_mosaic.version = 11 : i64} {
  func.func @_gemm_bias_act_kernel(%arg0: i32, %arg1: memref<32x192xbf16, #tpu.memory_space<vmem>>, %arg2: memref<192x288xbf16, #tpu.memory_space<vmem>>, %arg3: memref<32x1xf32, #tpu.memory_space<vmem>>, %arg4: memref<32x288xbf16, #tpu.memory_space<vmem>>) attributes {dimension_semantics = [#tpu.dimension_semantics<parallel>], iteration_bounds = array<i64: 1>, scalar_prefetch = 0 : i64, scratch_operands = 0 : i64, tpu.core_type = #tpu.core_type<tc>, window_params = [{pipeline_mode = #tpu.pipeline_mode<synchronous>, transform_indices = @transform_0, window_bounds = array<i64: 32, 192>}, {transform_indices = @transform_1, window_bounds = array<i64: 192, 288>}, {pipeline_mode = #tpu.pipeline_mode<synchronous>, transform_indices = @transform_2, window_bounds = array<i64: 32, 1>}, {transform_indices = @transform_3, window_bounds = array<i64: 32, 288>}]} {
    %c0 = arith.constant 0 : index
    %c0_0 = arith.constant 0 : index
    %0 = vector.load %arg1[%c0, %c0_0] : memref<32x192xbf16, #tpu.memory_space<vmem>>, vector<32x192xbf16>
    %c0_1 = arith.constant 0 : index
    %c0_2 = arith.constant 0 : index
    %1 = vector.load %arg2[%c0_1, %c0_2] : memref<192x288xbf16, #tpu.memory_space<vmem>>, vector<192x288xbf16>
    %cst = arith.constant dense<0.000000e+00> : vector<32x288xf32>
    %2 = tpu.matmul %0, %1, %cst {dimension_numbers = #tpu.dot_dimension_numbers<[1], [0], [0], [1], [0, 0, 1, 1], [], []>} : vector<32x192xbf16>, vector<192x288xbf16>, vector<32x288xf32> -> vector<32x288xf32>
    %c0_3 = arith.constant 0 : index
    %c0_4 = arith.constant 0 : index
    %3 = vector.load %arg3[%c0_3, %c0_4] : memref<32x1xf32, #tpu.memory_space<vmem>>, vector<32x1xf32>
    %4 = vector.broadcast %3 : vector<32x1xf32> to vector<32x288xf32>
    %5 = arith.addf %2, %4 : vector<32x288xf32>
    %cst_5 = arith.constant 0.000000e+00 : f32
    %6 = vector.broadcast %cst_5 : f32 to vector<32x288xf32>
    %7 = arith.cmpf oge, %5, %6 : vector<32x288xf32>
    %cst_6 = arith.constant 1.000000e-01 : f32
    %8 = vector.broadcast %cst_6 : f32 to vector<32x288xf32>
    %9 = arith.mulf %8, %5 : vector<32x288xf32>
    %10 = arith.select %7, %5, %9 : vector<32x288xi1>, vector<32x288xf32>
    %11 = arith.truncf %10 : vector<32x288xf32> to vector<32x288xbf16>
    %c0_7 = arith.constant 0 : index
    %c0_8 = arith.constant 0 : index
    %12 = vector.load %arg4[%c0_7, %c0_8] : memref<32x288xbf16, #tpu.memory_space<vmem>>, vector<32x288xbf16>
    tpu.vector_store %arg4[%c0_7, %c0_8], %11 {strides = array<i32>} : memref<32x288xbf16, #tpu.memory_space<vmem>>, vector<32x288xbf16>,
    return
  }
  func.func @transform_0(%arg0: i32) -> (i32, i32) {
    %c0_i32 = arith.constant 0 : i32
    %c0_i32_0 = arith.constant 0 : i32
    %c0_i32_1 = arith.constant 0 : i32
    return %c0_i32, %c0_i32_0 : i32, i32
  }
  func.func @transform_1(%arg0: i32) -> (i32, i32) {
    %c0_i32 = arith.constant 0 : i32
    %c0_i32_0 = arith.constant 0 : i32
    return %c0_i32, %arg0 : i32, i32
  }
  func.func @transform_2(%arg0: i32) -> (i32, i32) {
    %c0_i32 = arith.constant 0 : i32
    %c0_i32_0 = arith.constant 0 : i32
    %c0_i32_1 = arith.constant 0 : i32
    return %c0_i32, %c0_i32_0 : i32, i32
  }
  func.func @transform_3(%arg0: i32) -> (i32, i32) {
    %c0_i32 = arith.constant 0 : i32
    %c0_i32_0 = arith.constant 0 : i32
    return %c0_i32, %arg0 : i32, i32
  }
}

module attributes {stable_mosaic.version = 11 : i64} {
  func.func @_gemm_bias_act_kernel(%arg0: i32, %arg1: memref<64x288xbf16, #tpu.memory_space<vmem>>, %arg2: memref<288x72xbf16, #tpu.memory_space<vmem>>, %arg3: memref<64x1xf32, #tpu.memory_space<vmem>>, %arg4: memref<64x72xbf16, #tpu.memory_space<vmem>>) attributes {dimension_semantics = [#tpu.dimension_semantics<parallel>], iteration_bounds = array<i64: 1>, scalar_prefetch = 0 : i64, scratch_operands = 0 : i64, tpu.core_type = #tpu.core_type<tc>, window_params = [{pipeline_mode = #tpu.pipeline_mode<synchronous>, transform_indices = @transform_0, window_bounds = array<i64: 64, 288>}, {transform_indices = @transform_1, window_bounds = array<i64: 288, 72>}, {pipeline_mode = #tpu.pipeline_mode<synchronous>, transform_indices = @transform_2, window_bounds = array<i64: 64, 1>}, {transform_indices = @transform_3, window_bounds = array<i64: 64, 72>}]} {
    %c0 = arith.constant 0 : index
    %c0_0 = arith.constant 0 : index
    %0 = vector.load %arg1[%c0, %c0_0] : memref<64x288xbf16, #tpu.memory_space<vmem>>, vector<64x288xbf16>
    %c0_1 = arith.constant 0 : index
    %c0_2 = arith.constant 0 : index
    %1 = vector.load %arg2[%c0_1, %c0_2] : memref<288x72xbf16, #tpu.memory_space<vmem>>, vector<288x72xbf16>
    %cst = arith.constant dense<0.000000e+00> : vector<64x72xf32>
    %2 = tpu.matmul %0, %1, %cst {dimension_numbers = #tpu.dot_dimension_numbers<[1], [0], [0], [1], [0, 0, 1, 1], [], []>} : vector<64x288xbf16>, vector<288x72xbf16>, vector<64x72xf32> -> vector<64x72xf32>
    %c0_3 = arith.constant 0 : index
    %c0_4 = arith.constant 0 : index
    %3 = vector.load %arg3[%c0_3, %c0_4] : memref<64x1xf32, #tpu.memory_space<vmem>>, vector<64x1xf32>
    %4 = vector.broadcast %3 : vector<64x1xf32> to vector<64x72xf32>
    %5 = arith.addf %2, %4 : vector<64x72xf32>
    %cst_5 = arith.constant 0.000000e+00 : f32
    %6 = vector.broadcast %cst_5 : f32 to vector<64x72xf32>
    %7 = arith.cmpf oge, %5, %6 : vector<64x72xf32>
    %cst_6 = arith.constant 1.000000e-01 : f32
    %8 = vector.broadcast %cst_6 : f32 to vector<64x72xf32>
    %9 = arith.mulf %8, %5 : vector<64x72xf32>
    %10 = arith.select %7, %5, %9 : vector<64x72xi1>, vector<64x72xf32>
    %11 = arith.truncf %10 : vector<64x72xf32> to vector<64x72xbf16>
    %c0_7 = arith.constant 0 : index
    %c0_8 = arith.constant 0 : index
    %12 = vector.load %arg4[%c0_7, %c0_8] : memref<64x72xbf16, #tpu.memory_space<vmem>>, vector<64x72xbf16>
    tpu.vector_store %arg4[%c0_7, %c0_8], %11 {strides = array<i32>} : memref<64x72xbf16, #tpu.memory_space<vmem>>, vector<64x72xbf16>,
    return
  }
  func.func @transform_0(%arg0: i32) -> (i32, i32) {
    %c0_i32 = arith.constant 0 : i32
    %c0_i32_0 = arith.constant 0 : i32
    %c0_i32_1 = arith.constant 0 : i32
    return %c0_i32, %c0_i32_0 : i32, i32
  }
  func.func @transform_1(%arg0: i32) -> (i32, i32) {
    %c0_i32 = arith.constant 0 : i32
    %c0_i32_0 = arith.constant 0 : i32
    return %c0_i32, %arg0 : i32, i32
  }
  func.func @transform_2(%arg0: i32) -> (i32, i32) {
    %c0_i32 = arith.constant 0 : i32
    %c0_i32_0 = arith.constant 0 : i32
    %c0_i32_1 = arith.constant 0 : i32
    return %c0_i32, %c0_i32_0 : i32, i32
  }
  func.func @transform_3(%arg0: i32) -> (i32, i32) {
    %c0_i32 = arith.constant 0 : i32
    %c0_i32_0 = arith.constant 0 : i32
    return %c0_i32, %arg0 : i32, i32
  }
}

module attributes {stable_mosaic.version = 11 : i64} {
  func.func @_tail_kernel(%arg0: i32, %arg1: memref<128x768xbf16, #tpu.memory_space<vmem>>, %arg2: memref<768x18xbf16, #tpu.memory_space<vmem>>, %arg3: memref<128x1xf32, #tpu.memory_space<vmem>>, %arg4: memref<128x18xbf16, #tpu.memory_space<vmem>>, %arg5: memref<1x1xf32, #tpu.memory_space<vmem>>, %arg6: memref<1x2xf32, #tpu.memory_space<vmem>>) attributes {dimension_semantics = [#tpu.dimension_semantics<arbitrary>], iteration_bounds = array<i64: 1>, scalar_prefetch = 0 : i64, scratch_operands = 0 : i64, tpu.core_type = #tpu.core_type<tc>, window_params = [{pipeline_mode = #tpu.pipeline_mode<synchronous>, transform_indices = @transform_0, window_bounds = array<i64: 128, 768>}, {pipeline_mode = #tpu.pipeline_mode<synchronous>, transform_indices = @transform_1, window_bounds = array<i64: 768, 18>}, {pipeline_mode = #tpu.pipeline_mode<synchronous>, transform_indices = @transform_2, window_bounds = array<i64: 128, 1>}, {pipeline_mode = #tpu.pipeline_mode<synchronous>, transform_indices = @transform_3, window_bounds = array<i64: 128, 18>}, {pipeline_mode = #tpu.pipeline_mode<synchronous>, transform_indices = @transform_4, window_bounds = array<i64: 1, 1>}, {pipeline_mode = #tpu.pipeline_mode<synchronous>, transform_indices = @transform_5, window_bounds = array<i64: 1, 2>}]} {
    %c0 = arith.constant 0 : index
    %c0_0 = arith.constant 0 : index
    %0 = vector.load %arg1[%c0, %c0_0] : memref<128x768xbf16, #tpu.memory_space<vmem>>, vector<128x768xbf16>
    %c0_1 = arith.constant 0 : index
    %c0_2 = arith.constant 0 : index
    %1 = vector.load %arg2[%c0_1, %c0_2] : memref<768x18xbf16, #tpu.memory_space<vmem>>, vector<768x18xbf16>
    %cst = arith.constant dense<0.000000e+00> : vector<128x18xf32>
    %2 = tpu.matmul %0, %1, %cst {dimension_numbers = #tpu.dot_dimension_numbers<[1], [0], [0], [1], [0, 0, 1, 1], [], []>} : vector<128x768xbf16>, vector<768x18xbf16>, vector<128x18xf32> -> vector<128x18xf32>
    %c0_3 = arith.constant 0 : index
    %c0_4 = arith.constant 0 : index
    %3 = vector.load %arg3[%c0_3, %c0_4] : memref<128x1xf32, #tpu.memory_space<vmem>>, vector<128x1xf32>
    %4 = vector.broadcast %3 : vector<128x1xf32> to vector<128x18xf32>
    %5 = arith.addf %2, %4 : vector<128x18xf32>
    %cst_5 = arith.constant 0.000000e+00 : f32
    %6 = vector.broadcast %cst_5 : f32 to vector<128x18xf32>
    %7 = arith.cmpf oge, %5, %6 : vector<128x18xf32>
    %cst_6 = arith.constant 1.000000e-01 : f32
    %8 = vector.broadcast %cst_6 : f32 to vector<128x18xf32>
    %9 = arith.mulf %8, %5 : vector<128x18xf32>
    %10 = arith.select %7, %5, %9 : vector<128x18xi1>, vector<128x18xf32>
    %11 = arith.truncf %10 : vector<128x18xf32> to vector<128x18xbf16>
    %12 = arith.extf %11 : vector<128x18xbf16> to vector<128x18xf32>
    %c0_7 = arith.constant 0 : index
    %c0_8 = arith.constant 0 : index
    %13 = vector.load %arg4[%c0_7, %c0_8] : memref<128x18xbf16, #tpu.memory_space<vmem>>, vector<128x18xbf16>
    %14 = arith.extf %13 : vector<128x18xbf16> to vector<128x18xf32>
    %15 = arith.mulf %12, %14 : vector<128x18xf32>
    %cst_9 = arith.constant dense<0.000000e+00> : vector<18xf32>
    %16 = vector.multi_reduction <add>, %15, %cst_9 [0] : vector<128x18xf32> to vector<18xf32>
    %17 = vector.shape_cast %16 : vector<18xf32> to vector<1x18xf32>
    %18 = tpu.iota {dimensions = array<i32: 0>} : vector<18x2xi32>
    %19 = tpu.iota {dimensions = array<i32: 1>} : vector<18x2xi32>
    %c9_i32 = arith.constant 9 : i32
    %20 = vector.broadcast %c9_i32 : i32 to vector<18x2xi32>
    %21 = arith.muli %19, %20 : vector<18x2xi32>
    %22 = arith.cmpi sge, %18, %21 : vector<18x2xi32>
    %c9_i32_10 = arith.constant 9 : i32
    %23 = vector.broadcast %c9_i32_10 : i32 to vector<18x2xi32>
    %24 = arith.muli %19, %23 : vector<18x2xi32>
    %c9_i32_11 = arith.constant 9 : i32
    %25 = vector.broadcast %c9_i32_11 : i32 to vector<18x2xi32>
    %26 = arith.addi %24, %25 : vector<18x2xi32>
    %27 = arith.cmpi slt, %18, %26 : vector<18x2xi32>
    %28 = arith.andi %22, %27 : vector<18x2xi1>
    %29 = arith.extui %28 : vector<18x2xi1> to vector<18x2xi32>
    %30 = arith.sitofp %29 : vector<18x2xi32> to vector<18x2xf32>
    %cst_12 = arith.constant dense<0.000000e+00> : vector<1x2xf32>
    %31 = tpu.matmul %17, %30, %cst_12 {dimension_numbers = #tpu.dot_dimension_numbers<[1], [0], [0], [1], [0, 0, 1, 1], [], []>} : vector<1x18xf32>, vector<18x2xf32>, vector<1x2xf32> -> vector<1x2xf32>
    %c0_13 = arith.constant 0 : index
    %c0_14 = arith.constant 0 : index
    %32 = vector.load %arg5[%c0_13, %c0_14] : memref<1x1xf32, #tpu.memory_space<vmem>>, vector<1x1xf32>
    %33 = vector.broadcast %32 : vector<1x1xf32> to vector<1x2xf32>
    %34 = arith.addf %31, %33 : vector<1x2xf32>
    %cst_15 = arith.constant 0.000000e+00 : f32
    %35 = vector.broadcast %cst_15 : f32 to vector<1x2xf32>
    %36 = arith.subf %35, %34 : vector<1x2xf32>
    %37 = math.exp %36 : vector<1x2xf32>
    %cst_16 = arith.constant 1.000000e+00 : f32
    %38 = vector.broadcast %cst_16 : f32 to vector<1x2xf32>
    %39 = arith.addf %38, %37 : vector<1x2xf32>
    %cst_17 = arith.constant 1.000000e+00 : f32
    %40 = vector.broadcast %cst_17 : f32 to vector<1x2xf32>
    %41 = arith.divf %40, %39 : vector<1x2xf32>
    %c0_18 = arith.constant 0 : index
    %c0_19 = arith.constant 0 : index
    %42 = vector.load %arg6[%c0_18, %c0_19] : memref<1x2xf32, #tpu.memory_space<vmem>>, vector<1x2xf32>
    tpu.vector_store %arg6[%c0_18, %c0_19], %41 {strides = array<i32>} : memref<1x2xf32, #tpu.memory_space<vmem>>, vector<1x2xf32>,
    return
  }
  func.func @transform_0(%arg0: i32) -> (i32, i32) {
    %c0_i32 = arith.constant 0 : i32
    %c0_i32_0 = arith.constant 0 : i32
    %c0_i32_1 = arith.constant 0 : i32
    return %c0_i32, %c0_i32_0 : i32, i32
  }
  func.func @transform_1(%arg0: i32) -> (i32, i32) {
    %c0_i32 = arith.constant 0 : i32
    %c0_i32_0 = arith.constant 0 : i32
    %c0_i32_1 = arith.constant 0 : i32
    return %c0_i32, %c0_i32_0 : i32, i32
  }
  func.func @transform_2(%arg0: i32) -> (i32, i32) {
    %c0_i32 = arith.constant 0 : i32
    %c0_i32_0 = arith.constant 0 : i32
    %c0_i32_1 = arith.constant 0 : i32
    return %c0_i32, %c0_i32_0 : i32, i32
  }
  func.func @transform_3(%arg0: i32) -> (i32, i32) {
    %c0_i32 = arith.constant 0 : i32
    %c0_i32_0 = arith.constant 0 : i32
    %c0_i32_1 = arith.constant 0 : i32
    return %c0_i32, %c0_i32_0 : i32, i32
  }
  func.func @transform_4(%arg0: i32) -> (i32, i32) {
    %c0_i32 = arith.constant 0 : i32
    %c0_i32_0 = arith.constant 0 : i32
    %c0_i32_1 = arith.constant 0 : i32
    return %c0_i32, %c0_i32_0 : i32, i32
  }
  func.func @transform_5(%arg0: i32) -> (i32, i32) {
    %c0_i32 = arith.constant 0 : i32
    %c0_i32_0 = arith.constant 0 : i32
    %c0_i32_1 = arith.constant 0 : i32
    return %c0_i32, %c0_i32_0 : i32, i32
  }
}

module attributes {stable_mosaic.version = 11 : i64} {
  func.func @_gemm_bias_act_kernel(%arg0: i32, %arg1: memref<8x27xbf16, #tpu.memory_space<vmem>>, %arg2: memref<27x4608xbf16, #tpu.memory_space<vmem>>, %arg3: memref<8x1xf32, #tpu.memory_space<vmem>>, %arg4: memref<8x4608xbf16, #tpu.memory_space<vmem>>) attributes {dimension_semantics = [#tpu.dimension_semantics<parallel>], iteration_bounds = array<i64: 1>, scalar_prefetch = 0 : i64, scratch_operands = 0 : i64, tpu.core_type = #tpu.core_type<tc>, window_params = [{pipeline_mode = #tpu.pipeline_mode<synchronous>, transform_indices = @transform_0, window_bounds = array<i64: 8, 27>}, {transform_indices = @transform_1, window_bounds = array<i64: 27, 4608>}, {pipeline_mode = #tpu.pipeline_mode<synchronous>, transform_indices = @transform_2, window_bounds = array<i64: 8, 1>}, {transform_indices = @transform_3, window_bounds = array<i64: 8, 4608>}]} {
    %c0 = arith.constant 0 : index
    %c0_0 = arith.constant 0 : index
    %0 = vector.load %arg1[%c0, %c0_0] : memref<8x27xbf16, #tpu.memory_space<vmem>>, vector<8x27xbf16>
    %c0_1 = arith.constant 0 : index
    %c0_2 = arith.constant 0 : index
    %1 = vector.load %arg2[%c0_1, %c0_2] : memref<27x4608xbf16, #tpu.memory_space<vmem>>, vector<27x4608xbf16>
    %cst = arith.constant dense<0.000000e+00> : vector<8x4608xf32>
    %2 = tpu.matmul %0, %1, %cst {dimension_numbers = #tpu.dot_dimension_numbers<[1], [0], [0], [1], [0, 0, 1, 1], [], []>} : vector<8x27xbf16>, vector<27x4608xbf16>, vector<8x4608xf32> -> vector<8x4608xf32>
    %c0_3 = arith.constant 0 : index
    %c0_4 = arith.constant 0 : index
    %3 = vector.load %arg3[%c0_3, %c0_4] : memref<8x1xf32, #tpu.memory_space<vmem>>, vector<8x1xf32>
    %4 = vector.broadcast %3 : vector<8x1xf32> to vector<8x4608xf32>
    %5 = arith.addf %2, %4 : vector<8x4608xf32>
    %cst_5 = arith.constant 0.000000e+00 : f32
    %6 = vector.broadcast %cst_5 : f32 to vector<8x4608xf32>
    %7 = arith.cmpf oge, %5, %6 : vector<8x4608xf32>
    %cst_6 = arith.constant 1.000000e-01 : f32
    %8 = vector.broadcast %cst_6 : f32 to vector<8x4608xf32>
    %9 = arith.mulf %8, %5 : vector<8x4608xf32>
    %10 = arith.select %7, %5, %9 : vector<8x4608xi1>, vector<8x4608xf32>
    %11 = arith.truncf %10 : vector<8x4608xf32> to vector<8x4608xbf16>
    %c0_7 = arith.constant 0 : index
    %c0_8 = arith.constant 0 : index
    %12 = vector.load %arg4[%c0_7, %c0_8] : memref<8x4608xbf16, #tpu.memory_space<vmem>>, vector<8x4608xbf16>
    tpu.vector_store %arg4[%c0_7, %c0_8], %11 {strides = array<i32>} : memref<8x4608xbf16, #tpu.memory_space<vmem>>, vector<8x4608xbf16>,
    return
  }
  func.func @transform_0(%arg0: i32) -> (i32, i32) {
    %c0_i32 = arith.constant 0 : i32
    %c0_i32_0 = arith.constant 0 : i32
    %c0_i32_1 = arith.constant 0 : i32
    return %c0_i32, %c0_i32_0 : i32, i32
  }
  func.func @transform_1(%arg0: i32) -> (i32, i32) {
    %c0_i32 = arith.constant 0 : i32
    %c0_i32_0 = arith.constant 0 : i32
    return %c0_i32, %arg0 : i32, i32
  }
  func.func @transform_2(%arg0: i32) -> (i32, i32) {
    %c0_i32 = arith.constant 0 : i32
    %c0_i32_0 = arith.constant 0 : i32
    %c0_i32_1 = arith.constant 0 : i32
    return %c0_i32, %c0_i32_0 : i32, i32
  }
  func.func @transform_3(%arg0: i32) -> (i32, i32) {
    %c0_i32 = arith.constant 0 : i32
    %c0_i32_0 = arith.constant 0 : i32
    return %c0_i32, %arg0 : i32, i32
  }
}

module attributes {stable_mosaic.version = 11 : i64} {
  func.func @_gemm_bias_act_kernel(%arg0: i32, %arg1: memref<16x96xbf16, #tpu.memory_space<vmem>>, %arg2: memref<96x1152xbf16, #tpu.memory_space<vmem>>, %arg3: memref<16x1xf32, #tpu.memory_space<vmem>>, %arg4: memref<16x1152xbf16, #tpu.memory_space<vmem>>) attributes {dimension_semantics = [#tpu.dimension_semantics<parallel>], iteration_bounds = array<i64: 1>, scalar_prefetch = 0 : i64, scratch_operands = 0 : i64, tpu.core_type = #tpu.core_type<tc>, window_params = [{pipeline_mode = #tpu.pipeline_mode<synchronous>, transform_indices = @transform_0, window_bounds = array<i64: 16, 96>}, {transform_indices = @transform_1, window_bounds = array<i64: 96, 1152>}, {pipeline_mode = #tpu.pipeline_mode<synchronous>, transform_indices = @transform_2, window_bounds = array<i64: 16, 1>}, {transform_indices = @transform_3, window_bounds = array<i64: 16, 1152>}]} {
    %c0 = arith.constant 0 : index
    %c0_0 = arith.constant 0 : index
    %0 = vector.load %arg1[%c0, %c0_0] : memref<16x96xbf16, #tpu.memory_space<vmem>>, vector<16x96xbf16>
    %c0_1 = arith.constant 0 : index
    %c0_2 = arith.constant 0 : index
    %1 = vector.load %arg2[%c0_1, %c0_2] : memref<96x1152xbf16, #tpu.memory_space<vmem>>, vector<96x1152xbf16>
    %cst = arith.constant dense<0.000000e+00> : vector<16x1152xf32>
    %2 = tpu.matmul %0, %1, %cst {dimension_numbers = #tpu.dot_dimension_numbers<[1], [0], [0], [1], [0, 0, 1, 1], [], []>} : vector<16x96xbf16>, vector<96x1152xbf16>, vector<16x1152xf32> -> vector<16x1152xf32>
    %c0_3 = arith.constant 0 : index
    %c0_4 = arith.constant 0 : index
    %3 = vector.load %arg3[%c0_3, %c0_4] : memref<16x1xf32, #tpu.memory_space<vmem>>, vector<16x1xf32>
    %4 = vector.broadcast %3 : vector<16x1xf32> to vector<16x1152xf32>
    %5 = arith.addf %2, %4 : vector<16x1152xf32>
    %cst_5 = arith.constant 0.000000e+00 : f32
    %6 = vector.broadcast %cst_5 : f32 to vector<16x1152xf32>
    %7 = arith.cmpf oge, %5, %6 : vector<16x1152xf32>
    %cst_6 = arith.constant 1.000000e-01 : f32
    %8 = vector.broadcast %cst_6 : f32 to vector<16x1152xf32>
    %9 = arith.mulf %8, %5 : vector<16x1152xf32>
    %10 = arith.select %7, %5, %9 : vector<16x1152xi1>, vector<16x1152xf32>
    %11 = arith.truncf %10 : vector<16x1152xf32> to vector<16x1152xbf16>
    %c0_7 = arith.constant 0 : index
    %c0_8 = arith.constant 0 : index
    %12 = vector.load %arg4[%c0_7, %c0_8] : memref<16x1152xbf16, #tpu.memory_space<vmem>>, vector<16x1152xbf16>
    tpu.vector_store %arg4[%c0_7, %c0_8], %11 {strides = array<i32>} : memref<16x1152xbf16, #tpu.memory_space<vmem>>, vector<16x1152xbf16>,
    return
  }
  func.func @transform_0(%arg0: i32) -> (i32, i32) {
    %c0_i32 = arith.constant 0 : i32
    %c0_i32_0 = arith.constant 0 : i32
    %c0_i32_1 = arith.constant 0 : i32
    return %c0_i32, %c0_i32_0 : i32, i32
  }
  func.func @transform_1(%arg0: i32) -> (i32, i32) {
    %c0_i32 = arith.constant 0 : i32
    %c0_i32_0 = arith.constant 0 : i32
    return %c0_i32, %arg0 : i32, i32
  }
  func.func @transform_2(%arg0: i32) -> (i32, i32) {
    %c0_i32 = arith.constant 0 : i32
    %c0_i32_0 = arith.constant 0 : i32
    %c0_i32_1 = arith.constant 0 : i32
    return %c0_i32, %c0_i32_0 : i32, i32
  }
  func.func @transform_3(%arg0: i32) -> (i32, i32) {
    %c0_i32 = arith.constant 0 : i32
    %c0_i32_0 = arith.constant 0 : i32
    return %c0_i32, %arg0 : i32, i32
  }
}

module attributes {stable_mosaic.version = 11 : i64} {
  func.func @_gemm_bias_act_kernel(%arg0: i32, %arg1: memref<32x192xbf16, #tpu.memory_space<vmem>>, %arg2: memref<192x288xbf16, #tpu.memory_space<vmem>>, %arg3: memref<32x1xf32, #tpu.memory_space<vmem>>, %arg4: memref<32x288xbf16, #tpu.memory_space<vmem>>) attributes {dimension_semantics = [#tpu.dimension_semantics<parallel>], iteration_bounds = array<i64: 1>, scalar_prefetch = 0 : i64, scratch_operands = 0 : i64, tpu.core_type = #tpu.core_type<tc>, window_params = [{pipeline_mode = #tpu.pipeline_mode<synchronous>, transform_indices = @transform_0, window_bounds = array<i64: 32, 192>}, {transform_indices = @transform_1, window_bounds = array<i64: 192, 288>}, {pipeline_mode = #tpu.pipeline_mode<synchronous>, transform_indices = @transform_2, window_bounds = array<i64: 32, 1>}, {transform_indices = @transform_3, window_bounds = array<i64: 32, 288>}]} {
    %c0 = arith.constant 0 : index
    %c0_0 = arith.constant 0 : index
    %0 = vector.load %arg1[%c0, %c0_0] : memref<32x192xbf16, #tpu.memory_space<vmem>>, vector<32x192xbf16>
    %c0_1 = arith.constant 0 : index
    %c0_2 = arith.constant 0 : index
    %1 = vector.load %arg2[%c0_1, %c0_2] : memref<192x288xbf16, #tpu.memory_space<vmem>>, vector<192x288xbf16>
    %cst = arith.constant dense<0.000000e+00> : vector<32x288xf32>
    %2 = tpu.matmul %0, %1, %cst {dimension_numbers = #tpu.dot_dimension_numbers<[1], [0], [0], [1], [0, 0, 1, 1], [], []>} : vector<32x192xbf16>, vector<192x288xbf16>, vector<32x288xf32> -> vector<32x288xf32>
    %c0_3 = arith.constant 0 : index
    %c0_4 = arith.constant 0 : index
    %3 = vector.load %arg3[%c0_3, %c0_4] : memref<32x1xf32, #tpu.memory_space<vmem>>, vector<32x1xf32>
    %4 = vector.broadcast %3 : vector<32x1xf32> to vector<32x288xf32>
    %5 = arith.addf %2, %4 : vector<32x288xf32>
    %cst_5 = arith.constant 0.000000e+00 : f32
    %6 = vector.broadcast %cst_5 : f32 to vector<32x288xf32>
    %7 = arith.cmpf oge, %5, %6 : vector<32x288xf32>
    %cst_6 = arith.constant 1.000000e-01 : f32
    %8 = vector.broadcast %cst_6 : f32 to vector<32x288xf32>
    %9 = arith.mulf %8, %5 : vector<32x288xf32>
    %10 = arith.select %7, %5, %9 : vector<32x288xi1>, vector<32x288xf32>
    %11 = arith.truncf %10 : vector<32x288xf32> to vector<32x288xbf16>
    %c0_7 = arith.constant 0 : index
    %c0_8 = arith.constant 0 : index
    %12 = vector.load %arg4[%c0_7, %c0_8] : memref<32x288xbf16, #tpu.memory_space<vmem>>, vector<32x288xbf16>
    tpu.vector_store %arg4[%c0_7, %c0_8], %11 {strides = array<i32>} : memref<32x288xbf16, #tpu.memory_space<vmem>>, vector<32x288xbf16>,
    return
  }
  func.func @transform_0(%arg0: i32) -> (i32, i32) {
    %c0_i32 = arith.constant 0 : i32
    %c0_i32_0 = arith.constant 0 : i32
    %c0_i32_1 = arith.constant 0 : i32
    return %c0_i32, %c0_i32_0 : i32, i32
  }
  func.func @transform_1(%arg0: i32) -> (i32, i32) {
    %c0_i32 = arith.constant 0 : i32
    %c0_i32_0 = arith.constant 0 : i32
    return %c0_i32, %arg0 : i32, i32
  }
  func.func @transform_2(%arg0: i32) -> (i32, i32) {
    %c0_i32 = arith.constant 0 : i32
    %c0_i32_0 = arith.constant 0 : i32
    %c0_i32_1 = arith.constant 0 : i32
    return %c0_i32, %c0_i32_0 : i32, i32
  }
  func.func @transform_3(%arg0: i32) -> (i32, i32) {
    %c0_i32 = arith.constant 0 : i32
    %c0_i32_0 = arith.constant 0 : i32
    return %c0_i32, %arg0 : i32, i32
  }
}

module attributes {stable_mosaic.version = 11 : i64} {
  func.func @_gemm_bias_act_kernel(%arg0: i32, %arg1: memref<64x288xbf16, #tpu.memory_space<vmem>>, %arg2: memref<288x72xbf16, #tpu.memory_space<vmem>>, %arg3: memref<64x1xf32, #tpu.memory_space<vmem>>, %arg4: memref<64x72xbf16, #tpu.memory_space<vmem>>) attributes {dimension_semantics = [#tpu.dimension_semantics<parallel>], iteration_bounds = array<i64: 1>, scalar_prefetch = 0 : i64, scratch_operands = 0 : i64, tpu.core_type = #tpu.core_type<tc>, window_params = [{pipeline_mode = #tpu.pipeline_mode<synchronous>, transform_indices = @transform_0, window_bounds = array<i64: 64, 288>}, {transform_indices = @transform_1, window_bounds = array<i64: 288, 72>}, {pipeline_mode = #tpu.pipeline_mode<synchronous>, transform_indices = @transform_2, window_bounds = array<i64: 64, 1>}, {transform_indices = @transform_3, window_bounds = array<i64: 64, 72>}]} {
    %c0 = arith.constant 0 : index
    %c0_0 = arith.constant 0 : index
    %0 = vector.load %arg1[%c0, %c0_0] : memref<64x288xbf16, #tpu.memory_space<vmem>>, vector<64x288xbf16>
    %c0_1 = arith.constant 0 : index
    %c0_2 = arith.constant 0 : index
    %1 = vector.load %arg2[%c0_1, %c0_2] : memref<288x72xbf16, #tpu.memory_space<vmem>>, vector<288x72xbf16>
    %cst = arith.constant dense<0.000000e+00> : vector<64x72xf32>
    %2 = tpu.matmul %0, %1, %cst {dimension_numbers = #tpu.dot_dimension_numbers<[1], [0], [0], [1], [0, 0, 1, 1], [], []>} : vector<64x288xbf16>, vector<288x72xbf16>, vector<64x72xf32> -> vector<64x72xf32>
    %c0_3 = arith.constant 0 : index
    %c0_4 = arith.constant 0 : index
    %3 = vector.load %arg3[%c0_3, %c0_4] : memref<64x1xf32, #tpu.memory_space<vmem>>, vector<64x1xf32>
    %4 = vector.broadcast %3 : vector<64x1xf32> to vector<64x72xf32>
    %5 = arith.addf %2, %4 : vector<64x72xf32>
    %cst_5 = arith.constant 0.000000e+00 : f32
    %6 = vector.broadcast %cst_5 : f32 to vector<64x72xf32>
    %7 = arith.cmpf oge, %5, %6 : vector<64x72xf32>
    %cst_6 = arith.constant 1.000000e-01 : f32
    %8 = vector.broadcast %cst_6 : f32 to vector<64x72xf32>
    %9 = arith.mulf %8, %5 : vector<64x72xf32>
    %10 = arith.select %7, %5, %9 : vector<64x72xi1>, vector<64x72xf32>
    %11 = arith.truncf %10 : vector<64x72xf32> to vector<64x72xbf16>
    %c0_7 = arith.constant 0 : index
    %c0_8 = arith.constant 0 : index
    %12 = vector.load %arg4[%c0_7, %c0_8] : memref<64x72xbf16, #tpu.memory_space<vmem>>, vector<64x72xbf16>
    tpu.vector_store %arg4[%c0_7, %c0_8], %11 {strides = array<i32>} : memref<64x72xbf16, #tpu.memory_space<vmem>>, vector<64x72xbf16>,
    return
  }
  func.func @transform_0(%arg0: i32) -> (i32, i32) {
    %c0_i32 = arith.constant 0 : i32
    %c0_i32_0 = arith.constant 0 : i32
    %c0_i32_1 = arith.constant 0 : i32
    return %c0_i32, %c0_i32_0 : i32, i32
  }
  func.func @transform_1(%arg0: i32) -> (i32, i32) {
    %c0_i32 = arith.constant 0 : i32
    %c0_i32_0 = arith.constant 0 : i32
    return %c0_i32, %arg0 : i32, i32
  }
  func.func @transform_2(%arg0: i32) -> (i32, i32) {
    %c0_i32 = arith.constant 0 : i32
    %c0_i32_0 = arith.constant 0 : i32
    %c0_i32_1 = arith.constant 0 : i32
    return %c0_i32, %c0_i32_0 : i32, i32
  }
  func.func @transform_3(%arg0: i32) -> (i32, i32) {
    %c0_i32 = arith.constant 0 : i32
    %c0_i32_0 = arith.constant 0 : i32
    return %c0_i32, %arg0 : i32, i32
  }
}

module attributes {stable_mosaic.version = 11 : i64} {
  func.func @_tail_kernel(%arg0: i32, %arg1: memref<128x768xbf16, #tpu.memory_space<vmem>>, %arg2: memref<768x18xbf16, #tpu.memory_space<vmem>>, %arg3: memref<128x1xf32, #tpu.memory_space<vmem>>, %arg4: memref<128x18xbf16, #tpu.memory_space<vmem>>, %arg5: memref<1x1xf32, #tpu.memory_space<vmem>>, %arg6: memref<1x2xf32, #tpu.memory_space<vmem>>) attributes {dimension_semantics = [#tpu.dimension_semantics<arbitrary>], iteration_bounds = array<i64: 1>, scalar_prefetch = 0 : i64, scratch_operands = 0 : i64, tpu.core_type = #tpu.core_type<tc>, window_params = [{pipeline_mode = #tpu.pipeline_mode<synchronous>, transform_indices = @transform_0, window_bounds = array<i64: 128, 768>}, {pipeline_mode = #tpu.pipeline_mode<synchronous>, transform_indices = @transform_1, window_bounds = array<i64: 768, 18>}, {pipeline_mode = #tpu.pipeline_mode<synchronous>, transform_indices = @transform_2, window_bounds = array<i64: 128, 1>}, {pipeline_mode = #tpu.pipeline_mode<synchronous>, transform_indices = @transform_3, window_bounds = array<i64: 128, 18>}, {pipeline_mode = #tpu.pipeline_mode<synchronous>, transform_indices = @transform_4, window_bounds = array<i64: 1, 1>}, {pipeline_mode = #tpu.pipeline_mode<synchronous>, transform_indices = @transform_5, window_bounds = array<i64: 1, 2>}]} {
    %c0 = arith.constant 0 : index
    %c0_0 = arith.constant 0 : index
    %0 = vector.load %arg1[%c0, %c0_0] : memref<128x768xbf16, #tpu.memory_space<vmem>>, vector<128x768xbf16>
    %c0_1 = arith.constant 0 : index
    %c0_2 = arith.constant 0 : index
    %1 = vector.load %arg2[%c0_1, %c0_2] : memref<768x18xbf16, #tpu.memory_space<vmem>>, vector<768x18xbf16>
    %cst = arith.constant dense<0.000000e+00> : vector<128x18xf32>
    %2 = tpu.matmul %0, %1, %cst {dimension_numbers = #tpu.dot_dimension_numbers<[1], [0], [0], [1], [0, 0, 1, 1], [], []>} : vector<128x768xbf16>, vector<768x18xbf16>, vector<128x18xf32> -> vector<128x18xf32>
    %c0_3 = arith.constant 0 : index
    %c0_4 = arith.constant 0 : index
    %3 = vector.load %arg3[%c0_3, %c0_4] : memref<128x1xf32, #tpu.memory_space<vmem>>, vector<128x1xf32>
    %4 = vector.broadcast %3 : vector<128x1xf32> to vector<128x18xf32>
    %5 = arith.addf %2, %4 : vector<128x18xf32>
    %cst_5 = arith.constant 0.000000e+00 : f32
    %6 = vector.broadcast %cst_5 : f32 to vector<128x18xf32>
    %7 = arith.cmpf oge, %5, %6 : vector<128x18xf32>
    %cst_6 = arith.constant 1.000000e-01 : f32
    %8 = vector.broadcast %cst_6 : f32 to vector<128x18xf32>
    %9 = arith.mulf %8, %5 : vector<128x18xf32>
    %10 = arith.select %7, %5, %9 : vector<128x18xi1>, vector<128x18xf32>
    %11 = arith.truncf %10 : vector<128x18xf32> to vector<128x18xbf16>
    %12 = arith.extf %11 : vector<128x18xbf16> to vector<128x18xf32>
    %c0_7 = arith.constant 0 : index
    %c0_8 = arith.constant 0 : index
    %13 = vector.load %arg4[%c0_7, %c0_8] : memref<128x18xbf16, #tpu.memory_space<vmem>>, vector<128x18xbf16>
    %14 = arith.extf %13 : vector<128x18xbf16> to vector<128x18xf32>
    %15 = arith.mulf %12, %14 : vector<128x18xf32>
    %cst_9 = arith.constant dense<0.000000e+00> : vector<18xf32>
    %16 = vector.multi_reduction <add>, %15, %cst_9 [0] : vector<128x18xf32> to vector<18xf32>
    %17 = vector.shape_cast %16 : vector<18xf32> to vector<1x18xf32>
    %18 = tpu.iota {dimensions = array<i32: 0>} : vector<18x2xi32>
    %19 = tpu.iota {dimensions = array<i32: 1>} : vector<18x2xi32>
    %c9_i32 = arith.constant 9 : i32
    %20 = vector.broadcast %c9_i32 : i32 to vector<18x2xi32>
    %21 = arith.muli %19, %20 : vector<18x2xi32>
    %22 = arith.cmpi sge, %18, %21 : vector<18x2xi32>
    %c9_i32_10 = arith.constant 9 : i32
    %23 = vector.broadcast %c9_i32_10 : i32 to vector<18x2xi32>
    %24 = arith.muli %19, %23 : vector<18x2xi32>
    %c9_i32_11 = arith.constant 9 : i32
    %25 = vector.broadcast %c9_i32_11 : i32 to vector<18x2xi32>
    %26 = arith.addi %24, %25 : vector<18x2xi32>
    %27 = arith.cmpi slt, %18, %26 : vector<18x2xi32>
    %28 = arith.andi %22, %27 : vector<18x2xi1>
    %29 = arith.extui %28 : vector<18x2xi1> to vector<18x2xi32>
    %30 = arith.sitofp %29 : vector<18x2xi32> to vector<18x2xf32>
    %cst_12 = arith.constant dense<0.000000e+00> : vector<1x2xf32>
    %31 = tpu.matmul %17, %30, %cst_12 {dimension_numbers = #tpu.dot_dimension_numbers<[1], [0], [0], [1], [0, 0, 1, 1], [], []>} : vector<1x18xf32>, vector<18x2xf32>, vector<1x2xf32> -> vector<1x2xf32>
    %c0_13 = arith.constant 0 : index
    %c0_14 = arith.constant 0 : index
    %32 = vector.load %arg5[%c0_13, %c0_14] : memref<1x1xf32, #tpu.memory_space<vmem>>, vector<1x1xf32>
    %33 = vector.broadcast %32 : vector<1x1xf32> to vector<1x2xf32>
    %34 = arith.addf %31, %33 : vector<1x2xf32>
    %cst_15 = arith.constant 0.000000e+00 : f32
    %35 = vector.broadcast %cst_15 : f32 to vector<1x2xf32>
    %36 = arith.subf %35, %34 : vector<1x2xf32>
    %37 = math.exp %36 : vector<1x2xf32>
    %cst_16 = arith.constant 1.000000e+00 : f32
    %38 = vector.broadcast %cst_16 : f32 to vector<1x2xf32>
    %39 = arith.addf %38, %37 : vector<1x2xf32>
    %cst_17 = arith.constant 1.000000e+00 : f32
    %40 = vector.broadcast %cst_17 : f32 to vector<1x2xf32>
    %41 = arith.divf %40, %39 : vector<1x2xf32>
    %c0_18 = arith.constant 0 : index
    %c0_19 = arith.constant 0 : index
    %42 = vector.load %arg6[%c0_18, %c0_19] : memref<1x2xf32, #tpu.memory_space<vmem>>, vector<1x2xf32>
    tpu.vector_store %arg6[%c0_18, %c0_19], %41 {strides = array<i32>} : memref<1x2xf32, #tpu.memory_space<vmem>>, vector<1x2xf32>,
    return
  }
  func.func @transform_0(%arg0: i32) -> (i32, i32) {
    %c0_i32 = arith.constant 0 : i32
    %c0_i32_0 = arith.constant 0 : i32
    %c0_i32_1 = arith.constant 0 : i32
    return %c0_i32, %c0_i32_0 : i32, i32
  }
  func.func @transform_1(%arg0: i32) -> (i32, i32) {
    %c0_i32 = arith.constant 0 : i32
    %c0_i32_0 = arith.constant 0 : i32
    %c0_i32_1 = arith.constant 0 : i32
    return %c0_i32, %c0_i32_0 : i32, i32
  }
  func.func @transform_2(%arg0: i32) -> (i32, i32) {
    %c0_i32 = arith.constant 0 : i32
    %c0_i32_0 = arith.constant 0 : i32
    %c0_i32_1 = arith.constant 0 : i32
    return %c0_i32, %c0_i32_0 : i32, i32
  }
  func.func @transform_3(%arg0: i32) -> (i32, i32) {
    %c0_i32 = arith.constant 0 : i32
    %c0_i32_0 = arith.constant 0 : i32
    %c0_i32_1 = arith.constant 0 : i32
    return %c0_i32, %c0_i32_0 : i32, i32
  }
  func.func @transform_4(%arg0: i32) -> (i32, i32) {
    %c0_i32 = arith.constant 0 : i32
    %c0_i32_0 = arith.constant 0 : i32
    %c0_i32_1 = arith.constant 0 : i32
    return %c0_i32, %c0_i32_0 : i32, i32
  }
  func.func @transform_5(%arg0: i32) -> (i32, i32) {
    %c0_i32 = arith.constant 0 : i32
    %c0_i32_0 = arith.constant 0 : i32
    %c0_i32_1 = arith.constant 0 : i32
    return %c0_i32, %c0_i32_0 : i32, i32
  }
}

</mosaic_0001>

<llo_original>
// kernel: discriminator_forward.5
$region0: #{discriminator_forward.5}
  #allocation0 [shape = 'u32[]', space=smem, size = 0x4, offset = 0x4, fixed_abs, tag = 'smem constant byte address 0x4 - core index']
  #allocation1 [shape = 'u32[144,128]{1,0:T(1,128)}', space=vmem, size = 0x12000, scoped, tag = 'internal scratch']
  %s0 = inlined_call_operand.vmem [shape: bf16[8,27], index: 0, kind: input, shape index: {}]
  %s1 = inlined_call_operand.vmem [shape: bf16[27,4608], index: 1, kind: input, shape index: {}]
  %s2 = inlined_call_operand.vmem [shape: f32[8,1], index: 2, kind: input, shape index: {}]
  %s3 = inlined_call_operand.vmem [shape: bf16[8,4608], index: 3, kind: output, shape index: {}]
  %s4 = sld [smem:[#allocation0]]
  $region22: #{discriminator_forward.5} parent=0
    _
  %s6 = ssub.s32 1, %s4
  %s7 = scalar_select 0, %s6, %s4
  // Predicated region
  $region2: #{discriminator_forward.5} parent=0 // pred_check
    _
  $region3: #{discriminator_forward.5} parent=0 // pred_check_branch
    %9 = sbr.rel (0) target = $region5
  $region4: #{discriminator_forward.5} parent=0 // pred_region
    _
  $region5: #{discriminator_forward.5} parent=0 // pred_fallthru
    _
  // Predicated region
  $region6: #{discriminator_forward.5} parent=0 // pred_check
    _
  $region7: #{discriminator_forward.5} parent=0 // pred_check_branch
    %11 = sbr.rel (0) target = $region9
  $region8: #{discriminator_forward.5} parent=0 // pred_region
    _
  $region9: #{discriminator_forward.5} parent=0 // pred_fallthru
    _
  // Predicated region
  $region10: #{discriminator_forward.5} parent=0 // pred_check
    _
  $region11: #{discriminator_forward.5} parent=0 // pred_check_branch
    %13 = sbr.rel (0) target = $region13
  $region12: #{discriminator_forward.5} parent=0 // pred_region
    _
  $region13: #{discriminator_forward.5} parent=0 // pred_fallthru
    _
  %v15 = vld [vmem:[%s0] sm:$0xf]
  %v16 = vld [vmem:[%s1] sm:$0xff]
  %v17 = vld [vmem:[%s1 + $0x8] sm:$0xff]
  %v18 = vld [vmem:[%s1 + $0x10] sm:$0xff]
  %v19 = vld [vmem:[%s1 + $0x18] sm:$0xff]
  %v20 = vld [vmem:[%s1 + $0x20] sm:$0xff]
  %v21 = vld [vmem:[%s1 + $0x28] sm:$0xff]
  %v22 = vld [vmem:[%s1 + $0x30] sm:$0xff]
  %v23 = vld [vmem:[%s1 + $0x38] sm:$0xff]
  %v24 = vld [vmem:[%s1 + $0x40] sm:$0xff]
  %v25 = vld [vmem:[%s1 + $0x48] sm:$0xff]
  %v26 = vld [vmem:[%s1 + $0x50] sm:$0xff]
  %v27 = vld [vmem:[%s1 + $0x58] sm:$0xff]
  %v28 = vld [vmem:[%s1 + $0x60] sm:$0xff]
  %v29 = vld [vmem:[%s1 + $0x68] sm:$0xff]
  %v30 = vld [vmem:[%s1 + $0x70] sm:$0xff]
  %v31 = vld [vmem:[%s1 + $0x78] sm:$0xff]
  %v32 = vld [vmem:[%s1 + $0x80] sm:$0xff]
  %v33 = vld [vmem:[%s1 + $0x88] sm:$0xff]
  %v34 = vld [vmem:[%s1 + $0x90] sm:$0xff]
  %v35 = vld [vmem:[%s1 + $0x98] sm:$0xff]
  %v36 = vld [vmem:[%s1 + $0xa0] sm:$0xff]
  %v37 = vld [vmem:[%s1 + $0xa8] sm:$0xff]
  %v38 = vld [vmem:[%s1 + $0xb0] sm:$0xff]
  %v39 = vld [vmem:[%s1 + $0xb8] sm:$0xff]
  %v40 = vld [vmem:[%s1 + $0xc0] sm:$0xff]
  %v41 = vld [vmem:[%s1 + $0xc8] sm:$0xff]
  %v42 = vld [vmem:[%s1 + $0xd0] sm:$0xff]
  %v43 = vld [vmem:[%s1 + $0xd8] sm:$0xff]
  %v44 = vld [vmem:[%s1 + $0xe0] sm:$0xff]
  %v45 = vld [vmem:[%s1 + $0xe8] sm:$0xff]
  %v46 = vld [vmem:[%s1 + $0xf0] sm:$0xff]
  %v47 = vld [vmem:[%s1 + $0xf8] sm:$0xff]
  %v48 = vld [vmem:[%s1 + $0x100] sm:$0xff]
  %v49 = vld [vmem:[%s1 + $0x108] sm:$0xff]
  %v50 = vld [vmem:[%s1 + $0x110] sm:$0xff]
  %v51 = vld [vmem:[%s1 + $0x118] sm:$0xff]
  %v52 = vld [vmem:[%s1 + $0x120] sm:$0xff]
  %v53 = vld [vmem:[%s1 + $0x128] sm:$0xff]
  %v54 = vld [vmem:[%s1 + $0x130] sm:$0xff]
  %v55 = vld [vmem:[%s1 + $0x138] sm:$0xff]
  %v56 = vld [vmem:[%s1 + $0x140] sm:$0xff]
  %v57 = vld [vmem:[%s1 + $0x148] sm:$0xff]
  %v58 = vld [vmem:[%s1 + $0x150] sm:$0xff]
  %v59 = vld [vmem:[%s1 + $0x158] sm:$0xff]
  %v60 = vld [vmem:[%s1 + $0x160] sm:$0xff]
  %v61 = vld [vmem:[%s1 + $0x168] sm:$0xff]
  %v62 = vld [vmem:[%s1 + $0x170] sm:$0xff]
  %v63 = vld [vmem:[%s1 + $0x178] sm:$0xff]
  %v64 = vld [vmem:[%s1 + $0x180] sm:$0xff]
  %v65 = vld [vmem:[%s1 + $0x188] sm:$0xff]
  %v66 = vld [vmem:[%s1 + $0x190] sm:$0xff]
  %v67 = vld [vmem:[%s1 + $0x198] sm:$0xff]
  %v68 = vld [vmem:[%s1 + $0x1a0] sm:$0xff]
  %v69 = vld [vmem:[%s1 + $0x1a8] sm:$0xff]
  %v70 = vld [vmem:[%s1 + $0x1b0] sm:$0x33]
  %v71 = vld [vmem:[%s1 + $0x1b8] sm:$0x33]
  %v72 = vld [vmem:[%s1 + $0x1c0] sm:$0x33]
  %v73 = vld [vmem:[%s1 + $0x1c8] sm:$0x33]
  %v74 = vld [vmem:[%s1 + $0x1d0] sm:$0x33]
  %v75 = vld [vmem:[%s1 + $0x1d8] sm:$0x33]
  %v76 = vld [vmem:[%s1 + $0x1e0] sm:$0x33]
  %v77 = vld [vmem:[%s1 + $0x1e8] sm:$0x33]
  %v78 = vld [vmem:[%s1 + $0x1f0] sm:$0x33]
  %v79 = vld [vmem:[%s1 + $0x1f8] sm:$0x33]
  %v80 = vld [vmem:[%s1 + $0x200] sm:$0x33]
  %v81 = vld [vmem:[%s1 + $0x208] sm:$0x33]
  %v82 = vld [vmem:[%s1 + $0x210] sm:$0x33]
  %v83 = vld [vmem:[%s1 + $0x218] sm:$0x33]
  %v84 = vld [vmem:[%s1 + $0x220] sm:$0x33]
  %v85 = vld [vmem:[%s1 + $0x228] sm:$0x33]
  %v86 = vld [vmem:[%s1 + $0x230] sm:$0x33]
  %v87 = vld [vmem:[%s1 + $0x238] sm:$0x33]
  %v88 = vld [vmem:[%s2] sm:$0xff]
  %90 = vset.pattern.permute.xlu0 0
  %91 = vperm.xlu0 %90, %v88
  %v92 = vpop.permute.xlu0 %91
  %v166 = vunpack.c.l.b16 %v16
  %v167 = vunpack.c.h.b16 %v16
  %v168 = vunpack.c.l.b16 %v17
  %v169 = vunpack.c.h.b16 %v17
  %v170 = vunpack.c.l.b16 %v18
  %v171 = vunpack.c.h.b16 %v18
  %v172 = vunpack.c.l.b16 %v19
  %v173 = vunpack.c.h.b16 %v19
  %v174 = vunpack.c.l.b16 %v20
  %v175 = vunpack.c.h.b16 %v20
  %v176 = vunpack.c.l.b16 %v21
  %v177 = vunpack.c.h.b16 %v21
  %v178 = vunpack.c.l.b16 %v22
  %v179 = vunpack.c.h.b16 %v22
  %v180 = vunpack.c.l.b16 %v23
  %v181 = vunpack.c.h.b16 %v23
  %v182 = vunpack.c.l.b16 %v24
  %v183 = vunpack.c.h.b16 %v24
  %v184 = vunpack.c.l.b16 %v25
  %v185 = vunpack.c.h.b16 %v25
  %v186 = vunpack.c.l.b16 %v26
  %v187 = vunpack.c.h.b16 %v26
  %v188 = vunpack.c.l.b16 %v27
  %v189 = vunpack.c.h.b16 %v27
  %v190 = vunpack.c.l.b16 %v28
  %v191 = vunpack.c.h.b16 %v28
  %v192 = vunpack.c.l.b16 %v29
  %v193 = vunpack.c.h.b16 %v29
  %v194 = vunpack.c.l.b16 %v30
  %v195 = vunpack.c.h.b16 %v30
  %v196 = vunpack.c.l.b16 %v31
  %v197 = vunpack.c.h.b16 %v31
  %v198 = vunpack.c.l.b16 %v32
  %v199 = vunpack.c.h.b16 %v32
  %v200 = vunpack.c.l.b16 %v33
  %v201 = vunpack.c.h.b16 %v33
  %v202 = vunpack.c.l.b16 %v34
  %v203 = vunpack.c.h.b16 %v34
  %v204 = vunpack.c.l.b16 %v35
  %v205 = vunpack.c.h.b16 %v35
  %v206 = vunpack.c.l.b16 %v36
  %v207 = vunpack.c.h.b16 %v36
  %v208 = vunpack.c.l.b16 %v37
  %v209 = vunpack.c.h.b16 %v37
  %v210 = vunpack.c.l.b16 %v38
  %v211 = vunpack.c.h.b16 %v38
  %v212 = vunpack.c.l.b16 %v39
  %v213 = vunpack.c.h.b16 %v39
  %v214 = vunpack.c.l.b16 %v40
  %v215 = vunpack.c.h.b16 %v40
  %v216 = vunpack.c.l.b16 %v41
  %v217 = vunpack.c.h.b16 %v41
  %v218 = vunpack.c.l.b16 %v42
  %v219 = vunpack.c.h.b16 %v42
  %v220 = vunpack.c.l.b16 %v43
  %v221 = vunpack.c.h.b16 %v43
  %v222 = vunpack.c.l.b16 %v44
  %v223 = vunpack.c.h.b16 %v44
  %v224 = vunpack.c.l.b16 %v45
  %v225 = vunpack.c.h.b16 %v45
  %v226 = vunpack.c.l.b16 %v46
  %v227 = vunpack.c.h.b16 %v46
  %v228 = vunpack.c.l.b16 %v47
  %v229 = vunpack.c.h.b16 %v47
  %v230 = vunpack.c.l.b16 %v48
  %v231 = vunpack.c.h.b16 %v48
  %v232 = vunpack.c.l.b16 %v49
  %v233 = vunpack.c.h.b16 %v49
  %v234 = vunpack.c.l.b16 %v50
  %v235 = vunpack.c.h.b16 %v50
  %v236 = vunpack.c.l.b16 %v51
  %v237 = vunpack.c.h.b16 %v51
  %v238 = vunpack.c.l.b16 %v52
  %v239 = vunpack.c.h.b16 %v52
  %v240 = vunpack.c.l.b16 %v53
  %v241 = vunpack.c.h.b16 %v53
  %v242 = vunpack.c.l.b16 %v54
  %v243 = vunpack.c.h.b16 %v54
  %v244 = vunpack.c.l.b16 %v55
  %v245 = vunpack.c.h.b16 %v55
  %v246 = vunpack.c.l.b16 %v56
  %v247 = vunpack.c.h.b16 %v56
  %v248 = vunpack.c.l.b16 %v57
  %v249 = vunpack.c.h.b16 %v57
  %v250 = vunpack.c.l.b16 %v58
  %v251 = vunpack.c.h.b16 %v58
  %v252 = vunpack.c.l.b16 %v59
  %v253 = vunpack.c.h.b16 %v59
  %v254 = vunpack.c.l.b16 %v60
  %v255 = vunpack.c.h.b16 %v60
  %v256 = vunpack.c.l.b16 %v61
  %v257 = vunpack.c.h.b16 %v61
  %v258 = vunpack.c.l.b16 %v62
  %v259 = vunpack.c.h.b16 %v62
  %v260 = vunpack.c.l.b16 %v63
  %v261 = vunpack.c.h.b16 %v63
  %v262 = vunpack.c.l.b16 %v64
  %v263 = vunpack.c.h.b16 %v64
  %v264 = vunpack.c.l.b16 %v65
  %v265 = vunpack.c.h.b16 %v65
  %v266 = vunpack.c.l.b16 %v66
  %v267 = vunpack.c.h.b16 %v66
  %v268 = vunpack.c.l.b16 %v67
  %v269 = vunpack.c.h.b16 %v67
  %v270 = vunpack.c.l.b16 %v68
  %v271 = vunpack.c.h.b16 %v68
  %v272 = vunpack.c.l.b16 %v69
  %v273 = vunpack.c.h.b16 %v69
  %v274 = vunpack.c.l.b16 %v70
  %v275 = vunpack.c.h.b16 %v70
  %v276 = vunpack.c.l.b16 %v71
  %v277 = vunpack.c.h.b16 %v71
  %v278 = vunpack.c.l.b16 %v72
  %v279 = vunpack.c.h.b16 %v72
  %v280 = vunpack.c.l.b16 %v73
  %v281 = vunpack.c.h.b16 %v73
  %v282 = vunpack.c.l.b16 %v74
  %v283 = vunpack.c.h.b16 %v74
  %v284 = vunpack.c.l.b16 %v75
  %v285 = vunpack.c.h.b16 %v75
  %v286 = vunpack.c.l.b16 %v76
  %v287 = vunpack.c.h.b16 %v76
  %v288 = vunpack.c.l.b16 %v77
  %v289 = vunpack.c.h.b16 %v77
  %v290 = vunpack.c.l.b16 %v78
  %v291 = vunpack.c.h.b16 %v78
  %v292 = vunpack.c.l.b16 %v79
  %v293 = vunpack.c.h.b16 %v79
  %v294 = vunpack.c.l.b16 %v80
  %v295 = vunpack.c.h.b16 %v80
  %v296 = vunpack.c.l.b16 %v81
  %v297 = vunpack.c.h.b16 %v81
  %v298 = vunpack.c.l.b16 %v82
  %v299 = vunpack.c.h.b16 %v82
  %v300 = vunpack.c.l.b16 %v83
  %v301 = vunpack.c.h.b16 %v83
  %v302 = vunpack.c.l.b16 %v84
  %v303 = vunpack.c.h.b16 %v84
  %v304 = vunpack.c.l.b16 %v85
  %v305 = vunpack.c.h.b16 %v85
  %v306 = vunpack.c.l.b16 %v86
  %v307 = vunpack.c.h.b16 %v86
  %v308 = vunpack.c.l.b16 %v87
  %v309 = vunpack.c.h.b16 %v87
  %v310 = vpack.c.b16 %v202, %v166
  %v311 = vpack.c.b16 %v203, %v167
  %v312 = vpack.c.b16 %v204, %v168
  %v313 = vpack.c.b16 %v205, %v169
  %v314 = vpack.c.b16 %v206, %v170
  %v315 = vpack.c.b16 %v207, %v171
  %v316 = vpack.c.b16 %v208, %v172
  %v317 = vpack.c.b16 %v209, %v173
  %v318 = vpack.c.b16 %v210, %v174
  %v319 = vpack.c.b16 %v211, %v175
  %v320 = vpack.c.b16 %v212, %v176
  %v321 = vpack.c.b16 %v213, %v177
  %v322 = vpack.c.b16 %v214, %v178
  %v323 = vpack.c.b16 %v215, %v179
  %v324 = vpack.c.b16 %v216, %v180
  %v325 = vpack.c.b16 %v217, %v181
  %v326 = vpack.c.b16 %v218, %v182
  %v327 = vpack.c.b16 %v219, %v183
  %v328 = vpack.c.b16 %v220, %v184
  %v329 = vpack.c.b16 %v221, %v185
  %v330 = vpack.c.b16 %v222, %v186
  %v331 = vpack.c.b16 %v223, %v187
  %v332 = vpack.c.b16 %v224, %v188
  %v333 = vpack.c.b16 %v225, %v189
  %v334 = vpack.c.b16 %v226, %v190
  %v335 = vpack.c.b16 %v227, %v191
  %v336 = vpack.c.b16 %v228, %v192
  %v337 = vpack.c.b16 %v229, %v193
  %v338 = vpack.c.b16 %v230, %v194
  %v339 = vpack.c.b16 %v231, %v195
  %v340 = vpack.c.b16 %v232, %v196
  %v341 = vpack.c.b16 %v233, %v197
  %v342 = vpack.c.b16 %v234, %v198
  %v343 = vpack.c.b16 %v235, %v199
  %v344 = vpack.c.b16 %v236, %v200
  %v345 = vpack.c.b16 %v237, %v201
  %v346 = vpack.c.b16 %v274, %v238
  %v347 = vpack.c.b16 %v275, %v239
  %v348 = vpack.c.b16 %v276, %v240
  %v349 = vpack.c.b16 %v277, %v241
  %v350 = vpack.c.b16 %v278, %v242
  %v351 = vpack.c.b16 %v279, %v243
  %v352 = vpack.c.b16 %v280, %v244
  %v353 = vpack.c.b16 %v281, %v245
  %v354 = vpack.c.b16 %v282, %v246
  %v355 = vpack.c.b16 %v283, %v247
  %v356 = vpack.c.b16 %v284, %v248
  %v357 = vpack.c.b16 %v285, %v249
  %v358 = vpack.c.b16 %v286, %v250
  %v359 = vpack.c.b16 %v287, %v251
  %v360 = vpack.c.b16 %v288, %v252
  %v361 = vpack.c.b16 %v289, %v253
  %v362 = vpack.c.b16 %v290, %v254
  %v363 = vpack.c.b16 %v291, %v255
  %v364 = vpack.c.b16 %v292, %v256
  %v365 = vpack.c.b16 %v293, %v257
  %v366 = vpack.c.b16 %v294, %v258
  %v367 = vpack.c.b16 %v295, %v259
  %v368 = vpack.c.b16 %v296, %v260
  %v369 = vpack.c.b16 %v297, %v261
  %v370 = vpack.c.b16 %v298, %v262
  %v371 = vpack.c.b16 %v299, %v263
  %v372 = vpack.c.b16 %v300, %v264
  %v373 = vpack.c.b16 %v301, %v265
  %v374 = vpack.c.b16 %v302, %v266
  %v375 = vpack.c.b16 %v303, %v267
  %v376 = vpack.c.b16 %v304, %v268
  %v377 = vpack.c.b16 %v305, %v269
  %v378 = vpack.c.b16 %v306, %v270
  %v379 = vpack.c.b16 %v307, %v271
  %v380 = vpack.c.b16 %v308, %v272
  %v381 = vpack.c.b16 %v309, %v273
  %vm418 = vcmask 220160
  %v420 = vsel %vm418, %v15, 0
  %vm422 = vcmask 1044480
  %vm423 = vcmask 1045504
  %v424 = vsel %vm422, 4294967295, 65535
  %v425 = vsel %vm423, %v424, 0
  %v427 = vand.u32 %v346, %v425
  %v430 = vand.u32 %v347, %v425
  %v433 = vand.u32 %v348, %v425
  %v436 = vand.u32 %v349, %v425
  %v439 = vand.u32 %v350, %v425
  %v442 = vand.u32 %v351, %v425
  %v445 = vand.u32 %v352, %v425
  %v448 = vand.u32 %v353, %v425
  %v451 = vand.u32 %v354, %v425
  %v454 = vand.u32 %v355, %v425
  %v457 = vand.u32 %v356, %v425
  %v460 = vand.u32 %v357, %v425
  %v463 = vand.u32 %v358, %v425
  %v466 = vand.u32 %v359, %v425
  %v469 = vand.u32 %v360, %v425
  %v472 = vand.u32 %v361, %v425
  %v475 = vand.u32 %v362, %v425
  %v478 = vand.u32 %v363, %v425
  %v481 = vand.u32 %v364, %v425
  %v484 = vand.u32 %v365, %v425
  %v487 = vand.u32 %v366, %v425
  %v490 = vand.u32 %v367, %v425
  %v493 = vand.u32 %v368, %v425
  %v496 = vand.u32 %v369, %v425
  %v499 = vand.u32 %v370, %v425
  %v502 = vand.u32 %v371, %v425
  %v505 = vand.u32 %v372, %v425
  %v508 = vand.u32 %v373, %v425
  %v511 = vand.u32 %v374, %v425
  %v514 = vand.u32 %v375, %v425
  %v517 = vand.u32 %v376, %v425
  %v520 = vand.u32 %v377, %v425
  %v523 = vand.u32 %v378, %v425
  %v526 = vand.u32 %v379, %v425
  %v529 = vand.u32 %v380, %v425
  %v532 = vand.u32 %v381, %v425
  %534 = vmatprep.subr.bf16.mxu0 %v311
  %535 = vmatpush1.bf16.msra.mxu0 %v310
  %536 = vmatprep.subr.bf16.mxu0 %v430
  %537 = vmatpush1.bf16.msra.mxu0 %v427
  %538 = vmatprep.subr.bf16.mxu0 0
  %539 = vmatpush1.bf16.msra.mxu0 0
  %540 = vmatprep.subr.bf16.mxu0 0
  %541 = vmatpush1.bf16.msra.mxu0 0
  %542 = vmatprep.subr.bf16.mxu0 0
  %543 = vmatpush1.bf16.msra.mxu0 0
  %544 = vmatprep.subr.bf16.mxu0 0
  %545 = vmatpush1.bf16.msra.mxu0 0
  %546 = vmatprep.subr.bf16.mxu0 0
  %547 = vmatpush1.bf16.msra.mxu0 0
  %548 = vmatprep.subr.bf16.mxu0 0
  %549 = vmatpush1.bf16.msra.mxu0 0
  %550 = vmatprep.subr.bf16.mxu0 0
  %551 = vmatpush1.bf16.msra.mxu0 0
  %552 = vmatprep.subr.bf16.mxu0 0
  %553 = vmatpush1.bf16.msra.mxu0 0
  %554 = vmatprep.subr.bf16.mxu0 0
  %555 = vmatpush1.bf16.msra.mxu0 0
  %556 = vmatprep.subr.bf16.mxu0 0
  %557 = vmatpush1.bf16.msra.mxu0 0
  %558 = vmatprep.subr.bf16.mxu0 0
  %559 = vmatpush1.bf16.msra.mxu0 0
  %560 = vmatprep.subr.bf16.mxu0 0
  %561 = vmatpush1.bf16.msra.mxu0 0
  %562 = vmatprep.subr.bf16.mxu0 0
  %563 = vmatpush1.bf16.msra.mxu0 0
  %564 = vmatprep.subr.bf16.mxu0 0
  %565 = vmatpush1.bf16.msra.mxu0 0
  %566 = vmatprep.mubr.bf16.mxu0 0
  %567 = vmatmul.mubr.bf16.gmra.mrb[0].mxu0 %v420
  %v568 = vpop.f32.mrb[0].mxu0
  %v569 = vadd.f32 %v92, %v568
  %v570 = vpop.f32.mrb[0].mxu0
  %v571 = vadd.f32 %v92, %v570
  %v572 = vpop.f32.mrb[0].mxu0
  %v573 = vpop.f32.mrb[0].mxu0
  %574 = vdwg.mxu0
  %575 = vmatprep.subr.bf16.mxu0 %v313
  %576 = vmatpush1.bf16.msra.mxu0 %v312
  %577 = vmatprep.subr.bf16.mxu0 %v436
  %578 = vmatpush1.bf16.msra.mxu0 %v433
  %579 = vmatprep.subr.bf16.mxu0 0
  %580 = vmatpush1.bf16.msra.mxu0 0
  %581 = vmatprep.subr.bf16.mxu0 0
  %582 = vmatpush1.bf16.msra.mxu0 0
  %583 = vmatprep.subr.bf16.mxu0 0
  %584 = vmatpush1.bf16.msra.mxu0 0
  %585 = vmatprep.subr.bf16.mxu0 0
  %586 = vmatpush1.bf16.msra.mxu0 0
  %587 = vmatprep.subr.bf16.mxu0 0
  %588 = vmatpush1.bf16.msra.mxu0 0
  %589 = vmatprep.subr.bf16.mxu0 0
  %590 = vmatpush1.bf16.msra.mxu0 0
  %591 = vmatprep.subr.bf16.mxu0 0
  %592 = vmatpush1.bf16.msra.mxu0 0
  %593 = vmatprep.subr.bf16.mxu0 0
  %594 = vmatpush1.bf16.msra.mxu0 0
  %595 = vmatprep.subr.bf16.mxu0 0
  %596 = vmatpush1.bf16.msra.mxu0 0
  %597 = vmatprep.subr.bf16.mxu0 0
  %598 = vmatpush1.bf16.msra.mxu0 0
  %599 = vmatprep.subr.bf16.mxu0 0
  %600 = vmatpush1.bf16.msra.mxu0 0
  %601 = vmatprep.subr.bf16.mxu0 0
  %602 = vmatpush1.bf16.msra.mxu0 0
  %603 = vmatprep.subr.bf16.mxu0 0
  %604 = vmatpush1.bf16.msra.mxu0 0
  %605 = vmatprep.subr.bf16.mxu0 0
  %606 = vmatpush1.bf16.msra.mxu0 0
  %607 = vmatprep.mubr.bf16.mxu0 0
  %608 = vmatmul.mubr.bf16.gmra.mrb[0].mxu0 %v420
  %v609 = vpop.f32.mrb[0].mxu0
  %v610 = vadd.f32 %v92, %v609
  %v611 = vpop.f32.mrb[0].mxu0
  %v612 = vadd.f32 %v92, %v611
  %v613 = vpop.f32.mrb[0].mxu0
  %v614 = vpop.f32.mrb[0].mxu0
  %615 = vdwg.mxu0
  %616 = vmatprep.subr.bf16.mxu0 %v315
  %617 = vmatpush1.bf16.msra.mxu0 %v314
  %618 = vmatprep.subr.bf16.mxu0 %v442
  %619 = vmatpush1.bf16.msra.mxu0 %v439
  %620 = vmatprep.subr.bf16.mxu0 0
  %621 = vmatpush1.bf16.msra.mxu0 0
  %622 = vmatprep.subr.bf16.mxu0 0
  %623 = vmatpush1.bf16.msra.mxu0 0
  %624 = vmatprep.subr.bf16.mxu0 0
  %625 = vmatpush1.bf16.msra.mxu0 0
  %626 = vmatprep.subr.bf16.mxu0 0
  %627 = vmatpush1.bf16.msra.mxu0 0
  %628 = vmatprep.subr.bf16.mxu0 0
  %629 = vmatpush1.bf16.msra.mxu0 0
  %630 = vmatprep.subr.bf16.mxu0 0
  %631 = vmatpush1.bf16.msra.mxu0 0
  %632 = vmatprep.subr.bf16.mxu0 0
  %633 = vmatpush1.bf16.msra.mxu0 0
  %634 = vmatprep.subr.bf16.mxu0 0
  %635 = vmatpush1.bf16.msra.mxu0 0
  %636 = vmatprep.subr.bf16.mxu0 0
  %637 = vmatpush1.bf16.msra.mxu0 0
  %638 = vmatprep.subr.bf16.mxu0 0
  %639 = vmatpush1.bf16.msra.mxu0 0
  %640 = vmatprep.subr.bf16.mxu0 0
  %641 = vmatpush1.bf16.msra.mxu0 0
  %642 = vmatprep.subr.bf16.mxu0 0
  %643 = vmatpush1.bf16.msra.mxu0 0
  %644 = vmatprep.subr.bf16.mxu0 0
  %645 = vmatpush1.bf16.msra.mxu0 0
  %646 = vmatprep.subr.bf16.mxu0 0
  %647 = vmatpush1.bf16.msra.mxu0 0
  %648 = vmatprep.mubr.bf16.mxu0 0
  %649 = vmatmul.mubr.bf16.gmra.mrb[0].mxu0 %v420
  %v650 = vpop.f32.mrb[0].mxu0
  %v651 = vadd.f32 %v92, %v650
  %v652 = vpop.f32.mrb[0].mxu0
  %v653 = vadd.f32 %v92, %v652
  %v654 = vpop.f32.mrb[0].mxu0
  %v655 = vpop.f32.mrb[0].mxu0
  %656 = vdwg.mxu0
  %657 = vmatprep.subr.bf16.mxu0 %v317
  %658 = vmatpush1.bf16.msra.mxu0 %v316
  %659 = vmatprep.subr.bf16.mxu0 %v448
  %660 = vmatpush1.bf16.msra.mxu0 %v445
  %661 = vmatprep.subr.bf16.mxu0 0
  %662 = vmatpush1.bf16.msra.mxu0 0
  %663 = vmatprep.subr.bf16.mxu0 0
  %664 = vmatpush1.bf16.msra.mxu0 0
  %665 = vmatprep.subr.bf16.mxu0 0
  %666 = vmatpush1.bf16.msra.mxu0 0
  %667 = vmatprep.subr.bf16.mxu0 0
  %668 = vmatpush1.bf16.msra.mxu0 0
  %669 = vmatprep.subr.bf16.mxu0 0
  %670 = vmatpush1.bf16.msra.mxu0 0
  %671 = vmatprep.subr.bf16.mxu0 0
  %672 = vmatpush1.bf16.msra.mxu0 0
  %673 = vmatprep.subr.bf16.mxu0 0
  %674 = vmatpush1.bf16.msra.mxu0 0
  %675 = vmatprep.subr.bf16.mxu0 0
  %676 = vmatpush1.bf16.msra.mxu0 0
  %677 = vmatprep.subr.bf16.mxu0 0
  %678 = vmatpush1.bf16.msra.mxu0 0
  %679 = vmatprep.subr.bf16.mxu0 0
  %680 = vmatpush1.bf16.msra.mxu0 0
  %681 = vmatprep.subr.bf16.mxu0 0
  %682 = vmatpush1.bf16.msra.mxu0 0
  %683 = vmatprep.subr.bf16.mxu0 0
  %684 = vmatpush1.bf16.msra.mxu0 0
  %685 = vmatprep.subr.bf16.mxu0 0
  %686 = vmatpush1.bf16.msra.mxu0 0
  %687 = vmatprep.subr.bf16.mxu0 0
  %688 = vmatpush1.bf16.msra.mxu0 0
  %689 = vmatprep.mubr.bf16.mxu0 0
  %690 = vmatmul.mubr.bf16.gmra.mrb[0].mxu0 %v420
  %v691 = vpop.f32.mrb[0].mxu0
  %v692 = vadd.f32 %v92, %v691
  %v693 = vpop.f32.mrb[0].mxu0
  %v694 = vadd.f32 %v92, %v693
  %v695 = vpop.f32.mrb[0].mxu0
  %v696 = vpop.f32.mrb[0].mxu0
  %697 = vdwg.mxu0
  %698 = vmatprep.subr.bf16.mxu0 %v319
  %699 = vmatpush1.bf16.msra.mxu0 %v318
  %700 = vmatprep.subr.bf16.mxu0 %v454
  %701 = vmatpush1.bf16.msra.mxu0 %v451
  %702 = vmatprep.subr.bf16.mxu0 0
  %703 = vmatpush1.bf16.msra.mxu0 0
  %704 = vmatprep.subr.bf16.mxu0 0
  %705 = vmatpush1.bf16.msra.mxu0 0
  %706 = vmatprep.subr.bf16.mxu0 0
  %707 = vmatpush1.bf16.msra.mxu0 0
  %708 = vmatprep.subr.bf16.mxu0 0
  %709 = vmatpush1.bf16.msra.mxu0 0
  %710 = vmatprep.subr.bf16.mxu0 0
  %711 = vmatpush1.bf16.msra.mxu0 0
  %712 = vmatprep.subr.bf16.mxu0 0
  %713 = vmatpush1.bf16.msra.mxu0 0
  %714 = vmatprep.subr.bf16.mxu0 0
  %715 = vmatpush1.bf16.msra.mxu0 0
  %716 = vmatprep.subr.bf16.mxu0 0
  %717 = vmatpush1.bf16.msra.mxu0 0
  %718 = vmatprep.subr.bf16.mxu0 0
  %719 = vmatpush1.bf16.msra.mxu0 0
  %720 = vmatprep.subr.bf16.mxu0 0
  %721 = vmatpush1.bf16.msra.mxu0 0
  %722 = vmatprep.subr.bf16.mxu0 0
  %723 = vmatpush1.bf16.msra.mxu0 0
  %724 = vmatprep.subr.bf16.mxu0 0
  %725 = vmatpush1.bf16.msra.mxu0 0
  %726 = vmatprep.subr.bf16.mxu0 0
  %727 = vmatpush1.bf16.msra.mxu0 0
  %728 = vmatprep.subr.bf16.mxu0 0
  %729 = vmatpush1.bf16.msra.mxu0 0
  %730 = vmatprep.mubr.bf16.mxu0 0
  %731 = vmatmul.mubr.bf16.gmra.mrb[0].mxu0 %v420
  %v732 = vpop.f32.mrb[0].mxu0
  %v733 = vadd.f32 %v92, %v732
  %v734 = vpop.f32.mrb[0].mxu0
  %v735 = vadd.f32 %v92, %v734
  %v736 = vpop.f32.mrb[0].mxu0
  %v737 = vpop.f32.mrb[0].mxu0
  %738 = vdwg.mxu0
  %739 = vmatprep.subr.bf16.mxu0 %v321
  %740 = vmatpush1.bf16.msra.mxu0 %v320
  %741 = vmatprep.subr.bf16.mxu0 %v460
  %742 = vmatpush1.bf16.msra.mxu0 %v457
  %743 = vmatprep.subr.bf16.mxu0 0
  %744 = vmatpush1.bf16.msra.mxu0 0
  %745 = vmatprep.subr.bf16.mxu0 0
  %746 = vmatpush1.bf16.msra.mxu0 0
  %747 = vmatprep.subr.bf16.mxu0 0
  %748 = vmatpush1.bf16.msra.mxu0 0
  %749 = vmatprep.subr.bf16.mxu0 0
  %750 = vmatpush1.bf16.msra.mxu0 0
  %751 = vmatprep.subr.bf16.mxu0 0
  %752 = vmatpush1.bf16.msra.mxu0 0
  %753 = vmatprep.subr.bf16.mxu0 0
  %754 = vmatpush1.bf16.msra.mxu0 0
  %755 = vmatprep.subr.bf16.mxu0 0
  %756 = vmatpush1.bf16.msra.mxu0 0
  %757 = vmatprep.subr.bf16.mxu0 0
  %758 = vmatpush1.bf16.msra.mxu0 0
  %759 = vmatprep.subr.bf16.mxu0 0
  %760 = vmatpush1.bf16.msra.mxu0 0
  %761 = vmatprep.subr.bf16.mxu0 0
  %762 = vmatpush1.bf16.msra.mxu0 0
  %763 = vmatprep.subr.bf16.mxu0 0
  %764 = vmatpush1.bf16.msra.mxu0 0
  %765 = vmatprep.subr.bf16.mxu0 0
  %766 = vmatpush1.bf16.msra.mxu0 0
  %767 = vmatprep.subr.bf16.mxu0 0
  %768 = vmatpush1.bf16.msra.mxu0 0
  %769 = vmatprep.subr.bf16.mxu0 0
  %770 = vmatpush1.bf16.msra.mxu0 0
  %771 = vmatprep.mubr.bf16.mxu0 0
  %772 = vmatmul.mubr.bf16.gmra.mrb[0].mxu0 %v420
  %v773 = vpop.f32.mrb[0].mxu0
  %v774 = vadd.f32 %v92, %v773
  %v775 = vpop.f32.mrb[0].mxu0
  %v776 = vadd.f32 %v92, %v775
  %v777 = vpop.f32.mrb[0].mxu0
  %v778 = vpop.f32.mrb[0].mxu0
  %779 = vdwg.mxu0
  %780 = vmatprep.subr.bf16.mxu0 %v323
  %781 = vmatpush1.bf16.msra.mxu0 %v322
  %782 = vmatprep.subr.bf16.mxu0 %v466
  %783 = vmatpush1.bf16.msra.mxu0 %v463
  %784 = vmatprep.subr.bf16.mxu0 0
  %785 = vmatpush1.bf16.msra.mxu0 0
  %786 = vmatprep.subr.bf16.mxu0 0
  %787 = vmatpush1.bf16.msra.mxu0 0
  %788 = vmatprep.subr.bf16.mxu0 0
  %789 = vmatpush1.bf16.msra.mxu0 0
  %790 = vmatprep.subr.bf16.mxu0 0
  %791 = vmatpush1.bf16.msra.mxu0 0
  %792 = vmatprep.subr.bf16.mxu0 0
  %793 = vmatpush1.bf16.msra.mxu0 0
  %794 = vmatprep.subr.bf16.mxu0 0
  %795 = vmatpush1.bf16.msra.mxu0 0
  %796 = vmatprep.subr.bf16.mxu0 0
  %797 = vmatpush1.bf16.msra.mxu0 0
  %798 = vmatprep.subr.bf16.mxu0 0
  %799 = vmatpush1.bf16.msra.mxu0 0
  %800 = vmatprep.subr.bf16.mxu0 0
  %801 = vmatpush1.bf16.msra.mxu0 0
  %802 = vmatprep.subr.bf16.mxu0 0
  %803 = vmatpush1.bf16.msra.mxu0 0
  %804 = vmatprep.subr.bf16.mxu0 0
  %805 = vmatpush1.bf16.msra.mxu0 0
  %806 = vmatprep.subr.bf16.mxu0 0
  %807 = vmatpush1.bf16.msra.mxu0 0
  %808 = vmatprep.subr.bf16.mxu0 0
  %809 = vmatpush1.bf16.msra.mxu0 0
  %810 = vmatprep.subr.bf16.mxu0 0
  %811 = vmatpush1.bf16.msra.mxu0 0
  %812 = vmatprep.mubr.bf16.mxu0 0
  %813 = vmatmul.mubr.bf16.gmra.mrb[0].mxu0 %v420
  %v814 = vpop.f32.mrb[0].mxu0
  %v815 = vadd.f32 %v92, %v814
  %v816 = vpop.f32.mrb[0].mxu0
  %v817 = vadd.f32 %v92, %v816
  %v818 = vpop.f32.mrb[0].mxu0
  %v819 = vpop.f32.mrb[0].mxu0
  %820 = vdwg.mxu0
  %821 = vmatprep.subr.bf16.mxu0 %v325
  %822 = vmatpush1.bf16.msra.mxu0 %v324
  %823 = vmatprep.subr.bf16.mxu0 %v472
  %824 = vmatpush1.bf16.msra.mxu0 %v469
  %825 = vmatprep.subr.bf16.mxu0 0
  %826 = vmatpush1.bf16.msra.mxu0 0
  %827 = vmatprep.subr.bf16.mxu0 0
  %828 = vmatpush1.bf16.msra.mxu0 0
  %829 = vmatprep.subr.bf16.mxu0 0
  %830 = vmatpush1.bf16.msra.mxu0 0
  %831 = vmatprep.subr.bf16.mxu0 0
  %832 = vmatpush1.bf16.msra.mxu0 0
  %833 = vmatprep.subr.bf16.mxu0 0
  %834 = vmatpush1.bf16.msra.mxu0 0
  %835 = vmatprep.subr.bf16.mxu0 0
  %836 = vmatpush1.bf16.msra.mxu0 0
  %837 = vmatprep.subr.bf16.mxu0 0
  %838 = vmatpush1.bf16.msra.mxu0 0
  %839 = vmatprep.subr.bf16.mxu0 0
  %840 = vmatpush1.bf16.msra.mxu0 0
  %841 = vmatprep.subr.bf16.mxu0 0
  %842 = vmatpush1.bf16.msra.mxu0 0
  %843 = vmatprep.subr.bf16.mxu0 0
  %844 = vmatpush1.bf16.msra.mxu0 0
  %845 = vmatprep.subr.bf16.mxu0 0
  %846 = vmatpush1.bf16.msra.mxu0 0
  %847 = vmatprep.subr.bf16.mxu0 0
  %848 = vmatpush1.bf16.msra.mxu0 0
  %849 = vmatprep.subr.bf16.mxu0 0
  %850 = vmatpush1.bf16.msra.mxu0 0
  %851 = vmatprep.subr.bf16.mxu0 0
  %852 = vmatpush1.bf16.msra.mxu0 0
  %853 = vmatprep.mubr.bf16.mxu0 0
  %854 = vmatmul.mubr.bf16.gmra.mrb[0].mxu0 %v420
  %v855 = vpop.f32.mrb[0].mxu0
  %v856 = vadd.f32 %v92, %v855
  %v857 = vpop.f32.mrb[0].mxu0
  %v858 = vadd.f32 %v92, %v857
  %v859 = vpop.f32.mrb[0].mxu0
  %v860 = vpop.f32.mrb[0].mxu0
  %861 = vdwg.mxu0
  %862 = vmatprep.subr.bf16.mxu0 %v327
  %863 = vmatpush1.bf16.msra.mxu0 %v326
  %864 = vmatprep.subr.bf16.mxu0 %v478
  %865 = vmatpush1.bf16.msra.mxu0 %v475
  %866 = vmatprep.subr.bf16.mxu0 0
  %867 = vmatpush1.bf16.msra.mxu0 0
  %868 = vmatprep.subr.bf16.mxu0 0
  %869 = vmatpush1.bf16.msra.mxu0 0
  %870 = vmatprep.subr.bf16.mxu0 0
  %871 = vmatpush1.bf16.msra.mxu0 0
  %872 = vmatprep.subr.bf16.mxu0 0
  %873 = vmatpush1.bf16.msra.mxu0 0
  %874 = vmatprep.subr.bf16.mxu0 0
  %875 = vmatpush1.bf16.msra.mxu0 0
  %876 = vmatprep.subr.bf16.mxu0 0
  %877 = vmatpush1.bf16.msra.mxu0 0
  %878 = vmatprep.subr.bf16.mxu0 0
  %879 = vmatpush1.bf16.msra.mxu0 0
  %880 = vmatprep.subr.bf16.mxu0 0
  %881 = vmatpush1.bf16.msra.mxu0 0
  %882 = vmatprep.subr.bf16.mxu0 0
  %883 = vmatpush1.bf16.msra.mxu0 0
  %884 = vmatprep.subr.bf16.mxu0 0
  %885 = vmatpush1.bf16.msra.mxu0 0
  %886 = vmatprep.subr.bf16.mxu0 0
  %887 = vmatpush1.bf16.msra.mxu0 0
  %888 = vmatprep.subr.bf16.mxu0 0
  %889 = vmatpush1.bf16.msra.mxu0 0
  %890 = vmatprep.subr.bf16.mxu0 0
  %891 = vmatpush1.bf16.msra.mxu0 0
  %892 = vmatprep.subr.bf16.mxu0 0
  %893 = vmatpush1.bf16.msra.mxu0 0
  %894 = vmatprep.mubr.bf16.mxu0 0
  %895 = vmatmul.mubr.bf16.gmra.mrb[0].mxu0 %v420
  %v896 = vpop.f32.mrb[0].mxu0
  %v897 = vadd.f32 %v92, %v896
  %v898 = vpop.f32.mrb[0].mxu0
  %v899 = vadd.f32 %v92, %v898
  %v900 = vpop.f32.mrb[0].mxu0
  %v901 = vpop.f32.mrb[0].mxu0
  %902 = vdwg.mxu0
  %903 = vmatprep.subr.bf16.mxu0 %v329
  %904 = vmatpush1.bf16.msra.mxu0 %v328
  %905 = vmatprep.subr.bf16.mxu0 %v484
  %906 = vmatpush1.bf16.msra.mxu0 %v481
  %907 = vmatprep.subr.bf16.mxu0 0
  %908 = vmatpush1.bf16.msra.mxu0 0
  %909 = vmatprep.subr.bf16.mxu0 0
  %910 = vmatpush1.bf16.msra.mxu0 0
  %911 = vmatprep.subr.bf16.mxu0 0
  %912 = vmatpush1.bf16.msra.mxu0 0
  %913 = vmatprep.subr.bf16.mxu0 0
  %914 = vmatpush1.bf16.msra.mxu0 0
  %915 = vmatprep.subr.bf16.mxu0 0
  %916 = vmatpush1.bf16.msra.mxu0 0
  %917 = vmatprep.subr.bf16.mxu0 0
  %918 = vmatpush1.bf16.msra.mxu0 0
  %919 = vmatprep.subr.bf16.mxu0 0
  %920 = vmatpush1.bf16.msra.mxu0 0
  %921 = vmatprep.subr.bf16.mxu0 0
  %922 = vmatpush1.bf16.msra.mxu0 0
  %923 = vmatprep.subr.bf16.mxu0 0
  %924 = vmatpush1.bf16.msra.mxu0 0
  %925 = vmatprep.subr.bf16.mxu0 0
  %926 = vmatpush1.bf16.msra.mxu0 0
  %927 = vmatprep.subr.bf16.mxu0 0
  %928 = vmatpush1.bf16.msra.mxu0 0
  %929 = vmatprep.subr.bf16.mxu0 0
  %930 = vmatpush1.bf16.msra.mxu0 0
  %931 = vmatprep.subr.bf16.mxu0 0
  %932 = vmatpush1.bf16.msra.mxu0 0
  %933 = vmatprep.subr.bf16.mxu0 0
  %934 = vmatpush1.bf16.msra.mxu0 0
  %935 = vmatprep.mubr.bf16.mxu0 0
  %936 = vmatmul.mubr.bf16.gmra.mrb[0].mxu0 %v420
  %v937 = vpop.f32.mrb[0].mxu0
  %v938 = vadd.f32 %v92, %v937
  %v939 = vpop.f32.mrb[0].mxu0
  %v940 = vadd.f32 %v92, %v939
  %v941 = vpop.f32.mrb[0].mxu0
  %v942 = vpop.f32.mrb[0].mxu0
  %943 = vdwg.mxu0
  %944 = vmatprep.subr.bf16.mxu0 %v331
  %945 = vmatpush1.bf16.msra.mxu0 %v330
  %946 = vmatprep.subr.bf16.mxu0 %v490
  %947 = vmatpush1.bf16.msra.mxu0 %v487
  %948 = vmatprep.subr.bf16.mxu0 0
  %949 = vmatpush1.bf16.msra.mxu0 0
  %950 = vmatprep.subr.bf16.mxu0 0
  %951 = vmatpush1.bf16.msra.mxu0 0
  %952 = vmatprep.subr.bf16.mxu0 0
  %953 = vmatpush1.bf16.msra.mxu0 0
  %954 = vmatprep.subr.bf16.mxu0 0
  %955 = vmatpush1.bf16.msra.mxu0 0
  %956 = vmatprep.subr.bf16.mxu0 0
  %957 = vmatpush1.bf16.msra.mxu0 0
  %958 = vmatprep.subr.bf16.mxu0 0
  %959 = vmatpush1.bf16.msra.mxu0 0
  %960 = vmatprep.subr.bf16.mxu0 0
  %961 = vmatpush1.bf16.msra.mxu0 0
  %962 = vmatprep.subr.bf16.mxu0 0
  %963 = vmatpush1.bf16.msra.mxu0 0
  %964 = vmatprep.subr.bf16.mxu0 0
  %965 = vmatpush1.bf16.msra.mxu0 0
  %966 = vmatprep.subr.bf16.mxu0 0
  %967 = vmatpush1.bf16.msra.mxu0 0
  %968 = vmatprep.subr.bf16.mxu0 0
  %969 = vmatpush1.bf16.msra.mxu0 0
  %970 = vmatprep.subr.bf16.mxu0 0
  %971 = vmatpush1.bf16.msra.mxu0 0
  %972 = vmatprep.subr.bf16.mxu0 0
  %973 = vmatpush1.bf16.msra.mxu0 0
  %974 = vmatprep.subr.bf16.mxu0 0
  %975 = vmatpush1.bf16.msra.mxu0 0
  %976 = vmatprep.mubr.bf16.mxu0 0
  %977 = vmatmul.mubr.bf16.gmra.mrb[0].mxu0 %v420
  %v978 = vpop.f32.mrb[0].mxu0
  %v979 = vadd.f32 %v92, %v978
  %v980 = vpop.f32.mrb[0].mxu0
  %v981 = vadd.f32 %v92, %v980
  %v982 = vpop.f32.mrb[0].mxu0
  %v983 = vpop.f32.mrb[0].mxu0
  %984 = vdwg.mxu0
  %985 = vmatprep.subr.bf16.mxu0 %v333
  %986 = vmatpush1.bf16.msra.mxu0 %v332
  %987 = vmatprep.subr.bf16.mxu0 %v496
  %988 = vmatpush1.bf16.msra.mxu0 %v493
  %989 = vmatprep.subr.bf16.mxu0 0
  %990 = vmatpush1.bf16.msra.mxu0 0
  %991 = vmatprep.subr.bf16.mxu0 0
  %992 = vmatpush1.bf16.msra.mxu0 0
  %993 = vmatprep.subr.bf16.mxu0 0
  %994 = vmatpush1.bf16.msra.mxu0 0
  %995 = vmatprep.subr.bf16.mxu0 0
  %996 = vmatpush1.bf16.msra.mxu0 0
  %997 = vmatprep.subr.bf16.mxu0 0
  %998 = vmatpush1.bf16.msra.mxu0 0
  %999 = vmatprep.subr.bf16.mxu0 0
  %1000 = vmatpush1.bf16.msra.mxu0 0
  %1001 = vmatprep.subr.bf16.mxu0 0
  %1002 = vmatpush1.bf16.msra.mxu0 0
  %1003 = vmatprep.subr.bf16.mxu0 0
  %1004 = vmatpush1.bf16.msra.mxu0 0
  %1005 = vmatprep.subr.bf16.mxu0 0
  %1006 = vmatpush1.bf16.msra.mxu0 0
  %1007 = vmatprep.subr.bf16.mxu0 0
  %1008 = vmatpush1.bf16.msra.mxu0 0
  %1009 = vmatprep.subr.bf16.mxu0 0
  %1010 = vmatpush1.bf16.msra.mxu0 0
  %1011 = vmatprep.subr.bf16.mxu0 0
  %1012 = vmatpush1.bf16.msra.mxu0 0
  %1013 = vmatprep.subr.bf16.mxu0 0
  %1014 = vmatpush1.bf16.msra.mxu0 0
  %1015 = vmatprep.subr.bf16.mxu0 0
  %1016 = vmatpush1.bf16.msra.mxu0 0
  %1017 = vmatprep.mubr.bf16.mxu0 0
  %1018 = vmatmul.mubr.bf16.gmra.mrb[0].mxu0 %v420
  %v1019 = vpop.f32.mrb[0].mxu0
  %v1020 = vadd.f32 %v92, %v1019
  %v1021 = vpop.f32.mrb[0].mxu0
  %v1022 = vadd.f32 %v92, %v1021
  %v1023 = vpop.f32.mrb[0].mxu0
  %v1024 = vpop.f32.mrb[0].mxu0
  %1025 = vdwg.mxu0
  %1026 = vmatprep.subr.bf16.mxu0 %v335
  %1027 = vmatpush1.bf16.msra.mxu0 %v334
  %1028 = vmatprep.subr.bf16.mxu0 %v502
  %1029 = vmatpush1.bf16.msra.mxu0 %v499
  %1030 = vmatprep.subr.bf16.mxu0 0
  %1031 = vmatpush1.bf16.msra.mxu0 0
  %1032 = vmatprep.subr.bf16.mxu0 0
  %1033 = vmatpush1.bf16.msra.mxu0 0
  %1034 = vmatprep.subr.bf16.mxu0 0
  %1035 = vmatpush1.bf16.msra.mxu0 0
  %1036 = vmatprep.subr.bf16.mxu0 0
  %1037 = vmatpush1.bf16.msra.mxu0 0
  %1038 = vmatprep.subr.bf16.mxu0 0
  %1039 = vmatpush1.bf16.msra.mxu0 0
  %1040 = vmatprep.subr.bf16.mxu0 0
  %1041 = vmatpush1.bf16.msra.mxu0 0
  %1042 = vmatprep.subr.bf16.mxu0 0
  %1043 = vmatpush1.bf16.msra.mxu0 0
  %1044 = vmatprep.subr.bf16.mxu0 0
  %1045 = vmatpush1.bf16.msra.mxu0 0
  %1046 = vmatprep.subr.bf16.mxu0 0
  %1047 = vmatpush1.bf16.msra.mxu0 0
  %1048 = vmatprep.subr.bf16.mxu0 0
  %1049 = vmatpush1.bf16.msra.mxu0 0
  %1050 = vmatprep.subr.bf16.mxu0 0
  %1051 = vmatpush1.bf16.msra.mxu0 0
  %1052 = vmatprep.subr.bf16.mxu0 0
  %1053 = vmatpush1.bf16.msra.mxu0 0
  %1054 = vmatprep.subr.bf16.mxu0 0
  %1055 = vmatpush1.bf16.msra.mxu0 0
  %1056 = vmatprep.subr.bf16.mxu0 0
  %1057 = vmatpush1.bf16.msra.mxu0 0
  %1058 = vmatprep.mubr.bf16.mxu0 0
  %1059 = vmatmul.mubr.bf16.gmra.mrb[0].mxu0 %v420
  %v1060 = vpop.f32.mrb[0].mxu0
  %v1061 = vadd.f32 %v92, %v1060
  %v1062 = vpop.f32.mrb[0].mxu0
  %v1063 = vadd.f32 %v92, %v1062
  %v1064 = vpop.f32.mrb[0].mxu0
  %v1065 = vpop.f32.mrb[0].mxu0
  %1066 = vdwg.mxu0
  %1067 = vmatprep.subr.bf16.mxu0 %v337
  %1068 = vmatpush1.bf16.msra.mxu0 %v336
  %1069 = vmatprep.subr.bf16.mxu0 %v508
  %1070 = vmatpush1.bf16.msra.mxu0 %v505
  %1071 = vmatprep.subr.bf16.mxu0 0
  %1072 = vmatpush1.bf16.msra.mxu0 0
  %1073 = vmatprep.subr.bf16.mxu0 0
  %1074 = vmatpush1.bf16.msra.mxu0 0
  %1075 = vmatprep.subr.bf16.mxu0 0
  %1076 = vmatpush1.bf16.msra.mxu0 0
  %1077 = vmatprep.subr.bf16.mxu0 0
  %1078 = vmatpush1.bf16.msra.mxu0 0
  %1079 = vmatprep.subr.bf16.mxu0 0
  %1080 = vmatpush1.bf16.msra.mxu0 0
  %1081 = vmatprep.subr.bf16.mxu0 0
  %1082 = vmatpush1.bf16.msra.mxu0 0
  %1083 = vmatprep.subr.bf16.mxu0 0
  %1084 = vmatpush1.bf16.msra.mxu0 0
  %1085 = vmatprep.subr.bf16.mxu0 0
  %1086 = vmatpush1.bf16.msra.mxu0 0
  %1087 = vmatprep.subr.bf16.mxu0 0
  %1088 = vmatpush1.bf16.msra.mxu0 0
  %1089 = vmatprep.subr.bf16.mxu0 0
  %1090 = vmatpush1.bf16.msra.mxu0 0
  %1091 = vmatprep.subr.bf16.mxu0 0
  %1092 = vmatpush1.bf16.msra.mxu0 0
  %1093 = vmatprep.subr.bf16.mxu0 0
  %1094 = vmatpush1.bf16.msra.mxu0 0
  %1095 = vmatprep.subr.bf16.mxu0 0
  %1096 = vmatpush1.bf16.msra.mxu0 0
  %1097 = vmatprep.subr.bf16.mxu0 0
  %1098 = vmatpush1.bf16.msra.mxu0 0
  %1099 = vmatprep.mubr.bf16.mxu0 0
  %1100 = vmatmul.mubr.bf16.gmra.mrb[0].mxu0 %v420
  %v1101 = vpop.f32.mrb[0].mxu0
  %v1102 = vadd.f32 %v92, %v1101
  %v1103 = vpop.f32.mrb[0].mxu0
  %v1104 = vadd.f32 %v92, %v1103
  %v1105 = vpop.f32.mrb[0].mxu0
  %v1106 = vpop.f32.mrb[0].mxu0
  %1107 = vdwg.mxu0
  %1108 = vmatprep.subr.bf16.mxu0 %v339
  %1109 = vmatpush1.bf16.msra.mxu0 %v338
  %1110 = vmatprep.subr.bf16.mxu0 %v514
  %1111 = vmatpush1.bf16.msra.mxu0 %v511
  %1112 = vmatprep.subr.bf16.mxu0 0
  %1113 = vmatpush1.bf16.msra.mxu0 0
  %1114 = vmatprep.subr.bf16.mxu0 0
  %1115 = vmatpush1.bf16.msra.mxu0 0
  %1116 = vmatprep.subr.bf16.mxu0 0
  %1117 = vmatpush1.bf16.msra.mxu0 0
  %1118 = vmatprep.subr.bf16.mxu0 0
  %1119 = vmatpush1.bf16.msra.mxu0 0
  %1120 = vmatprep.subr.bf16.mxu0 0
  %1121 = vmatpush1.bf16.msra.mxu0 0
  %1122 = vmatprep.subr.bf16.mxu0 0
  %1123 = vmatpush1.bf16.msra.mxu0 0
  %1124 = vmatprep.subr.bf16.mxu0 0
  %1125 = vmatpush1.bf16.msra.mxu0 0
  %1126 = vmatprep.subr.bf16.mxu0 0
  %1127 = vmatpush1.bf16.msra.mxu0 0
  %1128 = vmatprep.subr.bf16.mxu0 0
  %1129 = vmatpush1.bf16.msra.mxu0 0
  %1130 = vmatprep.subr.bf16.mxu0 0
  %1131 = vmatpush1.bf16.msra.mxu0 0
  %1132 = vmatprep.subr.bf16.mxu0 0
  %1133 = vmatpush1.bf16.msra.mxu0 0
  %1134 = vmatprep.subr.bf16.mxu0 0
  %1135 = vmatpush1.bf16.msra.mxu0 0
  %1136 = vmatprep.subr.bf16.mxu0 0
  %1137 = vmatpush1.bf16.msra.mxu0 0
  %1138 = vmatprep.subr.bf16.mxu0 0
  %1139 = vmatpush1.bf16.msra.mxu0 0
  %1140 = vmatprep.mubr.bf16.mxu0 0
  %1141 = vmatmul.mubr.bf16.gmra.mrb[0].mxu0 %v420
  %v1142 = vpop.f32.mrb[0].mxu0
  %v1143 = vadd.f32 %v92, %v1142
  %v1144 = vpop.f32.mrb[0].mxu0
  %v1145 = vadd.f32 %v92, %v1144
  %v1146 = vpop.f32.mrb[0].mxu0
  %v1147 = vpop.f32.mrb[0].mxu0
  %1148 = vdwg.mxu0
  %1149 = vmatprep.subr.bf16.mxu0 %v341
  %1150 = vmatpush1.bf16.msra.mxu0 %v340
  %1151 = vmatprep.subr.bf16.mxu0 %v520
  %1152 = vmatpush1.bf16.msra.mxu0 %v517
  %1153 = vmatprep.subr.bf16.mxu0 0
  %1154 = vmatpush1.bf16.msra.mxu0 0
  %1155 = vmatprep.subr.bf16.mxu0 0
  %1156 = vmatpush1.bf16.msra.mxu0 0
  %1157 = vmatprep.subr.bf16.mxu0 0
  %1158 = vmatpush1.bf16.msra.mxu0 0
  %1159 = vmatprep.subr.bf16.mxu0 0
  %1160 = vmatpush1.bf16.msra.mxu0 0
  %1161 = vmatprep.subr.bf16.mxu0 0
  %1162 = vmatpush1.bf16.msra.mxu0 0
  %1163 = vmatprep.subr.bf16.mxu0 0
  %1164 = vmatpush1.bf16.msra.mxu0 0
  %1165 = vmatprep.subr.bf16.mxu0 0
  %1166 = vmatpush1.bf16.msra.mxu0 0
  %1167 = vmatprep.subr.bf16.mxu0 0
  %1168 = vmatpush1.bf16.msra.mxu0 0
  %1169 = vmatprep.subr.bf16.mxu0 0
  %1170 = vmatpush1.bf16.msra.mxu0 0
  %1171 = vmatprep.subr.bf16.mxu0 0
  %1172 = vmatpush1.bf16.msra.mxu0 0
  %1173 = vmatprep.subr.bf16.mxu0 0
  %1174 = vmatpush1.bf16.msra.mxu0 0
  %1175 = vmatprep.subr.bf16.mxu0 0
  %1176 = vmatpush1.bf16.msra.mxu0 0
  %1177 = vmatprep.subr.bf16.mxu0 0
  %1178 = vmatpush1.bf16.msra.mxu0 0
  %1179 = vmatprep.subr.bf16.mxu0 0
  %1180 = vmatpush1.bf16.msra.mxu0 0
  %1181 = vmatprep.mubr.bf16.mxu0 0
  %1182 = vmatmul.mubr.bf16.gmra.mrb[0].mxu0 %v420
  %v1183 = vpop.f32.mrb[0].mxu0
  %v1184 = vadd.f32 %v92, %v1183
  %v1185 = vpop.f32.mrb[0].mxu0
  %v1186 = vadd.f32 %v92, %v1185
  %v1187 = vpop.f32.mrb[0].mxu0
  %v1188 = vpop.f32.mrb[0].mxu0
  %1189 = vdwg.mxu0
  %1190 = vmatprep.subr.bf16.mxu0 %v343
  %1191 = vmatpush1.bf16.msra.mxu0 %v342
  %1192 = vmatprep.subr.bf16.mxu0 %v526
  %1193 = vmatpush1.bf16.msra.mxu0 %v523
  %1194 = vmatprep.subr.bf16.mxu0 0
  %1195 = vmatpush1.bf16.msra.mxu0 0
  %1196 = vmatprep.subr.bf16.mxu0 0
  %1197 = vmatpush1.bf16.msra.mxu0 0
  %1198 = vmatprep.subr.bf16.mxu0 0
  %1199 = vmatpush1.bf16.msra.mxu0 0
  %1200 = vmatprep.subr.bf16.mxu0 0
  %1201 = vmatpush1.bf16.msra.mxu0 0
  %1202 = vmatprep.subr.bf16.mxu0 0
  %1203 = vmatpush1.bf16.msra.mxu0 0
  %1204 = vmatprep.subr.bf16.mxu0 0
  %1205 = vmatpush1.bf16.msra.mxu0 0
  %1206 = vmatprep.subr.bf16.mxu0 0
  %1207 = vmatpush1.bf16.msra.mxu0 0
  %1208 = vmatprep.subr.bf16.mxu0 0
  %1209 = vmatpush1.bf16.msra.mxu0 0
  %1210 = vmatprep.subr.bf16.mxu0 0
  %1211 = vmatpush1.bf16.msra.mxu0 0
  %1212 = vmatprep.subr.bf16.mxu0 0
  %1213 = vmatpush1.bf16.msra.mxu0 0
  %1214 = vmatprep.subr.bf16.mxu0 0
  %1215 = vmatpush1.bf16.msra.mxu0 0
  %1216 = vmatprep.subr.bf16.mxu0 0
  %1217 = vmatpush1.bf16.msra.mxu0 0
  %1218 = vmatprep.subr.bf16.mxu0 0
  %1219 = vmatpush1.bf16.msra.mxu0 0
  %1220 = vmatprep.subr.bf16.mxu0 0
  %1221 = vmatpush1.bf16.msra.mxu0 0
  %1222 = vmatprep.mubr.bf16.mxu0 0
  %1223 = vmatmul.mubr.bf16.gmra.mrb[0].mxu0 %v420
  %v1224 = vpop.f32.mrb[0].mxu0
  %v1225 = vadd.f32 %v92, %v1224
  %v1226 = vpop.f32.mrb[0].mxu0
  %v1227 = vadd.f32 %v92, %v1226
  %v1228 = vpop.f32.mrb[0].mxu0
  %v1229 = vpop.f32.mrb[0].mxu0
  %1230 = vdwg.mxu0
  %1231 = vmatprep.subr.bf16.mxu0 %v345
  %1232 = vmatpush1.bf16.msra.mxu0 %v344
  %1233 = vmatprep.subr.bf16.mxu0 %v532
  %1234 = vmatpush1.bf16.msra.mxu0 %v529
  %1235 = vmatprep.subr.bf16.mxu0 0
  %1236 = vmatpush1.bf16.msra.mxu0 0
  %1237 = vmatprep.subr.bf16.mxu0 0
  %1238 = vmatpush1.bf16.msra.mxu0 0
  %1239 = vmatprep.subr.bf16.mxu0 0
  %1240 = vmatpush1.bf16.msra.mxu0 0
  %1241 = vmatprep.subr.bf16.mxu0 0
  %1242 = vmatpush1.bf16.msra.mxu0 0
  %1243 = vmatprep.subr.bf16.mxu0 0
  %1244 = vmatpush1.bf16.msra.mxu0 0
  %1245 = vmatprep.subr.bf16.mxu0 0
  %1246 = vmatpush1.bf16.msra.mxu0 0
  %1247 = vmatprep.subr.bf16.mxu0 0
  %1248 = vmatpush1.bf16.msra.mxu0 0
  %1249 = vmatprep.subr.bf16.mxu0 0
  %1250 = vmatpush1.bf16.msra.mxu0 0
  %1251 = vmatprep.subr.bf16.mxu0 0
  %1252 = vmatpush1.bf16.msra.mxu0 0
  %1253 = vmatprep.subr.bf16.mxu0 0
  %1254 = vmatpush1.bf16.msra.mxu0 0
  %1255 = vmatprep.subr.bf16.mxu0 0
  %1256 = vmatpush1.bf16.msra.mxu0 0
  %1257 = vmatprep.subr.bf16.mxu0 0
  %1258 = vmatpush1.bf16.msra.mxu0 0
  %1259 = vmatprep.subr.bf16.mxu0 0
  %1260 = vmatpush1.bf16.msra.mxu0 0
  %1261 = vmatprep.subr.bf16.mxu0 0
  %1262 = vmatpush1.bf16.msra.mxu0 0
  %1263 = vmatprep.mubr.bf16.mxu0 0
  %1264 = vmatmul.mubr.bf16.gmra.mrb[0].mxu0 %v420
  %v1265 = vpop.f32.mrb[0].mxu0
  %v1266 = vadd.f32 %v92, %v1265
  %v1267 = vpop.f32.mrb[0].mxu0
  %v1268 = vadd.f32 %v92, %v1267
  %v1269 = vpop.f32.mrb[0].mxu0
  %v1270 = vpop.f32.mrb[0].mxu0
  %1271 = vdwg.mxu0
  %vm1272 = vcmp.ge.f32.partialorder %v569, 0.0
  %vm1273 = vcmp.ge.f32.partialorder %v571, 0.0
  %vm1274 = vcmp.ge.f32.partialorder %v610, 0.0
  %vm1275 = vcmp.ge.f32.partialorder %v612, 0.0
  %vm1276 = vcmp.ge.f32.partialorder %v651, 0.0
  %vm1277 = vcmp.ge.f32.partialorder %v653, 0.0
  %vm1278 = vcmp.ge.f32.partialorder %v692, 0.0
  %vm1279 = vcmp.ge.f32.partialorder %v694, 0.0
  %vm1280 = vcmp.ge.f32.partialorder %v733, 0.0
  %vm1281 = vcmp.ge.f32.partialorder %v735, 0.0
  %vm1282 = vcmp.ge.f32.partialorder %v774, 0.0
  %vm1283 = vcmp.ge.f32.partialorder %v776, 0.0
  %vm1284 = vcmp.ge.f32.partialorder %v815, 0.0
  %vm1285 = vcmp.ge.f32.partialorder %v817, 0.0
  %vm1286 = vcmp.ge.f32.partialorder %v856, 0.0
  %vm1287 = vcmp.ge.f32.partialorder %v858, 0.0
  %vm1288 = vcmp.ge.f32.partialorder %v897, 0.0
  %vm1289 = vcmp.ge.f32.partialorder %v899, 0.0
  %vm1290 = vcmp.ge.f32.partialorder %v938, 0.0
  %vm1291 = vcmp.ge.f32.partialorder %v940, 0.0
  %vm1292 = vcmp.ge.f32.partialorder %v979, 0.0
  %vm1293 = vcmp.ge.f32.partialorder %v981, 0.0
  %vm1294 = vcmp.ge.f32.partialorder %v1020, 0.0
  %vm1295 = vcmp.ge.f32.partialorder %v1022, 0.0
  %vm1296 = vcmp.ge.f32.partialorder %v1061, 0.0
  %vm1297 = vcmp.ge.f32.partialorder %v1063, 0.0
  %vm1298 = vcmp.ge.f32.partialorder %v1102, 0.0
  %vm1299 = vcmp.ge.f32.partialorder %v1104, 0.0
  %vm1300 = vcmp.ge.f32.partialorder %v1143, 0.0
  %vm1301 = vcmp.ge.f32.partialorder %v1145, 0.0
  %vm1302 = vcmp.ge.f32.partialorder %v1184, 0.0
  %vm1303 = vcmp.ge.f32.partialorder %v1186, 0.0
  %vm1304 = vcmp.ge.f32.partialorder %v1225, 0.0
  %vm1305 = vcmp.ge.f32.partialorder %v1227, 0.0
  %vm1306 = vcmp.ge.f32.partialorder %v1266, 0.0
  %vm1307 = vcmp.ge.f32.partialorder %v1268, 0.0
  %v1308 = vmul.f32 %v569, 0.1
  %v1309 = vmul.f32 %v571, 0.1
  %v1310 = vmul.f32 %v610, 0.1
  %v1311 = vmul.f32 %v612, 0.1
  %v1312 = vmul.f32 %v651, 0.1
  %v1313 = vmul.f32 %v653, 0.1
  %v1314 = vmul.f32 %v692, 0.1
  %v1315 = vmul.f32 %v694, 0.1
  %v1316 = vmul.f32 %v733, 0.1
  %v1317 = vmul.f32 %v735, 0.1
  %v1318 = vmul.f32 %v774, 0.1
  %v1319 = vmul.f32 %v776, 0.1
  %v1320 = vmul.f32 %v815, 0.1
  %v1321 = vmul.f32 %v817, 0.1
  %v1322 = vmul.f32 %v856, 0.1
  %v1323 = vmul.f32 %v858, 0.1
  %v1324 = vmul.f32 %v897, 0.1
  %v1325 = vmul.f32 %v899, 0.1
  %v1326 = vmul.f32 %v938, 0.1
  %v1327 = vmul.f32 %v940, 0.1
  %v1328 = vmul.f32 %v979, 0.1
  %v1329 = vmul.f32 %v981, 0.1
  %v1330 = vmul.f32 %v1020, 0.1
  %v1331 = vmul.f32 %v1022, 0.1
  %v1332 = vmul.f32 %v1061, 0.1
  %v1333 = vmul.f32 %v1063, 0.1
  %v1334 = vmul.f32 %v1102, 0.1
  %v1335 = vmul.f32 %v1104, 0.1
  %v1336 = vmul.f32 %v1143, 0.1
  %v1337 = vmul.f32 %v1145, 0.1
  %v1338 = vmul.f32 %v1184, 0.1
  %v1339 = vmul.f32 %v1186, 0.1
  %v1340 = vmul.f32 %v1225, 0.1
  %v1341 = vmul.f32 %v1227, 0.1
  %v1342 = vmul.f32 %v1266, 0.1
  %v1343 = vmul.f32 %v1268, 0.1
  %v1344 = vsel %vm1272, %v569, %v1308
  %v1345 = vsel %vm1273, %v571, %v1309
  %v1346 = vsel %vm1274, %v610, %v1310
  %v1347 = vsel %vm1275, %v612, %v1311
  %v1348 = vsel %vm1276, %v651, %v1312
  %v1349 = vsel %vm1277, %v653, %v1313
  %v1350 = vsel %vm1278, %v692, %v1314
  %v1351 = vsel %vm1279, %v694, %v1315
  %v1352 = vsel %vm1280, %v733, %v1316
  %v1353 = vsel %vm1281, %v735, %v1317
  %v1354 = vsel %vm1282, %v774, %v1318
  %v1355 = vsel %vm1283, %v776, %v1319
  %v1356 = vsel %vm1284, %v815, %v1320
  %v1357 = vsel %vm1285, %v817, %v1321
  %v1358 = vsel %vm1286, %v856, %v1322
  %v1359 = vsel %vm1287, %v858, %v1323
  %v1360 = vsel %vm1288, %v897, %v1324
  %v1361 = vsel %vm1289, %v899, %v1325
  %v1362 = vsel %vm1290, %v938, %v1326
  %v1363 = vsel %vm1291, %v940, %v1327
  %v1364 = vsel %vm1292, %v979, %v1328
  %v1365 = vsel %vm1293, %v981, %v1329
  %v1366 = vsel %vm1294, %v1020, %v1330
  %v1367 = vsel %vm1295, %v1022, %v1331
  %v1368 = vsel %vm1296, %v1061, %v1332
  %v1369 = vsel %vm1297, %v1063, %v1333
  %v1370 = vsel %vm1298, %v1102, %v1334
  %v1371 = vsel %vm1299, %v1104, %v1335
  %v1372 = vsel %vm1300, %v1143, %v1336
  %v1373 = vsel %vm1301, %v1145, %v1337
  %v1374 = vsel %vm1302, %v1184, %v1338
  %v1375 = vsel %vm1303, %v1186, %v1339
  %v1376 = vsel %vm1304, %v1225, %v1340
  %v1377 = vsel %vm1305, %v1227, %v1341
  %v1378 = vsel %vm1306, %v1266, %v1342
  %v1379 = vsel %vm1307, %v1268, %v1343
  %v1380 = vpack.c.bf16 %v1344, %v1344
  %v1381 = vpack.c.bf16 %v1345, %v1345
  %v1382 = vpack.c.bf16 %v1346, %v1346
  %v1383 = vpack.c.bf16 %v1347, %v1347
  %v1384 = vpack.c.bf16 %v1348, %v1348
  %v1385 = vpack.c.bf16 %v1349, %v1349
  %v1386 = vpack.c.bf16 %v1350, %v1350
  %v1387 = vpack.c.bf16 %v1351, %v1351
  %v1388 = vpack.c.bf16 %v1352, %v1352
  %v1389 = vpack.c.bf16 %v1353, %v1353
  %v1390 = vpack.c.bf16 %v1354, %v1354
  %v1391 = vpack.c.bf16 %v1355, %v1355
  %v1392 = vpack.c.bf16 %v1356, %v1356
  %v1393 = vpack.c.bf16 %v1357, %v1357
  %v1394 = vpack.c.bf16 %v1358, %v1358
  %v1395 = vpack.c.bf16 %v1359, %v1359
  %v1396 = vpack.c.bf16 %v1360, %v1360
  %v1397 = vpack.c.bf16 %v1361, %v1361
  %v1398 = vpack.c.bf16 %v1362, %v1362
  %v1399 = vpack.c.bf16 %v1363, %v1363
  %v1400 = vpack.c.bf16 %v1364, %v1364
  %v1401 = vpack.c.bf16 %v1365, %v1365
  %v1402 = vpack.c.bf16 %v1366, %v1366
  %v1403 = vpack.c.bf16 %v1367, %v1367
  %v1404 = vpack.c.bf16 %v1368, %v1368
  %v1405 = vpack.c.bf16 %v1369, %v1369
  %v1406 = vpack.c.bf16 %v1370, %v1370
  %v1407 = vpack.c.bf16 %v1371, %v1371
  %v1408 = vpack.c.bf16 %v1372, %v1372
  %v1409 = vpack.c.bf16 %v1373, %v1373
  %v1410 = vpack.c.bf16 %v1374, %v1374
  %v1411 = vpack.c.bf16 %v1375, %v1375
  %v1412 = vpack.c.bf16 %v1376, %v1376
  %v1413 = vpack.c.bf16 %v1377, %v1377
  %v1414 = vpack.c.bf16 %v1378, %v1378
  %v1415 = vpack.c.bf16 %v1379, %v1379
  %v1452 = vunpack.c.l.b16 %v1380
  %v1453 = vunpack.c.l.b16 %v1381
  %v1454 = vunpack.c.l.b16 %v1382
  %v1455 = vunpack.c.l.b16 %v1383
  %v1456 = vunpack.c.l.b16 %v1384
  %v1457 = vunpack.c.l.b16 %v1385
  %v1458 = vunpack.c.l.b16 %v1386
  %v1459 = vunpack.c.l.b16 %v1387
  %v1460 = vunpack.c.l.b16 %v1388
  %v1461 = vunpack.c.l.b16 %v1389
  %v1462 = vunpack.c.l.b16 %v1390
  %v1463 = vunpack.c.l.b16 %v1391
  %v1464 = vunpack.c.l.b16 %v1392
  %v1465 = vunpack.c.l.b16 %v1393
  %v1466 = vunpack.c.l.b16 %v1394
  %v1467 = vunpack.c.l.b16 %v1395
  %v1468 = vunpack.c.l.b16 %v1396
  %v1469 = vunpack.c.l.b16 %v1397
  %v1470 = vunpack.c.l.b16 %v1398
  %v1471 = vunpack.c.l.b16 %v1399
  %v1472 = vunpack.c.l.b16 %v1400
  %v1473 = vunpack.c.l.b16 %v1401
  %v1474 = vunpack.c.l.b16 %v1402
  %v1475 = vunpack.c.l.b16 %v1403
  %v1476 = vunpack.c.l.b16 %v1404
  %v1477 = vunpack.c.l.b16 %v1405
  %v1478 = vunpack.c.l.b16 %v1406
  %v1479 = vunpack.c.l.b16 %v1407
  %v1480 = vunpack.c.l.b16 %v1408
  %v1481 = vunpack.c.l.b16 %v1409
  %v1482 = vunpack.c.l.b16 %v1410
  %v1483 = vunpack.c.l.b16 %v1411
  %v1484 = vunpack.c.l.b16 %v1412
  %v1485 = vunpack.c.l.b16 %v1413
  %v1486 = vunpack.c.l.b16 %v1414
  %v1487 = vunpack.c.l.b16 %v1415
  %v1488 = vpack.c.b16 %v1453, %v1452
  %v1489 = vpack.c.b16 %v1455, %v1454
  %v1490 = vpack.c.b16 %v1457, %v1456
  %v1491 = vpack.c.b16 %v1459, %v1458
  %v1492 = vpack.c.b16 %v1461, %v1460
  %v1493 = vpack.c.b16 %v1463, %v1462
  %v1494 = vpack.c.b16 %v1465, %v1464
  %v1495 = vpack.c.b16 %v1467, %v1466
  %v1496 = vpack.c.b16 %v1469, %v1468
  %v1497 = vpack.c.b16 %v1471, %v1470
  %v1498 = vpack.c.b16 %v1473, %v1472
  %v1499 = vpack.c.b16 %v1475, %v1474
  %v1500 = vpack.c.b16 %v1477, %v1476
  %v1501 = vpack.c.b16 %v1479, %v1478
  %v1502 = vpack.c.b16 %v1481, %v1480
  %v1503 = vpack.c.b16 %v1483, %v1482
  %v1504 = vpack.c.b16 %v1485, %v1484
  %v1505 = vpack.c.b16 %v1487, %v1486
  %1524 = vst [vmem:[%s3] sm:$0xff] %v1488
  %1525 = vst [vmem:[%s3 + $0x8] sm:$0xff] %v1489
  %1526 = vst [vmem:[%s3 + $0x10] sm:$0xff] %v1490
  %1527 = vst [vmem:[%s3 + $0x18] sm:$0xff] %v1491
  %1528 = vst [vmem:[%s3 + $0x20] sm:$0xff] %v1492
  %1529 = vst [vmem:[%s3 + $0x28] sm:$0xff] %v1493
  %1530 = vst [vmem:[%s3 + $0x30] sm:$0xff] %v1494
  %1531 = vst [vmem:[%s3 + $0x38] sm:$0xff] %v1495
  %1532 = vst [vmem:[%s3 + $0x40] sm:$0xff] %v1496
  %1533 = vst [vmem:[%s3 + $0x48] sm:$0xff] %v1497
  %1534 = vst [vmem:[%s3 + $0x50] sm:$0xff] %v1498
  %1535 = vst [vmem:[%s3 + $0x58] sm:$0xff] %v1499
  %1536 = vst [vmem:[%s3 + $0x60] sm:$0xff] %v1500
  %1537 = vst [vmem:[%s3 + $0x68] sm:$0xff] %v1501
  %1538 = vst [vmem:[%s3 + $0x70] sm:$0xff] %v1502
  %1539 = vst [vmem:[%s3 + $0x78] sm:$0xff] %v1503
  %1540 = vst [vmem:[%s3 + $0x80] sm:$0xff] %v1504
  %1541 = vst [vmem:[%s3 + $0x88] sm:$0xff] %v1505
  // Predicated region
  $region14: #{discriminator_forward.5} parent=0 // pred_check
    _
  $region15: #{discriminator_forward.5} parent=0 // pred_check_branch
    %1543 = sbr.rel (0) target = $region17
  $region16: #{discriminator_forward.5} parent=0 // pred_region
    _
  $region17: #{discriminator_forward.5} parent=0 // pred_fallthru
    _
  // Predicated region
  $region18: #{discriminator_forward.5} parent=0 // pred_check
    _
  $region19: #{discriminator_forward.5} parent=0 // pred_check_branch
    %1545 = sbr.rel (0) target = $region21
  $region20: #{discriminator_forward.5} parent=0 // pred_region
    _
  $region21: #{discriminator_forward.5} parent=0 // pred_fallthru
    _

// kernel: discriminator_forward.6
$region0: #{discriminator_forward.6}
  #allocation0 [shape = 'u32[]', space=smem, size = 0x4, offset = 0x4, fixed_abs, tag = 'smem constant byte address 0x4 - core index']
  #allocation1 [shape = 'u32[144,128]{1,0:T(1,128)}', space=vmem, size = 0x12000, scoped, tag = 'internal scratch']
  %s0 = inlined_call_operand.vmem [shape: bf16[16,96], index: 0, kind: input, shape index: {}]
  %s1 = inlined_call_operand.vmem [shape: bf16[96,1152], index: 1, kind: input, shape index: {}]
  %s2 = inlined_call_operand.vmem [shape: f32[16,1], index: 2, kind: input, shape index: {}]
  %s3 = inlined_call_operand.vmem [shape: bf16[16,1152], index: 3, kind: output, shape index: {}]
  %s4 = sld [smem:[#allocation0]]
  $region22: #{discriminator_forward.6} parent=0
    _
  %s6 = ssub.s32 1, %s4
  %s7 = scalar_select 0, %s6, %s4
  // Predicated region
  $region2: #{discriminator_forward.6} parent=0 // pred_check
    _
  $region3: #{discriminator_forward.6} parent=0 // pred_check_branch
    %9 = sbr.rel (0) target = $region5
  $region4: #{discriminator_forward.6} parent=0 // pred_region
    _
  $region5: #{discriminator_forward.6} parent=0 // pred_fallthru
    _
  // Predicated region
  $region6: #{discriminator_forward.6} parent=0 // pred_check
    _
  $region7: #{discriminator_forward.6} parent=0 // pred_check_branch
    %11 = sbr.rel (0) target = $region9
  $region8: #{discriminator_forward.6} parent=0 // pred_region
    _
  $region9: #{discriminator_forward.6} parent=0 // pred_fallthru
    _
  // Predicated region
  $region10: #{discriminator_forward.6} parent=0 // pred_check
    _
  $region11: #{discriminator_forward.6} parent=0 // pred_check_branch
    %13 = sbr.rel (0) target = $region13
  $region12: #{discriminator_forward.6} parent=0 // pred_region
    _
  $region13: #{discriminator_forward.6} parent=0 // pred_fallthru
    _
  %v15 = vld [vmem:[%s0] sm:$0xf]
  %v16 = vld [vmem:[%s0 + $0x4] sm:$0xf]
  %v17 = vld [vmem:[%s1] sm:$0xff]
  %v18 = vld [vmem:[%s1 + $0x8] sm:$0xff]
  %v19 = vld [vmem:[%s1 + $0x10] sm:$0xff]
  %v20 = vld [vmem:[%s1 + $0x18] sm:$0xff]
  %v21 = vld [vmem:[%s1 + $0x20] sm:$0xf]
  %v22 = vld [vmem:[%s1 + $0x24] sm:$0xff]
  %v23 = vld [vmem:[%s1 + $0x2c] sm:$0xff]
  %v24 = vld [vmem:[%s1 + $0x34] sm:$0xff]
  %v25 = vld [vmem:[%s1 + $0x3c] sm:$0xff]
  %v26 = vld [vmem:[%s1 + $0x44] sm:$0xf]
  %v27 = vld [vmem:[%s1 + $0x48] sm:$0xff]
  %v28 = vld [vmem:[%s1 + $0x50] sm:$0xff]
  %v29 = vld [vmem:[%s1 + $0x58] sm:$0xff]
  %v30 = vld [vmem:[%s1 + $0x60] sm:$0xff]
  %v31 = vld [vmem:[%s1 + $0x68] sm:$0xf]
  %v32 = vld [vmem:[%s1 + $0x6c] sm:$0xff]
  %v33 = vld [vmem:[%s1 + $0x74] sm:$0xff]
  %v34 = vld [vmem:[%s1 + $0x7c] sm:$0xff]
  %v35 = vld [vmem:[%s1 + $0x84] sm:$0xff]
  %v36 = vld [vmem:[%s1 + $0x8c] sm:$0xf]
  %v37 = vld [vmem:[%s1 + $0x90] sm:$0xff]
  %v38 = vld [vmem:[%s1 + $0x98] sm:$0xff]
  %v39 = vld [vmem:[%s1 + $0xa0] sm:$0xff]
  %v40 = vld [vmem:[%s1 + $0xa8] sm:$0xff]
  %v41 = vld [vmem:[%s1 + $0xb0] sm:$0xf]
  %v42 = vld [vmem:[%s1 + $0xb4] sm:$0xff]
  %v43 = vld [vmem:[%s1 + $0xbc] sm:$0xff]
  %v44 = vld [vmem:[%s1 + $0xc4] sm:$0xff]
  %v45 = vld [vmem:[%s1 + $0xcc] sm:$0xff]
  %v46 = vld [vmem:[%s1 + $0xd4] sm:$0xf]
  %v47 = vld [vmem:[%s1 + $0xd8] sm:$0xff]
  %v48 = vld [vmem:[%s1 + $0xe0] sm:$0xff]
  %v49 = vld [vmem:[%s1 + $0xe8] sm:$0xff]
  %v50 = vld [vmem:[%s1 + $0xf0] sm:$0xff]
  %v51 = vld [vmem:[%s1 + $0xf8] sm:$0xf]
  %v52 = vld [vmem:[%s1 + $0xfc] sm:$0xff]
  %v53 = vld [vmem:[%s1 + $0x104] sm:$0xff]
  %v54 = vld [vmem:[%s1 + $0x10c] sm:$0xff]
  %v55 = vld [vmem:[%s1 + $0x114] sm:$0xff]
  %v56 = vld [vmem:[%s1 + $0x11c] sm:$0xf]
  %v57 = vld [vmem:[%s1 + $0x120] sm:$0xff]
  %v58 = vld [vmem:[%s1 + $0x128] sm:$0xff]
  %v59 = vld [vmem:[%s1 + $0x130] sm:$0xff]
  %v60 = vld [vmem:[%s1 + $0x138] sm:$0xff]
  %v61 = vld [vmem:[%s1 + $0x140] sm:$0xf]
  %v62 = vld [vmem:[%s1 + $0x144] sm:$0xff]
  %v63 = vld [vmem:[%s1 + $0x14c] sm:$0xff]
  %v64 = vld [vmem:[%s1 + $0x154] sm:$0xff]
  %v65 = vld [vmem:[%s1 + $0x15c] sm:$0xff]
  %v66 = vld [vmem:[%s1 + $0x164] sm:$0xf]
  %v67 = vld [vmem:[%s1 + $0x168] sm:$0xff]
  %v68 = vld [vmem:[%s1 + $0x170] sm:$0xff]
  %v69 = vld [vmem:[%s1 + $0x178] sm:$0xff]
  %v70 = vld [vmem:[%s1 + $0x180] sm:$0xff]
  %v71 = vld [vmem:[%s1 + $0x188] sm:$0xf]
  %v72 = vld [vmem:[%s1 + $0x18c] sm:$0xff]
  %v73 = vld [vmem:[%s1 + $0x194] sm:$0xff]
  %v74 = vld [vmem:[%s1 + $0x19c] sm:$0xff]
  %v75 = vld [vmem:[%s1 + $0x1a4] sm:$0xff]
  %v76 = vld [vmem:[%s1 + $0x1ac] sm:$0xf]
  %v77 = vld [vmem:[%s2] sm:$0xff]
  %v78 = vld [vmem:[%s2 + $0x8] sm:$0xff]
  %80 = vset.pattern.permute.xlu0 0
  %81 = vperm.xlu0 %80, %v77
  %v82 = vpop.permute.xlu0 %81
  %85 = vset.pattern.permute.xlu0 0
  %86 = vperm.xlu0 %85, %v78
  %v87 = vpop.permute.xlu0 %86
  %v91 = vunpack.c.l.b16 %v15
  %v92 = vunpack.c.l.b16 %v16
  %v93 = vpack.c.b16 %v92, %v91
  %v154 = vunpack.c.l.b16 %v17
  %v155 = vunpack.c.h.b16 %v17
  %v156 = vunpack.c.l.b16 %v18
  %v157 = vunpack.c.h.b16 %v18
  %v158 = vunpack.c.l.b16 %v19
  %v159 = vunpack.c.h.b16 %v19
  %v160 = vunpack.c.l.b16 %v20
  %v161 = vunpack.c.h.b16 %v20
  %v162 = vunpack.c.l.b16 %v21
  %v163 = vunpack.c.l.b16 %v22
  %v164 = vunpack.c.h.b16 %v22
  %v165 = vunpack.c.l.b16 %v23
  %v166 = vunpack.c.h.b16 %v23
  %v167 = vunpack.c.l.b16 %v24
  %v168 = vunpack.c.h.b16 %v24
  %v169 = vunpack.c.l.b16 %v25
  %v170 = vunpack.c.h.b16 %v25
  %v171 = vunpack.c.l.b16 %v26
  %v172 = vunpack.c.l.b16 %v27
  %v173 = vunpack.c.h.b16 %v27
  %v174 = vunpack.c.l.b16 %v28
  %v175 = vunpack.c.h.b16 %v28
  %v176 = vunpack.c.l.b16 %v29
  %v177 = vunpack.c.h.b16 %v29
  %v178 = vunpack.c.l.b16 %v30
  %v179 = vunpack.c.h.b16 %v30
  %v180 = vunpack.c.l.b16 %v31
  %v181 = vunpack.c.l.b16 %v32
  %v182 = vunpack.c.h.b16 %v32
  %v183 = vunpack.c.l.b16 %v33
  %v184 = vunpack.c.h.b16 %v33
  %v185 = vunpack.c.l.b16 %v34
  %v186 = vunpack.c.h.b16 %v34
  %v187 = vunpack.c.l.b16 %v35
  %v188 = vunpack.c.h.b16 %v35
  %v189 = vunpack.c.l.b16 %v36
  %v190 = vunpack.c.l.b16 %v37
  %v191 = vunpack.c.h.b16 %v37
  %v192 = vunpack.c.l.b16 %v38
  %v193 = vunpack.c.h.b16 %v38
  %v194 = vunpack.c.l.b16 %v39
  %v195 = vunpack.c.h.b16 %v39
  %v196 = vunpack.c.l.b16 %v40
  %v197 = vunpack.c.h.b16 %v40
  %v198 = vunpack.c.l.b16 %v41
  %v199 = vunpack.c.l.b16 %v42
  %v200 = vunpack.c.h.b16 %v42
  %v201 = vunpack.c.l.b16 %v43
  %v202 = vunpack.c.h.b16 %v43
  %v203 = vunpack.c.l.b16 %v44
  %v204 = vunpack.c.h.b16 %v44
  %v205 = vunpack.c.l.b16 %v45
  %v206 = vunpack.c.h.b16 %v45
  %v207 = vunpack.c.l.b16 %v46
  %v208 = vunpack.c.l.b16 %v47
  %v209 = vunpack.c.h.b16 %v47
  %v210 = vunpack.c.l.b16 %v48
  %v211 = vunpack.c.h.b16 %v48
  %v212 = vunpack.c.l.b16 %v49
  %v213 = vunpack.c.h.b16 %v49
  %v214 = vunpack.c.l.b16 %v50
  %v215 = vunpack.c.h.b16 %v50
  %v216 = vunpack.c.l.b16 %v51
  %v217 = vunpack.c.l.b16 %v52
  %v218 = vunpack.c.h.b16 %v52
  %v219 = vunpack.c.l.b16 %v53
  %v220 = vunpack.c.h.b16 %v53
  %v221 = vunpack.c.l.b16 %v54
  %v222 = vunpack.c.h.b16 %v54
  %v223 = vunpack.c.l.b16 %v55
  %v224 = vunpack.c.h.b16 %v55
  %v225 = vunpack.c.l.b16 %v56
  %v226 = vunpack.c.l.b16 %v57
  %v227 = vunpack.c.h.b16 %v57
  %v228 = vunpack.c.l.b16 %v58
  %v229 = vunpack.c.h.b16 %v58
  %v230 = vunpack.c.l.b16 %v59
  %v231 = vunpack.c.h.b16 %v59
  %v232 = vunpack.c.l.b16 %v60
  %v233 = vunpack.c.h.b16 %v60
  %v234 = vunpack.c.l.b16 %v61
  %v235 = vunpack.c.l.b16 %v62
  %v236 = vunpack.c.h.b16 %v62
  %v237 = vunpack.c.l.b16 %v63
  %v238 = vunpack.c.h.b16 %v63
  %v239 = vunpack.c.l.b16 %v64
  %v240 = vunpack.c.h.b16 %v64
  %v241 = vunpack.c.l.b16 %v65
  %v242 = vunpack.c.h.b16 %v65
  %v243 = vunpack.c.l.b16 %v66
  %v244 = vunpack.c.l.b16 %v67
  %v245 = vunpack.c.h.b16 %v67
  %v246 = vunpack.c.l.b16 %v68
  %v247 = vunpack.c.h.b16 %v68
  %v248 = vunpack.c.l.b16 %v69
  %v249 = vunpack.c.h.b16 %v69
  %v250 = vunpack.c.l.b16 %v70
  %v251 = vunpack.c.h.b16 %v70
  %v252 = vunpack.c.l.b16 %v71
  %v253 = vunpack.c.l.b16 %v72
  %v254 = vunpack.c.h.b16 %v72
  %v255 = vunpack.c.l.b16 %v73
  %v256 = vunpack.c.h.b16 %v73
  %v257 = vunpack.c.l.b16 %v74
  %v258 = vunpack.c.h.b16 %v74
  %v259 = vunpack.c.l.b16 %v75
  %v260 = vunpack.c.h.b16 %v75
  %v261 = vunpack.c.l.b16 %v76
  %v262 = vpack.c.b16 %v163, %v154
  %v263 = vpack.c.b16 %v164, %v155
  %v264 = vpack.c.b16 %v165, %v156
  %v265 = vpack.c.b16 %v166, %v157
  %v266 = vpack.c.b16 %v167, %v158
  %v267 = vpack.c.b16 %v168, %v159
  %v268 = vpack.c.b16 %v169, %v160
  %v269 = vpack.c.b16 %v170, %v161
  %v270 = vpack.c.b16 %v171, %v162
  %v271 = vpack.c.b16 %v181, %v172
  %v272 = vpack.c.b16 %v182, %v173
  %v273 = vpack.c.b16 %v183, %v174
  %v274 = vpack.c.b16 %v184, %v175
  %v275 = vpack.c.b16 %v185, %v176
  %v276 = vpack.c.b16 %v186, %v177
  %v277 = vpack.c.b16 %v187, %v178
  %v278 = vpack.c.b16 %v188, %v179
  %v279 = vpack.c.b16 %v189, %v180
  %v280 = vpack.c.b16 %v199, %v190
  %v281 = vpack.c.b16 %v200, %v191
  %v282 = vpack.c.b16 %v201, %v192
  %v283 = vpack.c.b16 %v202, %v193
  %v284 = vpack.c.b16 %v203, %v194
  %v285 = vpack.c.b16 %v204, %v195
  %v286 = vpack.c.b16 %v205, %v196
  %v287 = vpack.c.b16 %v206, %v197
  %v288 = vpack.c.b16 %v207, %v198
  %v289 = vpack.c.b16 %v217, %v208
  %v290 = vpack.c.b16 %v218, %v209
  %v291 = vpack.c.b16 %v219, %v210
  %v292 = vpack.c.b16 %v220, %v211
  %v293 = vpack.c.b16 %v221, %v212
  %v294 = vpack.c.b16 %v222, %v213
  %v295 = vpack.c.b16 %v223, %v214
  %v296 = vpack.c.b16 %v224, %v215
  %v297 = vpack.c.b16 %v225, %v216
  %v298 = vpack.c.b16 %v235, %v226
  %v299 = vpack.c.b16 %v236, %v227
  %v300 = vpack.c.b16 %v237, %v228
  %v301 = vpack.c.b16 %v238, %v229
  %v302 = vpack.c.b16 %v239, %v230
  %v303 = vpack.c.b16 %v240, %v231
  %v304 = vpack.c.b16 %v241, %v232
  %v305 = vpack.c.b16 %v242, %v233
  %v306 = vpack.c.b16 %v243, %v234
  %v307 = vpack.c.b16 %v253, %v244
  %v308 = vpack.c.b16 %v254, %v245
  %v309 = vpack.c.b16 %v255, %v246
  %v310 = vpack.c.b16 %v256, %v247
  %v311 = vpack.c.b16 %v257, %v248
  %v312 = vpack.c.b16 %v258, %v249
  %v313 = vpack.c.b16 %v259, %v250
  %v314 = vpack.c.b16 %v260, %v251
  %v315 = vpack.c.b16 %v261, %v252
  %vm370 = vcmask 785408
  %v372 = vsel %vm370, %v93, 0
  %374 = vmatprep.subr.bf16.mxu0 %v263
  %375 = vmatpush1.bf16.msra.mxu0 %v262
  %376 = vmatprep.subr.bf16.mxu0 %v272
  %377 = vmatpush1.bf16.msra.mxu0 %v271
  %378 = vmatprep.subr.bf16.mxu0 %v281
  %379 = vmatpush1.bf16.msra.mxu0 %v280
  %380 = vmatprep.subr.bf16.mxu0 %v290
  %381 = vmatpush1.bf16.msra.mxu0 %v289
  %382 = vmatprep.subr.bf16.mxu0 %v299
  %383 = vmatpush1.bf16.msra.mxu0 %v298
  %384 = vmatprep.subr.bf16.mxu0 %v308
  %385 = vmatpush1.bf16.msra.mxu0 %v307
  %386 = vmatprep.subr.bf16.mxu0 0
  %387 = vmatpush1.bf16.msra.mxu0 0
  %388 = vmatprep.subr.bf16.mxu0 0
  %389 = vmatpush1.bf16.msra.mxu0 0
  %390 = vmatprep.subr.bf16.mxu0 0
  %391 = vmatpush1.bf16.msra.mxu0 0
  %392 = vmatprep.subr.bf16.mxu0 0
  %393 = vmatpush1.bf16.msra.mxu0 0
  %394 = vmatprep.subr.bf16.mxu0 0
  %395 = vmatpush1.bf16.msra.mxu0 0
  %396 = vmatprep.subr.bf16.mxu0 0
  %397 = vmatpush1.bf16.msra.mxu0 0
  %398 = vmatprep.subr.bf16.mxu0 0
  %399 = vmatpush1.bf16.msra.mxu0 0
  %400 = vmatprep.subr.bf16.mxu0 0
  %401 = vmatpush1.bf16.msra.mxu0 0
  %402 = vmatprep.subr.bf16.mxu0 0
  %403 = vmatpush1.bf16.msra.mxu0 0
  %404 = vmatprep.subr.bf16.mxu0 0
  %405 = vmatpush1.bf16.msra.mxu0 0
  %406 = vmatprep.mubr.bf16.mxu0 0
  %407 = vmatmul.mubr.bf16.gmra.mrb[0].mxu0 %v372
  %v408 = vpop.f32.mrb[0].mxu0
  %v409 = vadd.f32 %v82, %v408
  %v410 = vpop.f32.mrb[0].mxu0
  %v411 = vadd.f32 %v82, %v410
  %v412 = vpop.f32.mrb[0].mxu0
  %v413 = vadd.f32 %v87, %v412
  %v414 = vpop.f32.mrb[0].mxu0
  %v415 = vadd.f32 %v87, %v414
  %416 = vdwg.mxu0
  %417 = vmatprep.subr.bf16.mxu0 %v265
  %418 = vmatpush1.bf16.msra.mxu0 %v264
  %419 = vmatprep.subr.bf16.mxu0 %v274
  %420 = vmatpush1.bf16.msra.mxu0 %v273
  %421 = vmatprep.subr.bf16.mxu0 %v283
  %422 = vmatpush1.bf16.msra.mxu0 %v282
  %423 = vmatprep.subr.bf16.mxu0 %v292
  %424 = vmatpush1.bf16.msra.mxu0 %v291
  %425 = vmatprep.subr.bf16.mxu0 %v301
  %426 = vmatpush1.bf16.msra.mxu0 %v300
  %427 = vmatprep.subr.bf16.mxu0 %v310
  %428 = vmatpush1.bf16.msra.mxu0 %v309
  %429 = vmatprep.subr.bf16.mxu0 0
  %430 = vmatpush1.bf16.msra.mxu0 0
  %431 = vmatprep.subr.bf16.mxu0 0
  %432 = vmatpush1.bf16.msra.mxu0 0
  %433 = vmatprep.subr.bf16.mxu0 0
  %434 = vmatpush1.bf16.msra.mxu0 0
  %435 = vmatprep.subr.bf16.mxu0 0
  %436 = vmatpush1.bf16.msra.mxu0 0
  %437 = vmatprep.subr.bf16.mxu0 0
  %438 = vmatpush1.bf16.msra.mxu0 0
  %439 = vmatprep.subr.bf16.mxu0 0
  %440 = vmatpush1.bf16.msra.mxu0 0
  %441 = vmatprep.subr.bf16.mxu0 0
  %442 = vmatpush1.bf16.msra.mxu0 0
  %443 = vmatprep.subr.bf16.mxu0 0
  %444 = vmatpush1.bf16.msra.mxu0 0
  %445 = vmatprep.subr.bf16.mxu0 0
  %446 = vmatpush1.bf16.msra.mxu0 0
  %447 = vmatprep.subr.bf16.mxu0 0
  %448 = vmatpush1.bf16.msra.mxu0 0
  %449 = vmatprep.mubr.bf16.mxu0 0
  %450 = vmatmul.mubr.bf16.gmra.mrb[0].mxu0 %v372
  %v451 = vpop.f32.mrb[0].mxu0
  %v452 = vadd.f32 %v82, %v451
  %v453 = vpop.f32.mrb[0].mxu0
  %v454 = vadd.f32 %v82, %v453
  %v455 = vpop.f32.mrb[0].mxu0
  %v456 = vadd.f32 %v87, %v455
  %v457 = vpop.f32.mrb[0].mxu0
  %v458 = vadd.f32 %v87, %v457
  %459 = vdwg.mxu0
  %460 = vmatprep.subr.bf16.mxu0 %v267
  %461 = vmatpush1.bf16.msra.mxu0 %v266
  %462 = vmatprep.subr.bf16.mxu0 %v276
  %463 = vmatpush1.bf16.msra.mxu0 %v275
  %464 = vmatprep.subr.bf16.mxu0 %v285
  %465 = vmatpush1.bf16.msra.mxu0 %v284
  %466 = vmatprep.subr.bf16.mxu0 %v294
  %467 = vmatpush1.bf16.msra.mxu0 %v293
  %468 = vmatprep.subr.bf16.mxu0 %v303
  %469 = vmatpush1.bf16.msra.mxu0 %v302
  %470 = vmatprep.subr.bf16.mxu0 %v312
  %471 = vmatpush1.bf16.msra.mxu0 %v311
  %472 = vmatprep.subr.bf16.mxu0 0
  %473 = vmatpush1.bf16.msra.mxu0 0
  %474 = vmatprep.subr.bf16.mxu0 0
  %475 = vmatpush1.bf16.msra.mxu0 0
  %476 = vmatprep.subr.bf16.mxu0 0
  %477 = vmatpush1.bf16.msra.mxu0 0
  %478 = vmatprep.subr.bf16.mxu0 0
  %479 = vmatpush1.bf16.msra.mxu0 0
  %480 = vmatprep.subr.bf16.mxu0 0
  %481 = vmatpush1.bf16.msra.mxu0 0
  %482 = vmatprep.subr.bf16.mxu0 0
  %483 = vmatpush1.bf16.msra.mxu0 0
  %484 = vmatprep.subr.bf16.mxu0 0
  %485 = vmatpush1.bf16.msra.mxu0 0
  %486 = vmatprep.subr.bf16.mxu0 0
  %487 = vmatpush1.bf16.msra.mxu0 0
  %488 = vmatprep.subr.bf16.mxu0 0
  %489 = vmatpush1.bf16.msra.mxu0 0
  %490 = vmatprep.subr.bf16.mxu0 0
  %491 = vmatpush1.bf16.msra.mxu0 0
  %492 = vmatprep.mubr.bf16.mxu0 0
  %493 = vmatmul.mubr.bf16.gmra.mrb[0].mxu0 %v372
  %v494 = vpop.f32.mrb[0].mxu0
  %v495 = vadd.f32 %v82, %v494
  %v496 = vpop.f32.mrb[0].mxu0
  %v497 = vadd.f32 %v82, %v496
  %v498 = vpop.f32.mrb[0].mxu0
  %v499 = vadd.f32 %v87, %v498
  %v500 = vpop.f32.mrb[0].mxu0
  %v501 = vadd.f32 %v87, %v500
  %502 = vdwg.mxu0
  %503 = vmatprep.subr.bf16.mxu0 %v269
  %504 = vmatpush1.bf16.msra.mxu0 %v268
  %505 = vmatprep.subr.bf16.mxu0 %v278
  %506 = vmatpush1.bf16.msra.mxu0 %v277
  %507 = vmatprep.subr.bf16.mxu0 %v287
  %508 = vmatpush1.bf16.msra.mxu0 %v286
  %509 = vmatprep.subr.bf16.mxu0 %v296
  %510 = vmatpush1.bf16.msra.mxu0 %v295
  %511 = vmatprep.subr.bf16.mxu0 %v305
  %512 = vmatpush1.bf16.msra.mxu0 %v304
  %513 = vmatprep.subr.bf16.mxu0 %v314
  %514 = vmatpush1.bf16.msra.mxu0 %v313
  %515 = vmatprep.subr.bf16.mxu0 0
  %516 = vmatpush1.bf16.msra.mxu0 0
  %517 = vmatprep.subr.bf16.mxu0 0
  %518 = vmatpush1.bf16.msra.mxu0 0
  %519 = vmatprep.subr.bf16.mxu0 0
  %520 = vmatpush1.bf16.msra.mxu0 0
  %521 = vmatprep.subr.bf16.mxu0 0
  %522 = vmatpush1.bf16.msra.mxu0 0
  %523 = vmatprep.subr.bf16.mxu0 0
  %524 = vmatpush1.bf16.msra.mxu0 0
  %525 = vmatprep.subr.bf16.mxu0 0
  %526 = vmatpush1.bf16.msra.mxu0 0
  %527 = vmatprep.subr.bf16.mxu0 0
  %528 = vmatpush1.bf16.msra.mxu0 0
  %529 = vmatprep.subr.bf16.mxu0 0
  %530 = vmatpush1.bf16.msra.mxu0 0
  %531 = vmatprep.subr.bf16.mxu0 0
  %532 = vmatpush1.bf16.msra.mxu0 0
  %533 = vmatprep.subr.bf16.mxu0 0
  %534 = vmatpush1.bf16.msra.mxu0 0
  %535 = vmatprep.mubr.bf16.mxu0 0
  %536 = vmatmul.mubr.bf16.gmra.mrb[0].mxu0 %v372
  %v537 = vpop.f32.mrb[0].mxu0
  %v538 = vadd.f32 %v82, %v537
  %v539 = vpop.f32.mrb[0].mxu0
  %v540 = vadd.f32 %v82, %v539
  %v541 = vpop.f32.mrb[0].mxu0
  %v542 = vadd.f32 %v87, %v541
  %v543 = vpop.f32.mrb[0].mxu0
  %v544 = vadd.f32 %v87, %v543
  %545 = vdwg.mxu0
  %546 = vmatprep.subr.bf16.mxu0 0
  %547 = vmatpush1.bf16.msra.mxu0 %v270
  %548 = vmatprep.subr.bf16.mxu0 0
  %549 = vmatpush1.bf16.msra.mxu0 %v279
  %550 = vmatprep.subr.bf16.mxu0 0
  %551 = vmatpush1.bf16.msra.mxu0 %v288
  %552 = vmatprep.subr.bf16.mxu0 0
  %553 = vmatpush1.bf16.msra.mxu0 %v297
  %554 = vmatprep.subr.bf16.mxu0 0
  %555 = vmatpush1.bf16.msra.mxu0 %v306
  %556 = vmatprep.subr.bf16.mxu0 0
  %557 = vmatpush1.bf16.msra.mxu0 %v315
  %558 = vmatprep.subr.bf16.mxu0 0
  %559 = vmatpush1.bf16.msra.mxu0 0
  %560 = vmatprep.subr.bf16.mxu0 0
  %561 = vmatpush1.bf16.msra.mxu0 0
  %562 = vmatprep.subr.bf16.mxu0 0
  %563 = vmatpush1.bf16.msra.mxu0 0
  %564 = vmatprep.subr.bf16.mxu0 0
  %565 = vmatpush1.bf16.msra.mxu0 0
  %566 = vmatprep.subr.bf16.mxu0 0
  %567 = vmatpush1.bf16.msra.mxu0 0
  %568 = vmatprep.subr.bf16.mxu0 0
  %569 = vmatpush1.bf16.msra.mxu0 0
  %570 = vmatprep.subr.bf16.mxu0 0
  %571 = vmatpush1.bf16.msra.mxu0 0
  %572 = vmatprep.subr.bf16.mxu0 0
  %573 = vmatpush1.bf16.msra.mxu0 0
  %574 = vmatprep.subr.bf16.mxu0 0
  %575 = vmatpush1.bf16.msra.mxu0 0
  %576 = vmatprep.subr.bf16.mxu0 0
  %577 = vmatpush1.bf16.msra.mxu0 0
  %578 = vmatprep.mubr.bf16.mxu0 0
  %579 = vmatmul.mubr.bf16.gmra.mrb[0].mxu0 %v372
  %v580 = vpop.f32.mrb[0].mxu0
  %v581 = vadd.f32 %v82, %v580
  %v582 = vpop.f32.mrb[0].mxu0
  %v583 = vpop.f32.mrb[0].mxu0
  %v584 = vadd.f32 %v87, %v583
  %v585 = vpop.f32.mrb[0].mxu0
  %586 = vdwg.mxu0
  %vm587 = vcmp.ge.f32.partialorder %v409, 0.0
  %vm588 = vcmp.ge.f32.partialorder %v411, 0.0
  %vm589 = vcmp.ge.f32.partialorder %v452, 0.0
  %vm590 = vcmp.ge.f32.partialorder %v454, 0.0
  %vm591 = vcmp.ge.f32.partialorder %v495, 0.0
  %vm592 = vcmp.ge.f32.partialorder %v497, 0.0
  %vm593 = vcmp.ge.f32.partialorder %v538, 0.0
  %vm594 = vcmp.ge.f32.partialorder %v540, 0.0
  %vm595 = vcmp.ge.f32.partialorder %v581, 0.0
  %vm596 = vcmp.ge.f32.partialorder %v413, 0.0
  %vm597 = vcmp.ge.f32.partialorder %v415, 0.0
  %vm598 = vcmp.ge.f32.partialorder %v456, 0.0
  %vm599 = vcmp.ge.f32.partialorder %v458, 0.0
  %vm600 = vcmp.ge.f32.partialorder %v499, 0.0
  %vm601 = vcmp.ge.f32.partialorder %v501, 0.0
  %vm602 = vcmp.ge.f32.partialorder %v542, 0.0
  %vm603 = vcmp.ge.f32.partialorder %v544, 0.0
  %vm604 = vcmp.ge.f32.partialorder %v584, 0.0
  %v605 = vmul.f32 %v409, 0.1
  %v606 = vmul.f32 %v411, 0.1
  %v607 = vmul.f32 %v452, 0.1
  %v608 = vmul.f32 %v454, 0.1
  %v609 = vmul.f32 %v495, 0.1
  %v610 = vmul.f32 %v497, 0.1
  %v611 = vmul.f32 %v538, 0.1
  %v612 = vmul.f32 %v540, 0.1
  %v613 = vmul.f32 %v581, 0.1
  %v614 = vmul.f32 %v413, 0.1
  %v615 = vmul.f32 %v415, 0.1
  %v616 = vmul.f32 %v456, 0.1
  %v617 = vmul.f32 %v458, 0.1
  %v618 = vmul.f32 %v499, 0.1
  %v619 = vmul.f32 %v501, 0.1
  %v620 = vmul.f32 %v542, 0.1
  %v621 = vmul.f32 %v544, 0.1
  %v622 = vmul.f32 %v584, 0.1
  %v623 = vsel %vm587, %v409, %v605
  %v624 = vsel %vm588, %v411, %v606
  %v625 = vsel %vm589, %v452, %v607
  %v626 = vsel %vm590, %v454, %v608
  %v627 = vsel %vm591, %v495, %v609
  %v628 = vsel %vm592, %v497, %v610
  %v629 = vsel %vm593, %v538, %v611
  %v630 = vsel %vm594, %v540, %v612
  %v631 = vsel %vm595, %v581, %v613
  %v632 = vsel %vm596, %v413, %v614
  %v633 = vsel %vm597, %v415, %v615
  %v634 = vsel %vm598, %v456, %v616
  %v635 = vsel %vm599, %v458, %v617
  %v636 = vsel %vm600, %v499, %v618
  %v637 = vsel %vm601, %v501, %v619
  %v638 = vsel %vm602, %v542, %v620
  %v639 = vsel %vm603, %v544, %v621
  %v640 = vsel %vm604, %v584, %v622
  %v641 = vpack.c.bf16 %v632, %v623
  %v642 = vpack.c.bf16 %v633, %v624
  %v643 = vpack.c.bf16 %v634, %v625
  %v644 = vpack.c.bf16 %v635, %v626
  %v645 = vpack.c.bf16 %v636, %v627
  %v646 = vpack.c.bf16 %v637, %v628
  %v647 = vpack.c.bf16 %v638, %v629
  %v648 = vpack.c.bf16 %v639, %v630
  %v649 = vpack.c.bf16 %v640, %v631
  %v659 = vunpack.c.l.b16 %v641
  %v660 = vunpack.c.l.b16 %v642
  %v661 = vunpack.c.l.b16 %v643
  %v662 = vunpack.c.l.b16 %v644
  %v663 = vunpack.c.l.b16 %v645
  %v664 = vunpack.c.l.b16 %v646
  %v665 = vunpack.c.l.b16 %v647
  %v666 = vunpack.c.l.b16 %v648
  %v667 = vunpack.c.l.b16 %v649
  %v668 = vunpack.c.h.b16 %v641
  %v669 = vunpack.c.h.b16 %v642
  %v670 = vunpack.c.h.b16 %v643
  %v671 = vunpack.c.h.b16 %v644
  %v672 = vunpack.c.h.b16 %v645
  %v673 = vunpack.c.h.b16 %v646
  %v674 = vunpack.c.h.b16 %v647
  %v675 = vunpack.c.h.b16 %v648
  %v676 = vunpack.c.h.b16 %v649
  %v677 = vpack.c.b16 %v660, %v659
  %v678 = vpack.c.b16 %v662, %v661
  %v679 = vpack.c.b16 %v664, %v663
  %v680 = vpack.c.b16 %v666, %v665
  %v681 = vpack.c.b16 %v667, %v667
  %v682 = vpack.c.b16 %v669, %v668
  %v683 = vpack.c.b16 %v671, %v670
  %v684 = vpack.c.b16 %v673, %v672
  %v685 = vpack.c.b16 %v675, %v674
  %v686 = vpack.c.b16 %v676, %v676
  %697 = vst [vmem:[%s3] sm:$0xff] %v677
  %698 = vst [vmem:[%s3 + $0x8] sm:$0xff] %v678
  %699 = vst [vmem:[%s3 + $0x10] sm:$0xff] %v679
  %700 = vst [vmem:[%s3 + $0x18] sm:$0xff] %v680
  %701 = vst [vmem:[%s3 + $0x20] sm:$0xf] %v681
  %702 = vst [vmem:[%s3 + $0x24] sm:$0xff] %v682
  %703 = vst [vmem:[%s3 + $0x2c] sm:$0xff] %v683
  %704 = vst [vmem:[%s3 + $0x34] sm:$0xff] %v684
  %705 = vst [vmem:[%s3 + $0x3c] sm:$0xff] %v685
  %706 = vst [vmem:[%s3 + $0x44] sm:$0xf] %v686
  // Predicated region
  $region14: #{discriminator_forward.6} parent=0 // pred_check
    _
  $region15: #{discriminator_forward.6} parent=0 // pred_check_branch
    %708 = sbr.rel (0) target = $region17
  $region16: #{discriminator_forward.6} parent=0 // pred_region
    _
  $region17: #{discriminator_forward.6} parent=0 // pred_fallthru
    _
  // Predicated region
  $region18: #{discriminator_forward.6} parent=0 // pred_check
    _
  $region19: #{discriminator_forward.6} parent=0 // pred_check_branch
    %710 = sbr.rel (0) target = $region21
  $region20: #{discriminator_forward.6} parent=0 // pred_region
    _
  $region21: #{discriminator_forward.6} parent=0 // pred_fallthru
    _

// kernel: discriminator_forward.7
$region0: #{discriminator_forward.7}
  #allocation0 [shape = 'u32[]', space=smem, size = 0x4, offset = 0x4, fixed_abs, tag = 'smem constant byte address 0x4 - core index']
  #allocation1 [shape = 'u32[144,128]{1,0:T(1,128)}', space=vmem, size = 0x12000, scoped, tag = 'internal scratch']
  %s0 = inlined_call_operand.vmem [shape: bf16[32,192], index: 0, kind: input, shape index: {}]
  %s1 = inlined_call_operand.vmem [shape: bf16[192,288], index: 1, kind: input, shape index: {}]
  %s2 = inlined_call_operand.vmem [shape: f32[32,1], index: 2, kind: input, shape index: {}]
  %s3 = inlined_call_operand.vmem [shape: bf16[32,288], index: 3, kind: output, shape index: {}]
  %s4 = sld [smem:[#allocation0]]
  $region22: #{discriminator_forward.7} parent=0
    _
  %s6 = ssub.s32 1, %s4
  %s7 = scalar_select 0, %s6, %s4
  // Predicated region
  $region2: #{discriminator_forward.7} parent=0 // pred_check
    _
  $region3: #{discriminator_forward.7} parent=0 // pred_check_branch
    %9 = sbr.rel (0) target = $region5
  $region4: #{discriminator_forward.7} parent=0 // pred_region
    _
  $region5: #{discriminator_forward.7} parent=0 // pred_fallthru
    _
  // Predicated region
  $region6: #{discriminator_forward.7} parent=0 // pred_check
    _
  $region7: #{discriminator_forward.7} parent=0 // pred_check_branch
    %11 = sbr.rel (0) target = $region9
  $region8: #{discriminator_forward.7} parent=0 // pred_region
    _
  $region9: #{discriminator_forward.7} parent=0 // pred_fallthru
    _
  // Predicated region
  $region10: #{discriminator_forward.7} parent=0 // pred_check
    _
  $region11: #{discriminator_forward.7} parent=0 // pred_check_branch
    %13 = sbr.rel (0) target = $region13
  $region12: #{discriminator_forward.7} parent=0 // pred_region
    _
  $region13: #{discriminator_forward.7} parent=0 // pred_fallthru
    _
  %v15 = vld [vmem:[%s0] sm:$0xff]
  %v16 = vld [vmem:[%s0 + $0x8] sm:$0xff]
  %v17 = vld [vmem:[%s0 + $0x10] sm:$0xff]
  %v18 = vld [vmem:[%s0 + $0x18] sm:$0xff]
  %v19 = vld [vmem:[%s1] sm:$0xff]
  %v20 = vld [vmem:[%s1 + $0x8] sm:$0xf]
  %v21 = vld [vmem:[%s1 + $0xc] sm:$0xff]
  %v22 = vld [vmem:[%s1 + $0x14] sm:$0xf]
  %v23 = vld [vmem:[%s1 + $0x18] sm:$0xff]
  %v24 = vld [vmem:[%s1 + $0x20] sm:$0xf]
  %v25 = vld [vmem:[%s1 + $0x24] sm:$0xff]
  %v26 = vld [vmem:[%s1 + $0x2c] sm:$0xf]
  %v27 = vld [vmem:[%s1 + $0x30] sm:$0xff]
  %v28 = vld [vmem:[%s1 + $0x38] sm:$0xf]
  %v29 = vld [vmem:[%s1 + $0x3c] sm:$0xff]
  %v30 = vld [vmem:[%s1 + $0x44] sm:$0xf]
  %v31 = vld [vmem:[%s1 + $0x48] sm:$0xff]
  %v32 = vld [vmem:[%s1 + $0x50] sm:$0xf]
  %v33 = vld [vmem:[%s1 + $0x54] sm:$0xff]
  %v34 = vld [vmem:[%s1 + $0x5c] sm:$0xf]
  %v35 = vld [vmem:[%s1 + $0x60] sm:$0xff]
  %v36 = vld [vmem:[%s1 + $0x68] sm:$0xf]
  %v37 = vld [vmem:[%s1 + $0x6c] sm:$0xff]
  %v38 = vld [vmem:[%s1 + $0x74] sm:$0xf]
  %v39 = vld [vmem:[%s1 + $0x78] sm:$0xff]
  %v40 = vld [vmem:[%s1 + $0x80] sm:$0xf]
  %v41 = vld [vmem:[%s1 + $0x84] sm:$0xff]
  %v42 = vld [vmem:[%s1 + $0x8c] sm:$0xf]
  %v43 = vld [vmem:[%s1 + $0x90] sm:$0xff]
  %v44 = vld [vmem:[%s1 + $0x98] sm:$0xf]
  %v45 = vld [vmem:[%s1 + $0x9c] sm:$0xff]
  %v46 = vld [vmem:[%s1 + $0xa4] sm:$0xf]
  %v47 = vld [vmem:[%s1 + $0xa8] sm:$0xff]
  %v48 = vld [vmem:[%s1 + $0xb0] sm:$0xf]
  %v49 = vld [vmem:[%s1 + $0xb4] sm:$0xff]
  %v50 = vld [vmem:[%s1 + $0xbc] sm:$0xf]
  %v51 = vld [vmem:[%s1 + $0xc0] sm:$0xff]
  %v52 = vld [vmem:[%s1 + $0xc8] sm:$0xf]
  %v53 = vld [vmem:[%s1 + $0xcc] sm:$0xff]
  %v54 = vld [vmem:[%s1 + $0xd4] sm:$0xf]
  %v55 = vld [vmem:[%s1 + $0xd8] sm:$0xff]
  %v56 = vld [vmem:[%s1 + $0xe0] sm:$0xf]
  %v57 = vld [vmem:[%s1 + $0xe4] sm:$0xff]
  %v58 = vld [vmem:[%s1 + $0xec] sm:$0xf]
  %v59 = vld [vmem:[%s1 + $0xf0] sm:$0xff]
  %v60 = vld [vmem:[%s1 + $0xf8] sm:$0xf]
  %v61 = vld [vmem:[%s1 + $0xfc] sm:$0xff]
  %v62 = vld [vmem:[%s1 + $0x104] sm:$0xf]
  %v63 = vld [vmem:[%s1 + $0x108] sm:$0xff]
  %v64 = vld [vmem:[%s1 + $0x110] sm:$0xf]
  %v65 = vld [vmem:[%s1 + $0x114] sm:$0xff]
  %v66 = vld [vmem:[%s1 + $0x11c] sm:$0xf]
  %v67 = vld [vmem:[%s2] sm:$0xff]
  %v68 = vld [vmem:[%s2 + $0x8] sm:$0xff]
  %v69 = vld [vmem:[%s2 + $0x10] sm:$0xff]
  %v70 = vld [vmem:[%s2 + $0x18] sm:$0xff]
  %72 = vset.pattern.permute.xlu0 0
  %73 = vperm.xlu0 %72, %v67
  %v74 = vpop.permute.xlu0 %73
  %77 = vset.pattern.permute.xlu0 0
  %78 = vperm.xlu0 %77, %v68
  %v79 = vpop.permute.xlu0 %78
  %82 = vset.pattern.permute.xlu0 0
  %83 = vperm.xlu0 %82, %v69
  %v84 = vpop.permute.xlu0 %83
  %87 = vset.pattern.permute.xlu0 0
  %88 = vperm.xlu0 %87, %v70
  %v89 = vpop.permute.xlu0 %88
  %v95 = vunpack.c.l.b16 %v15
  %v96 = vunpack.c.h.b16 %v15
  %v97 = vunpack.c.l.b16 %v16
  %v98 = vunpack.c.h.b16 %v16
  %v99 = vunpack.c.l.b16 %v17
  %v100 = vunpack.c.h.b16 %v17
  %v101 = vunpack.c.l.b16 %v18
  %v102 = vunpack.c.h.b16 %v18
  %v103 = vpack.c.b16 %v97, %v95
  %v104 = vpack.c.b16 %v98, %v96
  %v105 = vpack.c.b16 %v101, %v99
  %v106 = vpack.c.b16 %v102, %v100
  %v157 = vunpack.c.l.b16 %v19
  %v158 = vunpack.c.h.b16 %v19
  %v159 = vunpack.c.l.b16 %v20
  %v160 = vunpack.c.l.b16 %v21
  %v161 = vunpack.c.h.b16 %v21
  %v162 = vunpack.c.l.b16 %v22
  %v163 = vunpack.c.l.b16 %v23
  %v164 = vunpack.c.h.b16 %v23
  %v165 = vunpack.c.l.b16 %v24
  %v166 = vunpack.c.l.b16 %v25
  %v167 = vunpack.c.h.b16 %v25
  %v168 = vunpack.c.l.b16 %v26
  %v169 = vunpack.c.l.b16 %v27
  %v170 = vunpack.c.h.b16 %v27
  %v171 = vunpack.c.l.b16 %v28
  %v172 = vunpack.c.l.b16 %v29
  %v173 = vunpack.c.h.b16 %v29
  %v174 = vunpack.c.l.b16 %v30
  %v175 = vunpack.c.l.b16 %v31
  %v176 = vunpack.c.h.b16 %v31
  %v177 = vunpack.c.l.b16 %v32
  %v178 = vunpack.c.l.b16 %v33
  %v179 = vunpack.c.h.b16 %v33
  %v180 = vunpack.c.l.b16 %v34
  %v181 = vunpack.c.l.b16 %v35
  %v182 = vunpack.c.h.b16 %v35
  %v183 = vunpack.c.l.b16 %v36
  %v184 = vunpack.c.l.b16 %v37
  %v185 = vunpack.c.h.b16 %v37
  %v186 = vunpack.c.l.b16 %v38
  %v187 = vunpack.c.l.b16 %v39
  %v188 = vunpack.c.h.b16 %v39
  %v189 = vunpack.c.l.b16 %v40
  %v190 = vunpack.c.l.b16 %v41
  %v191 = vunpack.c.h.b16 %v41
  %v192 = vunpack.c.l.b16 %v42
  %v193 = vunpack.c.l.b16 %v43
  %v194 = vunpack.c.h.b16 %v43
  %v195 = vunpack.c.l.b16 %v44
  %v196 = vunpack.c.l.b16 %v45
  %v197 = vunpack.c.h.b16 %v45
  %v198 = vunpack.c.l.b16 %v46
  %v199 = vunpack.c.l.b16 %v47
  %v200 = vunpack.c.h.b16 %v47
  %v201 = vunpack.c.l.b16 %v48
  %v202 = vunpack.c.l.b16 %v49
  %v203 = vunpack.c.h.b16 %v49
  %v204 = vunpack.c.l.b16 %v50
  %v205 = vunpack.c.l.b16 %v51
  %v206 = vunpack.c.h.b16 %v51
  %v207 = vunpack.c.l.b16 %v52
  %v208 = vunpack.c.l.b16 %v53
  %v209 = vunpack.c.h.b16 %v53
  %v210 = vunpack.c.l.b16 %v54
  %v211 = vunpack.c.l.b16 %v55
  %v212 = vunpack.c.h.b16 %v55
  %v213 = vunpack.c.l.b16 %v56
  %v214 = vunpack.c.l.b16 %v57
  %v215 = vunpack.c.h.b16 %v57
  %v216 = vunpack.c.l.b16 %v58
  %v217 = vunpack.c.l.b16 %v59
  %v218 = vunpack.c.h.b16 %v59
  %v219 = vunpack.c.l.b16 %v60
  %v220 = vunpack.c.l.b16 %v61
  %v221 = vunpack.c.h.b16 %v61
  %v222 = vunpack.c.l.b16 %v62
  %v223 = vunpack.c.l.b16 %v63
  %v224 = vunpack.c.h.b16 %v63
  %v225 = vunpack.c.l.b16 %v64
  %v226 = vunpack.c.l.b16 %v65
  %v227 = vunpack.c.h.b16 %v65
  %v228 = vunpack.c.l.b16 %v66
  %v229 = vpack.c.b16 %v160, %v157
  %v230 = vpack.c.b16 %v161, %v158
  %v231 = vpack.c.b16 %v162, %v159
  %v232 = vpack.c.b16 %v166, %v163
  %v233 = vpack.c.b16 %v167, %v164
  %v234 = vpack.c.b16 %v168, %v165
  %v235 = vpack.c.b16 %v172, %v169
  %v236 = vpack.c.b16 %v173, %v170
  %v237 = vpack.c.b16 %v174, %v171
  %v238 = vpack.c.b16 %v178, %v175
  %v239 = vpack.c.b16 %v179, %v176
  %v240 = vpack.c.b16 %v180, %v177
  %v241 = vpack.c.b16 %v184, %v181
  %v242 = vpack.c.b16 %v185, %v182
  %v243 = vpack.c.b16 %v186, %v183
  %v244 = vpack.c.b16 %v190, %v187
  %v245 = vpack.c.b16 %v191, %v188
  %v246 = vpack.c.b16 %v192, %v189
  %v247 = vpack.c.b16 %v196, %v193
  %v248 = vpack.c.b16 %v197, %v194
  %v249 = vpack.c.b16 %v198, %v195
  %v250 = vpack.c.b16 %v202, %v199
  %v251 = vpack.c.b16 %v203, %v200
  %v252 = vpack.c.b16 %v204, %v201
  %v253 = vpack.c.b16 %v208, %v205
  %v254 = vpack.c.b16 %v209, %v206
  %v255 = vpack.c.b16 %v210, %v207
  %v256 = vpack.c.b16 %v214, %v211
  %v257 = vpack.c.b16 %v215, %v212
  %v258 = vpack.c.b16 %v216, %v213
  %v259 = vpack.c.b16 %v220, %v217
  %v260 = vpack.c.b16 %v221, %v218
  %v261 = vpack.c.b16 %v222, %v219
  %v262 = vpack.c.b16 %v226, %v223
  %v263 = vpack.c.b16 %v227, %v224
  %v264 = vpack.c.b16 %v228, %v225
  %vm301 = vcmask 523264
  %v303 = vsel %vm301, %v104, 0
  %v306 = vsel %vm301, %v106, 0
  %308 = vmatprep.subr.bf16.mxu0 %v230
  %309 = vmatpush1.bf16.msra.mxu0 %v229
  %310 = vmatprep.subr.bf16.mxu0 %v233
  %311 = vmatpush1.bf16.msra.mxu0 %v232
  %312 = vmatprep.subr.bf16.mxu0 %v236
  %313 = vmatpush1.bf16.msra.mxu0 %v235
  %314 = vmatprep.subr.bf16.mxu0 %v239
  %315 = vmatpush1.bf16.msra.mxu0 %v238
  %316 = vmatprep.subr.bf16.mxu0 %v242
  %317 = vmatpush1.bf16.msra.mxu0 %v241
  %318 = vmatprep.subr.bf16.mxu0 %v245
  %319 = vmatpush1.bf16.msra.mxu0 %v244
  %320 = vmatprep.subr.bf16.mxu0 %v248
  %321 = vmatpush1.bf16.msra.mxu0 %v247
  %322 = vmatprep.subr.bf16.mxu0 %v251
  %323 = vmatpush1.bf16.msra.mxu0 %v250
  %324 = vmatprep.subr.bf16.mxu0 %v254
  %325 = vmatpush1.bf16.msra.mxu0 %v253
  %326 = vmatprep.subr.bf16.mxu0 %v257
  %327 = vmatpush1.bf16.msra.mxu0 %v256
  %328 = vmatprep.subr.bf16.mxu0 %v260
  %329 = vmatpush1.bf16.msra.mxu0 %v259
  %330 = vmatprep.subr.bf16.mxu0 %v263
  %331 = vmatpush1.bf16.msra.mxu0 %v262
  %332 = vmatprep.subr.bf16.mxu0 0
  %333 = vmatpush1.bf16.msra.mxu0 0
  %334 = vmatprep.subr.bf16.mxu0 0
  %335 = vmatpush1.bf16.msra.mxu0 0
  %336 = vmatprep.subr.bf16.mxu0 0
  %337 = vmatpush1.bf16.msra.mxu0 0
  %338 = vmatprep.subr.bf16.mxu0 0
  %339 = vmatpush1.bf16.msra.mxu0 0
  %340 = vmatprep.mubr.bf16.mxu0 %v303
  %341 = vmatmul.mubr.bf16.gmra.mrb[0].mxu0 %v103
  %v342 = vpop.f32.mrb[0].mxu0
  %v343 = vadd.f32 %v74, %v342
  %v344 = vpop.f32.mrb[0].mxu0
  %v345 = vadd.f32 %v74, %v344
  %v346 = vpop.f32.mrb[0].mxu0
  %v347 = vadd.f32 %v79, %v346
  %v348 = vpop.f32.mrb[0].mxu0
  %v349 = vadd.f32 %v79, %v348
  %350 = vmatprep.mubr.bf16.mxu0 %v306
  %351 = vmatmul.mubr.bf16.gmra.mrb[0].mxu0 %v105
  %v352 = vpop.f32.mrb[0].mxu0
  %v353 = vadd.f32 %v84, %v352
  %v354 = vpop.f32.mrb[0].mxu0
  %v355 = vadd.f32 %v84, %v354
  %v356 = vpop.f32.mrb[0].mxu0
  %v357 = vadd.f32 %v89, %v356
  %v358 = vpop.f32.mrb[0].mxu0
  %v359 = vadd.f32 %v89, %v358
  %360 = vdwg.mxu0
  %361 = vmatprep.subr.bf16.mxu0 0
  %362 = vmatpush1.bf16.msra.mxu0 %v231
  %363 = vmatprep.subr.bf16.mxu0 0
  %364 = vmatpush1.bf16.msra.mxu0 %v234
  %365 = vmatprep.subr.bf16.mxu0 0
  %366 = vmatpush1.bf16.msra.mxu0 %v237
  %367 = vmatprep.subr.bf16.mxu0 0
  %368 = vmatpush1.bf16.msra.mxu0 %v240
  %369 = vmatprep.subr.bf16.mxu0 0
  %370 = vmatpush1.bf16.msra.mxu0 %v243
  %371 = vmatprep.subr.bf16.mxu0 0
  %372 = vmatpush1.bf16.msra.mxu0 %v246
  %373 = vmatprep.subr.bf16.mxu0 0
  %374 = vmatpush1.bf16.msra.mxu0 %v249
  %375 = vmatprep.subr.bf16.mxu0 0
  %376 = vmatpush1.bf16.msra.mxu0 %v252
  %377 = vmatprep.subr.bf16.mxu0 0
  %378 = vmatpush1.bf16.msra.mxu0 %v255
  %379 = vmatprep.subr.bf16.mxu0 0
  %380 = vmatpush1.bf16.msra.mxu0 %v258
  %381 = vmatprep.subr.bf16.mxu0 0
  %382 = vmatpush1.bf16.msra.mxu0 %v261
  %383 = vmatprep.subr.bf16.mxu0 0
  %384 = vmatpush1.bf16.msra.mxu0 %v264
  %385 = vmatprep.subr.bf16.mxu0 0
  %386 = vmatpush1.bf16.msra.mxu0 0
  %387 = vmatprep.subr.bf16.mxu0 0
  %388 = vmatpush1.bf16.msra.mxu0 0
  %389 = vmatprep.subr.bf16.mxu0 0
  %390 = vmatpush1.bf16.msra.mxu0 0
  %391 = vmatprep.subr.bf16.mxu0 0
  %392 = vmatpush1.bf16.msra.mxu0 0
  %393 = vmatprep.mubr.bf16.mxu0 %v303
  %394 = vmatmul.mubr.bf16.gmra.mrb[0].mxu0 %v103
  %v395 = vpop.f32.mrb[0].mxu0
  %v396 = vadd.f32 %v74, %v395
  %v397 = vpop.f32.mrb[0].mxu0
  %v398 = vpop.f32.mrb[0].mxu0
  %v399 = vadd.f32 %v79, %v398
  %v400 = vpop.f32.mrb[0].mxu0
  %401 = vmatprep.mubr.bf16.mxu0 %v306
  %402 = vmatmul.mubr.bf16.gmra.mrb[0].mxu0 %v105
  %v403 = vpop.f32.mrb[0].mxu0
  %v404 = vadd.f32 %v84, %v403
  %v405 = vpop.f32.mrb[0].mxu0
  %v406 = vpop.f32.mrb[0].mxu0
  %v407 = vadd.f32 %v89, %v406
  %v408 = vpop.f32.mrb[0].mxu0
  %409 = vdwg.mxu0
  %vm410 = vcmp.ge.f32.partialorder %v343, 0.0
  %vm411 = vcmp.ge.f32.partialorder %v345, 0.0
  %vm412 = vcmp.ge.f32.partialorder %v396, 0.0
  %vm413 = vcmp.ge.f32.partialorder %v347, 0.0
  %vm414 = vcmp.ge.f32.partialorder %v349, 0.0
  %vm415 = vcmp.ge.f32.partialorder %v399, 0.0
  %vm416 = vcmp.ge.f32.partialorder %v353, 0.0
  %vm417 = vcmp.ge.f32.partialorder %v355, 0.0
  %vm418 = vcmp.ge.f32.partialorder %v404, 0.0
  %vm419 = vcmp.ge.f32.partialorder %v357, 0.0
  %vm420 = vcmp.ge.f32.partialorder %v359, 0.0
  %vm421 = vcmp.ge.f32.partialorder %v407, 0.0
  %v422 = vmul.f32 %v343, 0.1
  %v423 = vmul.f32 %v345, 0.1
  %v424 = vmul.f32 %v396, 0.1
  %v425 = vmul.f32 %v347, 0.1
  %v426 = vmul.f32 %v349, 0.1
  %v427 = vmul.f32 %v399, 0.1
  %v428 = vmul.f32 %v353, 0.1
  %v429 = vmul.f32 %v355, 0.1
  %v430 = vmul.f32 %v404, 0.1
  %v431 = vmul.f32 %v357, 0.1
  %v432 = vmul.f32 %v359, 0.1
  %v433 = vmul.f32 %v407, 0.1
  %v434 = vsel %vm410, %v343, %v422
  %v435 = vsel %vm411, %v345, %v423
  %v436 = vsel %vm412, %v396, %v424
  %v437 = vsel %vm413, %v347, %v425
  %v438 = vsel %vm414, %v349, %v426
  %v439 = vsel %vm415, %v399, %v427
  %v440 = vsel %vm416, %v353, %v428
  %v441 = vsel %vm417, %v355, %v429
  %v442 = vsel %vm418, %v404, %v430
  %v443 = vsel %vm419, %v357, %v431
  %v444 = vsel %vm420, %v359, %v432
  %v445 = vsel %vm421, %v407, %v433
  %v446 = vpack.c.bf16 %v437, %v434
  %v447 = vpack.c.bf16 %v438, %v435
  %v448 = vpack.c.bf16 %v439, %v436
  %v449 = vpack.c.bf16 %v443, %v440
  %v450 = vpack.c.bf16 %v444, %v441
  %v451 = vpack.c.bf16 %v445, %v442
  %v458 = vunpack.c.l.b16 %v446
  %v459 = vunpack.c.l.b16 %v447
  %v460 = vunpack.c.l.b16 %v448
  %v461 = vunpack.c.h.b16 %v446
  %v462 = vunpack.c.h.b16 %v447
  %v463 = vunpack.c.h.b16 %v448
  %v464 = vunpack.c.l.b16 %v449
  %v465 = vunpack.c.l.b16 %v450
  %v466 = vunpack.c.l.b16 %v451
  %v467 = vunpack.c.h.b16 %v449
  %v468 = vunpack.c.h.b16 %v450
  %v469 = vunpack.c.h.b16 %v451
  %v470 = vpack.c.b16 %v459, %v458
  %v471 = vpack.c.b16 %v460, %v460
  %v472 = vpack.c.b16 %v462, %v461
  %v473 = vpack.c.b16 %v463, %v463
  %v474 = vpack.c.b16 %v465, %v464
  %v475 = vpack.c.b16 %v466, %v466
  %v476 = vpack.c.b16 %v468, %v467
  %v477 = vpack.c.b16 %v469, %v469
  %486 = vst [vmem:[%s3] sm:$0xff] %v470
  %vm487 = vcmask 257024
  %488 = vst.msk [vmem:[%s3 + $0x8] sm:$0xf] %vm487, %v471
  %489 = vst [vmem:[%s3 + $0xc] sm:$0xff] %v472
  %490 = vst.msk [vmem:[%s3 + $0x14] sm:$0xf] %vm487, %v473
  %491 = vst [vmem:[%s3 + $0x18] sm:$0xff] %v474
  %492 = vst.msk [vmem:[%s3 + $0x20] sm:$0xf] %vm487, %v475
  %493 = vst [vmem:[%s3 + $0x24] sm:$0xff] %v476
  %494 = vst.msk [vmem:[%s3 + $0x2c] sm:$0xf] %vm487, %v477
  // Predicated region
  $region14: #{discriminator_forward.7} parent=0 // pred_check
    _
  $region15: #{discriminator_forward.7} parent=0 // pred_check_branch
    %496 = sbr.rel (0) target = $region17
  $region16: #{discriminator_forward.7} parent=0 // pred_region
    _
  $region17: #{discriminator_forward.7} parent=0 // pred_fallthru
    _
  // Predicated region
  $region18: #{discriminator_forward.7} parent=0 // pred_check
    _
  $region19: #{discriminator_forward.7} parent=0 // pred_check_branch
    %498 = sbr.rel (0) target = $region21
  $region20: #{discriminator_forward.7} parent=0 // pred_region
    _
  $region21: #{discriminator_forward.7} parent=0 // pred_fallthru
    _

// kernel: discriminator_forward.8
$region0: #{discriminator_forward.8}
  #allocation0 [shape = 'u32[]', space=smem, size = 0x4, offset = 0x4, fixed_abs, tag = 'smem constant byte address 0x4 - core index']
  #allocation1 [shape = 'u32[144,128]{1,0:T(1,128)}', space=vmem, size = 0x12000, scoped, tag = 'internal scratch']
  %s0 = inlined_call_operand.vmem [shape: bf16[64,288], index: 0, kind: input, shape index: {}]
  %s1 = inlined_call_operand.vmem [shape: bf16[288,72], index: 1, kind: input, shape index: {}]
  %s2 = inlined_call_operand.vmem [shape: f32[64,1], index: 2, kind: input, shape index: {}]
  %s3 = inlined_call_operand.vmem [shape: bf16[64,72], index: 3, kind: output, shape index: {}]
  %s4 = sld [smem:[#allocation0]]
  $region22: #{discriminator_forward.8} parent=0
    _
  %s6 = ssub.s32 1, %s4
  %s7 = scalar_select 0, %s6, %s4
  // Predicated region
  $region2: #{discriminator_forward.8} parent=0 // pred_check
    _
  $region3: #{discriminator_forward.8} parent=0 // pred_check_branch
    %9 = sbr.rel (0) target = $region5
  $region4: #{discriminator_forward.8} parent=0 // pred_region
    _
  $region5: #{discriminator_forward.8} parent=0 // pred_fallthru
    _
  // Predicated region
  $region6: #{discriminator_forward.8} parent=0 // pred_check
    _
  $region7: #{discriminator_forward.8} parent=0 // pred_check_branch
    %11 = sbr.rel (0) target = $region9
  $region8: #{discriminator_forward.8} parent=0 // pred_region
    _
  $region9: #{discriminator_forward.8} parent=0 // pred_fallthru
    _
  // Predicated region
  $region10: #{discriminator_forward.8} parent=0 // pred_check
    _
  $region11: #{discriminator_forward.8} parent=0 // pred_check_branch
    %13 = sbr.rel (0) target = $region13
  $region12: #{discriminator_forward.8} parent=0 // pred_region
    _
  $region13: #{discriminator_forward.8} parent=0 // pred_fallthru
    _
  %v15 = vld [vmem:[%s0] sm:$0xff]
  %v16 = vld [vmem:[%s0 + $0x8] sm:$0xf]
  %v17 = vld [vmem:[%s0 + $0xc] sm:$0xff]
  %v18 = vld [vmem:[%s0 + $0x14] sm:$0xf]
  %v19 = vld [vmem:[%s0 + $0x18] sm:$0xff]
  %v20 = vld [vmem:[%s0 + $0x20] sm:$0xf]
  %v21 = vld [vmem:[%s0 + $0x24] sm:$0xff]
  %v22 = vld [vmem:[%s0 + $0x2c] sm:$0xf]
  %v23 = vld [vmem:[%s0 + $0x30] sm:$0xff]
  %v24 = vld [vmem:[%s0 + $0x38] sm:$0xf]
  %v25 = vld [vmem:[%s0 + $0x3c] sm:$0xff]
  %v26 = vld [vmem:[%s0 + $0x44] sm:$0xf]
  %v27 = vld [vmem:[%s0 + $0x48] sm:$0xff]
  %v28 = vld [vmem:[%s0 + $0x50] sm:$0xf]
  %v29 = vld [vmem:[%s0 + $0x54] sm:$0xff]
  %v30 = vld [vmem:[%s0 + $0x5c] sm:$0xf]
  %v31 = vld [vmem:[%s1] sm:$0xf]
  %v32 = vld [vmem:[%s1 + $0x4] sm:$0xf]
  %v33 = vld [vmem:[%s1 + $0x8] sm:$0xf]
  %v34 = vld [vmem:[%s1 + $0xc] sm:$0xf]
  %v35 = vld [vmem:[%s1 + $0x10] sm:$0xf]
  %v36 = vld [vmem:[%s1 + $0x14] sm:$0xf]
  %v37 = vld [vmem:[%s1 + $0x18] sm:$0xf]
  %v38 = vld [vmem:[%s1 + $0x1c] sm:$0xf]
  %v39 = vld [vmem:[%s1 + $0x20] sm:$0xf]
  %v40 = vld [vmem:[%s1 + $0x24] sm:$0xf]
  %v41 = vld [vmem:[%s1 + $0x28] sm:$0xf]
  %v42 = vld [vmem:[%s1 + $0x2c] sm:$0xf]
  %v43 = vld [vmem:[%s1 + $0x30] sm:$0xf]
  %v44 = vld [vmem:[%s1 + $0x34] sm:$0xf]
  %v45 = vld [vmem:[%s1 + $0x38] sm:$0xf]
  %v46 = vld [vmem:[%s1 + $0x3c] sm:$0xf]
  %v47 = vld [vmem:[%s1 + $0x40] sm:$0xf]
  %v48 = vld [vmem:[%s1 + $0x44] sm:$0xf]
  %v49 = vld [vmem:[%s1 + $0x48] sm:$0xf]
  %v50 = vld [vmem:[%s1 + $0x4c] sm:$0xf]
  %v51 = vld [vmem:[%s1 + $0x50] sm:$0xf]
  %v52 = vld [vmem:[%s1 + $0x54] sm:$0xf]
  %v53 = vld [vmem:[%s1 + $0x58] sm:$0xf]
  %v54 = vld [vmem:[%s1 + $0x5c] sm:$0xf]
  %v55 = vld [vmem:[%s1 + $0x60] sm:$0xf]
  %v56 = vld [vmem:[%s1 + $0x64] sm:$0xf]
  %v57 = vld [vmem:[%s1 + $0x68] sm:$0xf]
  %v58 = vld [vmem:[%s1 + $0x6c] sm:$0xf]
  %v59 = vld [vmem:[%s1 + $0x70] sm:$0xf]
  %v60 = vld [vmem:[%s1 + $0x74] sm:$0xf]
  %v61 = vld [vmem:[%s1 + $0x78] sm:$0xf]
  %v62 = vld [vmem:[%s1 + $0x7c] sm:$0xf]
  %v63 = vld [vmem:[%s1 + $0x80] sm:$0xf]
  %v64 = vld [vmem:[%s1 + $0x84] sm:$0xf]
  %v65 = vld [vmem:[%s1 + $0x88] sm:$0xf]
  %v66 = vld [vmem:[%s1 + $0x8c] sm:$0xf]
  %v67 = vld [vmem:[%s2] sm:$0xff]
  %v68 = vld [vmem:[%s2 + $0x8] sm:$0xff]
  %v69 = vld [vmem:[%s2 + $0x10] sm:$0xff]
  %v70 = vld [vmem:[%s2 + $0x18] sm:$0xff]
  %v71 = vld [vmem:[%s2 + $0x20] sm:$0xff]
  %v72 = vld [vmem:[%s2 + $0x28] sm:$0xff]
  %v73 = vld [vmem:[%s2 + $0x30] sm:$0xff]
  %v74 = vld [vmem:[%s2 + $0x38] sm:$0xff]
  %76 = vset.pattern.permute.xlu0 0
  %77 = vperm.xlu0 %76, %v67
  %v78 = vpop.permute.xlu0 %77
  %81 = vset.pattern.permute.xlu0 0
  %82 = vperm.xlu0 %81, %v68
  %v83 = vpop.permute.xlu0 %82
  %86 = vset.pattern.permute.xlu0 0
  %87 = vperm.xlu0 %86, %v69
  %v88 = vpop.permute.xlu0 %87
  %91 = vset.pattern.permute.xlu0 0
  %92 = vperm.xlu0 %91, %v70
  %v93 = vpop.permute.xlu0 %92
  %96 = vset.pattern.permute.xlu0 0
  %97 = vperm.xlu0 %96, %v71
  %v98 = vpop.permute.xlu0 %97
  %101 = vset.pattern.permute.xlu0 0
  %102 = vperm.xlu0 %101, %v72
  %v103 = vpop.permute.xlu0 %102
  %106 = vset.pattern.permute.xlu0 0
  %107 = vperm.xlu0 %106, %v73
  %v108 = vpop.permute.xlu0 %107
  %111 = vset.pattern.permute.xlu0 0
  %112 = vperm.xlu0 %111, %v74
  %v113 = vpop.permute.xlu0 %112
  %v131 = vunpack.c.l.b16 %v15
  %v132 = vunpack.c.h.b16 %v15
  %v133 = vunpack.c.l.b16 %v16
  %v134 = vunpack.c.l.b16 %v17
  %v135 = vunpack.c.h.b16 %v17
  %v136 = vunpack.c.l.b16 %v18
  %v137 = vunpack.c.l.b16 %v19
  %v138 = vunpack.c.h.b16 %v19
  %v139 = vunpack.c.l.b16 %v20
  %v140 = vunpack.c.l.b16 %v21
  %v141 = vunpack.c.h.b16 %v21
  %v142 = vunpack.c.l.b16 %v22
  %v143 = vunpack.c.l.b16 %v23
  %v144 = vunpack.c.h.b16 %v23
  %v145 = vunpack.c.l.b16 %v24
  %v146 = vunpack.c.l.b16 %v25
  %v147 = vunpack.c.h.b16 %v25
  %v148 = vunpack.c.l.b16 %v26
  %v149 = vunpack.c.l.b16 %v27
  %v150 = vunpack.c.h.b16 %v27
  %v151 = vunpack.c.l.b16 %v28
  %v152 = vunpack.c.l.b16 %v29
  %v153 = vunpack.c.h.b16 %v29
  %v154 = vunpack.c.l.b16 %v30
  %v155 = vpack.c.b16 %v134, %v131
  %v156 = vpack.c.b16 %v135, %v132
  %v157 = vpack.c.b16 %v136, %v133
  %v158 = vpack.c.b16 %v140, %v137
  %v159 = vpack.c.b16 %v141, %v138
  %v160 = vpack.c.b16 %v142, %v139
  %v161 = vpack.c.b16 %v146, %v143
  %v162 = vpack.c.b16 %v147, %v144
  %v163 = vpack.c.b16 %v148, %v145
  %v164 = vpack.c.b16 %v152, %v149
  %v165 = vpack.c.b16 %v153, %v150
  %v166 = vpack.c.b16 %v154, %v151
  %v211 = vunpack.c.l.b16 %v31
  %v212 = vunpack.c.l.b16 %v32
  %v213 = vunpack.c.l.b16 %v33
  %v214 = vunpack.c.l.b16 %v34
  %v215 = vunpack.c.l.b16 %v35
  %v216 = vunpack.c.l.b16 %v36
  %v217 = vunpack.c.l.b16 %v37
  %v218 = vunpack.c.l.b16 %v38
  %v219 = vunpack.c.l.b16 %v39
  %v220 = vunpack.c.l.b16 %v40
  %v221 = vunpack.c.l.b16 %v41
  %v222 = vunpack.c.l.b16 %v42
  %v223 = vunpack.c.l.b16 %v43
  %v224 = vunpack.c.l.b16 %v44
  %v225 = vunpack.c.l.b16 %v45
  %v226 = vunpack.c.l.b16 %v46
  %v227 = vunpack.c.l.b16 %v47
  %v228 = vunpack.c.l.b16 %v48
  %v229 = vunpack.c.l.b16 %v49
  %v230 = vunpack.c.l.b16 %v50
  %v231 = vunpack.c.l.b16 %v51
  %v232 = vunpack.c.l.b16 %v52
  %v233 = vunpack.c.l.b16 %v53
  %v234 = vunpack.c.l.b16 %v54
  %v235 = vunpack.c.l.b16 %v55
  %v236 = vunpack.c.l.b16 %v56
  %v237 = vunpack.c.l.b16 %v57
  %v238 = vunpack.c.l.b16 %v58
  %v239 = vunpack.c.l.b16 %v59
  %v240 = vunpack.c.l.b16 %v60
  %v241 = vunpack.c.l.b16 %v61
  %v242 = vunpack.c.l.b16 %v62
  %v243 = vunpack.c.l.b16 %v63
  %v244 = vunpack.c.l.b16 %v64
  %v245 = vunpack.c.l.b16 %v65
  %v246 = vunpack.c.l.b16 %v66
  %v247 = vpack.c.b16 %v212, %v211
  %v248 = vpack.c.b16 %v214, %v213
  %v249 = vpack.c.b16 %v216, %v215
  %v250 = vpack.c.b16 %v218, %v217
  %v251 = vpack.c.b16 %v220, %v219
  %v252 = vpack.c.b16 %v222, %v221
  %v253 = vpack.c.b16 %v224, %v223
  %v254 = vpack.c.b16 %v226, %v225
  %v255 = vpack.c.b16 %v228, %v227
  %v256 = vpack.c.b16 %v230, %v229
  %v257 = vpack.c.b16 %v232, %v231
  %v258 = vpack.c.b16 %v234, %v233
  %v259 = vpack.c.b16 %v236, %v235
  %v260 = vpack.c.b16 %v238, %v237
  %v261 = vpack.c.b16 %v240, %v239
  %v262 = vpack.c.b16 %v242, %v241
  %v263 = vpack.c.b16 %v244, %v243
  %v264 = vpack.c.b16 %v246, %v245
  %vm283 = vcmask 261120
  %v285 = vsel %vm283, %v157, 0
  %v288 = vsel %vm283, %v160, 0
  %v291 = vsel %vm283, %v163, 0
  %v294 = vsel %vm283, %v166, 0
  %296 = vmatprep.subr.bf16.mxu0 0
  %297 = vmatpush1.bf16.msra.mxu0 %v247
  %298 = vmatprep.subr.bf16.mxu0 0
  %299 = vmatpush1.bf16.msra.mxu0 %v248
  %300 = vmatprep.subr.bf16.mxu0 0
  %301 = vmatpush1.bf16.msra.mxu0 %v249
  %302 = vmatprep.subr.bf16.mxu0 0
  %303 = vmatpush1.bf16.msra.mxu0 %v250
  %304 = vmatprep.subr.bf16.mxu0 0
  %305 = vmatpush1.bf16.msra.mxu0 %v251
  %306 = vmatprep.subr.bf16.mxu0 0
  %307 = vmatpush1.bf16.msra.mxu0 %v252
  %308 = vmatprep.subr.bf16.mxu0 0
  %309 = vmatpush1.bf16.msra.mxu0 %v253
  %310 = vmatprep.subr.bf16.mxu0 0
  %311 = vmatpush1.bf16.msra.mxu0 %v254
  %312 = vmatprep.subr.bf16.mxu0 0
  %313 = vmatpush1.bf16.msra.mxu0 %v255
  %314 = vmatprep.subr.bf16.mxu0 0
  %315 = vmatpush1.bf16.msra.mxu0 %v256
  %316 = vmatprep.subr.bf16.mxu0 0
  %317 = vmatpush1.bf16.msra.mxu0 %v257
  %318 = vmatprep.subr.bf16.mxu0 0
  %319 = vmatpush1.bf16.msra.mxu0 %v258
  %320 = vmatprep.subr.bf16.mxu0 0
  %321 = vmatpush1.bf16.msra.mxu0 %v259
  %322 = vmatprep.subr.bf16.mxu0 0
  %323 = vmatpush1.bf16.msra.mxu0 %v260
  %324 = vmatprep.subr.bf16.mxu0 0
  %325 = vmatpush1.bf16.msra.mxu0 %v261
  %326 = vmatprep.subr.bf16.mxu0 0
  %327 = vmatpush1.bf16.msra.mxu0 %v262
  %328 = vmatprep.mubr.bf16.mxu0 %v156
  %329 = vmatmul.mubr.bf16.gmra.mrb[0].mxu0 %v155
  %v330 = vpop.f32.mrb[0].mxu0
  %v331 = vadd.f32 %v78, %v330
  %v332 = vpop.f32.mrb[0].mxu0
  %v333 = vpop.f32.mrb[0].mxu0
  %v334 = vadd.f32 %v83, %v333
  %v335 = vpop.f32.mrb[0].mxu0
  %336 = vmatprep.mubr.bf16.mxu0 %v159
  %337 = vmatmul.mubr.bf16.gmra.mrb[0].mxu0 %v158
  %v338 = vpop.f32.mrb[0].mxu0
  %v339 = vadd.f32 %v88, %v338
  %v340 = vpop.f32.mrb[0].mxu0
  %v341 = vpop.f32.mrb[0].mxu0
  %v342 = vadd.f32 %v93, %v341
  %v343 = vpop.f32.mrb[0].mxu0
  %344 = vmatprep.mubr.bf16.mxu0 %v162
  %345 = vmatmul.mubr.bf16.gmra.mrb[0].mxu0 %v161
  %v346 = vpop.f32.mrb[0].mxu0
  %v347 = vadd.f32 %v98, %v346
  %v348 = vpop.f32.mrb[0].mxu0
  %v349 = vpop.f32.mrb[0].mxu0
  %v350 = vadd.f32 %v103, %v349
  %v351 = vpop.f32.mrb[0].mxu0
  %352 = vmatprep.mubr.bf16.mxu0 %v165
  %353 = vmatmul.mubr.bf16.gmra.mrb[0].mxu0 %v164
  %v354 = vpop.f32.mrb[0].mxu0
  %v355 = vadd.f32 %v108, %v354
  %v356 = vpop.f32.mrb[0].mxu0
  %v357 = vpop.f32.mrb[0].mxu0
  %v358 = vadd.f32 %v113, %v357
  %v359 = vpop.f32.mrb[0].mxu0
  %360 = vdwg.mxu0
  %361 = vmatprep.subr.bf16.mxu0 0
  %362 = vmatpush1.bf16.msra.mxu0 %v263
  %363 = vmatprep.subr.bf16.mxu0 0
  %364 = vmatpush1.bf16.msra.mxu0 %v264
  %365 = vmatprep.subr.bf16.mxu0 0
  %366 = vmatpush1.bf16.msra.mxu0 0
  %367 = vmatprep.subr.bf16.mxu0 0
  %368 = vmatpush1.bf16.msra.mxu0 0
  %369 = vmatprep.subr.bf16.mxu0 0
  %370 = vmatpush1.bf16.msra.mxu0 0
  %371 = vmatprep.subr.bf16.mxu0 0
  %372 = vmatpush1.bf16.msra.mxu0 0
  %373 = vmatprep.subr.bf16.mxu0 0
  %374 = vmatpush1.bf16.msra.mxu0 0
  %375 = vmatprep.subr.bf16.mxu0 0
  %376 = vmatpush1.bf16.msra.mxu0 0
  %377 = vmatprep.subr.bf16.mxu0 0
  %378 = vmatpush1.bf16.msra.mxu0 0
  %379 = vmatprep.subr.bf16.mxu0 0
  %380 = vmatpush1.bf16.msra.mxu0 0
  %381 = vmatprep.subr.bf16.mxu0 0
  %382 = vmatpush1.bf16.msra.mxu0 0
  %383 = vmatprep.subr.bf16.mxu0 0
  %384 = vmatpush1.bf16.msra.mxu0 0
  %385 = vmatprep.subr.bf16.mxu0 0
  %386 = vmatpush1.bf16.msra.mxu0 0
  %387 = vmatprep.subr.bf16.mxu0 0
  %388 = vmatpush1.bf16.msra.mxu0 0
  %389 = vmatprep.subr.bf16.mxu0 0
  %390 = vmatpush1.bf16.msra.mxu0 0
  %391 = vmatprep.subr.bf16.mxu0 0
  %392 = vmatpush1.bf16.msra.mxu0 0
  %393 = vmatprep.mubr.bf16.mxu0 0
  %394 = vmatmul.mubr.bf16.gmra.mrb[0].mxu0 %v285
  %v395 = vpop.f32.mrb[0].mxu0
  %v396 = vadd.f32 %v331, %v395
  %v397 = vpop.f32.mrb[0].mxu0
  %v398 = vpop.f32.mrb[0].mxu0
  %v399 = vadd.f32 %v334, %v398
  %v400 = vpop.f32.mrb[0].mxu0
  %401 = vmatprep.mubr.bf16.mxu0 0
  %402 = vmatmul.mubr.bf16.gmra.mrb[0].mxu0 %v288
  %v403 = vpop.f32.mrb[0].mxu0
  %v404 = vadd.f32 %v339, %v403
  %v405 = vpop.f32.mrb[0].mxu0
  %v406 = vpop.f32.mrb[0].mxu0
  %v407 = vadd.f32 %v342, %v406
  %v408 = vpop.f32.mrb[0].mxu0
  %409 = vmatprep.mubr.bf16.mxu0 0
  %410 = vmatmul.mubr.bf16.gmra.mrb[0].mxu0 %v291
  %v411 = vpop.f32.mrb[0].mxu0
  %v412 = vadd.f32 %v347, %v411
  %v413 = vpop.f32.mrb[0].mxu0
  %v414 = vpop.f32.mrb[0].mxu0
  %v415 = vadd.f32 %v350, %v414
  %v416 = vpop.f32.mrb[0].mxu0
  %417 = vmatprep.mubr.bf16.mxu0 0
  %418 = vmatmul.mubr.bf16.gmra.mrb[0].mxu0 %v294
  %v419 = vpop.f32.mrb[0].mxu0
  %v420 = vadd.f32 %v355, %v419
  %v421 = vpop.f32.mrb[0].mxu0
  %v422 = vpop.f32.mrb[0].mxu0
  %v423 = vadd.f32 %v358, %v422
  %v424 = vpop.f32.mrb[0].mxu0
  %425 = vdwg.mxu0
  %vm426 = vcmp.ge.f32.partialorder %v396, 0.0
  %vm427 = vcmp.ge.f32.partialorder %v399, 0.0
  %vm428 = vcmp.ge.f32.partialorder %v404, 0.0
  %vm429 = vcmp.ge.f32.partialorder %v407, 0.0
  %vm430 = vcmp.ge.f32.partialorder %v412, 0.0
  %vm431 = vcmp.ge.f32.partialorder %v415, 0.0
  %vm432 = vcmp.ge.f32.partialorder %v420, 0.0
  %vm433 = vcmp.ge.f32.partialorder %v423, 0.0
  %v434 = vmul.f32 %v396, 0.1
  %v435 = vmul.f32 %v399, 0.1
  %v436 = vmul.f32 %v404, 0.1
  %v437 = vmul.f32 %v407, 0.1
  %v438 = vmul.f32 %v412, 0.1
  %v439 = vmul.f32 %v415, 0.1
  %v440 = vmul.f32 %v420, 0.1
  %v441 = vmul.f32 %v423, 0.1
  %v442 = vsel %vm426, %v396, %v434
  %v443 = vsel %vm427, %v399, %v435
  %v444 = vsel %vm428, %v404, %v436
  %v445 = vsel %vm429, %v407, %v437
  %v446 = vsel %vm430, %v412, %v438
  %v447 = vsel %vm431, %v415, %v439
  %v448 = vsel %vm432, %v420, %v440
  %v449 = vsel %vm433, %v423, %v441
  %v450 = vpack.c.bf16 %v443, %v442
  %v451 = vpack.c.bf16 %v445, %v444
  %v452 = vpack.c.bf16 %v447, %v446
  %v453 = vpack.c.bf16 %v449, %v448
  %v458 = vunpack.c.l.b16 %v450
  %v459 = vunpack.c.h.b16 %v450
  %v460 = vunpack.c.l.b16 %v451
  %v461 = vunpack.c.h.b16 %v451
  %v462 = vunpack.c.l.b16 %v452
  %v463 = vunpack.c.h.b16 %v452
  %v464 = vunpack.c.l.b16 %v453
  %v465 = vunpack.c.h.b16 %v453
  %v466 = vpack.c.b16 %v458, %v458
  %v467 = vpack.c.b16 %v459, %v459
  %v468 = vpack.c.b16 %v460, %v460
  %v469 = vpack.c.b16 %v461, %v461
  %v470 = vpack.c.b16 %v462, %v462
  %v471 = vpack.c.b16 %v463, %v463
  %v472 = vpack.c.b16 %v464, %v464
  %v473 = vpack.c.b16 %v465, %v465
  %vm482 = vcmask 584704
  %483 = vst.msk [vmem:[%s3] sm:$0xf] %vm482, %v466
  %484 = vst.msk [vmem:[%s3 + $0x4] sm:$0xf] %vm482, %v467
  %485 = vst.msk [vmem:[%s3 + $0x8] sm:$0xf] %vm482, %v468
  %486 = vst.msk [vmem:[%s3 + $0xc] sm:$0xf] %vm482, %v469
  %487 = vst.msk [vmem:[%s3 + $0x10] sm:$0xf] %vm482, %v470
  %488 = vst.msk [vmem:[%s3 + $0x14] sm:$0xf] %vm482, %v471
  %489 = vst.msk [vmem:[%s3 + $0x18] sm:$0xf] %vm482, %v472
  %490 = vst.msk [vmem:[%s3 + $0x1c] sm:$0xf] %vm482, %v473
  // Predicated region
  $region14: #{discriminator_forward.8} parent=0 // pred_check
    _
  $region15: #{discriminator_forward.8} parent=0 // pred_check_branch
    %492 = sbr.rel (0) target = $region17
  $region16: #{discriminator_forward.8} parent=0 // pred_region
    _
  $region17: #{discriminator_forward.8} parent=0 // pred_fallthru
    _
  // Predicated region
  $region18: #{discriminator_forward.8} parent=0 // pred_check
    _
  $region19: #{discriminator_forward.8} parent=0 // pred_check_branch
    %494 = sbr.rel (0) target = $region21
  $region20: #{discriminator_forward.8} parent=0 // pred_region
    _
  $region21: #{discriminator_forward.8} parent=0 // pred_fallthru
    _

// kernel: tile.9
$region0: #{tile.9}
  %s0 = inlined_call_operand.vmem [shape: bf16[128,2,9], index: 0, kind: input, shape index: {}]
  %s1 = inlined_call_operand.vmem [shape: bf16[128,18], index: 1, kind: output, shape index: {}]
  $region1: #{tile.9} parent=0
    #allocation0 [shape = 'u8[12288]{0}', space=vmem, size = 0x3000, scoped, tag = 'scoped mem for output reshape']
    #allocation1 [shape = 'u8[16384]{0}', space=vmem, size = 0x4000, scoped, tag = 'scoped mem for input reshape']
    %s3 = smul.u32 4, 2
    %s4 = sshllo.u32 0, %s3
    %s5 = smul.addr 4, 3
    %s6 = scalar_lea.vmem %s0, %s5
    %s7 = sshrl.u32 %s4, 1
    %s8 = sor.u32 %s4, %s7
    %s9 = sand.u32 %s8, 85
    %s10 = sshrl.u32 %s9, 1
    %s11 = sor.u32 %s9, %s10
    %s12 = sand.u32 51, %s11
    %s13 = sshrl.u32 %s12, 2
    %s14 = sor.u32 %s12, %s13
    %s15 = sand.u32 15, %s14
    %v16 = vld [vmem:[%s6] sm:%s15]
    %v17 = vunpack.c.l.bf16 %v16
    %v18 = vunpack.c.h.bf16 %v16
    %s19 = scalar_lea.vmem [#allocation1], 24
    %20 = vst [vmem:[%s19] sm:%s4] %v17
    %s21 = smul.addr 4, 2
    %s22 = scalar_lea.vmem %s0, %s21
    %s23 = sshrl.u32 %s4, 1
    %s24 = sor.u32 %s4, %s23
    %s25 = sand.u32 %s24, 85
    %s26 = sshrl.u32 %s25, 1
    %s27 = sor.u32 %s25, %s26
    %s28 = sand.u32 51, %s27
    %s29 = sshrl.u32 %s28, 2
    %s30 = sor.u32 %s28, %s29
    %s31 = sand.u32 15, %s30
    %v32 = vld [vmem:[%s22] sm:%s31]
    %v33 = vunpack.c.l.bf16 %v32
    %v34 = vunpack.c.h.bf16 %v32
    %s35 = scalar_lea.vmem [#allocation1], 16
    %36 = vst [vmem:[%s35] sm:%s4] %v33
    %s37 = scalar_lea.vmem %s0, 4
    %s38 = sshrl.u32 %s4, 1
    %s39 = sor.u32 %s4, %s38
    %s40 = sand.u32 %s39, 85
    %s41 = sshrl.u32 %s40, 1
    %s42 = sor.u32 %s40, %s41
    %s43 = sand.u32 51, %s42
    %s44 = sshrl.u32 %s43, 2
    %s45 = sor.u32 %s43, %s44
    %s46 = sand.u32 15, %s45
    %v47 = vld [vmem:[%s37] sm:%s46]
    %v48 = vunpack.c.l.bf16 %v47
    %v49 = vunpack.c.h.bf16 %v47
    %s50 = scalar_lea.vmem [#allocation1], 8
    %51 = vst [vmem:[%s50] sm:%s4] %v48
    %s52 = sshrl.u32 %s4, 1
    %s53 = sor.u32 %s4, %s52
    %s54 = sand.u32 %s53, 85
    %s55 = sshrl.u32 %s54, 1
    %s56 = sor.u32 %s54, %s55
    %s57 = sand.u32 51, %s56
    %s58 = sshrl.u32 %s57, 2
    %s59 = sor.u32 %s57, %s58
    %s60 = sand.u32 15, %s59
    %v61 = vld [vmem:[%s0] sm:%s60]
    %v62 = vunpack.c.l.bf16 %v61
    %v63 = vunpack.c.h.bf16 %v61
    %64 = vst [vmem:[#allocation1] sm:%s4] %v62
    %v65 = vld [vmem:[#allocation1] sm:$0xff]
    %66 = vst [vmem:[#allocation0] sm:$0xff] %v65
    %s67 = scalar_lea.vmem [#allocation1], 8
    %s68 = smov 3
    %v69 = vld [vmem:[%s67] ss:$8 sm:%s68]
    %s70 = scalar_lea.vmem [#allocation0], 8
    %71 = vst [vmem:[%s70] sm:$0x3] %v69
    %s72 = scalar_lea.vmem [#allocation1], 17
    %v73 = vld [vmem:[%s72] sm:$0xff]
    %s74 = scalar_lea.vmem [#allocation0], 10
    %75 = vst [vmem:[%s74] sm:$0xff] %v73
    %s77 = smul.u32 4, 2
    %s78 = sshllo.u32 0, %s77
    %s79 = sshrl.u32 %s77, 1
    %v80 = vld [vmem:[#allocation0] sm:%s78]
    %v81 = vpack.c.bf16 0.0, %v80
    %s82 = sshllo.u32 0, %s79
    %83 = vst [vmem:[%s1] sm:%s82] %v81
    %s84 = scalar_lea.vmem [#allocation0], 8
    %v85 = vld [vmem:[%s84] sm:%s78]
    %v86 = vpack.c.bf16 0.0, %v85
    %s87 = sshllo.u32 0, %s79
    %s88 = scalar_lea.vmem %s1, 4
    %89 = vst [vmem:[%s88] sm:%s87] %v86
    %s90 = scalar_lea.vmem [#allocation0], 16
    %v91 = vld [vmem:[%s90] sm:%s78]
    %v92 = vpack.c.bf16 0.0, %v91
    %s93 = sshllo.u32 0, %s79
    %s94 = smul.addr 4, 2
    %s95 = scalar_lea.vmem %s1, %s94
    %96 = vst [vmem:[%s95] sm:%s93] %v92

// kernel: discriminator_forward.9
$region0: #{discriminator_forward.9}
  #allocation0 [shape = 'u32[]', space=smem, size = 0x4, offset = 0x4, fixed_abs, tag = 'smem constant byte address 0x4 - core index']
  #allocation1 [shape = 'u32[144,128]{1,0:T(1,128)}', space=vmem, size = 0x12000, scoped, tag = 'internal scratch']
  #allocation2 [shape = 'f32[1,1]{1,0:T(1,128)S(1)}', space=vmem, size = 0x200, scoped, tag = 'scoped memory for discriminator_forward.9']
  %s0 = inlined_call_operand.vmem [shape: bf16[128,768], index: 0, kind: input, shape index: {}]
  %s1 = inlined_call_operand.vmem [shape: bf16[768,18], index: 1, kind: input, shape index: {}]
  %s2 = inlined_call_operand.vmem [shape: f32[128,1], index: 2, kind: input, shape index: {}]
  %s3 = inlined_call_operand.vmem [shape: bf16[128,18], index: 3, kind: input, shape index: {}]
  %s4 = inlined_call_operand.<no memory space> [shape: f32[1,1], index: 4, kind: input, shape index: {}]
  %s5 = inlined_call_operand.hbm [shape: f32[1,2], index: 5, kind: output, shape index: {}]
  %s6 = sld [smem:[#allocation0]]
  $region30: #{discriminator_forward.9} parent=0
    _
  %s8 = ssub.s32 1, %s6
  %s9 = scalar_select 0, %s8, %s6
  %v10 = vstv %s4
  %11 = vst [vmem:[#allocation2] sm:$0x1] %v10
  $region1: #{discriminator_forward.9} parent=0
    #allocation3 [shape = 'u8[512]{0}', space=vmem, size = 0x400, scoped, tag = 'output window, operand 0, single buffered']
    #allocation4 [shape = 's32[1]{0}', space=sflag, size = 0x4, scoped, tag = 'scoped memory for discriminator_forward.9']
    %12 = vsyncpa [#allocation4], 0
    // Predicated region
    $region2: #{discriminator_forward.9} parent=1 // pred_check
      _
    $region3: #{discriminator_forward.9} parent=1 // pred_check_branch
      %14 = sbr.rel (0) target = $region5
    $region4: #{discriminator_forward.9} parent=1 // pred_region
      _
    $region5: #{discriminator_forward.9} parent=1 // pred_fallthru
      _
    // Predicated region
    $region6: #{discriminator_forward.9} parent=1 // pred_check
      _
    $region7: #{discriminator_forward.9} parent=1 // pred_check_branch
      %16 = sbr.rel (0) target = $region9
    $region8: #{discriminator_forward.9} parent=1 // pred_region
      _
    $region9: #{discriminator_forward.9} parent=1 // pred_fallthru
      _
    // Predicated region
    $region10: #{discriminator_forward.9} parent=1 // pred_check
      _
    $region11: #{discriminator_forward.9} parent=1 // pred_check_branch
      %18 = sbr.rel (0) target = $region13
    $region12: #{discriminator_forward.9} parent=1 // pred_region
      _
    $region13: #{discriminator_forward.9} parent=1 // pred_fallthru
      _
    // Predicated region
    $region14: #{discriminator_forward.9} parent=1 // pred_check
      _
    $region15: #{discriminator_forward.9} parent=1 // pred_check_branch
      %20 = sbr.rel (0) target = $region17
    $region16: #{discriminator_forward.9} parent=1 // pred_region
      _
    $region17: #{discriminator_forward.9} parent=1 // pred_fallthru
      _
    // Predicated region
    $region18: #{discriminator_forward.9} parent=1 // pred_check
      _
    $region19: #{discriminator_forward.9} parent=1 // pred_check_branch
      %22 = sbr.rel (0) target = $region21
    $region20: #{discriminator_forward.9} parent=1 // pred_region
      _
    $region21: #{discriminator_forward.9} parent=1 // pred_fallthru
      _
    %v24 = vld [vmem:[%s0] sm:$0xff]
    %v25 = vld [vmem:[%s0 + $0x8] sm:$0xff]
    %v26 = vld [vmem:[%s0 + $0x10] sm:$0xff]
    %v27 = vld [vmem:[%s0 + $0x18] sm:$0xff]
    %v28 = vld [vmem:[%s0 + $0x20] sm:$0xff]
    %v29 = vld [vmem:[%s0 + $0x28] sm:$0xff]
    %v30 = vld [vmem:[%s0 + $0x30] sm:$0xff]
    %v31 = vld [vmem:[%s0 + $0x38] sm:$0xff]
    %v32 = vld [vmem:[%s0 + $0x40] sm:$0xff]
    %v33 = vld [vmem:[%s0 + $0x48] sm:$0xff]
    %v34 = vld [vmem:[%s0 + $0x50] sm:$0xff]
    %v35 = vld [vmem:[%s0 + $0x58] sm:$0xff]
    %v36 = vld [vmem:[%s0 + $0x60] sm:$0xff]
    %v37 = vld [vmem:[%s0 + $0x68] sm:$0xff]
    %v38 = vld [vmem:[%s0 + $0x70] sm:$0xff]
    %v39 = vld [vmem:[%s0 + $0x78] sm:$0xff]
    %v40 = vld [vmem:[%s0 + $0x80] sm:$0xff]
    %v41 = vld [vmem:[%s0 + $0x88] sm:$0xff]
    %v42 = vld [vmem:[%s0 + $0x90] sm:$0xff]
    %v43 = vld [vmem:[%s0 + $0x98] sm:$0xff]
    %v44 = vld [vmem:[%s0 + $0xa0] sm:$0xff]
    %v45 = vld [vmem:[%s0 + $0xa8] sm:$0xff]
    %v46 = vld [vmem:[%s0 + $0xb0] sm:$0xff]
    %v47 = vld [vmem:[%s0 + $0xb8] sm:$0xff]
    %v48 = vld [vmem:[%s0 + $0xc0] sm:$0xff]
    %v49 = vld [vmem:[%s0 + $0xc8] sm:$0xff]
    %v50 = vld [vmem:[%s0 + $0xd0] sm:$0xff]
    %v51 = vld [vmem:[%s0 + $0xd8] sm:$0xff]
    %v52 = vld [vmem:[%s0 + $0xe0] sm:$0xff]
    %v53 = vld [vmem:[%s0 + $0xe8] sm:$0xff]
    %v54 = vld [vmem:[%s0 + $0xf0] sm:$0xff]
    %v55 = vld [vmem:[%s0 + $0xf8] sm:$0xff]
    %v56 = vld [vmem:[%s0 + $0x100] sm:$0xff]
    %v57 = vld [vmem:[%s0 + $0x108] sm:$0xff]
    %v58 = vld [vmem:[%s0 + $0x110] sm:$0xff]
    %v59 = vld [vmem:[%s0 + $0x118] sm:$0xff]
    %v60 = vld [vmem:[%s0 + $0x120] sm:$0xff]
    %v61 = vld [vmem:[%s0 + $0x128] sm:$0xff]
    %v62 = vld [vmem:[%s0 + $0x130] sm:$0xff]
    %v63 = vld [vmem:[%s0 + $0x138] sm:$0xff]
    %v64 = vld [vmem:[%s0 + $0x140] sm:$0xff]
    %v65 = vld [vmem:[%s0 + $0x148] sm:$0xff]
    %v66 = vld [vmem:[%s0 + $0x150] sm:$0xff]
    %v67 = vld [vmem:[%s0 + $0x158] sm:$0xff]
    %v68 = vld [vmem:[%s0 + $0x160] sm:$0xff]
    %v69 = vld [vmem:[%s0 + $0x168] sm:$0xff]
    %v70 = vld [vmem:[%s0 + $0x170] sm:$0xff]
    %v71 = vld [vmem:[%s0 + $0x178] sm:$0xff]
    %v72 = vld [vmem:[%s1] sm:$0xf]
    %v73 = vld [vmem:[%s1 + $0x4] sm:$0xf]
    %v74 = vld [vmem:[%s1 + $0x8] sm:$0xf]
    %v75 = vld [vmem:[%s1 + $0xc] sm:$0xf]
    %v76 = vld [vmem:[%s1 + $0x10] sm:$0xf]
    %v77 = vld [vmem:[%s1 + $0x14] sm:$0xf]
    %v78 = vld [vmem:[%s1 + $0x18] sm:$0xf]
    %v79 = vld [vmem:[%s1 + $0x1c] sm:$0xf]
    %v80 = vld [vmem:[%s1 + $0x20] sm:$0xf]
    %v81 = vld [vmem:[%s1 + $0x24] sm:$0xf]
    %v82 = vld [vmem:[%s1 + $0x28] sm:$0xf]
    %v83 = vld [vmem:[%s1 + $0x2c] sm:$0xf]
    %v84 = vld [vmem:[%s1 + $0x30] sm:$0xf]
    %v85 = vld [vmem:[%s1 + $0x34] sm:$0xf]
    %v86 = vld [vmem:[%s1 + $0x38] sm:$0xf]
    %v87 = vld [vmem:[%s1 + $0x3c] sm:$0xf]
    %v88 = vld [vmem:[%s1 + $0x40] sm:$0xf]
    %v89 = vld [vmem:[%s1 + $0x44] sm:$0xf]
    %v90 = vld [vmem:[%s1 + $0x48] sm:$0xf]
    %v91 = vld [vmem:[%s1 + $0x4c] sm:$0xf]
    %v92 = vld [vmem:[%s1 + $0x50] sm:$0xf]
    %v93 = vld [vmem:[%s1 + $0x54] sm:$0xf]
    %v94 = vld [vmem:[%s1 + $0x58] sm:$0xf]
    %v95 = vld [vmem:[%s1 + $0x5c] sm:$0xf]
    %v96 = vld [vmem:[%s1 + $0x60] sm:$0xf]
    %v97 = vld [vmem:[%s1 + $0x64] sm:$0xf]
    %v98 = vld [vmem:[%s1 + $0x68] sm:$0xf]
    %v99 = vld [vmem:[%s1 + $0x6c] sm:$0xf]
    %v100 = vld [vmem:[%s1 + $0x70] sm:$0xf]
    %v101 = vld [vmem:[%s1 + $0x74] sm:$0xf]
    %v102 = vld [vmem:[%s1 + $0x78] sm:$0xf]
    %v103 = vld [vmem:[%s1 + $0x7c] sm:$0xf]
    %v104 = vld [vmem:[%s1 + $0x80] sm:$0xf]
    %v105 = vld [vmem:[%s1 + $0x84] sm:$0xf]
    %v106 = vld [vmem:[%s1 + $0x88] sm:$0xf]
    %v107 = vld [vmem:[%s1 + $0x8c] sm:$0xf]
    %v108 = vld [vmem:[%s1 + $0x90] sm:$0xf]
    %v109 = vld [vmem:[%s1 + $0x94] sm:$0xf]
    %v110 = vld [vmem:[%s1 + $0x98] sm:$0xf]
    %v111 = vld [vmem:[%s1 + $0x9c] sm:$0xf]
    %v112 = vld [vmem:[%s1 + $0xa0] sm:$0xf]
    %v113 = vld [vmem:[%s1 + $0xa4] sm:$0xf]
    %v114 = vld [vmem:[%s1 + $0xa8] sm:$0xf]
    %v115 = vld [vmem:[%s1 + $0xac] sm:$0xf]
    %v116 = vld [vmem:[%s1 + $0xb0] sm:$0xf]
    %v117 = vld [vmem:[%s1 + $0xb4] sm:$0xf]
    %v118 = vld [vmem:[%s1 + $0xb8] sm:$0xf]
    %v119 = vld [vmem:[%s1 + $0xbc] sm:$0xf]
    %v120 = vld [vmem:[%s1 + $0xc0] sm:$0xf]
    %v121 = vld [vmem:[%s1 + $0xc4] sm:$0xf]
    %v122 = vld [vmem:[%s1 + $0xc8] sm:$0xf]
    %v123 = vld [vmem:[%s1 + $0xcc] sm:$0xf]
    %v124 = vld [vmem:[%s1 + $0xd0] sm:$0xf]
    %v125 = vld [vmem:[%s1 + $0xd4] sm:$0xf]
    %v126 = vld [vmem:[%s1 + $0xd8] sm:$0xf]
    %v127 = vld [vmem:[%s1 + $0xdc] sm:$0xf]
    %v128 = vld [vmem:[%s1 + $0xe0] sm:$0xf]
    %v129 = vld [vmem:[%s1 + $0xe4] sm:$0xf]
    %v130 = vld [vmem:[%s1 + $0xe8] sm:$0xf]
    %v131 = vld [vmem:[%s1 + $0xec] sm:$0xf]
    %v132 = vld [vmem:[%s1 + $0xf0] sm:$0xf]
    %v133 = vld [vmem:[%s1 + $0xf4] sm:$0xf]
    %v134 = vld [vmem:[%s1 + $0xf8] sm:$0xf]
    %v135 = vld [vmem:[%s1 + $0xfc] sm:$0xf]
    %v136 = vld [vmem:[%s1 + $0x100] sm:$0xf]
    %v137 = vld [vmem:[%s1 + $0x104] sm:$0xf]
    %v138 = vld [vmem:[%s1 + $0x108] sm:$0xf]
    %v139 = vld [vmem:[%s1 + $0x10c] sm:$0xf]
    %v140 = vld [vmem:[%s1 + $0x110] sm:$0xf]
    %v141 = vld [vmem:[%s1 + $0x114] sm:$0xf]
    %v142 = vld [vmem:[%s1 + $0x118] sm:$0xf]
    %v143 = vld [vmem:[%s1 + $0x11c] sm:$0xf]
    %v144 = vld [vmem:[%s1 + $0x120] sm:$0xf]
    %v145 = vld [vmem:[%s1 + $0x124] sm:$0xf]
    %v146 = vld [vmem:[%s1 + $0x128] sm:$0xf]
    %v147 = vld [vmem:[%s1 + $0x12c] sm:$0xf]
    %v148 = vld [vmem:[%s1 + $0x130] sm:$0xf]
    %v149 = vld [vmem:[%s1 + $0x134] sm:$0xf]
    %v150 = vld [vmem:[%s1 + $0x138] sm:$0xf]
    %v151 = vld [vmem:[%s1 + $0x13c] sm:$0xf]
    %v152 = vld [vmem:[%s1 + $0x140] sm:$0xf]
    %v153 = vld [vmem:[%s1 + $0x144] sm:$0xf]
    %v154 = vld [vmem:[%s1 + $0x148] sm:$0xf]
    %v155 = vld [vmem:[%s1 + $0x14c] sm:$0xf]
    %v156 = vld [vmem:[%s1 + $0x150] sm:$0xf]
    %v157 = vld [vmem:[%s1 + $0x154] sm:$0xf]
    %v158 = vld [vmem:[%s1 + $0x158] sm:$0xf]
    %v159 = vld [vmem:[%s1 + $0x15c] sm:$0xf]
    %v160 = vld [vmem:[%s1 + $0x160] sm:$0xf]
    %v161 = vld [vmem:[%s1 + $0x164] sm:$0xf]
    %v162 = vld [vmem:[%s1 + $0x168] sm:$0xf]
    %v163 = vld [vmem:[%s1 + $0x16c] sm:$0xf]
    %v164 = vld [vmem:[%s1 + $0x170] sm:$0xf]
    %v165 = vld [vmem:[%s1 + $0x174] sm:$0xf]
    %v166 = vld [vmem:[%s1 + $0x178] sm:$0xf]
    %v167 = vld [vmem:[%s1 + $0x17c] sm:$0xf]
    %v168 = vld [vmem:[%s2] sm:$0xff]
    %v169 = vld [vmem:[%s2 + $0x8] sm:$0xff]
    %v170 = vld [vmem:[%s2 + $0x10] sm:$0xff]
    %v171 = vld [vmem:[%s2 + $0x18] sm:$0xff]
    %v172 = vld [vmem:[%s2 + $0x20] sm:$0xff]
    %v173 = vld [vmem:[%s2 + $0x28] sm:$0xff]
    %v174 = vld [vmem:[%s2 + $0x30] sm:$0xff]
    %v175 = vld [vmem:[%s2 + $0x38] sm:$0xff]
    %v176 = vld [vmem:[%s2 + $0x40] sm:$0xff]
    %v177 = vld [vmem:[%s2 + $0x48] sm:$0xff]
    %v178 = vld [vmem:[%s2 + $0x50] sm:$0xff]
    %v179 = vld [vmem:[%s2 + $0x58] sm:$0xff]
    %v180 = vld [vmem:[%s2 + $0x60] sm:$0xff]
    %v181 = vld [vmem:[%s2 + $0x68] sm:$0xff]
    %v182 = vld [vmem:[%s2 + $0x70] sm:$0xff]
    %v183 = vld [vmem:[%s2 + $0x78] sm:$0xff]
    %185 = vset.pattern.permute.xlu0 0
    %186 = vperm.xlu0 %185, %v168
    %v187 = vpop.permute.xlu0 %186
    %190 = vset.pattern.permute.xlu0 0
    %191 = vperm.xlu0 %190, %v169
    %v192 = vpop.permute.xlu0 %191
    %195 = vset.pattern.permute.xlu0 0
    %196 = vperm.xlu0 %195, %v170
    %v197 = vpop.permute.xlu0 %196
    %200 = vset.pattern.permute.xlu0 0
    %201 = vperm.xlu0 %200, %v171
    %v202 = vpop.permute.xlu0 %201
    %205 = vset.pattern.permute.xlu0 0
    %206 = vperm.xlu0 %205, %v172
    %v207 = vpop.permute.xlu0 %206
    %210 = vset.pattern.permute.xlu0 0
    %211 = vperm.xlu0 %210, %v173
    %v212 = vpop.permute.xlu0 %211
    %215 = vset.pattern.permute.xlu0 0
    %216 = vperm.xlu0 %215, %v174
    %v217 = vpop.permute.xlu0 %216
    %220 = vset.pattern.permute.xlu0 0
    %221 = vperm.xlu0 %220, %v175
    %v222 = vpop.permute.xlu0 %221
    %225 = vset.pattern.permute.xlu0 0
    %226 = vperm.xlu0 %225, %v176
    %v227 = vpop.permute.xlu0 %226
    %230 = vset.pattern.permute.xlu0 0
    %231 = vperm.xlu0 %230, %v177
    %v232 = vpop.permute.xlu0 %231
    %235 = vset.pattern.permute.xlu0 0
    %236 = vperm.xlu0 %235, %v178
    %v237 = vpop.permute.xlu0 %236
    %240 = vset.pattern.permute.xlu0 0
    %241 = vperm.xlu0 %240, %v179
    %v242 = vpop.permute.xlu0 %241
    %245 = vset.pattern.permute.xlu0 0
    %246 = vperm.xlu0 %245, %v180
    %v247 = vpop.permute.xlu0 %246
    %250 = vset.pattern.permute.xlu0 0
    %251 = vperm.xlu0 %250, %v181
    %v252 = vpop.permute.xlu0 %251
    %255 = vset.pattern.permute.xlu0 0
    %256 = vperm.xlu0 %255, %v182
    %v257 = vpop.permute.xlu0 %256
    %260 = vset.pattern.permute.xlu0 0
    %261 = vperm.xlu0 %260, %v183
    %v262 = vpop.permute.xlu0 %261
    %v312 = vunpack.c.l.b16 %v24
    %v313 = vunpack.c.h.b16 %v24
    %v314 = vunpack.c.l.b16 %v25
    %v315 = vunpack.c.h.b16 %v25
    %v316 = vunpack.c.l.b16 %v26
    %v317 = vunpack.c.h.b16 %v26
    %v318 = vunpack.c.l.b16 %v27
    %v319 = vunpack.c.h.b16 %v27
    %v320 = vunpack.c.l.b16 %v28
    %v321 = vunpack.c.h.b16 %v28
    %v322 = vunpack.c.l.b16 %v29
    %v323 = vunpack.c.h.b16 %v29
    %v324 = vunpack.c.l.b16 %v30
    %v325 = vunpack.c.h.b16 %v30
    %v326 = vunpack.c.l.b16 %v31
    %v327 = vunpack.c.h.b16 %v31
    %v328 = vunpack.c.l.b16 %v32
    %v329 = vunpack.c.h.b16 %v32
    %v330 = vunpack.c.l.b16 %v33
    %v331 = vunpack.c.h.b16 %v33
    %v332 = vunpack.c.l.b16 %v34
    %v333 = vunpack.c.h.b16 %v34
    %v334 = vunpack.c.l.b16 %v35
    %v335 = vunpack.c.h.b16 %v35
    %v336 = vunpack.c.l.b16 %v36
    %v337 = vunpack.c.h.b16 %v36
    %v338 = vunpack.c.l.b16 %v37
    %v339 = vunpack.c.h.b16 %v37
    %v340 = vunpack.c.l.b16 %v38
    %v341 = vunpack.c.h.b16 %v38
    %v342 = vunpack.c.l.b16 %v39
    %v343 = vunpack.c.h.b16 %v39
    %v344 = vunpack.c.l.b16 %v40
    %v345 = vunpack.c.h.b16 %v40
    %v346 = vunpack.c.l.b16 %v41
    %v347 = vunpack.c.h.b16 %v41
    %v348 = vunpack.c.l.b16 %v42
    %v349 = vunpack.c.h.b16 %v42
    %v350 = vunpack.c.l.b16 %v43
    %v351 = vunpack.c.h.b16 %v43
    %v352 = vunpack.c.l.b16 %v44
    %v353 = vunpack.c.h.b16 %v44
    %v354 = vunpack.c.l.b16 %v45
    %v355 = vunpack.c.h.b16 %v45
    %v356 = vunpack.c.l.b16 %v46
    %v357 = vunpack.c.h.b16 %v46
    %v358 = vunpack.c.l.b16 %v47
    %v359 = vunpack.c.h.b16 %v47
    %v360 = vunpack.c.l.b16 %v48
    %v361 = vunpack.c.h.b16 %v48
    %v362 = vunpack.c.l.b16 %v49
    %v363 = vunpack.c.h.b16 %v49
    %v364 = vunpack.c.l.b16 %v50
    %v365 = vunpack.c.h.b16 %v50
    %v366 = vunpack.c.l.b16 %v51
    %v367 = vunpack.c.h.b16 %v51
    %v368 = vunpack.c.l.b16 %v52
    %v369 = vunpack.c.h.b16 %v52
    %v370 = vunpack.c.l.b16 %v53
    %v371 = vunpack.c.h.b16 %v53
    %v372 = vunpack.c.l.b16 %v54
    %v373 = vunpack.c.h.b16 %v54
    %v374 = vunpack.c.l.b16 %v55
    %v375 = vunpack.c.h.b16 %v55
    %v376 = vunpack.c.l.b16 %v56
    %v377 = vunpack.c.h.b16 %v56
    %v378 = vunpack.c.l.b16 %v57
    %v379 = vunpack.c.h.b16 %v57
    %v380 = vunpack.c.l.b16 %v58
    %v381 = vunpack.c.h.b16 %v58
    %v382 = vunpack.c.l.b16 %v59
    %v383 = vunpack.c.h.b16 %v59
    %v384 = vunpack.c.l.b16 %v60
    %v385 = vunpack.c.h.b16 %v60
    %v386 = vunpack.c.l.b16 %v61
    %v387 = vunpack.c.h.b16 %v61
    %v388 = vunpack.c.l.b16 %v62
    %v389 = vunpack.c.h.b16 %v62
    %v390 = vunpack.c.l.b16 %v63
    %v391 = vunpack.c.h.b16 %v63
    %v392 = vunpack.c.l.b16 %v64
    %v393 = vunpack.c.h.b16 %v64
    %v394 = vunpack.c.l.b16 %v65
    %v395 = vunpack.c.h.b16 %v65
    %v396 = vunpack.c.l.b16 %v66
    %v397 = vunpack.c.h.b16 %v66
    %v398 = vunpack.c.l.b16 %v67
    %v399 = vunpack.c.h.b16 %v67
    %v400 = vunpack.c.l.b16 %v68
    %v401 = vunpack.c.h.b16 %v68
    %v402 = vunpack.c.l.b16 %v69
    %v403 = vunpack.c.h.b16 %v69
    %v404 = vunpack.c.l.b16 %v70
    %v405 = vunpack.c.h.b16 %v70
    %v406 = vunpack.c.l.b16 %v71
    %v407 = vunpack.c.h.b16 %v71
    %v408 = vpack.c.b16 %v318, %v312
    %v409 = vpack.c.b16 %v319, %v313
    %v410 = vpack.c.b16 %v320, %v314
    %v411 = vpack.c.b16 %v321, %v315
    %v412 = vpack.c.b16 %v322, %v316
    %v413 = vpack.c.b16 %v323, %v317
    %v414 = vpack.c.b16 %v330, %v324
    %v415 = vpack.c.b16 %v331, %v325
    %v416 = vpack.c.b16 %v332, %v326
    %v417 = vpack.c.b16 %v333, %v327
    %v418 = vpack.c.b16 %v334, %v328
    %v419 = vpack.c.b16 %v335, %v329
    %v420 = vpack.c.b16 %v342, %v336
    %v421 = vpack.c.b16 %v343, %v337
    %v422 = vpack.c.b16 %v344, %v338
    %v423 = vpack.c.b16 %v345, %v339
    %v424 = vpack.c.b16 %v346, %v340
    %v425 = vpack.c.b16 %v347, %v341
    %v426 = vpack.c.b16 %v354, %v348
    %v427 = vpack.c.b16 %v355, %v349
    %v428 = vpack.c.b16 %v356, %v350
    %v429 = vpack.c.b16 %v357, %v351
    %v430 = vpack.c.b16 %v358, %v352
    %v431 = vpack.c.b16 %v359, %v353
    %v432 = vpack.c.b16 %v366, %v360
    %v433 = vpack.c.b16 %v367, %v361
    %v434 = vpack.c.b16 %v368, %v362
    %v435 = vpack.c.b16 %v369, %v363
    %v436 = vpack.c.b16 %v370, %v364
    %v437 = vpack.c.b16 %v371, %v365
    %v438 = vpack.c.b16 %v378, %v372
    %v439 = vpack.c.b16 %v379, %v373
    %v440 = vpack.c.b16 %v380, %v374
    %v441 = vpack.c.b16 %v381, %v375
    %v442 = vpack.c.b16 %v382, %v376
    %v443 = vpack.c.b16 %v383, %v377
    %v444 = vpack.c.b16 %v390, %v384
    %v445 = vpack.c.b16 %v391, %v385
    %v446 = vpack.c.b16 %v392, %v386
    %v447 = vpack.c.b16 %v393, %v387
    %v448 = vpack.c.b16 %v394, %v388
    %v449 = vpack.c.b16 %v395, %v389
    %v450 = vpack.c.b16 %v402, %v396
    %v451 = vpack.c.b16 %v403, %v397
    %v452 = vpack.c.b16 %v404, %v398
    %v453 = vpack.c.b16 %v405, %v399
    %v454 = vpack.c.b16 %v406, %v400
    %v455 = vpack.c.b16 %v407, %v401
    %v600 = vunpack.c.l.b16 %v72
    %v601 = vunpack.c.l.b16 %v73
    %v602 = vunpack.c.l.b16 %v74
    %v603 = vunpack.c.l.b16 %v75
    %v604 = vunpack.c.l.b16 %v76
    %v605 = vunpack.c.l.b16 %v77
    %v606 = vunpack.c.l.b16 %v78
    %v607 = vunpack.c.l.b16 %v79
    %v608 = vunpack.c.l.b16 %v80
    %v609 = vunpack.c.l.b16 %v81
    %v610 = vunpack.c.l.b16 %v82
    %v611 = vunpack.c.l.b16 %v83
    %v612 = vunpack.c.l.b16 %v84
    %v613 = vunpack.c.l.b16 %v85
    %v614 = vunpack.c.l.b16 %v86
    %v615 = vunpack.c.l.b16 %v87
    %v616 = vunpack.c.l.b16 %v88
    %v617 = vunpack.c.l.b16 %v89
    %v618 = vunpack.c.l.b16 %v90
    %v619 = vunpack.c.l.b16 %v91
    %v620 = vunpack.c.l.b16 %v92
    %v621 = vunpack.c.l.b16 %v93
    %v622 = vunpack.c.l.b16 %v94
    %v623 = vunpack.c.l.b16 %v95
    %v624 = vunpack.c.l.b16 %v96
    %v625 = vunpack.c.l.b16 %v97
    %v626 = vunpack.c.l.b16 %v98
    %v627 = vunpack.c.l.b16 %v99
    %v628 = vunpack.c.l.b16 %v100
    %v629 = vunpack.c.l.b16 %v101
    %v630 = vunpack.c.l.b16 %v102
    %v631 = vunpack.c.l.b16 %v103
    %v632 = vunpack.c.l.b16 %v104
    %v633 = vunpack.c.l.b16 %v105
    %v634 = vunpack.c.l.b16 %v106
    %v635 = vunpack.c.l.b16 %v107
    %v636 = vunpack.c.l.b16 %v108
    %v637 = vunpack.c.l.b16 %v109
    %v638 = vunpack.c.l.b16 %v110
    %v639 = vunpack.c.l.b16 %v111
    %v640 = vunpack.c.l.b16 %v112
    %v641 = vunpack.c.l.b16 %v113
    %v642 = vunpack.c.l.b16 %v114
    %v643 = vunpack.c.l.b16 %v115
    %v644 = vunpack.c.l.b16 %v116
    %v645 = vunpack.c.l.b16 %v117
    %v646 = vunpack.c.l.b16 %v118
    %v647 = vunpack.c.l.b16 %v119
    %v648 = vunpack.c.l.b16 %v120
    %v649 = vunpack.c.l.b16 %v121
    %v650 = vunpack.c.l.b16 %v122
    %v651 = vunpack.c.l.b16 %v123
    %v652 = vunpack.c.l.b16 %v124
    %v653 = vunpack.c.l.b16 %v125
    %v654 = vunpack.c.l.b16 %v126
    %v655 = vunpack.c.l.b16 %v127
    %v656 = vunpack.c.l.b16 %v128
    %v657 = vunpack.c.l.b16 %v129
    %v658 = vunpack.c.l.b16 %v130
    %v659 = vunpack.c.l.b16 %v131
    %v660 = vunpack.c.l.b16 %v132
    %v661 = vunpack.c.l.b16 %v133
    %v662 = vunpack.c.l.b16 %v134
    %v663 = vunpack.c.l.b16 %v135
    %v664 = vunpack.c.l.b16 %v136
    %v665 = vunpack.c.l.b16 %v137
    %v666 = vunpack.c.l.b16 %v138
    %v667 = vunpack.c.l.b16 %v139
    %v668 = vunpack.c.l.b16 %v140
    %v669 = vunpack.c.l.b16 %v141
    %v670 = vunpack.c.l.b16 %v142
    %v671 = vunpack.c.l.b16 %v143
    %v672 = vunpack.c.l.b16 %v144
    %v673 = vunpack.c.l.b16 %v145
    %v674 = vunpack.c.l.b16 %v146
    %v675 = vunpack.c.l.b16 %v147
    %v676 = vunpack.c.l.b16 %v148
    %v677 = vunpack.c.l.b16 %v149
    %v678 = vunpack.c.l.b16 %v150
    %v679 = vunpack.c.l.b16 %v151
    %v680 = vunpack.c.l.b16 %v152
    %v681 = vunpack.c.l.b16 %v153
    %v682 = vunpack.c.l.b16 %v154
    %v683 = vunpack.c.l.b16 %v155
    %v684 = vunpack.c.l.b16 %v156
    %v685 = vunpack.c.l.b16 %v157
    %v686 = vunpack.c.l.b16 %v158
    %v687 = vunpack.c.l.b16 %v159
    %v688 = vunpack.c.l.b16 %v160
    %v689 = vunpack.c.l.b16 %v161
    %v690 = vunpack.c.l.b16 %v162
    %v691 = vunpack.c.l.b16 %v163
    %v692 = vunpack.c.l.b16 %v164
    %v693 = vunpack.c.l.b16 %v165
    %v694 = vunpack.c.l.b16 %v166
    %v695 = vunpack.c.l.b16 %v167
    %v696 = vpack.c.b16 %v601, %v600
    %v697 = vpack.c.b16 %v603, %v602
    %v698 = vpack.c.b16 %v605, %v604
    %v699 = vpack.c.b16 %v607, %v606
    %v700 = vpack.c.b16 %v609, %v608
    %v701 = vpack.c.b16 %v611, %v610
    %v702 = vpack.c.b16 %v613, %v612
    %v703 = vpack.c.b16 %v615, %v614
    %v704 = vpack.c.b16 %v617, %v616
    %v705 = vpack.c.b16 %v619, %v618
    %v706 = vpack.c.b16 %v621, %v620
    %v707 = vpack.c.b16 %v623, %v622
    %v708 = vpack.c.b16 %v625, %v624
    %v709 = vpack.c.b16 %v627, %v626
    %v710 = vpack.c.b16 %v629, %v628
    %v711 = vpack.c.b16 %v631, %v630
    %v712 = vpack.c.b16 %v633, %v632
    %v713 = vpack.c.b16 %v635, %v634
    %v714 = vpack.c.b16 %v637, %v636
    %v715 = vpack.c.b16 %v639, %v638
    %v716 = vpack.c.b16 %v641, %v640
    %v717 = vpack.c.b16 %v643, %v642
    %v718 = vpack.c.b16 %v645, %v644
    %v719 = vpack.c.b16 %v647, %v646
    %v720 = vpack.c.b16 %v649, %v648
    %v721 = vpack.c.b16 %v651, %v650
    %v722 = vpack.c.b16 %v653, %v652
    %v723 = vpack.c.b16 %v655, %v654
    %v724 = vpack.c.b16 %v657, %v656
    %v725 = vpack.c.b16 %v659, %v658
    %v726 = vpack.c.b16 %v661, %v660
    %v727 = vpack.c.b16 %v663, %v662
    %v728 = vpack.c.b16 %v665, %v664
    %v729 = vpack.c.b16 %v667, %v666
    %v730 = vpack.c.b16 %v669, %v668
    %v731 = vpack.c.b16 %v671, %v670
    %v732 = vpack.c.b16 %v673, %v672
    %v733 = vpack.c.b16 %v675, %v674
    %v734 = vpack.c.b16 %v677, %v676
    %v735 = vpack.c.b16 %v679, %v678
    %v736 = vpack.c.b16 %v681, %v680
    %v737 = vpack.c.b16 %v683, %v682
    %v738 = vpack.c.b16 %v685, %v684
    %v739 = vpack.c.b16 %v687, %v686
    %v740 = vpack.c.b16 %v689, %v688
    %v741 = vpack.c.b16 %v691, %v690
    %v742 = vpack.c.b16 %v693, %v692
    %v743 = vpack.c.b16 %v695, %v694
    %792 = vmatprep.subr.bf16.mxu0 0
    %793 = vmatpush1.bf16.msra.mxu0 %v696
    %794 = vmatprep.subr.bf16.mxu0 0
    %795 = vmatpush1.bf16.msra.mxu0 %v697
    %796 = vmatprep.subr.bf16.mxu0 0
    %797 = vmatpush1.bf16.msra.mxu0 %v698
    %798 = vmatprep.subr.bf16.mxu0 0
    %799 = vmatpush1.bf16.msra.mxu0 %v699
    %800 = vmatprep.subr.bf16.mxu0 0
    %801 = vmatpush1.bf16.msra.mxu0 %v700
    %802 = vmatprep.subr.bf16.mxu0 0
    %803 = vmatpush1.bf16.msra.mxu0 %v701
    %804 = vmatprep.subr.bf16.mxu0 0
    %805 = vmatpush1.bf16.msra.mxu0 %v702
    %806 = vmatprep.subr.bf16.mxu0 0
    %807 = vmatpush1.bf16.msra.mxu0 %v703
    %808 = vmatprep.subr.bf16.mxu0 0
    %809 = vmatpush1.bf16.msra.mxu0 %v704
    %810 = vmatprep.subr.bf16.mxu0 0
    %811 = vmatpush1.bf16.msra.mxu0 %v705
    %812 = vmatprep.subr.bf16.mxu0 0
    %813 = vmatpush1.bf16.msra.mxu0 %v706
    %814 = vmatprep.subr.bf16.mxu0 0
    %815 = vmatpush1.bf16.msra.mxu0 %v707
    %816 = vmatprep.subr.bf16.mxu0 0
    %817 = vmatpush1.bf16.msra.mxu0 %v708
    %818 = vmatprep.subr.bf16.mxu0 0
    %819 = vmatpush1.bf16.msra.mxu0 %v709
    %820 = vmatprep.subr.bf16.mxu0 0
    %821 = vmatpush1.bf16.msra.mxu0 %v710
    %822 = vmatprep.subr.bf16.mxu0 0
    %823 = vmatpush1.bf16.msra.mxu0 %v711
    %824 = vmatprep.mubr.bf16.mxu0 %v409
    %825 = vmatmul.mubr.bf16.gmra.mrb[0].mxu0 %v408
    %v826 = vpop.f32.mrb[0].mxu0
    %v827 = vadd.f32 %v187, %v826
    %v828 = vpop.f32.mrb[0].mxu0
    %v829 = vpop.f32.mrb[0].mxu0
    %v830 = vadd.f32 %v192, %v829
    %v831 = vpop.f32.mrb[0].mxu0
    %832 = vmatprep.mubr.bf16.mxu0 %v415
    %833 = vmatmul.mubr.bf16.gmra.mrb[0].mxu0 %v414
    %v834 = vpop.f32.mrb[0].mxu0
    %v835 = vadd.f32 %v197, %v834
    %v836 = vpop.f32.mrb[0].mxu0
    %v837 = vpop.f32.mrb[0].mxu0
    %v838 = vadd.f32 %v202, %v837
    %v839 = vpop.f32.mrb[0].mxu0
    %840 = vmatprep.mubr.bf16.mxu0 %v421
    %841 = vmatmul.mubr.bf16.gmra.mrb[0].mxu0 %v420
    %v842 = vpop.f32.mrb[0].mxu0
    %v843 = vadd.f32 %v207, %v842
    %v844 = vpop.f32.mrb[0].mxu0
    %v845 = vpop.f32.mrb[0].mxu0
    %v846 = vadd.f32 %v212, %v845
    %v847 = vpop.f32.mrb[0].mxu0
    %848 = vmatprep.mubr.bf16.mxu0 %v427
    %849 = vmatmul.mubr.bf16.gmra.mrb[0].mxu0 %v426
    %v850 = vpop.f32.mrb[0].mxu0
    %v851 = vadd.f32 %v217, %v850
    %v852 = vpop.f32.mrb[0].mxu0
    %v853 = vpop.f32.mrb[0].mxu0
    %v854 = vadd.f32 %v222, %v853
    %v855 = vpop.f32.mrb[0].mxu0
    %856 = vmatprep.mubr.bf16.mxu0 %v433
    %857 = vmatmul.mubr.bf16.gmra.mrb[0].mxu0 %v432
    %v858 = vpop.f32.mrb[0].mxu0
    %v859 = vadd.f32 %v227, %v858
    %v860 = vpop.f32.mrb[0].mxu0
    %v861 = vpop.f32.mrb[0].mxu0
    %v862 = vadd.f32 %v232, %v861
    %v863 = vpop.f32.mrb[0].mxu0
    %864 = vmatprep.mubr.bf16.mxu0 %v439
    %865 = vmatmul.mubr.bf16.gmra.mrb[0].mxu0 %v438
    %v866 = vpop.f32.mrb[0].mxu0
    %v867 = vadd.f32 %v237, %v866
    %v868 = vpop.f32.mrb[0].mxu0
    %v869 = vpop.f32.mrb[0].mxu0
    %v870 = vadd.f32 %v242, %v869
    %v871 = vpop.f32.mrb[0].mxu0
    %872 = vmatprep.mubr.bf16.mxu0 %v445
    %873 = vmatmul.mubr.bf16.gmra.mrb[0].mxu0 %v444
    %v874 = vpop.f32.mrb[0].mxu0
    %v875 = vadd.f32 %v247, %v874
    %v876 = vpop.f32.mrb[0].mxu0
    %v877 = vpop.f32.mrb[0].mxu0
    %v878 = vadd.f32 %v252, %v877
    %v879 = vpop.f32.mrb[0].mxu0
    %880 = vmatprep.mubr.bf16.mxu0 %v451
    %881 = vmatmul.mubr.bf16.gmra.mrb[0].mxu0 %v450
    %v882 = vpop.f32.mrb[0].mxu0
    %v883 = vadd.f32 %v257, %v882
    %v884 = vpop.f32.mrb[0].mxu0
    %v885 = vpop.f32.mrb[0].mxu0
    %v886 = vadd.f32 %v262, %v885
    %v887 = vpop.f32.mrb[0].mxu0
    %888 = vdwg.mxu0
    %889 = vmatprep.subr.bf16.mxu0 0
    %890 = vmatpush1.bf16.msra.mxu0 %v712
    %891 = vmatprep.subr.bf16.mxu0 0
    %892 = vmatpush1.bf16.msra.mxu0 %v713
    %893 = vmatprep.subr.bf16.mxu0 0
    %894 = vmatpush1.bf16.msra.mxu0 %v714
    %895 = vmatprep.subr.bf16.mxu0 0
    %896 = vmatpush1.bf16.msra.mxu0 %v715
    %897 = vmatprep.subr.bf16.mxu0 0
    %898 = vmatpush1.bf16.msra.mxu0 %v716
    %899 = vmatprep.subr.bf16.mxu0 0
    %900 = vmatpush1.bf16.msra.mxu0 %v717
    %901 = vmatprep.subr.bf16.mxu0 0
    %902 = vmatpush1.bf16.msra.mxu0 %v718
    %903 = vmatprep.subr.bf16.mxu0 0
    %904 = vmatpush1.bf16.msra.mxu0 %v719
    %905 = vmatprep.subr.bf16.mxu0 0
    %906 = vmatpush1.bf16.msra.mxu0 %v720
    %907 = vmatprep.subr.bf16.mxu0 0
    %908 = vmatpush1.bf16.msra.mxu0 %v721
    %909 = vmatprep.subr.bf16.mxu0 0
    %910 = vmatpush1.bf16.msra.mxu0 %v722
    %911 = vmatprep.subr.bf16.mxu0 0
    %912 = vmatpush1.bf16.msra.mxu0 %v723
    %913 = vmatprep.subr.bf16.mxu0 0
    %914 = vmatpush1.bf16.msra.mxu0 %v724
    %915 = vmatprep.subr.bf16.mxu0 0
    %916 = vmatpush1.bf16.msra.mxu0 %v725
    %917 = vmatprep.subr.bf16.mxu0 0
    %918 = vmatpush1.bf16.msra.mxu0 %v726
    %919 = vmatprep.subr.bf16.mxu0 0
    %920 = vmatpush1.bf16.msra.mxu0 %v727
    %921 = vmatprep.mubr.bf16.mxu0 %v411
    %922 = vmatmul.mubr.bf16.gmra.mrb[0].mxu0 %v410
    %v923 = vpop.f32.mrb[0].mxu0
    %v924 = vadd.f32 %v827, %v923
    %v925 = vpop.f32.mrb[0].mxu0
    %v926 = vpop.f32.mrb[0].mxu0
    %v927 = vadd.f32 %v830, %v926
    %v928 = vpop.f32.mrb[0].mxu0
    %929 = vmatprep.mubr.bf16.mxu0 %v417
    %930 = vmatmul.mubr.bf16.gmra.mrb[0].mxu0 %v416
    %v931 = vpop.f32.mrb[0].mxu0
    %v932 = vadd.f32 %v835, %v931
    %v933 = vpop.f32.mrb[0].mxu0
    %v934 = vpop.f32.mrb[0].mxu0
    %v935 = vadd.f32 %v838, %v934
    %v936 = vpop.f32.mrb[0].mxu0
    %937 = vmatprep.mubr.bf16.mxu0 %v423
    %938 = vmatmul.mubr.bf16.gmra.mrb[0].mxu0 %v422
    %v939 = vpop.f32.mrb[0].mxu0
    %v940 = vadd.f32 %v843, %v939
    %v941 = vpop.f32.mrb[0].mxu0
    %v942 = vpop.f32.mrb[0].mxu0
    %v943 = vadd.f32 %v846, %v942
    %v944 = vpop.f32.mrb[0].mxu0
    %945 = vmatprep.mubr.bf16.mxu0 %v429
    %946 = vmatmul.mubr.bf16.gmra.mrb[0].mxu0 %v428
    %v947 = vpop.f32.mrb[0].mxu0
    %v948 = vadd.f32 %v851, %v947
    %v949 = vpop.f32.mrb[0].mxu0
    %v950 = vpop.f32.mrb[0].mxu0
    %v951 = vadd.f32 %v854, %v950
    %v952 = vpop.f32.mrb[0].mxu0
    %953 = vmatprep.mubr.bf16.mxu0 %v435
    %954 = vmatmul.mubr.bf16.gmra.mrb[0].mxu0 %v434
    %v955 = vpop.f32.mrb[0].mxu0
    %v956 = vadd.f32 %v859, %v955
    %v957 = vpop.f32.mrb[0].mxu0
    %v958 = vpop.f32.mrb[0].mxu0
    %v959 = vadd.f32 %v862, %v958
    %v960 = vpop.f32.mrb[0].mxu0
    %961 = vmatprep.mubr.bf16.mxu0 %v441
    %962 = vmatmul.mubr.bf16.gmra.mrb[0].mxu0 %v440
    %v963 = vpop.f32.mrb[0].mxu0
    %v964 = vadd.f32 %v867, %v963
    %v965 = vpop.f32.mrb[0].mxu0
    %v966 = vpop.f32.mrb[0].mxu0
    %v967 = vadd.f32 %v870, %v966
    %v968 = vpop.f32.mrb[0].mxu0
    %969 = vmatprep.mubr.bf16.mxu0 %v447
    %970 = vmatmul.mubr.bf16.gmra.mrb[0].mxu0 %v446
    %v971 = vpop.f32.mrb[0].mxu0
    %v972 = vadd.f32 %v875, %v971
    %v973 = vpop.f32.mrb[0].mxu0
    %v974 = vpop.f32.mrb[0].mxu0
    %v975 = vadd.f32 %v878, %v974
    %v976 = vpop.f32.mrb[0].mxu0
    %977 = vmatprep.mubr.bf16.mxu0 %v453
    %978 = vmatmul.mubr.bf16.gmra.mrb[0].mxu0 %v452
    %v979 = vpop.f32.mrb[0].mxu0
    %v980 = vadd.f32 %v883, %v979
    %v981 = vpop.f32.mrb[0].mxu0
    %v982 = vpop.f32.mrb[0].mxu0
    %v983 = vadd.f32 %v886, %v982
    %v984 = vpop.f32.mrb[0].mxu0
    %985 = vdwg.mxu0
    %986 = vmatprep.subr.bf16.mxu0 0
    %987 = vmatpush1.bf16.msra.mxu0 %v728
    %988 = vmatprep.subr.bf16.mxu0 0
    %989 = vmatpush1.bf16.msra.mxu0 %v729
    %990 = vmatprep.subr.bf16.mxu0 0
    %991 = vmatpush1.bf16.msra.mxu0 %v730
    %992 = vmatprep.subr.bf16.mxu0 0
    %993 = vmatpush1.bf16.msra.mxu0 %v731
    %994 = vmatprep.subr.bf16.mxu0 0
    %995 = vmatpush1.bf16.msra.mxu0 %v732
    %996 = vmatprep.subr.bf16.mxu0 0
    %997 = vmatpush1.bf16.msra.mxu0 %v733
    %998 = vmatprep.subr.bf16.mxu0 0
    %999 = vmatpush1.bf16.msra.mxu0 %v734
    %1000 = vmatprep.subr.bf16.mxu0 0
    %1001 = vmatpush1.bf16.msra.mxu0 %v735
    %1002 = vmatprep.subr.bf16.mxu0 0
    %1003 = vmatpush1.bf16.msra.mxu0 %v736
    %1004 = vmatprep.subr.bf16.mxu0 0
    %1005 = vmatpush1.bf16.msra.mxu0 %v737
    %1006 = vmatprep.subr.bf16.mxu0 0
    %1007 = vmatpush1.bf16.msra.mxu0 %v738
    %1008 = vmatprep.subr.bf16.mxu0 0
    %1009 = vmatpush1.bf16.msra.mxu0 %v739
    %1010 = vmatprep.subr.bf16.mxu0 0
    %1011 = vmatpush1.bf16.msra.mxu0 %v740
    %1012 = vmatprep.subr.bf16.mxu0 0
    %1013 = vmatpush1.bf16.msra.mxu0 %v741
    %1014 = vmatprep.subr.bf16.mxu0 0
    %1015 = vmatpush1.bf16.msra.mxu0 %v742
    %1016 = vmatprep.subr.bf16.mxu0 0
    %1017 = vmatpush1.bf16.msra.mxu0 %v743
    %1018 = vmatprep.mubr.bf16.mxu0 %v413
    %1019 = vmatmul.mubr.bf16.gmra.mrb[0].mxu0 %v412
    %v1020 = vpop.f32.mrb[0].mxu0
    %v1021 = vadd.f32 %v924, %v1020
    %v1022 = vpop.f32.mrb[0].mxu0
    %v1023 = vpop.f32.mrb[0].mxu0
    %v1024 = vadd.f32 %v927, %v1023
    %v1025 = vpop.f32.mrb[0].mxu0
    %1026 = vmatprep.mubr.bf16.mxu0 %v419
    %1027 = vmatmul.mubr.bf16.gmra.mrb[0].mxu0 %v418
    %v1028 = vpop.f32.mrb[0].mxu0
    %v1029 = vadd.f32 %v932, %v1028
    %v1030 = vpop.f32.mrb[0].mxu0
    %v1031 = vpop.f32.mrb[0].mxu0
    %v1032 = vadd.f32 %v935, %v1031
    %v1033 = vpop.f32.mrb[0].mxu0
    %1034 = vmatprep.mubr.bf16.mxu0 %v425
    %1035 = vmatmul.mubr.bf16.gmra.mrb[0].mxu0 %v424
    %v1036 = vpop.f32.mrb[0].mxu0
    %v1037 = vadd.f32 %v940, %v1036
    %v1038 = vpop.f32.mrb[0].mxu0
    %v1039 = vpop.f32.mrb[0].mxu0
    %v1040 = vadd.f32 %v943, %v1039
    %v1041 = vpop.f32.mrb[0].mxu0
    %1042 = vmatprep.mubr.bf16.mxu0 %v431
    %1043 = vmatmul.mubr.bf16.gmra.mrb[0].mxu0 %v430
    %v1044 = vpop.f32.mrb[0].mxu0
    %v1045 = vadd.f32 %v948, %v1044
    %v1046 = vpop.f32.mrb[0].mxu0
    %v1047 = vpop.f32.mrb[0].mxu0
    %v1048 = vadd.f32 %v951, %v1047
    %v1049 = vpop.f32.mrb[0].mxu0
    %1050 = vmatprep.mubr.bf16.mxu0 %v437
    %1051 = vmatmul.mubr.bf16.gmra.mrb[0].mxu0 %v436
    %v1052 = vpop.f32.mrb[0].mxu0
    %v1053 = vadd.f32 %v956, %v1052
    %v1054 = vpop.f32.mrb[0].mxu0
    %v1055 = vpop.f32.mrb[0].mxu0
    %v1056 = vadd.f32 %v959, %v1055
    %v1057 = vpop.f32.mrb[0].mxu0
    %1058 = vmatprep.mubr.bf16.mxu0 %v443
    %1059 = vmatmul.mubr.bf16.gmra.mrb[0].mxu0 %v442
    %v1060 = vpop.f32.mrb[0].mxu0
    %v1061 = vadd.f32 %v964, %v1060
    %v1062 = vpop.f32.mrb[0].mxu0
    %v1063 = vpop.f32.mrb[0].mxu0
    %v1064 = vadd.f32 %v967, %v1063
    %v1065 = vpop.f32.mrb[0].mxu0
    %1066 = vmatprep.mubr.bf16.mxu0 %v449
    %1067 = vmatmul.mubr.bf16.gmra.mrb[0].mxu0 %v448
    %v1068 = vpop.f32.mrb[0].mxu0
    %v1069 = vadd.f32 %v972, %v1068
    %v1070 = vpop.f32.mrb[0].mxu0
    %v1071 = vpop.f32.mrb[0].mxu0
    %v1072 = vadd.f32 %v975, %v1071
    %v1073 = vpop.f32.mrb[0].mxu0
    %1074 = vmatprep.mubr.bf16.mxu0 %v455
    %1075 = vmatmul.mubr.bf16.gmra.mrb[0].mxu0 %v454
    %v1076 = vpop.f32.mrb[0].mxu0
    %v1077 = vadd.f32 %v980, %v1076
    %v1078 = vpop.f32.mrb[0].mxu0
    %v1079 = vpop.f32.mrb[0].mxu0
    %v1080 = vadd.f32 %v983, %v1079
    %v1081 = vpop.f32.mrb[0].mxu0
    %1082 = vdwg.mxu0
    %vm1083 = vcmp.ge.f32.partialorder %v1021, 0.0
    %vm1084 = vcmp.ge.f32.partialorder %v1024, 0.0
    %vm1085 = vcmp.ge.f32.partialorder %v1029, 0.0
    %vm1086 = vcmp.ge.f32.partialorder %v1032, 0.0
    %vm1087 = vcmp.ge.f32.partialorder %v1037, 0.0
    %vm1088 = vcmp.ge.f32.partialorder %v1040, 0.0
    %vm1089 = vcmp.ge.f32.partialorder %v1045, 0.0
    %vm1090 = vcmp.ge.f32.partialorder %v1048, 0.0
    %vm1091 = vcmp.ge.f32.partialorder %v1053, 0.0
    %vm1092 = vcmp.ge.f32.partialorder %v1056, 0.0
    %vm1093 = vcmp.ge.f32.partialorder %v1061, 0.0
    %vm1094 = vcmp.ge.f32.partialorder %v1064, 0.0
    %vm1095 = vcmp.ge.f32.partialorder %v1069, 0.0
    %vm1096 = vcmp.ge.f32.partialorder %v1072, 0.0
    %vm1097 = vcmp.ge.f32.partialorder %v1077, 0.0
    %vm1098 = vcmp.ge.f32.partialorder %v1080, 0.0
    %v1099 = vmul.f32 %v1021, 0.1
    %v1100 = vmul.f32 %v1024, 0.1
    %v1101 = vmul.f32 %v1029, 0.1
    %v1102 = vmul.f32 %v1032, 0.1
    %v1103 = vmul.f32 %v1037, 0.1
    %v1104 = vmul.f32 %v1040, 0.1
    %v1105 = vmul.f32 %v1045, 0.1
    %v1106 = vmul.f32 %v1048, 0.1
    %v1107 = vmul.f32 %v1053, 0.1
    %v1108 = vmul.f32 %v1056, 0.1
    %v1109 = vmul.f32 %v1061, 0.1
    %v1110 = vmul.f32 %v1064, 0.1
    %v1111 = vmul.f32 %v1069, 0.1
    %v1112 = vmul.f32 %v1072, 0.1
    %v1113 = vmul.f32 %v1077, 0.1
    %v1114 = vmul.f32 %v1080, 0.1
    %v1115 = vsel %vm1083, %v1021, %v1099
    %v1116 = vsel %vm1084, %v1024, %v1100
    %v1117 = vsel %vm1085, %v1029, %v1101
    %v1118 = vsel %vm1086, %v1032, %v1102
    %v1119 = vsel %vm1087, %v1037, %v1103
    %v1120 = vsel %vm1088, %v1040, %v1104
    %v1121 = vsel %vm1089, %v1045, %v1105
    %v1122 = vsel %vm1090, %v1048, %v1106
    %v1123 = vsel %vm1091, %v1053, %v1107
    %v1124 = vsel %vm1092, %v1056, %v1108
    %v1125 = vsel %vm1093, %v1061, %v1109
    %v1126 = vsel %vm1094, %v1064, %v1110
    %v1127 = vsel %vm1095, %v1069, %v1111
    %v1128 = vsel %vm1096, %v1072, %v1112
    %v1129 = vsel %vm1097, %v1077, %v1113
    %v1130 = vsel %vm1098, %v1080, %v1114
    %v1131 = vpack.c.bf16 %v1116, %v1115
    %v1132 = vpack.c.bf16 %v1118, %v1117
    %v1133 = vpack.c.bf16 %v1120, %v1119
    %v1134 = vpack.c.bf16 %v1122, %v1121
    %v1135 = vpack.c.bf16 %v1124, %v1123
    %v1136 = vpack.c.bf16 %v1126, %v1125
    %v1137 = vpack.c.bf16 %v1128, %v1127
    %v1138 = vpack.c.bf16 %v1130, %v1129
    %v1139 = vunpack.c.l.bf16 %v1131
    %v1140 = vunpack.c.h.bf16 %v1131
    %v1141 = vunpack.c.l.bf16 %v1132
    %v1142 = vunpack.c.h.bf16 %v1132
    %v1143 = vunpack.c.l.bf16 %v1133
    %v1144 = vunpack.c.h.bf16 %v1133
    %v1145 = vunpack.c.l.bf16 %v1134
    %v1146 = vunpack.c.h.bf16 %v1134
    %v1147 = vunpack.c.l.bf16 %v1135
    %v1148 = vunpack.c.h.bf16 %v1135
    %v1149 = vunpack.c.l.bf16 %v1136
    %v1150 = vunpack.c.h.bf16 %v1136
    %v1151 = vunpack.c.l.bf16 %v1137
    %v1152 = vunpack.c.h.bf16 %v1137
    %v1153 = vunpack.c.l.bf16 %v1138
    %v1154 = vunpack.c.h.bf16 %v1138
    %v1155 = vld [vmem:[%s3] sm:$0xf]
    %v1156 = vld [vmem:[%s3 + $0x4] sm:$0xf]
    %v1157 = vld [vmem:[%s3 + $0x8] sm:$0xf]
    %v1158 = vld [vmem:[%s3 + $0xc] sm:$0xf]
    %v1159 = vld [vmem:[%s3 + $0x10] sm:$0xf]
    %v1160 = vld [vmem:[%s3 + $0x14] sm:$0xf]
    %v1161 = vld [vmem:[%s3 + $0x18] sm:$0xf]
    %v1162 = vld [vmem:[%s3 + $0x1c] sm:$0xf]
    %v1163 = vld [vmem:[%s3 + $0x20] sm:$0xf]
    %v1164 = vld [vmem:[%s3 + $0x24] sm:$0xf]
    %v1165 = vld [vmem:[%s3 + $0x28] sm:$0xf]
    %v1166 = vld [vmem:[%s3 + $0x2c] sm:$0xf]
    %v1167 = vld [vmem:[%s3 + $0x30] sm:$0xf]
    %v1168 = vld [vmem:[%s3 + $0x34] sm:$0xf]
    %v1169 = vld [vmem:[%s3 + $0x38] sm:$0xf]
    %v1170 = vld [vmem:[%s3 + $0x3c] sm:$0xf]
    %v1171 = vunpack.c.l.bf16 %v1155
    %v1172 = vunpack.c.l.bf16 %v1156
    %v1173 = vunpack.c.l.bf16 %v1157
    %v1174 = vunpack.c.l.bf16 %v1158
    %v1175 = vunpack.c.l.bf16 %v1159
    %v1176 = vunpack.c.l.bf16 %v1160
    %v1177 = vunpack.c.l.bf16 %v1161
    %v1178 = vunpack.c.l.bf16 %v1162
    %v1179 = vunpack.c.l.bf16 %v1163
    %v1180 = vunpack.c.l.bf16 %v1164
    %v1181 = vunpack.c.l.bf16 %v1165
    %v1182 = vunpack.c.l.bf16 %v1166
    %v1183 = vunpack.c.l.bf16 %v1167
    %v1184 = vunpack.c.l.bf16 %v1168
    %v1185 = vunpack.c.l.bf16 %v1169
    %v1186 = vunpack.c.l.bf16 %v1170
    %v1187 = vmul.f32 %v1139, %v1171
    %v1188 = vmul.f32 %v1140, %v1172
    %v1189 = vmul.f32 %v1141, %v1173
    %v1190 = vmul.f32 %v1142, %v1174
    %v1191 = vmul.f32 %v1143, %v1175
    %v1192 = vmul.f32 %v1144, %v1176
    %v1193 = vmul.f32 %v1145, %v1177
    %v1194 = vmul.f32 %v1146, %v1178
    %v1195 = vmul.f32 %v1147, %v1179
    %v1196 = vmul.f32 %v1148, %v1180
    %v1197 = vmul.f32 %v1149, %v1181
    %v1198 = vmul.f32 %v1150, %v1182
    %v1199 = vmul.f32 %v1151, %v1183
    %v1200 = vmul.f32 %v1152, %v1184
    %v1201 = vmul.f32 %v1153, %v1185
    %v1202 = vmul.f32 %v1154, %v1186
    %vm1203 = vcmask 146432
    %v1204 = vsel %vm1203, %v1187, 0.0
    %v1205 = vsel %vm1203, %v1188, 0.0
    %v1206 = vadd.f32 %v1204, %v1205
    %v1207 = vsel %vm1203, %v1189, 0.0
    %v1208 = vadd.f32 %v1206, %v1207
    %v1209 = vsel %vm1203, %v1190, 0.0
    %v1210 = vadd.f32 %v1208, %v1209
    %v1211 = vsel %vm1203, %v1191, 0.0
    %v1212 = vadd.f32 %v1210, %v1211
    %v1213 = vsel %vm1203, %v1192, 0.0
    %v1214 = vadd.f32 %v1212, %v1213
    %v1215 = vsel %vm1203, %v1193, 0.0
    %v1216 = vadd.f32 %v1214, %v1215
    %v1217 = vsel %vm1203, %v1194, 0.0
    %v1218 = vadd.f32 %v1216, %v1217
    %v1219 = vsel %vm1203, %v1195, 0.0
    %v1220 = vadd.f32 %v1218, %v1219
    %v1221 = vsel %vm1203, %v1196, 0.0
    %v1222 = vadd.f32 %v1220, %v1221
    %v1223 = vsel %vm1203, %v1197, 0.0
    %v1224 = vadd.f32 %v1222, %v1223
    %v1225 = vsel %vm1203, %v1198, 0.0
    %v1226 = vadd.f32 %v1224, %v1225
    %v1227 = vsel %vm1203, %v1199, 0.0
    %v1228 = vadd.f32 %v1226, %v1227
    %v1229 = vsel %vm1203, %v1200, 0.0
    %v1230 = vadd.f32 %v1228, %v1229
    %v1231 = vsel %vm1203, %v1201, 0.0
    %v1232 = vadd.f32 %v1230, %v1231
    %v1233 = vsel %vm1203, %v1202, 0.0
    %v1234 = vadd.f32 %v1232, %v1233
    %v1235 = vrot.slane %v1234, 4
    %v1236 = vadd.f32 %v1234, %v1235
    %v1237 = vrot.slane %v1236, 2
    %v1238 = vadd.f32 %v1236, %v1237
    %v1239 = vrot.slane %v1238, 1
    %v1240 = vadd.f32 %v1238, %v1239
    %v1241 = vlaneseq
    %v1242 = vshrl.u32 %v1241, 7
    %v1243 = vadd.s32 %v1242, 8
    %v1244 = vadd.s32 %v1242, 16
    %v1245 = vlaneseq
    %v1246 = vand.u32 %v1245, 127
    %v1247 = vmul.u32 %v1246, 9
    %vm1248 = vcmp.ge.s32.totalorder %v1242, %v1247
    %vm1249 = vcmp.ge.s32.totalorder %v1243, %v1247
    %vm1250 = vcmp.ge.s32.totalorder %v1244, %v1247
    %v1251 = vadd.s32 %v1247, 9
    %vm1252 = vcmp.lt.s32.totalorder %v1242, %v1251
    %vm1253 = vcmp.lt.s32.totalorder %v1243, %v1251
    %vm1254 = vcmp.lt.s32.totalorder %v1244, %v1251
    %vm1255 = vmand %vm1248, %vm1252
    %vm1256 = vmand %vm1249, %vm1253
    %vm1257 = vmand %vm1250, %vm1254
    %v1258 = vsel %vm1255, 1, 0
    %v1259 = vsel %vm1256, 1, 0
    %v1260 = vsel %vm1257, 1, 0
    %v1261 = vcvt.s32.f32 %v1258
    %v1262 = vcvt.s32.f32 %v1259
    %v1263 = vcvt.s32.f32 %v1260
    %v1264 = vld [vmem:[#allocation2] sm:$0x1]
    %1266 = vset.pattern.permute.xlu0 0
    %1267 = vperm.xlu0 %1266, %v1264
    %v1268 = vpop.permute.xlu0 %1267
    %v1270 = vlaneseq
    %v1271 = vshrl.u32 %v1270, 7
    %v1272 = vsub.s32 0, %v1271
    %v1273 = vrot.slane %v1268, %v1272
    %v1275 = vsel %vm1203, %v1240, 0
    %vm1277 = vcmask 1041408
    %v1279 = vsel %vm1277, %v1263, 0
    %1281 = vmatprep.subr.mxu0 0.0
    %1282 = vmatpush1.msra.mxu0 %v1261
    %1283 = vmatprep.subr.mxu0 0.0
    %1284 = vmatpush1.msra.mxu0 %v1262
    %1285 = vmatprep.subr.mxu0 0.0
    %1286 = vmatpush1.msra.mxu0 %v1279
    %1287 = vmatprep.subr.mxu0 0.0
    %1288 = vmatpush1.msra.mxu0 0.0
    %1289 = vmatprep.subr.mxu0 0.0
    %1290 = vmatpush1.msra.mxu0 0.0
    %1291 = vmatprep.subr.mxu0 0.0
    %1292 = vmatpush1.msra.mxu0 0.0
    %1293 = vmatprep.subr.mxu0 0.0
    %1294 = vmatpush1.msra.mxu0 0.0
    %1295 = vmatprep.subr.mxu0 0.0
    %1296 = vmatpush1.msra.mxu0 0.0
    %1297 = vmatprep.subr.mxu0 0.0
    %1298 = vmatpush1.msra.mxu0 0.0
    %1299 = vmatprep.subr.mxu0 0.0
    %1300 = vmatpush1.msra.mxu0 0.0
    %1301 = vmatprep.subr.mxu0 0.0
    %1302 = vmatpush1.msra.mxu0 0.0
    %1303 = vmatprep.subr.mxu0 0.0
    %1304 = vmatpush1.msra.mxu0 0.0
    %1305 = vmatprep.subr.mxu0 0.0
    %1306 = vmatpush1.msra.mxu0 0.0
    %1307 = vmatprep.subr.mxu0 0.0
    %1308 = vmatpush1.msra.mxu0 0.0
    %1309 = vmatprep.subr.mxu0 0.0
    %1310 = vmatpush1.msra.mxu0 0.0
    %1311 = vmatprep.subr.mxu0 0.0
    %1312 = vmatpush1.msra.mxu0 0.0
    %1313 = vmatprep.subr.mxu0 0.0
    %1314 = vmatpush1.msra.mxu0 0.0
    %1315 = vmatprep.subr.mxu0 0.0
    %1316 = vmatpush1.msra.mxu0 0.0
    %1317 = vmatprep.subr.mxu0 0.0
    %1318 = vmatpush1.msra.mxu0 0.0
    %1319 = vmatprep.subr.mxu0 0.0
    %1320 = vmatpush1.msra.mxu0 0.0
    %1321 = vmatprep.subr.mxu0 0.0
    %1322 = vmatpush1.msra.mxu0 0.0
    %1323 = vmatprep.subr.mxu0 0.0
    %1324 = vmatpush1.msra.mxu0 0.0
    %1325 = vmatprep.subr.mxu0 0.0
    %1326 = vmatpush1.msra.mxu0 0.0
    %1327 = vmatprep.subr.mxu0 0.0
    %1328 = vmatpush1.msra.mxu0 0.0
    %1329 = vmatprep.subr.mxu0 0.0
    %1330 = vmatpush1.msra.mxu0 0.0
    %1331 = vmatprep.subr.mxu0 0.0
    %1332 = vmatpush1.msra.mxu0 0.0
    %1333 = vmatprep.subr.mxu0 0.0
    %1334 = vmatpush1.msra.mxu0 0.0
    %1335 = vmatprep.subr.mxu0 0.0
    %1336 = vmatpush1.msra.mxu0 0.0
    %1337 = vmatprep.subr.mxu0 0.0
    %1338 = vmatpush1.msra.mxu0 0.0
    %1339 = vmatprep.subr.mxu0 0.0
    %1340 = vmatpush1.msra.mxu0 0.0
    %1341 = vmatprep.subr.mxu0 0.0
    %1342 = vmatpush1.msra.mxu0 0.0
    %1343 = vmatprep.subr.mxu0 0.0
    %1344 = vmatpush1.msra.mxu0 0.0
    %1345 = vmatprep.mubr.f32.mxu0 0.0
    %1346 = vmatmul.mubr.f32.gmra.mrb[0].mxu0 %v1275
    %v1347 = vpop.f32.mrb[0].mxu0
    %v1348 = vadd.f32 %v1273, %v1347
    %v1349 = vpop.f32.mrb[0].mxu0
    %1350 = vdwg.mxu0
    %v1351 = vsub.f32 0.0, %v1348
    %v1352 = vmul.f32 %v1351, 1.442695
    %v1353 = vpow.pop %v1352
    %v1354 = vadd.f32 %v1353, 1.0
    %v1355 = vrcp.pop %v1354
    %v1356 = vmul.f32 1.0, %v1355
    %vm1357 = vcmask 8192
    %1358 = vst.msk [vmem:[#allocation3] sm:$0x1] %vm1357, %v1356
    // Predicated region
    $region22: #{discriminator_forward.9} parent=1 // pred_check
      _
    $region23: #{discriminator_forward.9} parent=1 // pred_check_branch
      %1360 = sbr.rel (0) target = $region25
    $region24: #{discriminator_forward.9} parent=1 // pred_region
      %s1362 = ssub.s32 16, 16
      %1363 = vsyncadd [#allocation4], %s1362
      %s1365 = sshll.u32 [#allocation3], 4
      %s1366 = int_to_ptr.vmem [resolvable:$true] %s1365
      %1368 = dma.vmem_to_hbm [thread:$0]  %s1366, 16, %s5, [#allocation4]
    $region25: #{discriminator_forward.9} parent=1 // pred_fallthru
      _
    // Predicated region
    $region26: #{discriminator_forward.9} parent=1 // pred_check
      _
    $region27: #{discriminator_forward.9} parent=1 // pred_check_branch
      %1370 = sbr.rel (0) target = $region29
    $region28: #{discriminator_forward.9} parent=1 // pred_region
      %1371 = dma.done [#allocation4], 16
    $region29: #{discriminator_forward.9} parent=1 // pred_fallthru
      _
    %1372 = vsyncpa [#allocation4], 1

// kernel: discriminator_forward.5
$region0: #{discriminator_forward.5}
  #allocation0 [shape = 'u32[]', space=smem, size = 0x4, offset = 0x4, fixed_abs, tag = 'smem constant byte address 0x4 - core index']
  #allocation1 [shape = 'u32[144,128]{1,0:T(1,128)}', space=vmem, size = 0x12000, scoped, tag = 'internal scratch']
  %s0 = inlined_call_operand.vmem [shape: bf16[8,27], index: 0, kind: input, shape index: {}]
  %s1 = inlined_call_operand.vmem [shape: bf16[27,4608], index: 1, kind: input, shape index: {}]
  %s2 = inlined_call_operand.vmem [shape: f32[8,1], index: 2, kind: input, shape index: {}]
  %s3 = inlined_call_operand.vmem [shape: bf16[8,4608], index: 3, kind: output, shape index: {}]
  %s4 = sld [smem:[#allocation0]]
  $region22: #{discriminator_forward.5} parent=0
    _
  %s6 = ssub.s32 1, %s4
  %s7 = scalar_select 0, %s6, %s4
  // Predicated region
  $region2: #{discriminator_forward.5} parent=0 // pred_check
    _
  $region3: #{discriminator_forward.5} parent=0 // pred_check_branch
    %9 = sbr.rel (0) target = $region5
  $region4: #{discriminator_forward.5} parent=0 // pred_region
    _
  $region5: #{discriminator_forward.5} parent=0 // pred_fallthru
    _
  // Predicated region
  $region6: #{discriminator_forward.5} parent=0 // pred_check
    _
  $region7: #{discriminator_forward.5} parent=0 // pred_check_branch
    %11 = sbr.rel (0) target = $region9
  $region8: #{discriminator_forward.5} parent=0 // pred_region
    _
  $region9: #{discriminator_forward.5} parent=0 // pred_fallthru
    _
  // Predicated region
  $region10: #{discriminator_forward.5} parent=0 // pred_check
    _
  $region11: #{discriminator_forward.5} parent=0 // pred_check_branch
    %13 = sbr.rel (0) target = $region13
  $region12: #{discriminator_forward.5} parent=0 // pred_region
    _
  $region13: #{discriminator_forward.5} parent=0 // pred_fallthru
    _
  %v15 = vld [vmem:[%s0] sm:$0xf]
  %v16 = vld [vmem:[%s1] sm:$0xff]
  %v17 = vld [vmem:[%s1 + $0x8] sm:$0xff]
  %v18 = vld [vmem:[%s1 + $0x10] sm:$0xff]
  %v19 = vld [vmem:[%s1 + $0x18] sm:$0xff]
  %v20 = vld [vmem:[%s1 + $0x20] sm:$0xff]
  %v21 = vld [vmem:[%s1 + $0x28] sm:$0xff]
  %v22 = vld [vmem:[%s1 + $0x30] sm:$0xff]
  %v23 = vld [vmem:[%s1 + $0x38] sm:$0xff]
  %v24 = vld [vmem:[%s1 + $0x40] sm:$0xff]
  %v25 = vld [vmem:[%s1 + $0x48] sm:$0xff]
  %v26 = vld [vmem:[%s1 + $0x50] sm:$0xff]
  %v27 = vld [vmem:[%s1 + $0x58] sm:$0xff]
  %v28 = vld [vmem:[%s1 + $0x60] sm:$0xff]
  %v29 = vld [vmem:[%s1 + $0x68] sm:$0xff]
  %v30 = vld [vmem:[%s1 + $0x70] sm:$0xff]
  %v31 = vld [vmem:[%s1 + $0x78] sm:$0xff]
  %v32 = vld [vmem:[%s1 + $0x80] sm:$0xff]
  %v33 = vld [vmem:[%s1 + $0x88] sm:$0xff]
  %v34 = vld [vmem:[%s1 + $0x90] sm:$0xff]
  %v35 = vld [vmem:[%s1 + $0x98] sm:$0xff]
  %v36 = vld [vmem:[%s1 + $0xa0] sm:$0xff]
  %v37 = vld [vmem:[%s1 + $0xa8] sm:$0xff]
  %v38 = vld [vmem:[%s1 + $0xb0] sm:$0xff]
  %v39 = vld [vmem:[%s1 + $0xb8] sm:$0xff]
  %v40 = vld [vmem:[%s1 + $0xc0] sm:$0xff]
  %v41 = vld [vmem:[%s1 + $0xc8] sm:$0xff]
  %v42 = vld [vmem:[%s1 + $0xd0] sm:$0xff]
  %v43 = vld [vmem:[%s1 + $0xd8] sm:$0xff]
  %v44 = vld [vmem:[%s1 + $0xe0] sm:$0xff]
  %v45 = vld [vmem:[%s1 + $0xe8] sm:$0xff]
  %v46 = vld [vmem:[%s1 + $0xf0] sm:$0xff]
  %v47 = vld [vmem:[%s1 + $0xf8] sm:$0xff]
  %v48 = vld [vmem:[%s1 + $0x100] sm:$0xff]
  %v49 = vld [vmem:[%s1 + $0x108] sm:$0xff]
  %v50 = vld [vmem:[%s1 + $0x110] sm:$0xff]
  %v51 = vld [vmem:[%s1 + $0x118] sm:$0xff]
  %v52 = vld [vmem:[%s1 + $0x120] sm:$0xff]
  %v53 = vld [vmem:[%s1 + $0x128] sm:$0xff]
  %v54 = vld [vmem:[%s1 + $0x130] sm:$0xff]
  %v55 = vld [vmem:[%s1 + $0x138] sm:$0xff]
  %v56 = vld [vmem:[%s1 + $0x140] sm:$0xff]
  %v57 = vld [vmem:[%s1 + $0x148] sm:$0xff]
  %v58 = vld [vmem:[%s1 + $0x150] sm:$0xff]
  %v59 = vld [vmem:[%s1 + $0x158] sm:$0xff]
  %v60 = vld [vmem:[%s1 + $0x160] sm:$0xff]
  %v61 = vld [vmem:[%s1 + $0x168] sm:$0xff]
  %v62 = vld [vmem:[%s1 + $0x170] sm:$0xff]
  %v63 = vld [vmem:[%s1 + $0x178] sm:$0xff]
  %v64 = vld [vmem:[%s1 + $0x180] sm:$0xff]
  %v65 = vld [vmem:[%s1 + $0x188] sm:$0xff]
  %v66 = vld [vmem:[%s1 + $0x190] sm:$0xff]
  %v67 = vld [vmem:[%s1 + $0x198] sm:$0xff]
  %v68 = vld [vmem:[%s1 + $0x1a0] sm:$0xff]
  %v69 = vld [vmem:[%s1 + $0x1a8] sm:$0xff]
  %v70 = vld [vmem:[%s1 + $0x1b0] sm:$0x33]
  %v71 = vld [vmem:[%s1 + $0x1b8] sm:$0x33]
  %v72 = vld [vmem:[%s1 + $0x1c0] sm:$0x33]
  %v73 = vld [vmem:[%s1 + $0x1c8] sm:$0x33]
  %v74 = vld [vmem:[%s1 + $0x1d0] sm:$0x33]
  %v75 = vld [vmem:[%s1 + $0x1d8] sm:$0x33]
  %v76 = vld [vmem:[%s1 + $0x1e0] sm:$0x33]
  %v77 = vld [vmem:[%s1 + $0x1e8] sm:$0x33]
  %v78 = vld [vmem:[%s1 + $0x1f0] sm:$0x33]
  %v79 = vld [vmem:[%s1 + $0x1f8] sm:$0x33]
  %v80 = vld [vmem:[%s1 + $0x200] sm:$0x33]
  %v81 = vld [vmem:[%s1 + $0x208] sm:$0x33]
  %v82 = vld [vmem:[%s1 + $0x210] sm:$0x33]
  %v83 = vld [vmem:[%s1 + $0x218] sm:$0x33]
  %v84 = vld [vmem:[%s1 + $0x220] sm:$0x33]
  %v85 = vld [vmem:[%s1 + $0x228] sm:$0x33]
  %v86 = vld [vmem:[%s1 + $0x230] sm:$0x33]
  %v87 = vld [vmem:[%s1 + $0x238] sm:$0x33]
  %v88 = vld [vmem:[%s2] sm:$0xff]
  %90 = vset.pattern.permute.xlu0 0
  %91 = vperm.xlu0 %90, %v88
  %v92 = vpop.permute.xlu0 %91
  %v166 = vunpack.c.l.b16 %v16
  %v167 = vunpack.c.h.b16 %v16
  %v168 = vunpack.c.l.b16 %v17
  %v169 = vunpack.c.h.b16 %v17
  %v170 = vunpack.c.l.b16 %v18
  %v171 = vunpack.c.h.b16 %v18
  %v172 = vunpack.c.l.b16 %v19
  %v173 = vunpack.c.h.b16 %v19
  %v174 = vunpack.c.l.b16 %v20
  %v175 = vunpack.c.h.b16 %v20
  %v176 = vunpack.c.l.b16 %v21
  %v177 = vunpack.c.h.b16 %v21
  %v178 = vunpack.c.l.b16 %v22
  %v179 = vunpack.c.h.b16 %v22
  %v180 = vunpack.c.l.b16 %v23
  %v181 = vunpack.c.h.b16 %v23
  %v182 = vunpack.c.l.b16 %v24
  %v183 = vunpack.c.h.b16 %v24
  %v184 = vunpack.c.l.b16 %v25
  %v185 = vunpack.c.h.b16 %v25
  %v186 = vunpack.c.l.b16 %v26
  %v187 = vunpack.c.h.b16 %v26
  %v188 = vunpack.c.l.b16 %v27
  %v189 = vunpack.c.h.b16 %v27
  %v190 = vunpack.c.l.b16 %v28
  %v191 = vunpack.c.h.b16 %v28
  %v192 = vunpack.c.l.b16 %v29
  %v193 = vunpack.c.h.b16 %v29
  %v194 = vunpack.c.l.b16 %v30
  %v195 = vunpack.c.h.b16 %v30
  %v196 = vunpack.c.l.b16 %v31
  %v197 = vunpack.c.h.b16 %v31
  %v198 = vunpack.c.l.b16 %v32
  %v199 = vunpack.c.h.b16 %v32
  %v200 = vunpack.c.l.b16 %v33
  %v201 = vunpack.c.h.b16 %v33
  %v202 = vunpack.c.l.b16 %v34
  %v203 = vunpack.c.h.b16 %v34
  %v204 = vunpack.c.l.b16 %v35
  %v205 = vunpack.c.h.b16 %v35
  %v206 = vunpack.c.l.b16 %v36
  %v207 = vunpack.c.h.b16 %v36
  %v208 = vunpack.c.l.b16 %v37
  %v209 = vunpack.c.h.b16 %v37
  %v210 = vunpack.c.l.b16 %v38
  %v211 = vunpack.c.h.b16 %v38
  %v212 = vunpack.c.l.b16 %v39
  %v213 = vunpack.c.h.b16 %v39
  %v214 = vunpack.c.l.b16 %v40
  %v215 = vunpack.c.h.b16 %v40
  %v216 = vunpack.c.l.b16 %v41
  %v217 = vunpack.c.h.b16 %v41
  %v218 = vunpack.c.l.b16 %v42
  %v219 = vunpack.c.h.b16 %v42
  %v220 = vunpack.c.l.b16 %v43
  %v221 = vunpack.c.h.b16 %v43
  %v222 = vunpack.c.l.b16 %v44
  %v223 = vunpack.c.h.b16 %v44
  %v224 = vunpack.c.l.b16 %v45
  %v225 = vunpack.c.h.b16 %v45
  %v226 = vunpack.c.l.b16 %v46
  %v227 = vunpack.c.h.b16 %v46
  %v228 = vunpack.c.l.b16 %v47
  %v229 = vunpack.c.h.b16 %v47
  %v230 = vunpack.c.l.b16 %v48
  %v231 = vunpack.c.h.b16 %v48
  %v232 = vunpack.c.l.b16 %v49
  %v233 = vunpack.c.h.b16 %v49
  %v234 = vunpack.c.l.b16 %v50
  %v235 = vunpack.c.h.b16 %v50
  %v236 = vunpack.c.l.b16 %v51
  %v237 = vunpack.c.h.b16 %v51
  %v238 = vunpack.c.l.b16 %v52
  %v239 = vunpack.c.h.b16 %v52
  %v240 = vunpack.c.l.b16 %v53
  %v241 = vunpack.c.h.b16 %v53
  %v242 = vunpack.c.l.b16 %v54
  %v243 = vunpack.c.h.b16 %v54
  %v244 = vunpack.c.l.b16 %v55
  %v245 = vunpack.c.h.b16 %v55
  %v246 = vunpack.c.l.b16 %v56
  %v247 = vunpack.c.h.b16 %v56
  %v248 = vunpack.c.l.b16 %v57
  %v249 = vunpack.c.h.b16 %v57
  %v250 = vunpack.c.l.b16 %v58
  %v251 = vunpack.c.h.b16 %v58
  %v252 = vunpack.c.l.b16 %v59
  %v253 = vunpack.c.h.b16 %v59
  %v254 = vunpack.c.l.b16 %v60
  %v255 = vunpack.c.h.b16 %v60
  %v256 = vunpack.c.l.b16 %v61
  %v257 = vunpack.c.h.b16 %v61
  %v258 = vunpack.c.l.b16 %v62
  %v259 = vunpack.c.h.b16 %v62
  %v260 = vunpack.c.l.b16 %v63
  %v261 = vunpack.c.h.b16 %v63
  %v262 = vunpack.c.l.b16 %v64
  %v263 = vunpack.c.h.b16 %v64
  %v264 = vunpack.c.l.b16 %v65
  %v265 = vunpack.c.h.b16 %v65
  %v266 = vunpack.c.l.b16 %v66
  %v267 = vunpack.c.h.b16 %v66
  %v268 = vunpack.c.l.b16 %v67
  %v269 = vunpack.c.h.b16 %v67
  %v270 = vunpack.c.l.b16 %v68
  %v271 = vunpack.c.h.b16 %v68
  %v272 = vunpack.c.l.b16 %v69
  %v273 = vunpack.c.h.b16 %v69
  %v274 = vunpack.c.l.b16 %v70
  %v275 = vunpack.c.h.b16 %v70
  %v276 = vunpack.c.l.b16 %v71
  %v277 = vunpack.c.h.b16 %v71
  %v278 = vunpack.c.l.b16 %v72
  %v279 = vunpack.c.h.b16 %v72
  %v280 = vunpack.c.l.b16 %v73
  %v281 = vunpack.c.h.b16 %v73
  %v282 = vunpack.c.l.b16 %v74
  %v283 = vunpack.c.h.b16 %v74
  %v284 = vunpack.c.l.b16 %v75
  %v285 = vunpack.c.h.b16 %v75
  %v286 = vunpack.c.l.b16 %v76
  %v287 = vunpack.c.h.b16 %v76
  %v288 = vunpack.c.l.b16 %v77
  %v289 = vunpack.c.h.b16 %v77
  %v290 = vunpack.c.l.b16 %v78
  %v291 = vunpack.c.h.b16 %v78
  %v292 = vunpack.c.l.b16 %v79
  %v293 = vunpack.c.h.b16 %v79
  %v294 = vunpack.c.l.b16 %v80
  %v295 = vunpack.c.h.b16 %v80
  %v296 = vunpack.c.l.b16 %v81
  %v297 = vunpack.c.h.b16 %v81
  %v298 = vunpack.c.l.b16 %v82
  %v299 = vunpack.c.h.b16 %v82
  %v300 = vunpack.c.l.b16 %v83
  %v301 = vunpack.c.h.b16 %v83
  %v302 = vunpack.c.l.b16 %v84
  %v303 = vunpack.c.h.b16 %v84
  %v304 = vunpack.c.l.b16 %v85
  %v305 = vunpack.c.h.b16 %v85
  %v306 = vunpack.c.l.b16 %v86
  %v307 = vunpack.c.h.b16 %v86
  %v308 = vunpack.c.l.b16 %v87
  %v309 = vunpack.c.h.b16 %v87
  %v310 = vpack.c.b16 %v202, %v166
  %v311 = vpack.c.b16 %v203, %v167
  %v312 = vpack.c.b16 %v204, %v168
  %v313 = vpack.c.b16 %v205, %v169
  %v314 = vpack.c.b16 %v206, %v170
  %v315 = vpack.c.b16 %v207, %v171
  %v316 = vpack.c.b16 %v208, %v172
  %v317 = vpack.c.b16 %v209, %v173
  %v318 = vpack.c.b16 %v210, %v174
  %v319 = vpack.c.b16 %v211, %v175
  %v320 = vpack.c.b16 %v212, %v176
  %v321 = vpack.c.b16 %v213, %v177
  %v322 = vpack.c.b16 %v214, %v178
  %v323 = vpack.c.b16 %v215, %v179
  %v324 = vpack.c.b16 %v216, %v180
  %v325 = vpack.c.b16 %v217, %v181
  %v326 = vpack.c.b16 %v218, %v182
  %v327 = vpack.c.b16 %v219, %v183
  %v328 = vpack.c.b16 %v220, %v184
  %v329 = vpack.c.b16 %v221, %v185
  %v330 = vpack.c.b16 %v222, %v186
  %v331 = vpack.c.b16 %v223, %v187
  %v332 = vpack.c.b16 %v224, %v188
  %v333 = vpack.c.b16 %v225, %v189
  %v334 = vpack.c.b16 %v226, %v190
  %v335 = vpack.c.b16 %v227, %v191
  %v336 = vpack.c.b16 %v228, %v192
  %v337 = vpack.c.b16 %v229, %v193
  %v338 = vpack.c.b16 %v230, %v194
  %v339 = vpack.c.b16 %v231, %v195
  %v340 = vpack.c.b16 %v232, %v196
  %v341 = vpack.c.b16 %v233, %v197
  %v342 = vpack.c.b16 %v234, %v198
  %v343 = vpack.c.b16 %v235, %v199
  %v344 = vpack.c.b16 %v236, %v200
  %v345 = vpack.c.b16 %v237, %v201
  %v346 = vpack.c.b16 %v274, %v238
  %v347 = vpack.c.b16 %v275, %v239
  %v348 = vpack.c.b16 %v276, %v240
  %v349 = vpack.c.b16 %v277, %v241
  %v350 = vpack.c.b16 %v278, %v242
  %v351 = vpack.c.b16 %v279, %v243
  %v352 = vpack.c.b16 %v280, %v244
  %v353 = vpack.c.b16 %v281, %v245
  %v354 = vpack.c.b16 %v282, %v246
  %v355 = vpack.c.b16 %v283, %v247
  %v356 = vpack.c.b16 %v284, %v248
  %v357 = vpack.c.b16 %v285, %v249
  %v358 = vpack.c.b16 %v286, %v250
  %v359 = vpack.c.b16 %v287, %v251
  %v360 = vpack.c.b16 %v288, %v252
  %v361 = vpack.c.b16 %v289, %v253
  %v362 = vpack.c.b16 %v290, %v254
  %v363 = vpack.c.b16 %v291, %v255
  %v364 = vpack.c.b16 %v292, %v256
  %v365 = vpack.c.b16 %v293, %v257
  %v366 = vpack.c.b16 %v294, %v258
  %v367 = vpack.c.b16 %v295, %v259
  %v368 = vpack.c.b16 %v296, %v260
  %v369 = vpack.c.b16 %v297, %v261
  %v370 = vpack.c.b16 %v298, %v262
  %v371 = vpack.c.b16 %v299, %v263
  %v372 = vpack.c.b16 %v300, %v264
  %v373 = vpack.c.b16 %v301, %v265
  %v374 = vpack.c.b16 %v302, %v266
  %v375 = vpack.c.b16 %v303, %v267
  %v376 = vpack.c.b16 %v304, %v268
  %v377 = vpack.c.b16 %v305, %v269
  %v378 = vpack.c.b16 %v306, %v270
  %v379 = vpack.c.b16 %v307, %v271
  %v380 = vpack.c.b16 %v308, %v272
  %v381 = vpack.c.b16 %v309, %v273
  %vm418 = vcmask 220160
  %v420 = vsel %vm418, %v15, 0
  %vm422 = vcmask 1044480
  %vm423 = vcmask 1045504
  %v424 = vsel %vm422, 4294967295, 65535
  %v425 = vsel %vm423, %v424, 0
  %v427 = vand.u32 %v346, %v425
  %v430 = vand.u32 %v347, %v425
  %v433 = vand.u32 %v348, %v425
  %v436 = vand.u32 %v349, %v425
  %v439 = vand.u32 %v350, %v425
  %v442 = vand.u32 %v351, %v425
  %v445 = vand.u32 %v352, %v425
  %v448 = vand.u32 %v353, %v425
  %v451 = vand.u32 %v354, %v425
  %v454 = vand.u32 %v355, %v425
  %v457 = vand.u32 %v356, %v425
  %v460 = vand.u32 %v357, %v425
  %v463 = vand.u32 %v358, %v425
  %v466 = vand.u32 %v359, %v425
  %v469 = vand.u32 %v360, %v425
  %v472 = vand.u32 %v361, %v425
  %v475 = vand.u32 %v362, %v425
  %v478 = vand.u32 %v363, %v425
  %v481 = vand.u32 %v364, %v425
  %v484 = vand.u32 %v365, %v425
  %v487 = vand.u32 %v366, %v425
  %v490 = vand.u32 %v367, %v425
  %v493 = vand.u32 %v368, %v425
  %v496 = vand.u32 %v369, %v425
  %v499 = vand.u32 %v370, %v425
  %v502 = vand.u32 %v371, %v425
  %v505 = vand.u32 %v372, %v425
  %v508 = vand.u32 %v373, %v425
  %v511 = vand.u32 %v374, %v425
  %v514 = vand.u32 %v375, %v425
  %v517 = vand.u32 %v376, %v425
  %v520 = vand.u32 %v377, %v425
  %v523 = vand.u32 %v378, %v425
  %v526 = vand.u32 %v379, %v425
  %v529 = vand.u32 %v380, %v425
  %v532 = vand.u32 %v381, %v425
  %534 = vmatprep.subr.bf16.mxu0 %v311
  %535 = vmatpush1.bf16.msra.mxu0 %v310
  %536 = vmatprep.subr.bf16.mxu0 %v430
  %537 = vmatpush1.bf16.msra.mxu0 %v427
  %538 = vmatprep.subr.bf16.mxu0 0
  %539 = vmatpush1.bf16.msra.mxu0 0
  %540 = vmatprep.subr.bf16.mxu0 0
  %541 = vmatpush1.bf16.msra.mxu0 0
  %542 = vmatprep.subr.bf16.mxu0 0
  %543 = vmatpush1.bf16.msra.mxu0 0
  %544 = vmatprep.subr.bf16.mxu0 0
  %545 = vmatpush1.bf16.msra.mxu0 0
  %546 = vmatprep.subr.bf16.mxu0 0
  %547 = vmatpush1.bf16.msra.mxu0 0
  %548 = vmatprep.subr.bf16.mxu0 0
  %549 = vmatpush1.bf16.msra.mxu0 0
  %550 = vmatprep.subr.bf16.mxu0 0
  %551 = vmatpush1.bf16.msra.mxu0 0
  %552 = vmatprep.subr.bf16.mxu0 0
  %553 = vmatpush1.bf16.msra.mxu0 0
  %554 = vmatprep.subr.bf16.mxu0 0
  %555 = vmatpush1.bf16.msra.mxu0 0
  %556 = vmatprep.subr.bf16.mxu0 0
  %557 = vmatpush1.bf16.msra.mxu0 0
  %558 = vmatprep.subr.bf16.mxu0 0
  %559 = vmatpush1.bf16.msra.mxu0 0
  %560 = vmatprep.subr.bf16.mxu0 0
  %561 = vmatpush1.bf16.msra.mxu0 0
  %562 = vmatprep.subr.bf16.mxu0 0
  %563 = vmatpush1.bf16.msra.mxu0 0
  %564 = vmatprep.subr.bf16.mxu0 0
  %565 = vmatpush1.bf16.msra.mxu0 0
  %566 = vmatprep.mubr.bf16.mxu0 0
  %567 = vmatmul.mubr.bf16.gmra.mrb[0].mxu0 %v420
  %v568 = vpop.f32.mrb[0].mxu0
  %v569 = vadd.f32 %v92, %v568
  %v570 = vpop.f32.mrb[0].mxu0
  %v571 = vadd.f32 %v92, %v570
  %v572 = vpop.f32.mrb[0].mxu0
  %v573 = vpop.f32.mrb[0].mxu0
  %574 = vdwg.mxu0
  %575 = vmatprep.subr.bf16.mxu0 %v313
  %576 = vmatpush1.bf16.msra.mxu0 %v312
  %577 = vmatprep.subr.bf16.mxu0 %v436
  %578 = vmatpush1.bf16.msra.mxu0 %v433
  %579 = vmatprep.subr.bf16.mxu0 0
  %580 = vmatpush1.bf16.msra.mxu0 0
  %581 = vmatprep.subr.bf16.mxu0 0
  %582 = vmatpush1.bf16.msra.mxu0 0
  %583 = vmatprep.subr.bf16.mxu0 0
  %584 = vmatpush1.bf16.msra.mxu0 0
  %585 = vmatprep.subr.bf16.mxu0 0
  %586 = vmatpush1.bf16.msra.mxu0 0
  %587 = vmatprep.subr.bf16.mxu0 0
  %588 = vmatpush1.bf16.msra.mxu0 0
  %589 = vmatprep.subr.bf16.mxu0 0
  %590 = vmatpush1.bf16.msra.mxu0 0
  %591 = vmatprep.subr.bf16.mxu0 0
  %592 = vmatpush1.bf16.msra.mxu0 0
  %593 = vmatprep.subr.bf16.mxu0 0
  %594 = vmatpush1.bf16.msra.mxu0 0
  %595 = vmatprep.subr.bf16.mxu0 0
  %596 = vmatpush1.bf16.msra.mxu0 0
  %597 = vmatprep.subr.bf16.mxu0 0
  %598 = vmatpush1.bf16.msra.mxu0 0
  %599 = vmatprep.subr.bf16.mxu0 0
  %600 = vmatpush1.bf16.msra.mxu0 0
  %601 = vmatprep.subr.bf16.mxu0 0
  %602 = vmatpush1.bf16.msra.mxu0 0
  %603 = vmatprep.subr.bf16.mxu0 0
  %604 = vmatpush1.bf16.msra.mxu0 0
  %605 = vmatprep.subr.bf16.mxu0 0
  %606 = vmatpush1.bf16.msra.mxu0 0
  %607 = vmatprep.mubr.bf16.mxu0 0
  %608 = vmatmul.mubr.bf16.gmra.mrb[0].mxu0 %v420
  %v609 = vpop.f32.mrb[0].mxu0
  %v610 = vadd.f32 %v92, %v609
  %v611 = vpop.f32.mrb[0].mxu0
  %v612 = vadd.f32 %v92, %v611
  %v613 = vpop.f32.mrb[0].mxu0
  %v614 = vpop.f32.mrb[0].mxu0
  %615 = vdwg.mxu0
  %616 = vmatprep.subr.bf16.mxu0 %v315
  %617 = vmatpush1.bf16.msra.mxu0 %v314
  %618 = vmatprep.subr.bf16.mxu0 %v442
  %619 = vmatpush1.bf16.msra.mxu0 %v439
  %620 = vmatprep.subr.bf16.mxu0 0
  %621 = vmatpush1.bf16.msra.mxu0 0
  %622 = vmatprep.subr.bf16.mxu0 0
  %623 = vmatpush1.bf16.msra.mxu0 0
  %624 = vmatprep.subr.bf16.mxu0 0
  %625 = vmatpush1.bf16.msra.mxu0 0
  %626 = vmatprep.subr.bf16.mxu0 0
  %627 = vmatpush1.bf16.msra.mxu0 0
  %628 = vmatprep.subr.bf16.mxu0 0
  %629 = vmatpush1.bf16.msra.mxu0 0
  %630 = vmatprep.subr.bf16.mxu0 0
  %631 = vmatpush1.bf16.msra.mxu0 0
  %632 = vmatprep.subr.bf16.mxu0 0
  %633 = vmatpush1.bf16.msra.mxu0 0
  %634 = vmatprep.subr.bf16.mxu0 0
  %635 = vmatpush1.bf16.msra.mxu0 0
  %636 = vmatprep.subr.bf16.mxu0 0
  %637 = vmatpush1.bf16.msra.mxu0 0
  %638 = vmatprep.subr.bf16.mxu0 0
  %639 = vmatpush1.bf16.msra.mxu0 0
  %640 = vmatprep.subr.bf16.mxu0 0
  %641 = vmatpush1.bf16.msra.mxu0 0
  %642 = vmatprep.subr.bf16.mxu0 0
  %643 = vmatpush1.bf16.msra.mxu0 0
  %644 = vmatprep.subr.bf16.mxu0 0
  %645 = vmatpush1.bf16.msra.mxu0 0
  %646 = vmatprep.subr.bf16.mxu0 0
  %647 = vmatpush1.bf16.msra.mxu0 0
  %648 = vmatprep.mubr.bf16.mxu0 0
  %649 = vmatmul.mubr.bf16.gmra.mrb[0].mxu0 %v420
  %v650 = vpop.f32.mrb[0].mxu0
  %v651 = vadd.f32 %v92, %v650
  %v652 = vpop.f32.mrb[0].mxu0
  %v653 = vadd.f32 %v92, %v652
  %v654 = vpop.f32.mrb[0].mxu0
  %v655 = vpop.f32.mrb[0].mxu0
  %656 = vdwg.mxu0
  %657 = vmatprep.subr.bf16.mxu0 %v317
  %658 = vmatpush1.bf16.msra.mxu0 %v316
  %659 = vmatprep.subr.bf16.mxu0 %v448
  %660 = vmatpush1.bf16.msra.mxu0 %v445
  %661 = vmatprep.subr.bf16.mxu0 0
  %662 = vmatpush1.bf16.msra.mxu0 0
  %663 = vmatprep.subr.bf16.mxu0 0
  %664 = vmatpush1.bf16.msra.mxu0 0
  %665 = vmatprep.subr.bf16.mxu0 0
  %666 = vmatpush1.bf16.msra.mxu0 0
  %667 = vmatprep.subr.bf16.mxu0 0
  %668 = vmatpush1.bf16.msra.mxu0 0
  %669 = vmatprep.subr.bf16.mxu0 0
  %670 = vmatpush1.bf16.msra.mxu0 0
  %671 = vmatprep.subr.bf16.mxu0 0
  %672 = vmatpush1.bf16.msra.mxu0 0
  %673 = vmatprep.subr.bf16.mxu0 0
  %674 = vmatpush1.bf16.msra.mxu0 0
  %675 = vmatprep.subr.bf16.mxu0 0
  %676 = vmatpush1.bf16.msra.mxu0 0
  %677 = vmatprep.subr.bf16.mxu0 0
  %678 = vmatpush1.bf16.msra.mxu0 0
  %679 = vmatprep.subr.bf16.mxu0 0
  %680 = vmatpush1.bf16.msra.mxu0 0
  %681 = vmatprep.subr.bf16.mxu0 0
  %682 = vmatpush1.bf16.msra.mxu0 0
  %683 = vmatprep.subr.bf16.mxu0 0
  %684 = vmatpush1.bf16.msra.mxu0 0
  %685 = vmatprep.subr.bf16.mxu0 0
  %686 = vmatpush1.bf16.msra.mxu0 0
  %687 = vmatprep.subr.bf16.mxu0 0
  %688 = vmatpush1.bf16.msra.mxu0 0
  %689 = vmatprep.mubr.bf16.mxu0 0
  %690 = vmatmul.mubr.bf16.gmra.mrb[0].mxu0 %v420
  %v691 = vpop.f32.mrb[0].mxu0
  %v692 = vadd.f32 %v92, %v691
  %v693 = vpop.f32.mrb[0].mxu0
  %v694 = vadd.f32 %v92, %v693
  %v695 = vpop.f32.mrb[0].mxu0
  %v696 = vpop.f32.mrb[0].mxu0
  %697 = vdwg.mxu0
  %698 = vmatprep.subr.bf16.mxu0 %v319
  %699 = vmatpush1.bf16.msra.mxu0 %v318
  %700 = vmatprep.subr.bf16.mxu0 %v454
  %701 = vmatpush1.bf16.msra.mxu0 %v451
  %702 = vmatprep.subr.bf16.mxu0 0
  %703 = vmatpush1.bf16.msra.mxu0 0
  %704 = vmatprep.subr.bf16.mxu0 0
  %705 = vmatpush1.bf16.msra.mxu0 0
  %706 = vmatprep.subr.bf16.mxu0 0
  %707 = vmatpush1.bf16.msra.mxu0 0
  %708 = vmatprep.subr.bf16.mxu0 0
  %709 = vmatpush1.bf16.msra.mxu0 0
  %710 = vmatprep.subr.bf16.mxu0 0
  %711 = vmatpush1.bf16.msra.mxu0 0
  %712 = vmatprep.subr.bf16.mxu0 0
  %713 = vmatpush1.bf16.msra.mxu0 0
  %714 = vmatprep.subr.bf16.mxu0 0
  %715 = vmatpush1.bf16.msra.mxu0 0
  %716 = vmatprep.subr.bf16.mxu0 0
  %717 = vmatpush1.bf16.msra.mxu0 0
  %718 = vmatprep.subr.bf16.mxu0 0
  %719 = vmatpush1.bf16.msra.mxu0 0
  %720 = vmatprep.subr.bf16.mxu0 0
  %721 = vmatpush1.bf16.msra.mxu0 0
  %722 = vmatprep.subr.bf16.mxu0 0
  %723 = vmatpush1.bf16.msra.mxu0 0
  %724 = vmatprep.subr.bf16.mxu0 0
  %725 = vmatpush1.bf16.msra.mxu0 0
  %726 = vmatprep.subr.bf16.mxu0 0
  %727 = vmatpush1.bf16.msra.mxu0 0
  %728 = vmatprep.subr.bf16.mxu0 0
  %729 = vmatpush1.bf16.msra.mxu0 0
  %730 = vmatprep.mubr.bf16.mxu0 0
  %731 = vmatmul.mubr.bf16.gmra.mrb[0].mxu0 %v420
  %v732 = vpop.f32.mrb[0].mxu0
  %v733 = vadd.f32 %v92, %v732
  %v734 = vpop.f32.mrb[0].mxu0
  %v735 = vadd.f32 %v92, %v734
  %v736 = vpop.f32.mrb[0].mxu0
  %v737 = vpop.f32.mrb[0].mxu0
  %738 = vdwg.mxu0
  %739 = vmatprep.subr.bf16.mxu0 %v321
  %740 = vmatpush1.bf16.msra.mxu0 %v320
  %741 = vmatprep.subr.bf16.mxu0 %v460
  %742 = vmatpush1.bf16.msra.mxu0 %v457
  %743 = vmatprep.subr.bf16.mxu0 0
  %744 = vmatpush1.bf16.msra.mxu0 0
  %745 = vmatprep.subr.bf16.mxu0 0
  %746 = vmatpush1.bf16.msra.mxu0 0
  %747 = vmatprep.subr.bf16.mxu0 0
  %748 = vmatpush1.bf16.msra.mxu0 0
  %749 = vmatprep.subr.bf16.mxu0 0
  %750 = vmatpush1.bf16.msra.mxu0 0
  %751 = vmatprep.subr.bf16.mxu0 0
  %752 = vmatpush1.bf16.msra.mxu0 0
  %753 = vmatprep.subr.bf16.mxu0 0
  %754 = vmatpush1.bf16.msra.mxu0 0
  %755 = vmatprep.subr.bf16.mxu0 0
  %756 = vmatpush1.bf16.msra.mxu0 0
  %757 = vmatprep.subr.bf16.mxu0 0
  %758 = vmatpush1.bf16.msra.mxu0 0
  %759 = vmatprep.subr.bf16.mxu0 0
  %760 = vmatpush1.bf16.msra.mxu0 0
  %761 = vmatprep.subr.bf16.mxu0 0
  %762 = vmatpush1.bf16.msra.mxu0 0
  %763 = vmatprep.subr.bf16.mxu0 0
  %764 = vmatpush1.bf16.msra.mxu0 0
  %765 = vmatprep.subr.bf16.mxu0 0
  %766 = vmatpush1.bf16.msra.mxu0 0
  %767 = vmatprep.subr.bf16.mxu0 0
  %768 = vmatpush1.bf16.msra.mxu0 0
  %769 = vmatprep.subr.bf16.mxu0 0
  %770 = vmatpush1.bf16.msra.mxu0 0
  %771 = vmatprep.mubr.bf16.mxu0 0
  %772 = vmatmul.mubr.bf16.gmra.mrb[0].mxu0 %v420
  %v773 = vpop.f32.mrb[0].mxu0
  %v774 = vadd.f32 %v92, %v773
  %v775 = vpop.f32.mrb[0].mxu0
  %v776 = vadd.f32 %v92, %v775
  %v777 = vpop.f32.mrb[0].mxu0
  %v778 = vpop.f32.mrb[0].mxu0
  %779 = vdwg.mxu0
  %780 = vmatprep.subr.bf16.mxu0 %v323
  %781 = vmatpush1.bf16.msra.mxu0 %v322
  %782 = vmatprep.subr.bf16.mxu0 %v466
  %783 = vmatpush1.bf16.msra.mxu0 %v463
  %784 = vmatprep.subr.bf16.mxu0 0
  %785 = vmatpush1.bf16.msra.mxu0 0
  %786 = vmatprep.subr.bf16.mxu0 0
  %787 = vmatpush1.bf16.msra.mxu0 0
  %788 = vmatprep.subr.bf16.mxu0 0
  %789 = vmatpush1.bf16.msra.mxu0 0
  %790 = vmatprep.subr.bf16.mxu0 0
  %791 = vmatpush1.bf16.msra.mxu0 0
  %792 = vmatprep.subr.bf16.mxu0 0
  %793 = vmatpush1.bf16.msra.mxu0 0
  %794 = vmatprep.subr.bf16.mxu0 0
  %795 = vmatpush1.bf16.msra.mxu0 0
  %796 = vmatprep.subr.bf16.mxu0 0
  %797 = vmatpush1.bf16.msra.mxu0 0
  %798 = vmatprep.subr.bf16.mxu0 0
  %799 = vmatpush1.bf16.msra.mxu0 0
  %800 = vmatprep.subr.bf16.mxu0 0
  %801 = vmatpush1.bf16.msra.mxu0 0
  %802 = vmatprep.subr.bf16.mxu0 0
  %803 = vmatpush1.bf16.msra.mxu0 0
  %804 = vmatprep.subr.bf16.mxu0 0
  %805 = vmatpush1.bf16.msra.mxu0 0
  %806 = vmatprep.subr.bf16.mxu0 0
  %807 = vmatpush1.bf16.msra.mxu0 0
  %808 = vmatprep.subr.bf16.mxu0 0
  %809 = vmatpush1.bf16.msra.mxu0 0
  %810 = vmatprep.subr.bf16.mxu0 0
  %811 = vmatpush1.bf16.msra.mxu0 0
  %812 = vmatprep.mubr.bf16.mxu0 0
  %813 = vmatmul.mubr.bf16.gmra.mrb[0].mxu0 %v420
  %v814 = vpop.f32.mrb[0].mxu0
  %v815 = vadd.f32 %v92, %v814
  %v816 = vpop.f32.mrb[0].mxu0
  %v817 = vadd.f32 %v92, %v816
  %v818 = vpop.f32.mrb[0].mxu0
  %v819 = vpop.f32.mrb[0].mxu0
  %820 = vdwg.mxu0
  %821 = vmatprep.subr.bf16.mxu0 %v325
  %822 = vmatpush1.bf16.msra.mxu0 %v324
  %823 = vmatprep.subr.bf16.mxu0 %v472
  %824 = vmatpush1.bf16.msra.mxu0 %v469
  %825 = vmatprep.subr.bf16.mxu0 0
  %826 = vmatpush1.bf16.msra.mxu0 0
  %827 = vmatprep.subr.bf16.mxu0 0
  %828 = vmatpush1.bf16.msra.mxu0 0
  %829 = vmatprep.subr.bf16.mxu0 0
  %830 = vmatpush1.bf16.msra.mxu0 0
  %831 = vmatprep.subr.bf16.mxu0 0
  %832 = vmatpush1.bf16.msra.mxu0 0
  %833 = vmatprep.subr.bf16.mxu0 0
  %834 = vmatpush1.bf16.msra.mxu0 0
  %835 = vmatprep.subr.bf16.mxu0 0
  %836 = vmatpush1.bf16.msra.mxu0 0
  %837 = vmatprep.subr.bf16.mxu0 0
  %838 = vmatpush1.bf16.msra.mxu0 0
  %839 = vmatprep.subr.bf16.mxu0 0
  %840 = vmatpush1.bf16.msra.mxu0 0
  %841 = vmatprep.subr.bf16.mxu0 0
  %842 = vmatpush1.bf16.msra.mxu0 0
  %843 = vmatprep.subr.bf16.mxu0 0
  %844 = vmatpush1.bf16.msra.mxu0 0
  %845 = vmatprep.subr.bf16.mxu0 0
  %846 = vmatpush1.bf16.msra.mxu0 0
  %847 = vmatprep.subr.bf16.mxu0 0
  %848 = vmatpush1.bf16.msra.mxu0 0
  %849 = vmatprep.subr.bf16.mxu0 0
  %850 = vmatpush1.bf16.msra.mxu0 0
  %851 = vmatprep.subr.bf16.mxu0 0
  %852 = vmatpush1.bf16.msra.mxu0 0
  %853 = vmatprep.mubr.bf16.mxu0 0
  %854 = vmatmul.mubr.bf16.gmra.mrb[0].mxu0 %v420
  %v855 = vpop.f32.mrb[0].mxu0
  %v856 = vadd.f32 %v92, %v855
  %v857 = vpop.f32.mrb[0].mxu0
  %v858 = vadd.f32 %v92, %v857
  %v859 = vpop.f32.mrb[0].mxu0
  %v860 = vpop.f32.mrb[0].mxu0
  %861 = vdwg.mxu0
  %862 = vmatprep.subr.bf16.mxu0 %v327
  %863 = vmatpush1.bf16.msra.mxu0 %v326
  %864 = vmatprep.subr.bf16.mxu0 %v478
  %865 = vmatpush1.bf16.msra.mxu0 %v475
  %866 = vmatprep.subr.bf16.mxu0 0
  %867 = vmatpush1.bf16.msra.mxu0 0
  %868 = vmatprep.subr.bf16.mxu0 0
  %869 = vmatpush1.bf16.msra.mxu0 0
  %870 = vmatprep.subr.bf16.mxu0 0
  %871 = vmatpush1.bf16.msra.mxu0 0
  %872 = vmatprep.subr.bf16.mxu0 0
  %873 = vmatpush1.bf16.msra.mxu0 0
  %874 = vmatprep.subr.bf16.mxu0 0
  %875 = vmatpush1.bf16.msra.mxu0 0
  %876 = vmatprep.subr.bf16.mxu0 0
  %877 = vmatpush1.bf16.msra.mxu0 0
  %878 = vmatprep.subr.bf16.mxu0 0
  %879 = vmatpush1.bf16.msra.mxu0 0
  %880 = vmatprep.subr.bf16.mxu0 0
  %881 = vmatpush1.bf16.msra.mxu0 0
  %882 = vmatprep.subr.bf16.mxu0 0
  %883 = vmatpush1.bf16.msra.mxu0 0
  %884 = vmatprep.subr.bf16.mxu0 0
  %885 = vmatpush1.bf16.msra.mxu0 0
  %886 = vmatprep.subr.bf16.mxu0 0
  %887 = vmatpush1.bf16.msra.mxu0 0
  %888 = vmatprep.subr.bf16.mxu0 0
  %889 = vmatpush1.bf16.msra.mxu0 0
  %890 = vmatprep.subr.bf16.mxu0 0
  %891 = vmatpush1.bf16.msra.mxu0 0
  %892 = vmatprep.subr.bf16.mxu0 0
  %893 = vmatpush1.bf16.msra.mxu0 0
  %894 = vmatprep.mubr.bf16.mxu0 0
  %895 = vmatmul.mubr.bf16.gmra.mrb[0].mxu0 %v420
  %v896 = vpop.f32.mrb[0].mxu0
  %v897 = vadd.f32 %v92, %v896
  %v898 = vpop.f32.mrb[0].mxu0
  %v899 = vadd.f32 %v92, %v898
  %v900 = vpop.f32.mrb[0].mxu0
  %v901 = vpop.f32.mrb[0].mxu0
  %902 = vdwg.mxu0
  %903 = vmatprep.subr.bf16.mxu0 %v329
  %904 = vmatpush1.bf16.msra.mxu0 %v328
  %905 = vmatprep.subr.bf16.mxu0 %v484
  %906 = vmatpush1.bf16.msra.mxu0 %v481
  %907 = vmatprep.subr.bf16.mxu0 0
  %908 = vmatpush1.bf16.msra.mxu0 0
  %909 = vmatprep.subr.bf16.mxu0 0
  %910 = vmatpush1.bf16.msra.mxu0 0
  %911 = vmatprep.subr.bf16.mxu0 0
  %912 = vmatpush1.bf16.msra.mxu0 0
  %913 = vmatprep.subr.bf16.mxu0 0
  %914 = vmatpush1.bf16.msra.mxu0 0
  %915 = vmatprep.subr.bf16.mxu0 0
  %916 = vmatpush1.bf16.msra.mxu0 0
  %917 = vmatprep.subr.bf16.mxu0 0
  %918 = vmatpush1.bf16.msra.mxu0 0
  %919 = vmatprep.subr.bf16.mxu0 0
  %920 = vmatpush1.bf16.msra.mxu0 0
  %921 = vmatprep.subr.bf16.mxu0 0
  %922 = vmatpush1.bf16.msra.mxu0 0
  %923 = vmatprep.subr.bf16.mxu0 0
  %924 = vmatpush1.bf16.msra.mxu0 0
  %925 = vmatprep.subr.bf16.mxu0 0
  %926 = vmatpush1.bf16.msra.mxu0 0
  %927 = vmatprep.subr.bf16.mxu0 0
  %928 = vmatpush1.bf16.msra.mxu0 0
  %929 = vmatprep.subr.bf16.mxu0 0
  %930 = vmatpush1.bf16.msra.mxu0 0
  %931 = vmatprep.subr.bf16.mxu0 0
  %932 = vmatpush1.bf16.msra.mxu0 0
  %933 = vmatprep.subr.bf16.mxu0 0
  %934 = vmatpush1.bf16.msra.mxu0 0
  %935 = vmatprep.mubr.bf16.mxu0 0
  %936 = vmatmul.mubr.bf16.gmra.mrb[0].mxu0 %v420
  %v937 = vpop.f32.mrb[0].mxu0
  %v938 = vadd.f32 %v92, %v937
  %v939 = vpop.f32.mrb[0].mxu0
  %v940 = vadd.f32 %v92, %v939
  %v941 = vpop.f32.mrb[0].mxu0
  %v942 = vpop.f32.mrb[0].mxu0
  %943 = vdwg.mxu0
  %944 = vmatprep.subr.bf16.mxu0 %v331
  %945 = vmatpush1.bf16.msra.mxu0 %v330
  %946 = vmatprep.subr.bf16.mxu0 %v490
  %947 = vmatpush1.bf16.msra.mxu0 %v487
  %948 = vmatprep.subr.bf16.mxu0 0
  %949 = vmatpush1.bf16.msra.mxu0 0
  %950 = vmatprep.subr.bf16.mxu0 0
  %951 = vmatpush1.bf16.msra.mxu0 0
  %952 = vmatprep.subr.bf16.mxu0 0
  %953 = vmatpush1.bf16.msra.mxu0 0
  %954 = vmatprep.subr.bf16.mxu0 0
  %955 = vmatpush1.bf16.msra.mxu0 0
  %956 = vmatprep.subr.bf16.mxu0 0
  %957 = vmatpush1.bf16.msra.mxu0 0
  %958 = vmatprep.subr.bf16.mxu0 0
  %959 = vmatpush1.bf16.msra.mxu0 0
  %960 = vmatprep.subr.bf16.mxu0 0
  %961 = vmatpush1.bf16.msra.mxu0 0
  %962 = vmatprep.subr.bf16.mxu0 0
  %963 = vmatpush1.bf16.msra.mxu0 0
  %964 = vmatprep.subr.bf16.mxu0 0
  %965 = vmatpush1.bf16.msra.mxu0 0
  %966 = vmatprep.subr.bf16.mxu0 0
  %967 = vmatpush1.bf16.msra.mxu0 0
  %968 = vmatprep.subr.bf16.mxu0 0
  %969 = vmatpush1.bf16.msra.mxu0 0
  %970 = vmatprep.subr.bf16.mxu0 0
  %971 = vmatpush1.bf16.msra.mxu0 0
  %972 = vmatprep.subr.bf16.mxu0 0
  %973 = vmatpush1.bf16.msra.mxu0 0
  %974 = vmatprep.subr.bf16.mxu0 0
  %975 = vmatpush1.bf16.msra.mxu0 0
  %976 = vmatprep.mubr.bf16.mxu0 0
  %977 = vmatmul.mubr.bf16.gmra.mrb[0].mxu0 %v420
  %v978 = vpop.f32.mrb[0].mxu0
  %v979 = vadd.f32 %v92, %v978
  %v980 = vpop.f32.mrb[0].mxu0
  %v981 = vadd.f32 %v92, %v980
  %v982 = vpop.f32.mrb[0].mxu0
  %v983 = vpop.f32.mrb[0].mxu0
  %984 = vdwg.mxu0
  %985 = vmatprep.subr.bf16.mxu0 %v333
  %986 = vmatpush1.bf16.msra.mxu0 %v332
  %987 = vmatprep.subr.bf16.mxu0 %v496
  %988 = vmatpush1.bf16.msra.mxu0 %v493
  %989 = vmatprep.subr.bf16.mxu0 0
  %990 = vmatpush1.bf16.msra.mxu0 0
  %991 = vmatprep.subr.bf16.mxu0 0
  %992 = vmatpush1.bf16.msra.mxu0 0
  %993 = vmatprep.subr.bf16.mxu0 0
  %994 = vmatpush1.bf16.msra.mxu0 0
  %995 = vmatprep.subr.bf16.mxu0 0
  %996 = vmatpush1.bf16.msra.mxu0 0
  %997 = vmatprep.subr.bf16.mxu0 0
  %998 = vmatpush1.bf16.msra.mxu0 0
  %999 = vmatprep.subr.bf16.mxu0 0
  %1000 = vmatpush1.bf16.msra.mxu0 0
  %1001 = vmatprep.subr.bf16.mxu0 0
  %1002 = vmatpush1.bf16.msra.mxu0 0
  %1003 = vmatprep.subr.bf16.mxu0 0
  %1004 = vmatpush1.bf16.msra.mxu0 0
  %1005 = vmatprep.subr.bf16.mxu0 0
  %1006 = vmatpush1.bf16.msra.mxu0 0
  %1007 = vmatprep.subr.bf16.mxu0 0
  %1008 = vmatpush1.bf16.msra.mxu0 0
  %1009 = vmatprep.subr.bf16.mxu0 0
  %1010 = vmatpush1.bf16.msra.mxu0 0
  %1011 = vmatprep.subr.bf16.mxu0 0
  %1012 = vmatpush1.bf16.msra.mxu0 0
  %1013 = vmatprep.subr.bf16.mxu0 0
  %1014 = vmatpush1.bf16.msra.mxu0 0
  %1015 = vmatprep.subr.bf16.mxu0 0
  %1016 = vmatpush1.bf16.msra.mxu0 0
  %1017 = vmatprep.mubr.bf16.mxu0 0
  %1018 = vmatmul.mubr.bf16.gmra.mrb[0].mxu0 %v420
  %v1019 = vpop.f32.mrb[0].mxu0
  %v1020 = vadd.f32 %v92, %v1019
  %v1021 = vpop.f32.mrb[0].mxu0
  %v1022 = vadd.f32 %v92, %v1021
  %v1023 = vpop.f32.mrb[0].mxu0
  %v1024 = vpop.f32.mrb[0].mxu0
  %1025 = vdwg.mxu0
  %1026 = vmatprep.subr.bf16.mxu0 %v335
  %1027 = vmatpush1.bf16.msra.mxu0 %v334
  %1028 = vmatprep.subr.bf16.mxu0 %v502
  %1029 = vmatpush1.bf16.msra.mxu0 %v499
  %1030 = vmatprep.subr.bf16.mxu0 0
  %1031 = vmatpush1.bf16.msra.mxu0 0
  %1032 = vmatprep.subr.bf16.mxu0 0
  %1033 = vmatpush1.bf16.msra.mxu0 0
  %1034 = vmatprep.subr.bf16.mxu0 0
  %1035 = vmatpush1.bf16.msra.mxu0 0
  %1036 = vmatprep.subr.bf16.mxu0 0
  %1037 = vmatpush1.bf16.msra.mxu0 0
  %1038 = vmatprep.subr.bf16.mxu0 0
  %1039 = vmatpush1.bf16.msra.mxu0 0
  %1040 = vmatprep.subr.bf16.mxu0 0
  %1041 = vmatpush1.bf16.msra.mxu0 0
  %1042 = vmatprep.subr.bf16.mxu0 0
  %1043 = vmatpush1.bf16.msra.mxu0 0
  %1044 = vmatprep.subr.bf16.mxu0 0
  %1045 = vmatpush1.bf16.msra.mxu0 0
  %1046 = vmatprep.subr.bf16.mxu0 0
  %1047 = vmatpush1.bf16.msra.mxu0 0
  %1048 = vmatprep.subr.bf16.mxu0 0
  %1049 = vmatpush1.bf16.msra.mxu0 0
  %1050 = vmatprep.subr.bf16.mxu0 0
  %1051 = vmatpush1.bf16.msra.mxu0 0
  %1052 = vmatprep.subr.bf16.mxu0 0
  %1053 = vmatpush1.bf16.msra.mxu0 0
  %1054 = vmatprep.subr.bf16.mxu0 0
  %1055 = vmatpush1.bf16.msra.mxu0 0
  %1056 = vmatprep.subr.bf16.mxu0 0
  %1057 = vmatpush1.bf16.msra.mxu0 0
  %1058 = vmatprep.mubr.bf16.mxu0 0
  %1059 = vmatmul.mubr.bf16.gmra.mrb[0].mxu0 %v420
  %v1060 = vpop.f32.mrb[0].mxu0
  %v1061 = vadd.f32 %v92, %v1060
  %v1062 = vpop.f32.mrb[0].mxu0
  %v1063 = vadd.f32 %v92, %v1062
  %v1064 = vpop.f32.mrb[0].mxu0
  %v1065 = vpop.f32.mrb[0].mxu0
  %1066 = vdwg.mxu0
  %1067 = vmatprep.subr.bf16.mxu0 %v337
  %1068 = vmatpush1.bf16.msra.mxu0 %v336
  %1069 = vmatprep.subr.bf16.mxu0 %v508
  %1070 = vmatpush1.bf16.msra.mxu0 %v505
  %1071 = vmatprep.subr.bf16.mxu0 0
  %1072 = vmatpush1.bf16.msra.mxu0 0
  %1073 = vmatprep.subr.bf16.mxu0 0
  %1074 = vmatpush1.bf16.msra.mxu0 0
  %1075 = vmatprep.subr.bf16.mxu0 0
  %1076 = vmatpush1.bf16.msra.mxu0 0
  %1077 = vmatprep.subr.bf16.mxu0 0
  %1078 = vmatpush1.bf16.msra.mxu0 0
  %1079 = vmatprep.subr.bf16.mxu0 0
  %1080 = vmatpush1.bf16.msra.mxu0 0
  %1081 = vmatprep.subr.bf16.mxu0 0
  %1082 = vmatpush1.bf16.msra.mxu0 0
  %1083 = vmatprep.subr.bf16.mxu0 0
  %1084 = vmatpush1.bf16.msra.mxu0 0
  %1085 = vmatprep.subr.bf16.mxu0 0
  %1086 = vmatpush1.bf16.msra.mxu0 0
  %1087 = vmatprep.subr.bf16.mxu0 0
  %1088 = vmatpush1.bf16.msra.mxu0 0
  %1089 = vmatprep.subr.bf16.mxu0 0
  %1090 = vmatpush1.bf16.msra.mxu0 0
  %1091 = vmatprep.subr.bf16.mxu0 0
  %1092 = vmatpush1.bf16.msra.mxu0 0
  %1093 = vmatprep.subr.bf16.mxu0 0
  %1094 = vmatpush1.bf16.msra.mxu0 0
  %1095 = vmatprep.subr.bf16.mxu0 0
  %1096 = vmatpush1.bf16.msra.mxu0 0
  %1097 = vmatprep.subr.bf16.mxu0 0
  %1098 = vmatpush1.bf16.msra.mxu0 0
  %1099 = vmatprep.mubr.bf16.mxu0 0
  %1100 = vmatmul.mubr.bf16.gmra.mrb[0].mxu0 %v420
  %v1101 = vpop.f32.mrb[0].mxu0
  %v1102 = vadd.f32 %v92, %v1101
  %v1103 = vpop.f32.mrb[0].mxu0
  %v1104 = vadd.f32 %v92, %v1103
  %v1105 = vpop.f32.mrb[0].mxu0
  %v1106 = vpop.f32.mrb[0].mxu0
  %1107 = vdwg.mxu0
  %1108 = vmatprep.subr.bf16.mxu0 %v339
  %1109 = vmatpush1.bf16.msra.mxu0 %v338
  %1110 = vmatprep.subr.bf16.mxu0 %v514
  %1111 = vmatpush1.bf16.msra.mxu0 %v511
  %1112 = vmatprep.subr.bf16.mxu0 0
  %1113 = vmatpush1.bf16.msra.mxu0 0
  %1114 = vmatprep.subr.bf16.mxu0 0
  %1115 = vmatpush1.bf16.msra.mxu0 0
  %1116 = vmatprep.subr.bf16.mxu0 0
  %1117 = vmatpush1.bf16.msra.mxu0 0
  %1118 = vmatprep.subr.bf16.mxu0 0
  %1119 = vmatpush1.bf16.msra.mxu0 0
  %1120 = vmatprep.subr.bf16.mxu0 0
  %1121 = vmatpush1.bf16.msra.mxu0 0
  %1122 = vmatprep.subr.bf16.mxu0 0
  %1123 = vmatpush1.bf16.msra.mxu0 0
  %1124 = vmatprep.subr.bf16.mxu0 0
  %1125 = vmatpush1.bf16.msra.mxu0 0
  %1126 = vmatprep.subr.bf16.mxu0 0
  %1127 = vmatpush1.bf16.msra.mxu0 0
  %1128 = vmatprep.subr.bf16.mxu0 0
  %1129 = vmatpush1.bf16.msra.mxu0 0
  %1130 = vmatprep.subr.bf16.mxu0 0
  %1131 = vmatpush1.bf16.msra.mxu0 0
  %1132 = vmatprep.subr.bf16.mxu0 0
  %1133 = vmatpush1.bf16.msra.mxu0 0
  %1134 = vmatprep.subr.bf16.mxu0 0
  %1135 = vmatpush1.bf16.msra.mxu0 0
  %1136 = vmatprep.subr.bf16.mxu0 0
  %1137 = vmatpush1.bf16.msra.mxu0 0
  %1138 = vmatprep.subr.bf16.mxu0 0
  %1139 = vmatpush1.bf16.msra.mxu0 0
  %1140 = vmatprep.mubr.bf16.mxu0 0
  %1141 = vmatmul.mubr.bf16.gmra.mrb[0].mxu0 %v420
  %v1142 = vpop.f32.mrb[0].mxu0
  %v1143 = vadd.f32 %v92, %v1142
  %v1144 = vpop.f32.mrb[0].mxu0
  %v1145 = vadd.f32 %v92, %v1144
  %v1146 = vpop.f32.mrb[0].mxu0
  %v1147 = vpop.f32.mrb[0].mxu0
  %1148 = vdwg.mxu0
  %1149 = vmatprep.subr.bf16.mxu0 %v341
  %1150 = vmatpush1.bf16.msra.mxu0 %v340
  %1151 = vmatprep.subr.bf16.mxu0 %v520
  %1152 = vmatpush1.bf16.msra.mxu0 %v517
  %1153 = vmatprep.subr.bf16.mxu0 0
  %1154 = vmatpush1.bf16.msra.mxu0 0
  %1155 = vmatprep.subr.bf16.mxu0 0
  %1156 = vmatpush1.bf16.msra.mxu0 0
  %1157 = vmatprep.subr.bf16.mxu0 0
  %1158 = vmatpush1.bf16.msra.mxu0 0
  %1159 = vmatprep.subr.bf16.mxu0 0
  %1160 = vmatpush1.bf16.msra.mxu0 0
  %1161 = vmatprep.subr.bf16.mxu0 0
  %1162 = vmatpush1.bf16.msra.mxu0 0
  %1163 = vmatprep.subr.bf16.mxu0 0
  %1164 = vmatpush1.bf16.msra.mxu0 0
  %1165 = vmatprep.subr.bf16.mxu0 0
  %1166 = vmatpush1.bf16.msra.mxu0 0
  %1167 = vmatprep.subr.bf16.mxu0 0
  %1168 = vmatpush1.bf16.msra.mxu0 0
  %1169 = vmatprep.subr.bf16.mxu0 0
  %1170 = vmatpush1.bf16.msra.mxu0 0
  %1171 = vmatprep.subr.bf16.mxu0 0
  %1172 = vmatpush1.bf16.msra.mxu0 0
  %1173 = vmatprep.subr.bf16.mxu0 0
  %1174 = vmatpush1.bf16.msra.mxu0 0
  %1175 = vmatprep.subr.bf16.mxu0 0
  %1176 = vmatpush1.bf16.msra.mxu0 0
  %1177 = vmatprep.subr.bf16.mxu0 0
  %1178 = vmatpush1.bf16.msra.mxu0 0
  %1179 = vmatprep.subr.bf16.mxu0 0
  %1180 = vmatpush1.bf16.msra.mxu0 0
  %1181 = vmatprep.mubr.bf16.mxu0 0
  %1182 = vmatmul.mubr.bf16.gmra.mrb[0].mxu0 %v420
  %v1183 = vpop.f32.mrb[0].mxu0
  %v1184 = vadd.f32 %v92, %v1183
  %v1185 = vpop.f32.mrb[0].mxu0
  %v1186 = vadd.f32 %v92, %v1185
  %v1187 = vpop.f32.mrb[0].mxu0
  %v1188 = vpop.f32.mrb[0].mxu0
  %1189 = vdwg.mxu0
  %1190 = vmatprep.subr.bf16.mxu0 %v343
  %1191 = vmatpush1.bf16.msra.mxu0 %v342
  %1192 = vmatprep.subr.bf16.mxu0 %v526
  %1193 = vmatpush1.bf16.msra.mxu0 %v523
  %1194 = vmatprep.subr.bf16.mxu0 0
  %1195 = vmatpush1.bf16.msra.mxu0 0
  %1196 = vmatprep.subr.bf16.mxu0 0
  %1197 = vmatpush1.bf16.msra.mxu0 0
  %1198 = vmatprep.subr.bf16.mxu0 0
  %1199 = vmatpush1.bf16.msra.mxu0 0
  %1200 = vmatprep.subr.bf16.mxu0 0
  %1201 = vmatpush1.bf16.msra.mxu0 0
  %1202 = vmatprep.subr.bf16.mxu0 0
  %1203 = vmatpush1.bf16.msra.mxu0 0
  %1204 = vmatprep.subr.bf16.mxu0 0
  %1205 = vmatpush1.bf16.msra.mxu0 0
  %1206 = vmatprep.subr.bf16.mxu0 0
  %1207 = vmatpush1.bf16.msra.mxu0 0
  %1208 = vmatprep.subr.bf16.mxu0 0
  %1209 = vmatpush1.bf16.msra.mxu0 0
  %1210 = vmatprep.subr.bf16.mxu0 0
  %1211 = vmatpush1.bf16.msra.mxu0 0
  %1212 = vmatprep.subr.bf16.mxu0 0
  %1213 = vmatpush1.bf16.msra.mxu0 0
  %1214 = vmatprep.subr.bf16.mxu0 0
  %1215 = vmatpush1.bf16.msra.mxu0 0
  %1216 = vmatprep.subr.bf16.mxu0 0
  %1217 = vmatpush1.bf16.msra.mxu0 0
  %1218 = vmatprep.subr.bf16.mxu0 0
  %1219 = vmatpush1.bf16.msra.mxu0 0
  %1220 = vmatprep.subr.bf16.mxu0 0
  %1221 = vmatpush1.bf16.msra.mxu0 0
  %1222 = vmatprep.mubr.bf16.mxu0 0
  %1223 = vmatmul.mubr.bf16.gmra.mrb[0].mxu0 %v420
  %v1224 = vpop.f32.mrb[0].mxu0
  %v1225 = vadd.f32 %v92, %v1224
  %v1226 = vpop.f32.mrb[0].mxu0
  %v1227 = vadd.f32 %v92, %v1226
  %v1228 = vpop.f32.mrb[0].mxu0
  %v1229 = vpop.f32.mrb[0].mxu0
  %1230 = vdwg.mxu0
  %1231 = vmatprep.subr.bf16.mxu0 %v345
  %1232 = vmatpush1.bf16.msra.mxu0 %v344
  %1233 = vmatprep.subr.bf16.mxu0 %v532
  %1234 = vmatpush1.bf16.msra.mxu0 %v529
  %1235 = vmatprep.subr.bf16.mxu0 0
  %1236 = vmatpush1.bf16.msra.mxu0 0
  %1237 = vmatprep.subr.bf16.mxu0 0
  %1238 = vmatpush1.bf16.msra.mxu0 0
  %1239 = vmatprep.subr.bf16.mxu0 0
  %1240 = vmatpush1.bf16.msra.mxu0 0
  %1241 = vmatprep.subr.bf16.mxu0 0
  %1242 = vmatpush1.bf16.msra.mxu0 0
  %1243 = vmatprep.subr.bf16.mxu0 0
  %1244 = vmatpush1.bf16.msra.mxu0 0
  %1245 = vmatprep.subr.bf16.mxu0 0
  %1246 = vmatpush1.bf16.msra.mxu0 0
  %1247 = vmatprep.subr.bf16.mxu0 0
  %1248 = vmatpush1.bf16.msra.mxu0 0
  %1249 = vmatprep.subr.bf16.mxu0 0
  %1250 = vmatpush1.bf16.msra.mxu0 0
  %1251 = vmatprep.subr.bf16.mxu0 0
  %1252 = vmatpush1.bf16.msra.mxu0 0
  %1253 = vmatprep.subr.bf16.mxu0 0
  %1254 = vmatpush1.bf16.msra.mxu0 0
  %1255 = vmatprep.subr.bf16.mxu0 0
  %1256 = vmatpush1.bf16.msra.mxu0 0
  %1257 = vmatprep.subr.bf16.mxu0 0
  %1258 = vmatpush1.bf16.msra.mxu0 0
  %1259 = vmatprep.subr.bf16.mxu0 0
  %1260 = vmatpush1.bf16.msra.mxu0 0
  %1261 = vmatprep.subr.bf16.mxu0 0
  %1262 = vmatpush1.bf16.msra.mxu0 0
  %1263 = vmatprep.mubr.bf16.mxu0 0
  %1264 = vmatmul.mubr.bf16.gmra.mrb[0].mxu0 %v420
  %v1265 = vpop.f32.mrb[0].mxu0
  %v1266 = vadd.f32 %v92, %v1265
  %v1267 = vpop.f32.mrb[0].mxu0
  %v1268 = vadd.f32 %v92, %v1267
  %v1269 = vpop.f32.mrb[0].mxu0
  %v1270 = vpop.f32.mrb[0].mxu0
  %1271 = vdwg.mxu0
  %vm1272 = vcmp.ge.f32.partialorder %v569, 0.0
  %vm1273 = vcmp.ge.f32.partialorder %v571, 0.0
  %vm1274 = vcmp.ge.f32.partialorder %v610, 0.0
  %vm1275 = vcmp.ge.f32.partialorder %v612, 0.0
  %vm1276 = vcmp.ge.f32.partialorder %v651, 0.0
  %vm1277 = vcmp.ge.f32.partialorder %v653, 0.0
  %vm1278 = vcmp.ge.f32.partialorder %v692, 0.0
  %vm1279 = vcmp.ge.f32.partialorder %v694, 0.0
  %vm1280 = vcmp.ge.f32.partialorder %v733, 0.0
  %vm1281 = vcmp.ge.f32.partialorder %v735, 0.0
  %vm1282 = vcmp.ge.f32.partialorder %v774, 0.0
  %vm1283 = vcmp.ge.f32.partialorder %v776, 0.0
  %vm1284 = vcmp.ge.f32.partialorder %v815, 0.0
  %vm1285 = vcmp.ge.f32.partialorder %v817, 0.0
  %vm1286 = vcmp.ge.f32.partialorder %v856, 0.0
  %vm1287 = vcmp.ge.f32.partialorder %v858, 0.0
  %vm1288 = vcmp.ge.f32.partialorder %v897, 0.0
  %vm1289 = vcmp.ge.f32.partialorder %v899, 0.0
  %vm1290 = vcmp.ge.f32.partialorder %v938, 0.0
  %vm1291 = vcmp.ge.f32.partialorder %v940, 0.0
  %vm1292 = vcmp.ge.f32.partialorder %v979, 0.0
  %vm1293 = vcmp.ge.f32.partialorder %v981, 0.0
  %vm1294 = vcmp.ge.f32.partialorder %v1020, 0.0
  %vm1295 = vcmp.ge.f32.partialorder %v1022, 0.0
  %vm1296 = vcmp.ge.f32.partialorder %v1061, 0.0
  %vm1297 = vcmp.ge.f32.partialorder %v1063, 0.0
  %vm1298 = vcmp.ge.f32.partialorder %v1102, 0.0
  %vm1299 = vcmp.ge.f32.partialorder %v1104, 0.0
  %vm1300 = vcmp.ge.f32.partialorder %v1143, 0.0
  %vm1301 = vcmp.ge.f32.partialorder %v1145, 0.0
  %vm1302 = vcmp.ge.f32.partialorder %v1184, 0.0
  %vm1303 = vcmp.ge.f32.partialorder %v1186, 0.0
  %vm1304 = vcmp.ge.f32.partialorder %v1225, 0.0
  %vm1305 = vcmp.ge.f32.partialorder %v1227, 0.0
  %vm1306 = vcmp.ge.f32.partialorder %v1266, 0.0
  %vm1307 = vcmp.ge.f32.partialorder %v1268, 0.0
  %v1308 = vmul.f32 %v569, 0.1
  %v1309 = vmul.f32 %v571, 0.1
  %v1310 = vmul.f32 %v610, 0.1
  %v1311 = vmul.f32 %v612, 0.1
  %v1312 = vmul.f32 %v651, 0.1
  %v1313 = vmul.f32 %v653, 0.1
  %v1314 = vmul.f32 %v692, 0.1
  %v1315 = vmul.f32 %v694, 0.1
  %v1316 = vmul.f32 %v733, 0.1
  %v1317 = vmul.f32 %v735, 0.1
  %v1318 = vmul.f32 %v774, 0.1
  %v1319 = vmul.f32 %v776, 0.1
  %v1320 = vmul.f32 %v815, 0.1
  %v1321 = vmul.f32 %v817, 0.1
  %v1322 = vmul.f32 %v856, 0.1
  %v1323 = vmul.f32 %v858, 0.1
  %v1324 = vmul.f32 %v897, 0.1
  %v1325 = vmul.f32 %v899, 0.1
  %v1326 = vmul.f32 %v938, 0.1
  %v1327 = vmul.f32 %v940, 0.1
  %v1328 = vmul.f32 %v979, 0.1
  %v1329 = vmul.f32 %v981, 0.1
  %v1330 = vmul.f32 %v1020, 0.1
  %v1331 = vmul.f32 %v1022, 0.1
  %v1332 = vmul.f32 %v1061, 0.1
  %v1333 = vmul.f32 %v1063, 0.1
  %v1334 = vmul.f32 %v1102, 0.1
  %v1335 = vmul.f32 %v1104, 0.1
  %v1336 = vmul.f32 %v1143, 0.1
  %v1337 = vmul.f32 %v1145, 0.1
  %v1338 = vmul.f32 %v1184, 0.1
  %v1339 = vmul.f32 %v1186, 0.1
  %v1340 = vmul.f32 %v1225, 0.1
  %v1341 = vmul.f32 %v1227, 0.1
  %v1342 = vmul.f32 %v1266, 0.1
  %v1343 = vmul.f32 %v1268, 0.1
  %v1344 = vsel %vm1272, %v569, %v1308
  %v1345 = vsel %vm1273, %v571, %v1309
  %v1346 = vsel %vm1274, %v610, %v1310
  %v1347 = vsel %vm1275, %v612, %v1311
  %v1348 = vsel %vm1276, %v651, %v1312
  %v1349 = vsel %vm1277, %v653, %v1313
  %v1350 = vsel %vm1278, %v692, %v1314
  %v1351 = vsel %vm1279, %v694, %v1315
  %v1352 = vsel %vm1280, %v733, %v1316
  %v1353 = vsel %vm1281, %v735, %v1317
  %v1354 = vsel %vm1282, %v774, %v1318
  %v1355 = vsel %vm1283, %v776, %v1319
  %v1356 = vsel %vm1284, %v815, %v1320
  %v1357 = vsel %vm1285, %v817, %v1321
  %v1358 = vsel %vm1286, %v856, %v1322
  %v1359 = vsel %vm1287, %v858, %v1323
  %v1360 = vsel %vm1288, %v897, %v1324
  %v1361 = vsel %vm1289, %v899, %v1325
  %v1362 = vsel %vm1290, %v938, %v1326
  %v1363 = vsel %vm1291, %v940, %v1327
  %v1364 = vsel %vm1292, %v979, %v1328
  %v1365 = vsel %vm1293, %v981, %v1329
  %v1366 = vsel %vm1294, %v1020, %v1330
  %v1367 = vsel %vm1295, %v1022, %v1331
  %v1368 = vsel %vm1296, %v1061, %v1332
  %v1369 = vsel %vm1297, %v1063, %v1333
  %v1370 = vsel %vm1298, %v1102, %v1334
  %v1371 = vsel %vm1299, %v1104, %v1335
  %v1372 = vsel %vm1300, %v1143, %v1336
  %v1373 = vsel %vm1301, %v1145, %v1337
  %v1374 = vsel %vm1302, %v1184, %v1338
  %v1375 = vsel %vm1303, %v1186, %v1339
  %v1376 = vsel %vm1304, %v1225, %v1340
  %v1377 = vsel %vm1305, %v1227, %v1341
  %v1378 = vsel %vm1306, %v1266, %v1342
  %v1379 = vsel %vm1307, %v1268, %v1343
  %v1380 = vpack.c.bf16 %v1344, %v1344
  %v1381 = vpack.c.bf16 %v1345, %v1345
  %v1382 = vpack.c.bf16 %v1346, %v1346
  %v1383 = vpack.c.bf16 %v1347, %v1347
  %v1384 = vpack.c.bf16 %v1348, %v1348
  %v1385 = vpack.c.bf16 %v1349, %v1349
  %v1386 = vpack.c.bf16 %v1350, %v1350
  %v1387 = vpack.c.bf16 %v1351, %v1351
  %v1388 = vpack.c.bf16 %v1352, %v1352
  %v1389 = vpack.c.bf16 %v1353, %v1353
  %v1390 = vpack.c.bf16 %v1354, %v1354
  %v1391 = vpack.c.bf16 %v1355, %v1355
  %v1392 = vpack.c.bf16 %v1356, %v1356
  %v1393 = vpack.c.bf16 %v1357, %v1357
  %v1394 = vpack.c.bf16 %v1358, %v1358
  %v1395 = vpack.c.bf16 %v1359, %v1359
  %v1396 = vpack.c.bf16 %v1360, %v1360
  %v1397 = vpack.c.bf16 %v1361, %v1361
  %v1398 = vpack.c.bf16 %v1362, %v1362
  %v1399 = vpack.c.bf16 %v1363, %v1363
  %v1400 = vpack.c.bf16 %v1364, %v1364
  %v1401 = vpack.c.bf16 %v1365, %v1365
  %v1402 = vpack.c.bf16 %v1366, %v1366
  %v1403 = vpack.c.bf16 %v1367, %v1367
  %v1404 = vpack.c.bf16 %v1368, %v1368
  %v1405 = vpack.c.bf16 %v1369, %v1369
  %v1406 = vpack.c.bf16 %v1370, %v1370
  %v1407 = vpack.c.bf16 %v1371, %v1371
  %v1408 = vpack.c.bf16 %v1372, %v1372
  %v1409 = vpack.c.bf16 %v1373, %v1373
  %v1410 = vpack.c.bf16 %v1374, %v1374
  %v1411 = vpack.c.bf16 %v1375, %v1375
  %v1412 = vpack.c.bf16 %v1376, %v1376
  %v1413 = vpack.c.bf16 %v1377, %v1377
  %v1414 = vpack.c.bf16 %v1378, %v1378
  %v1415 = vpack.c.bf16 %v1379, %v1379
  %v1452 = vunpack.c.l.b16 %v1380
  %v1453 = vunpack.c.l.b16 %v1381
  %v1454 = vunpack.c.l.b16 %v1382
  %v1455 = vunpack.c.l.b16 %v1383
  %v1456 = vunpack.c.l.b16 %v1384
  %v1457 = vunpack.c.l.b16 %v1385
  %v1458 = vunpack.c.l.b16 %v1386
  %v1459 = vunpack.c.l.b16 %v1387
  %v1460 = vunpack.c.l.b16 %v1388
  %v1461 = vunpack.c.l.b16 %v1389
  %v1462 = vunpack.c.l.b16 %v1390
  %v1463 = vunpack.c.l.b16 %v1391
  %v1464 = vunpack.c.l.b16 %v1392
  %v1465 = vunpack.c.l.b16 %v1393
  %v1466 = vunpack.c.l.b16 %v1394
  %v1467 = vunpack.c.l.b16 %v1395
  %v1468 = vunpack.c.l.b16 %v1396
  %v1469 = vunpack.c.l.b16 %v1397
  %v1470 = vunpack.c.l.b16 %v1398
  %v1471 = vunpack.c.l.b16 %v1399
  %v1472 = vunpack.c.l.b16 %v1400
  %v1473 = vunpack.c.l.b16 %v1401
  %v1474 = vunpack.c.l.b16 %v1402
  %v1475 = vunpack.c.l.b16 %v1403
  %v1476 = vunpack.c.l.b16 %v1404
  %v1477 = vunpack.c.l.b16 %v1405
  %v1478 = vunpack.c.l.b16 %v1406
  %v1479 = vunpack.c.l.b16 %v1407
  %v1480 = vunpack.c.l.b16 %v1408
  %v1481 = vunpack.c.l.b16 %v1409
  %v1482 = vunpack.c.l.b16 %v1410
  %v1483 = vunpack.c.l.b16 %v1411
  %v1484 = vunpack.c.l.b16 %v1412
  %v1485 = vunpack.c.l.b16 %v1413
  %v1486 = vunpack.c.l.b16 %v1414
  %v1487 = vunpack.c.l.b16 %v1415
  %v1488 = vpack.c.b16 %v1453, %v1452
  %v1489 = vpack.c.b16 %v1455, %v1454
  %v1490 = vpack.c.b16 %v1457, %v1456
  %v1491 = vpack.c.b16 %v1459, %v1458
  %v1492 = vpack.c.b16 %v1461, %v1460
  %v1493 = vpack.c.b16 %v1463, %v1462
  %v1494 = vpack.c.b16 %v1465, %v1464
  %v1495 = vpack.c.b16 %v1467, %v1466
  %v1496 = vpack.c.b16 %v1469, %v1468
  %v1497 = vpack.c.b16 %v1471, %v1470
  %v1498 = vpack.c.b16 %v1473, %v1472
  %v1499 = vpack.c.b16 %v1475, %v1474
  %v1500 = vpack.c.b16 %v1477, %v1476
  %v1501 = vpack.c.b16 %v1479, %v1478
  %v1502 = vpack.c.b16 %v1481, %v1480
  %v1503 = vpack.c.b16 %v1483, %v1482
  %v1504 = vpack.c.b16 %v1485, %v1484
  %v1505 = vpack.c.b16 %v1487, %v1486
  %1524 = vst [vmem:[%s3] sm:$0xff] %v1488
  %1525 = vst [vmem:[%s3 + $0x8] sm:$0xff] %v1489
  %1526 = vst [vmem:[%s3 + $0x10] sm:$0xff] %v1490
  %1527 = vst [vmem:[%s3 + $0x18] sm:$0xff] %v1491
  %1528 = vst [vmem:[%s3 + $0x20] sm:$0xff] %v1492
  %1529 = vst [vmem:[%s3 + $0x28] sm:$0xff] %v1493
  %1530 = vst [vmem:[%s3 + $0x30] sm:$0xff] %v1494
  %1531 = vst [vmem:[%s3 + $0x38] sm:$0xff] %v1495
  %1532 = vst [vmem:[%s3 + $0x40] sm:$0xff] %v1496
  %1533 = vst [vmem:[%s3 + $0x48] sm:$0xff] %v1497
  %1534 = vst [vmem:[%s3 + $0x50] sm:$0xff] %v1498
  %1535 = vst [vmem:[%s3 + $0x58] sm:$0xff] %v1499
  %1536 = vst [vmem:[%s3 + $0x60] sm:$0xff] %v1500
  %1537 = vst [vmem:[%s3 + $0x68] sm:$0xff] %v1501
  %1538 = vst [vmem:[%s3 + $0x70] sm:$0xff] %v1502
  %1539 = vst [vmem:[%s3 + $0x78] sm:$0xff] %v1503
  %1540 = vst [vmem:[%s3 + $0x80] sm:$0xff] %v1504
  %1541 = vst [vmem:[%s3 + $0x88] sm:$0xff] %v1505
  // Predicated region
  $region14: #{discriminator_forward.5} parent=0 // pred_check
    _
  $region15: #{discriminator_forward.5} parent=0 // pred_check_branch
    %1543 = sbr.rel (0) target = $region17
  $region16: #{discriminator_forward.5} parent=0 // pred_region
    _
  $region17: #{discriminator_forward.5} parent=0 // pred_fallthru
    _
  // Predicated region
  $region18: #{discriminator_forward.5} parent=0 // pred_check
    _
  $region19: #{discriminator_forward.5} parent=0 // pred_check_branch
    %1545 = sbr.rel (0) target = $region21
  $region20: #{discriminator_forward.5} parent=0 // pred_region
    _
  $region21: #{discriminator_forward.5} parent=0 // pred_fallthru
    _

// kernel: discriminator_forward.6
$region0: #{discriminator_forward.6}
  #allocation0 [shape = 'u32[]', space=smem, size = 0x4, offset = 0x4, fixed_abs, tag = 'smem constant byte address 0x4 - core index']
  #allocation1 [shape = 'u32[144,128]{1,0:T(1,128)}', space=vmem, size = 0x12000, scoped, tag = 'internal scratch']
  %s0 = inlined_call_operand.vmem [shape: bf16[16,96], index: 0, kind: input, shape index: {}]
  %s1 = inlined_call_operand.vmem [shape: bf16[96,1152], index: 1, kind: input, shape index: {}]
  %s2 = inlined_call_operand.vmem [shape: f32[16,1], index: 2, kind: input, shape index: {}]
  %s3 = inlined_call_operand.vmem [shape: bf16[16,1152], index: 3, kind: output, shape index: {}]
  %s4 = sld [smem:[#allocation0]]
  $region22: #{discriminator_forward.6} parent=0
    _
  %s6 = ssub.s32 1, %s4
  %s7 = scalar_select 0, %s6, %s4
  // Predicated region
  $region2: #{discriminator_forward.6} parent=0 // pred_check
    _
  $region3: #{discriminator_forward.6} parent=0 // pred_check_branch
    %9 = sbr.rel (0) target = $region5
  $region4: #{discriminator_forward.6} parent=0 // pred_region
    _
  $region5: #{discriminator_forward.6} parent=0 // pred_fallthru
    _
  // Predicated region
  $region6: #{discriminator_forward.6} parent=0 // pred_check
    _
  $region7: #{discriminator_forward.6} parent=0 // pred_check_branch
    %11 = sbr.rel (0) target = $region9
  $region8: #{discriminator_forward.6} parent=0 // pred_region
    _
  $region9: #{discriminator_forward.6} parent=0 // pred_fallthru
    _
  // Predicated region
  $region10: #{discriminator_forward.6} parent=0 // pred_check
    _
  $region11: #{discriminator_forward.6} parent=0 // pred_check_branch
    %13 = sbr.rel (0) target = $region13
  $region12: #{discriminator_forward.6} parent=0 // pred_region
    _
  $region13: #{discriminator_forward.6} parent=0 // pred_fallthru
    _
  %v15 = vld [vmem:[%s0] sm:$0xf]
  %v16 = vld [vmem:[%s0 + $0x4] sm:$0xf]
  %v17 = vld [vmem:[%s1] sm:$0xff]
  %v18 = vld [vmem:[%s1 + $0x8] sm:$0xff]
  %v19 = vld [vmem:[%s1 + $0x10] sm:$0xff]
  %v20 = vld [vmem:[%s1 + $0x18] sm:$0xff]
  %v21 = vld [vmem:[%s1 + $0x20] sm:$0xf]
  %v22 = vld [vmem:[%s1 + $0x24] sm:$0xff]
  %v23 = vld [vmem:[%s1 + $0x2c] sm:$0xff]
  %v24 = vld [vmem:[%s1 + $0x34] sm:$0xff]
  %v25 = vld [vmem:[%s1 + $0x3c] sm:$0xff]
  %v26 = vld [vmem:[%s1 + $0x44] sm:$0xf]
  %v27 = vld [vmem:[%s1 + $0x48] sm:$0xff]
  %v28 = vld [vmem:[%s1 + $0x50] sm:$0xff]
  %v29 = vld [vmem:[%s1 + $0x58] sm:$0xff]
  %v30 = vld [vmem:[%s1 + $0x60] sm:$0xff]
  %v31 = vld [vmem:[%s1 + $0x68] sm:$0xf]
  %v32 = vld [vmem:[%s1 + $0x6c] sm:$0xff]
  %v33 = vld [vmem:[%s1 + $0x74] sm:$0xff]
  %v34 = vld [vmem:[%s1 + $0x7c] sm:$0xff]
  %v35 = vld [vmem:[%s1 + $0x84] sm:$0xff]
  %v36 = vld [vmem:[%s1 + $0x8c] sm:$0xf]
  %v37 = vld [vmem:[%s1 + $0x90] sm:$0xff]
  %v38 = vld [vmem:[%s1 + $0x98] sm:$0xff]
  %v39 = vld [vmem:[%s1 + $0xa0] sm:$0xff]
  %v40 = vld [vmem:[%s1 + $0xa8] sm:$0xff]
  %v41 = vld [vmem:[%s1 + $0xb0] sm:$0xf]
  %v42 = vld [vmem:[%s1 + $0xb4] sm:$0xff]
  %v43 = vld [vmem:[%s1 + $0xbc] sm:$0xff]
  %v44 = vld [vmem:[%s1 + $0xc4] sm:$0xff]
  %v45 = vld [vmem:[%s1 + $0xcc] sm:$0xff]
  %v46 = vld [vmem:[%s1 + $0xd4] sm:$0xf]
  %v47 = vld [vmem:[%s1 + $0xd8] sm:$0xff]
  %v48 = vld [vmem:[%s1 + $0xe0] sm:$0xff]
  %v49 = vld [vmem:[%s1 + $0xe8] sm:$0xff]
  %v50 = vld [vmem:[%s1 + $0xf0] sm:$0xff]
  %v51 = vld [vmem:[%s1 + $0xf8] sm:$0xf]
  %v52 = vld [vmem:[%s1 + $0xfc] sm:$0xff]
  %v53 = vld [vmem:[%s1 + $0x104] sm:$0xff]
  %v54 = vld [vmem:[%s1 + $0x10c] sm:$0xff]
  %v55 = vld [vmem:[%s1 + $0x114] sm:$0xff]
  %v56 = vld [vmem:[%s1 + $0x11c] sm:$0xf]
  %v57 = vld [vmem:[%s1 + $0x120] sm:$0xff]
  %v58 = vld [vmem:[%s1 + $0x128] sm:$0xff]
  %v59 = vld [vmem:[%s1 + $0x130] sm:$0xff]
  %v60 = vld [vmem:[%s1 + $0x138] sm:$0xff]
  %v61 = vld [vmem:[%s1 + $0x140] sm:$0xf]
  %v62 = vld [vmem:[%s1 + $0x144] sm:$0xff]
  %v63 = vld [vmem:[%s1 + $0x14c] sm:$0xff]
  %v64 = vld [vmem:[%s1 + $0x154] sm:$0xff]
  %v65 = vld [vmem:[%s1 + $0x15c] sm:$0xff]
  %v66 = vld [vmem:[%s1 + $0x164] sm:$0xf]
  %v67 = vld [vmem:[%s1 + $0x168] sm:$0xff]
  %v68 = vld [vmem:[%s1 + $0x170] sm:$0xff]
  %v69 = vld [vmem:[%s1 + $0x178] sm:$0xff]
  %v70 = vld [vmem:[%s1 + $0x180] sm:$0xff]
  %v71 = vld [vmem:[%s1 + $0x188] sm:$0xf]
  %v72 = vld [vmem:[%s1 + $0x18c] sm:$0xff]
  %v73 = vld [vmem:[%s1 + $0x194] sm:$0xff]
  %v74 = vld [vmem:[%s1 + $0x19c] sm:$0xff]
  %v75 = vld [vmem:[%s1 + $0x1a4] sm:$0xff]
  %v76 = vld [vmem:[%s1 + $0x1ac] sm:$0xf]
  %v77 = vld [vmem:[%s2] sm:$0xff]
  %v78 = vld [vmem:[%s2 + $0x8] sm:$0xff]
  %80 = vset.pattern.permute.xlu0 0
  %81 = vperm.xlu0 %80, %v77
  %v82 = vpop.permute.xlu0 %81
  %85 = vset.pattern.permute.xlu0 0
  %86 = vperm.xlu0 %85, %v78
  %v87 = vpop.permute.xlu0 %86
  %v91 = vunpack.c.l.b16 %v15
  %v92 = vunpack.c.l.b16 %v16
  %v93 = vpack.c.b16 %v92, %v91
  %v154 = vunpack.c.l.b16 %v17
  %v155 = vunpack.c.h.b16 %v17
  %v156 = vunpack.c.l.b16 %v18
  %v157 = vunpack.c.h.b16 %v18
  %v158 = vunpack.c.l.b16 %v19
  %v159 = vunpack.c.h.b16 %v19
  %v160 = vunpack.c.l.b16 %v20
  %v161 = vunpack.c.h.b16 %v20
  %v162 = vunpack.c.l.b16 %v21
  %v163 = vunpack.c.l.b16 %v22
  %v164 = vunpack.c.h.b16 %v22
  %v165 = vunpack.c.l.b16 %v23
  %v166 = vunpack.c.h.b16 %v23
  %v167 = vunpack.c.l.b16 %v24
  %v168 = vunpack.c.h.b16 %v24
  %v169 = vunpack.c.l.b16 %v25
  %v170 = vunpack.c.h.b16 %v25
  %v171 = vunpack.c.l.b16 %v26
  %v172 = vunpack.c.l.b16 %v27
  %v173 = vunpack.c.h.b16 %v27
  %v174 = vunpack.c.l.b16 %v28
  %v175 = vunpack.c.h.b16 %v28
  %v176 = vunpack.c.l.b16 %v29
  %v177 = vunpack.c.h.b16 %v29
  %v178 = vunpack.c.l.b16 %v30
  %v179 = vunpack.c.h.b16 %v30
  %v180 = vunpack.c.l.b16 %v31
  %v181 = vunpack.c.l.b16 %v32
  %v182 = vunpack.c.h.b16 %v32
  %v183 = vunpack.c.l.b16 %v33
  %v184 = vunpack.c.h.b16 %v33
  %v185 = vunpack.c.l.b16 %v34
  %v186 = vunpack.c.h.b16 %v34
  %v187 = vunpack.c.l.b16 %v35
  %v188 = vunpack.c.h.b16 %v35
  %v189 = vunpack.c.l.b16 %v36
  %v190 = vunpack.c.l.b16 %v37
  %v191 = vunpack.c.h.b16 %v37
  %v192 = vunpack.c.l.b16 %v38
  %v193 = vunpack.c.h.b16 %v38
  %v194 = vunpack.c.l.b16 %v39
  %v195 = vunpack.c.h.b16 %v39
  %v196 = vunpack.c.l.b16 %v40
  %v197 = vunpack.c.h.b16 %v40
  %v198 = vunpack.c.l.b16 %v41
  %v199 = vunpack.c.l.b16 %v42
  %v200 = vunpack.c.h.b16 %v42
  %v201 = vunpack.c.l.b16 %v43
  %v202 = vunpack.c.h.b16 %v43
  %v203 = vunpack.c.l.b16 %v44
  %v204 = vunpack.c.h.b16 %v44
  %v205 = vunpack.c.l.b16 %v45
  %v206 = vunpack.c.h.b16 %v45
  %v207 = vunpack.c.l.b16 %v46
  %v208 = vunpack.c.l.b16 %v47
  %v209 = vunpack.c.h.b16 %v47
  %v210 = vunpack.c.l.b16 %v48
  %v211 = vunpack.c.h.b16 %v48
  %v212 = vunpack.c.l.b16 %v49
  %v213 = vunpack.c.h.b16 %v49
  %v214 = vunpack.c.l.b16 %v50
  %v215 = vunpack.c.h.b16 %v50
  %v216 = vunpack.c.l.b16 %v51
  %v217 = vunpack.c.l.b16 %v52
  %v218 = vunpack.c.h.b16 %v52
  %v219 = vunpack.c.l.b16 %v53
  %v220 = vunpack.c.h.b16 %v53
  %v221 = vunpack.c.l.b16 %v54
  %v222 = vunpack.c.h.b16 %v54
  %v223 = vunpack.c.l.b16 %v55
  %v224 = vunpack.c.h.b16 %v55
  %v225 = vunpack.c.l.b16 %v56
  %v226 = vunpack.c.l.b16 %v57
  %v227 = vunpack.c.h.b16 %v57
  %v228 = vunpack.c.l.b16 %v58
  %v229 = vunpack.c.h.b16 %v58
  %v230 = vunpack.c.l.b16 %v59
  %v231 = vunpack.c.h.b16 %v59
  %v232 = vunpack.c.l.b16 %v60
  %v233 = vunpack.c.h.b16 %v60
  %v234 = vunpack.c.l.b16 %v61
  %v235 = vunpack.c.l.b16 %v62
  %v236 = vunpack.c.h.b16 %v62
  %v237 = vunpack.c.l.b16 %v63
  %v238 = vunpack.c.h.b16 %v63
  %v239 = vunpack.c.l.b16 %v64
  %v240 = vunpack.c.h.b16 %v64
  %v241 = vunpack.c.l.b16 %v65
  %v242 = vunpack.c.h.b16 %v65
  %v243 = vunpack.c.l.b16 %v66
  %v244 = vunpack.c.l.b16 %v67
  %v245 = vunpack.c.h.b16 %v67
  %v246 = vunpack.c.l.b16 %v68
  %v247 = vunpack.c.h.b16 %v68
  %v248 = vunpack.c.l.b16 %v69
  %v249 = vunpack.c.h.b16 %v69
  %v250 = vunpack.c.l.b16 %v70
  %v251 = vunpack.c.h.b16 %v70
  %v252 = vunpack.c.l.b16 %v71
  %v253 = vunpack.c.l.b16 %v72
  %v254 = vunpack.c.h.b16 %v72
  %v255 = vunpack.c.l.b16 %v73
  %v256 = vunpack.c.h.b16 %v73
  %v257 = vunpack.c.l.b16 %v74
  %v258 = vunpack.c.h.b16 %v74
  %v259 = vunpack.c.l.b16 %v75
  %v260 = vunpack.c.h.b16 %v75
  %v261 = vunpack.c.l.b16 %v76
  %v262 = vpack.c.b16 %v163, %v154
  %v263 = vpack.c.b16 %v164, %v155
  %v264 = vpack.c.b16 %v165, %v156
  %v265 = vpack.c.b16 %v166, %v157
  %v266 = vpack.c.b16 %v167, %v158
  %v267 = vpack.c.b16 %v168, %v159
  %v268 = vpack.c.b16 %v169, %v160
  %v269 = vpack.c.b16 %v170, %v161
  %v270 = vpack.c.b16 %v171, %v162
  %v271 = vpack.c.b16 %v181, %v172
  %v272 = vpack.c.b16 %v182, %v173
  %v273 = vpack.c.b16 %v183, %v174
  %v274 = vpack.c.b16 %v184, %v175
  %v275 = vpack.c.b16 %v185, %v176
  %v276 = vpack.c.b16 %v186, %v177
  %v277 = vpack.c.b16 %v187, %v178
  %v278 = vpack.c.b16 %v188, %v179
  %v279 = vpack.c.b16 %v189, %v180
  %v280 = vpack.c.b16 %v199, %v190
  %v281 = vpack.c.b16 %v200, %v191
  %v282 = vpack.c.b16 %v201, %v192
  %v283 = vpack.c.b16 %v202, %v193
  %v284 = vpack.c.b16 %v203, %v194
  %v285 = vpack.c.b16 %v204, %v195
  %v286 = vpack.c.b16 %v205, %v196
  %v287 = vpack.c.b16 %v206, %v197
  %v288 = vpack.c.b16 %v207, %v198
  %v289 = vpack.c.b16 %v217, %v208
  %v290 = vpack.c.b16 %v218, %v209
  %v291 = vpack.c.b16 %v219, %v210
  %v292 = vpack.c.b16 %v220, %v211
  %v293 = vpack.c.b16 %v221, %v212
  %v294 = vpack.c.b16 %v222, %v213
  %v295 = vpack.c.b16 %v223, %v214
  %v296 = vpack.c.b16 %v224, %v215
  %v297 = vpack.c.b16 %v225, %v216
  %v298 = vpack.c.b16 %v235, %v226
  %v299 = vpack.c.b16 %v236, %v227
  %v300 = vpack.c.b16 %v237, %v228
  %v301 = vpack.c.b16 %v238, %v229
  %v302 = vpack.c.b16 %v239, %v230
  %v303 = vpack.c.b16 %v240, %v231
  %v304 = vpack.c.b16 %v241, %v232
  %v305 = vpack.c.b16 %v242, %v233
  %v306 = vpack.c.b16 %v243, %v234
  %v307 = vpack.c.b16 %v253, %v244
  %v308 = vpack.c.b16 %v254, %v245
  %v309 = vpack.c.b16 %v255, %v246
  %v310 = vpack.c.b16 %v256, %v247
  %v311 = vpack.c.b16 %v257, %v248
  %v312 = vpack.c.b16 %v258, %v249
  %v313 = vpack.c.b16 %v259, %v250
  %v314 = vpack.c.b16 %v260, %v251
  %v315 = vpack.c.b16 %v261, %v252
  %vm370 = vcmask 785408
  %v372 = vsel %vm370, %v93, 0
  %374 = vmatprep.subr.bf16.mxu0 %v263
  %375 = vmatpush1.bf16.msra.mxu0 %v262
  %376 = vmatprep.subr.bf16.mxu0 %v272
  %377 = vmatpush1.bf16.msra.mxu0 %v271
  %378 = vmatprep.subr.bf16.mxu0 %v281
  %379 = vmatpush1.bf16.msra.mxu0 %v280
  %380 = vmatprep.subr.bf16.mxu0 %v290
  %381 = vmatpush1.bf16.msra.mxu0 %v289
  %382 = vmatprep.subr.bf16.mxu0 %v299
  %383 = vmatpush1.bf16.msra.mxu0 %v298
  %384 = vmatprep.subr.bf16.mxu0 %v308
  %385 = vmatpush1.bf16.msra.mxu0 %v307
  %386 = vmatprep.subr.bf16.mxu0 0
  %387 = vmatpush1.bf16.msra.mxu0 0
  %388 = vmatprep.subr.bf16.mxu0 0
  %389 = vmatpush1.bf16.msra.mxu0 0
  %390 = vmatprep.subr.bf16.mxu0 0
  %391 = vmatpush1.bf16.msra.mxu0 0
  %392 = vmatprep.subr.bf16.mxu0 0
  %393 = vmatpush1.bf16.msra.mxu0 0
  %394 = vmatprep.subr.bf16.mxu0 0
  %395 = vmatpush1.bf16.msra.mxu0 0
  %396 = vmatprep.subr.bf16.mxu0 0
  %397 = vmatpush1.bf16.msra.mxu0 0
  %398 = vmatprep.subr.bf16.mxu0 0
  %399 = vmatpush1.bf16.msra.mxu0 0
  %400 = vmatprep.subr.bf16.mxu0 0
  %401 = vmatpush1.bf16.msra.mxu0 0
  %402 = vmatprep.subr.bf16.mxu0 0
  %403 = vmatpush1.bf16.msra.mxu0 0
  %404 = vmatprep.subr.bf16.mxu0 0
  %405 = vmatpush1.bf16.msra.mxu0 0
  %406 = vmatprep.mubr.bf16.mxu0 0
  %407 = vmatmul.mubr.bf16.gmra.mrb[0].mxu0 %v372
  %v408 = vpop.f32.mrb[0].mxu0
  %v409 = vadd.f32 %v82, %v408
  %v410 = vpop.f32.mrb[0].mxu0
  %v411 = vadd.f32 %v82, %v410
  %v412 = vpop.f32.mrb[0].mxu0
  %v413 = vadd.f32 %v87, %v412
  %v414 = vpop.f32.mrb[0].mxu0
  %v415 = vadd.f32 %v87, %v414
  %416 = vdwg.mxu0
  %417 = vmatprep.subr.bf16.mxu0 %v265
  %418 = vmatpush1.bf16.msra.mxu0 %v264
  %419 = vmatprep.subr.bf16.mxu0 %v274
  %420 = vmatpush1.bf16.msra.mxu0 %v273
  %421 = vmatprep.subr.bf16.mxu0 %v283
  %422 = vmatpush1.bf16.msra.mxu0 %v282
  %423 = vmatprep.subr.bf16.mxu0 %v292
  %424 = vmatpush1.bf16.msra.mxu0 %v291
  %425 = vmatprep.subr.bf16.mxu0 %v301
  %426 = vmatpush1.bf16.msra.mxu0 %v300
  %427 = vmatprep.subr.bf16.mxu0 %v310
  %428 = vmatpush1.bf16.msra.mxu0 %v309
  %429 = vmatprep.subr.bf16.mxu0 0
  %430 = vmatpush1.bf16.msra.mxu0 0
  %431 = vmatprep.subr.bf16.mxu0 0
  %432 = vmatpush1.bf16.msra.mxu0 0
  %433 = vmatprep.subr.bf16.mxu0 0
  %434 = vmatpush1.bf16.msra.mxu0 0
  %435 = vmatprep.subr.bf16.mxu0 0
  %436 = vmatpush1.bf16.msra.mxu0 0
  %437 = vmatprep.subr.bf16.mxu0 0
  %438 = vmatpush1.bf16.msra.mxu0 0
  %439 = vmatprep.subr.bf16.mxu0 0
  %440 = vmatpush1.bf16.msra.mxu0 0
  %441 = vmatprep.subr.bf16.mxu0 0
  %442 = vmatpush1.bf16.msra.mxu0 0
  %443 = vmatprep.subr.bf16.mxu0 0
  %444 = vmatpush1.bf16.msra.mxu0 0
  %445 = vmatprep.subr.bf16.mxu0 0
  %446 = vmatpush1.bf16.msra.mxu0 0
  %447 = vmatprep.subr.bf16.mxu0 0
  %448 = vmatpush1.bf16.msra.mxu0 0
  %449 = vmatprep.mubr.bf16.mxu0 0
  %450 = vmatmul.mubr.bf16.gmra.mrb[0].mxu0 %v372
  %v451 = vpop.f32.mrb[0].mxu0
  %v452 = vadd.f32 %v82, %v451
  %v453 = vpop.f32.mrb[0].mxu0
  %v454 = vadd.f32 %v82, %v453
  %v455 = vpop.f32.mrb[0].mxu0
  %v456 = vadd.f32 %v87, %v455
  %v457 = vpop.f32.mrb[0].mxu0
  %v458 = vadd.f32 %v87, %v457
  %459 = vdwg.mxu0
  %460 = vmatprep.subr.bf16.mxu0 %v267
  %461 = vmatpush1.bf16.msra.mxu0 %v266
  %462 = vmatprep.subr.bf16.mxu0 %v276
  %463 = vmatpush1.bf16.msra.mxu0 %v275
  %464 = vmatprep.subr.bf16.mxu0 %v285
  %465 = vmatpush1.bf16.msra.mxu0 %v284
  %466 = vmatprep.subr.bf16.mxu0 %v294
  %467 = vmatpush1.bf16.msra.mxu0 %v293
  %468 = vmatprep.subr.bf16.mxu0 %v303
  %469 = vmatpush1.bf16.msra.mxu0 %v302
  %470 = vmatprep.subr.bf16.mxu0 %v312
  %471 = vmatpush1.bf16.msra.mxu0 %v311
  %472 = vmatprep.subr.bf16.mxu0 0
  %473 = vmatpush1.bf16.msra.mxu0 0
  %474 = vmatprep.subr.bf16.mxu0 0
  %475 = vmatpush1.bf16.msra.mxu0 0
  %476 = vmatprep.subr.bf16.mxu0 0
  %477 = vmatpush1.bf16.msra.mxu0 0
  %478 = vmatprep.subr.bf16.mxu0 0
  %479 = vmatpush1.bf16.msra.mxu0 0
  %480 = vmatprep.subr.bf16.mxu0 0
  %481 = vmatpush1.bf16.msra.mxu0 0
  %482 = vmatprep.subr.bf16.mxu0 0
  %483 = vmatpush1.bf16.msra.mxu0 0
  %484 = vmatprep.subr.bf16.mxu0 0
  %485 = vmatpush1.bf16.msra.mxu0 0
  %486 = vmatprep.subr.bf16.mxu0 0
  %487 = vmatpush1.bf16.msra.mxu0 0
  %488 = vmatprep.subr.bf16.mxu0 0
  %489 = vmatpush1.bf16.msra.mxu0 0
  %490 = vmatprep.subr.bf16.mxu0 0
  %491 = vmatpush1.bf16.msra.mxu0 0
  %492 = vmatprep.mubr.bf16.mxu0 0
  %493 = vmatmul.mubr.bf16.gmra.mrb[0].mxu0 %v372
  %v494 = vpop.f32.mrb[0].mxu0
  %v495 = vadd.f32 %v82, %v494
  %v496 = vpop.f32.mrb[0].mxu0
  %v497 = vadd.f32 %v82, %v496
  %v498 = vpop.f32.mrb[0].mxu0
  %v499 = vadd.f32 %v87, %v498
  %v500 = vpop.f32.mrb[0].mxu0
  %v501 = vadd.f32 %v87, %v500
  %502 = vdwg.mxu0
  %503 = vmatprep.subr.bf16.mxu0 %v269
  %504 = vmatpush1.bf16.msra.mxu0 %v268
  %505 = vmatprep.subr.bf16.mxu0 %v278
  %506 = vmatpush1.bf16.msra.mxu0 %v277
  %507 = vmatprep.subr.bf16.mxu0 %v287
  %508 = vmatpush1.bf16.msra.mxu0 %v286
  %509 = vmatprep.subr.bf16.mxu0 %v296
  %510 = vmatpush1.bf16.msra.mxu0 %v295
  %511 = vmatprep.subr.bf16.mxu0 %v305
  %512 = vmatpush1.bf16.msra.mxu0 %v304
  %513 = vmatprep.subr.bf16.mxu0 %v314
  %514 = vmatpush1.bf16.msra.mxu0 %v313
  %515 = vmatprep.subr.bf16.mxu0 0
  %516 = vmatpush1.bf16.msra.mxu0 0
  %517 = vmatprep.subr.bf16.mxu0 0
  %518 = vmatpush1.bf16.msra.mxu0 0
  %519 = vmatprep.subr.bf16.mxu0 0
  %520 = vmatpush1.bf16.msra.mxu0 0
  %521 = vmatprep.subr.bf16.mxu0 0
  %522 = vmatpush1.bf16.msra.mxu0 0
  %523 = vmatprep.subr.bf16.mxu0 0
  %524 = vmatpush1.bf16.msra.mxu0 0
  %525 = vmatprep.subr.bf16.mxu0 0
  %526 = vmatpush1.bf16.msra.mxu0 0
  %527 = vmatprep.subr.bf16.mxu0 0
  %528 = vmatpush1.bf16.msra.mxu0 0
  %529 = vmatprep.subr.bf16.mxu0 0
  %530 = vmatpush1.bf16.msra.mxu0 0
  %531 = vmatprep.subr.bf16.mxu0 0
  %532 = vmatpush1.bf16.msra.mxu0 0
  %533 = vmatprep.subr.bf16.mxu0 0
  %534 = vmatpush1.bf16.msra.mxu0 0
  %535 = vmatprep.mubr.bf16.mxu0 0
  %536 = vmatmul.mubr.bf16.gmra.mrb[0].mxu0 %v372
  %v537 = vpop.f32.mrb[0].mxu0
  %v538 = vadd.f32 %v82, %v537
  %v539 = vpop.f32.mrb[0].mxu0
  %v540 = vadd.f32 %v82, %v539
  %v541 = vpop.f32.mrb[0].mxu0
  %v542 = vadd.f32 %v87, %v541
  %v543 = vpop.f32.mrb[0].mxu0
  %v544 = vadd.f32 %v87, %v543
  %545 = vdwg.mxu0
  %546 = vmatprep.subr.bf16.mxu0 0
  %547 = vmatpush1.bf16.msra.mxu0 %v270
  %548 = vmatprep.subr.bf16.mxu0 0
  %549 = vmatpush1.bf16.msra.mxu0 %v279
  %550 = vmatprep.subr.bf16.mxu0 0
  %551 = vmatpush1.bf16.msra.mxu0 %v288
  %552 = vmatprep.subr.bf16.mxu0 0
  %553 = vmatpush1.bf16.msra.mxu0 %v297
  %554 = vmatprep.subr.bf16.mxu0 0
  %555 = vmatpush1.bf16.msra.mxu0 %v306
  %556 = vmatprep.subr.bf16.mxu0 0
  %557 = vmatpush1.bf16.msra.mxu0 %v315
  %558 = vmatprep.subr.bf16.mxu0 0
  %559 = vmatpush1.bf16.msra.mxu0 0
  %560 = vmatprep.subr.bf16.mxu0 0
  %561 = vmatpush1.bf16.msra.mxu0 0
  %562 = vmatprep.subr.bf16.mxu0 0
  %563 = vmatpush1.bf16.msra.mxu0 0
  %564 = vmatprep.subr.bf16.mxu0 0
  %565 = vmatpush1.bf16.msra.mxu0 0
  %566 = vmatprep.subr.bf16.mxu0 0
  %567 = vmatpush1.bf16.msra.mxu0 0
  %568 = vmatprep.subr.bf16.mxu0 0
  %569 = vmatpush1.bf16.msra.mxu0 0
  %570 = vmatprep.subr.bf16.mxu0 0
  %571 = vmatpush1.bf16.msra.mxu0 0
  %572 = vmatprep.subr.bf16.mxu0 0
  %573 = vmatpush1.bf16.msra.mxu0 0
  %574 = vmatprep.subr.bf16.mxu0 0
  %575 = vmatpush1.bf16.msra.mxu0 0
  %576 = vmatprep.subr.bf16.mxu0 0
  %577 = vmatpush1.bf16.msra.mxu0 0
  %578 = vmatprep.mubr.bf16.mxu0 0
  %579 = vmatmul.mubr.bf16.gmra.mrb[0].mxu0 %v372
  %v580 = vpop.f32.mrb[0].mxu0
  %v581 = vadd.f32 %v82, %v580
  %v582 = vpop.f32.mrb[0].mxu0
  %v583 = vpop.f32.mrb[0].mxu0
  %v584 = vadd.f32 %v87, %v583
  %v585 = vpop.f32.mrb[0].mxu0
  %586 = vdwg.mxu0
  %vm587 = vcmp.ge.f32.partialorder %v409, 0.0
  %vm588 = vcmp.ge.f32.partialorder %v411, 0.0
  %vm589 = vcmp.ge.f32.partialorder %v452, 0.0
  %vm590 = vcmp.ge.f32.partialorder %v454, 0.0
  %vm591 = vcmp.ge.f32.partialorder %v495, 0.0
  %vm592 = vcmp.ge.f32.partialorder %v497, 0.0
  %vm593 = vcmp.ge.f32.partialorder %v538, 0.0
  %vm594 = vcmp.ge.f32.partialorder %v540, 0.0
  %vm595 = vcmp.ge.f32.partialorder %v581, 0.0
  %vm596 = vcmp.ge.f32.partialorder %v413, 0.0
  %vm597 = vcmp.ge.f32.partialorder %v415, 0.0
  %vm598 = vcmp.ge.f32.partialorder %v456, 0.0
  %vm599 = vcmp.ge.f32.partialorder %v458, 0.0
  %vm600 = vcmp.ge.f32.partialorder %v499, 0.0
  %vm601 = vcmp.ge.f32.partialorder %v501, 0.0
  %vm602 = vcmp.ge.f32.partialorder %v542, 0.0
  %vm603 = vcmp.ge.f32.partialorder %v544, 0.0
  %vm604 = vcmp.ge.f32.partialorder %v584, 0.0
  %v605 = vmul.f32 %v409, 0.1
  %v606 = vmul.f32 %v411, 0.1
  %v607 = vmul.f32 %v452, 0.1
  %v608 = vmul.f32 %v454, 0.1
  %v609 = vmul.f32 %v495, 0.1
  %v610 = vmul.f32 %v497, 0.1
  %v611 = vmul.f32 %v538, 0.1
  %v612 = vmul.f32 %v540, 0.1
  %v613 = vmul.f32 %v581, 0.1
  %v614 = vmul.f32 %v413, 0.1
  %v615 = vmul.f32 %v415, 0.1
  %v616 = vmul.f32 %v456, 0.1
  %v617 = vmul.f32 %v458, 0.1
  %v618 = vmul.f32 %v499, 0.1
  %v619 = vmul.f32 %v501, 0.1
  %v620 = vmul.f32 %v542, 0.1
  %v621 = vmul.f32 %v544, 0.1
  %v622 = vmul.f32 %v584, 0.1
  %v623 = vsel %vm587, %v409, %v605
  %v624 = vsel %vm588, %v411, %v606
  %v625 = vsel %vm589, %v452, %v607
  %v626 = vsel %vm590, %v454, %v608
  %v627 = vsel %vm591, %v495, %v609
  %v628 = vsel %vm592, %v497, %v610
  %v629 = vsel %vm593, %v538, %v611
  %v630 = vsel %vm594, %v540, %v612
  %v631 = vsel %vm595, %v581, %v613
  %v632 = vsel %vm596, %v413, %v614
  %v633 = vsel %vm597, %v415, %v615
  %v634 = vsel %vm598, %v456, %v616
  %v635 = vsel %vm599, %v458, %v617
  %v636 = vsel %vm600, %v499, %v618
  %v637 = vsel %vm601, %v501, %v619
  %v638 = vsel %vm602, %v542, %v620
  %v639 = vsel %vm603, %v544, %v621
  %v640 = vsel %vm604, %v584, %v622
  %v641 = vpack.c.bf16 %v632, %v623
  %v642 = vpack.c.bf16 %v633, %v624
  %v643 = vpack.c.bf16 %v634, %v625
  %v644 = vpack.c.bf16 %v635, %v626
  %v645 = vpack.c.bf16 %v636, %v627
  %v646 = vpack.c.bf16 %v637, %v628
  %v647 = vpack.c.bf16 %v638, %v629
  %v648 = vpack.c.bf16 %v639, %v630
  %v649 = vpack.c.bf16 %v640, %v631
  %v659 = vunpack.c.l.b16 %v641
  %v660 = vunpack.c.l.b16 %v642
  %v661 = vunpack.c.l.b16 %v643
  %v662 = vunpack.c.l.b16 %v644
  %v663 = vunpack.c.l.b16 %v645
  %v664 = vunpack.c.l.b16 %v646
  %v665 = vunpack.c.l.b16 %v647
  %v666 = vunpack.c.l.b16 %v648
  %v667 = vunpack.c.l.b16 %v649
  %v668 = vunpack.c.h.b16 %v641
  %v669 = vunpack.c.h.b16 %v642
  %v670 = vunpack.c.h.b16 %v643
  %v671 = vunpack.c.h.b16 %v644
  %v672 = vunpack.c.h.b16 %v645
  %v673 = vunpack.c.h.b16 %v646
  %v674 = vunpack.c.h.b16 %v647
  %v675 = vunpack.c.h.b16 %v648
  %v676 = vunpack.c.h.b16 %v649
  %v677 = vpack.c.b16 %v660, %v659
  %v678 = vpack.c.b16 %v662, %v661
  %v679 = vpack.c.b16 %v664, %v663
  %v680 = vpack.c.b16 %v666, %v665
  %v681 = vpack.c.b16 %v667, %v667
  %v682 = vpack.c.b16 %v669, %v668
  %v683 = vpack.c.b16 %v671, %v670
  %v684 = vpack.c.b16 %v673, %v672
  %v685 = vpack.c.b16 %v675, %v674
  %v686 = vpack.c.b16 %v676, %v676
  %697 = vst [vmem:[%s3] sm:$0xff] %v677
  %698 = vst [vmem:[%s3 + $0x8] sm:$0xff] %v678
  %699 = vst [vmem:[%s3 + $0x10] sm:$0xff] %v679
  %700 = vst [vmem:[%s3 + $0x18] sm:$0xff] %v680
  %701 = vst [vmem:[%s3 + $0x20] sm:$0xf] %v681
  %702 = vst [vmem:[%s3 + $0x24] sm:$0xff] %v682
  %703 = vst [vmem:[%s3 + $0x2c] sm:$0xff] %v683
  %704 = vst [vmem:[%s3 + $0x34] sm:$0xff] %v684
  %705 = vst [vmem:[%s3 + $0x3c] sm:$0xff] %v685
  %706 = vst [vmem:[%s3 + $0x44] sm:$0xf] %v686
  // Predicated region
  $region14: #{discriminator_forward.6} parent=0 // pred_check
    _
  $region15: #{discriminator_forward.6} parent=0 // pred_check_branch
    %708 = sbr.rel (0) target = $region17
  $region16: #{discriminator_forward.6} parent=0 // pred_region
    _
  $region17: #{discriminator_forward.6} parent=0 // pred_fallthru
    _
  // Predicated region
  $region18: #{discriminator_forward.6} parent=0 // pred_check
    _
  $region19: #{discriminator_forward.6} parent=0 // pred_check_branch
    %710 = sbr.rel (0) target = $region21
  $region20: #{discriminator_forward.6} parent=0 // pred_region
    _
  $region21: #{discriminator_forward.6} parent=0 // pred_fallthru
    _

// kernel: discriminator_forward.7
$region0: #{discriminator_forward.7}
  #allocation0 [shape = 'u32[]', space=smem, size = 0x4, offset = 0x4, fixed_abs, tag = 'smem constant byte address 0x4 - core index']
  #allocation1 [shape = 'u32[144,128]{1,0:T(1,128)}', space=vmem, size = 0x12000, scoped, tag = 'internal scratch']
  %s0 = inlined_call_operand.vmem [shape: bf16[32,192], index: 0, kind: input, shape index: {}]
  %s1 = inlined_call_operand.vmem [shape: bf16[192,288], index: 1, kind: input, shape index: {}]
  %s2 = inlined_call_operand.vmem [shape: f32[32,1], index: 2, kind: input, shape index: {}]
  %s3 = inlined_call_operand.vmem [shape: bf16[32,288], index: 3, kind: output, shape index: {}]
  %s4 = sld [smem:[#allocation0]]
  $region22: #{discriminator_forward.7} parent=0
    _
  %s6 = ssub.s32 1, %s4
  %s7 = scalar_select 0, %s6, %s4
  // Predicated region
  $region2: #{discriminator_forward.7} parent=0 // pred_check
    _
  $region3: #{discriminator_forward.7} parent=0 // pred_check_branch
    %9 = sbr.rel (0) target = $region5
  $region4: #{discriminator_forward.7} parent=0 // pred_region
    _
  $region5: #{discriminator_forward.7} parent=0 // pred_fallthru
    _
  // Predicated region
  $region6: #{discriminator_forward.7} parent=0 // pred_check
    _
  $region7: #{discriminator_forward.7} parent=0 // pred_check_branch
    %11 = sbr.rel (0) target = $region9
  $region8: #{discriminator_forward.7} parent=0 // pred_region
    _
  $region9: #{discriminator_forward.7} parent=0 // pred_fallthru
    _
  // Predicated region
  $region10: #{discriminator_forward.7} parent=0 // pred_check
    _
  $region11: #{discriminator_forward.7} parent=0 // pred_check_branch
    %13 = sbr.rel (0) target = $region13
  $region12: #{discriminator_forward.7} parent=0 // pred_region
    _
  $region13: #{discriminator_forward.7} parent=0 // pred_fallthru
    _
  %v15 = vld [vmem:[%s0] sm:$0xff]
  %v16 = vld [vmem:[%s0 + $0x8] sm:$0xff]
  %v17 = vld [vmem:[%s0 + $0x10] sm:$0xff]
  %v18 = vld [vmem:[%s0 + $0x18] sm:$0xff]
  %v19 = vld [vmem:[%s1] sm:$0xff]
  %v20 = vld [vmem:[%s1 + $0x8] sm:$0xf]
  %v21 = vld [vmem:[%s1 + $0xc] sm:$0xff]
  %v22 = vld [vmem:[%s1 + $0x14] sm:$0xf]
  %v23 = vld [vmem:[%s1 + $0x18] sm:$0xff]
  %v24 = vld [vmem:[%s1 + $0x20] sm:$0xf]
  %v25 = vld [vmem:[%s1 + $0x24] sm:$0xff]
  %v26 = vld [vmem:[%s1 + $0x2c] sm:$0xf]
  %v27 = vld [vmem:[%s1 + $0x30] sm:$0xff]
  %v28 = vld [vmem:[%s1 + $0x38] sm:$0xf]
  %v29 = vld [vmem:[%s1 + $0x3c] sm:$0xff]
  %v30 = vld [vmem:[%s1 + $0x44] sm:$0xf]
  %v31 = vld [vmem:[%s1 + $0x48] sm:$0xff]
  %v32 = vld [vmem:[%s1 + $0x50] sm:$0xf]
  %v33 = vld [vmem:[%s1 + $0x54] sm:$0xff]
  %v34 = vld [vmem:[%s1 + $0x5c] sm:$0xf]
  %v35 = vld [vmem:[%s1 + $0x60] sm:$0xff]
  %v36 = vld [vmem:[%s1 + $0x68] sm:$0xf]
  %v37 = vld [vmem:[%s1 + $0x6c] sm:$0xff]
  %v38 = vld [vmem:[%s1 + $0x74] sm:$0xf]
  %v39 = vld [vmem:[%s1 + $0x78] sm:$0xff]
  %v40 = vld [vmem:[%s1 + $0x80] sm:$0xf]
  %v41 = vld [vmem:[%s1 + $0x84] sm:$0xff]
  %v42 = vld [vmem:[%s1 + $0x8c] sm:$0xf]
  %v43 = vld [vmem:[%s1 + $0x90] sm:$0xff]
  %v44 = vld [vmem:[%s1 + $0x98] sm:$0xf]
  %v45 = vld [vmem:[%s1 + $0x9c] sm:$0xff]
  %v46 = vld [vmem:[%s1 + $0xa4] sm:$0xf]
  %v47 = vld [vmem:[%s1 + $0xa8] sm:$0xff]
  %v48 = vld [vmem:[%s1 + $0xb0] sm:$0xf]
  %v49 = vld [vmem:[%s1 + $0xb4] sm:$0xff]
  %v50 = vld [vmem:[%s1 + $0xbc] sm:$0xf]
  %v51 = vld [vmem:[%s1 + $0xc0] sm:$0xff]
  %v52 = vld [vmem:[%s1 + $0xc8] sm:$0xf]
  %v53 = vld [vmem:[%s1 + $0xcc] sm:$0xff]
  %v54 = vld [vmem:[%s1 + $0xd4] sm:$0xf]
  %v55 = vld [vmem:[%s1 + $0xd8] sm:$0xff]
  %v56 = vld [vmem:[%s1 + $0xe0] sm:$0xf]
  %v57 = vld [vmem:[%s1 + $0xe4] sm:$0xff]
  %v58 = vld [vmem:[%s1 + $0xec] sm:$0xf]
  %v59 = vld [vmem:[%s1 + $0xf0] sm:$0xff]
  %v60 = vld [vmem:[%s1 + $0xf8] sm:$0xf]
  %v61 = vld [vmem:[%s1 + $0xfc] sm:$0xff]
  %v62 = vld [vmem:[%s1 + $0x104] sm:$0xf]
  %v63 = vld [vmem:[%s1 + $0x108] sm:$0xff]
  %v64 = vld [vmem:[%s1 + $0x110] sm:$0xf]
  %v65 = vld [vmem:[%s1 + $0x114] sm:$0xff]
  %v66 = vld [vmem:[%s1 + $0x11c] sm:$0xf]
  %v67 = vld [vmem:[%s2] sm:$0xff]
  %v68 = vld [vmem:[%s2 + $0x8] sm:$0xff]
  %v69 = vld [vmem:[%s2 + $0x10] sm:$0xff]
  %v70 = vld [vmem:[%s2 + $0x18] sm:$0xff]
  %72 = vset.pattern.permute.xlu0 0
  %73 = vperm.xlu0 %72, %v67
  %v74 = vpop.permute.xlu0 %73
  %77 = vset.pattern.permute.xlu0 0
  %78 = vperm.xlu0 %77, %v68
  %v79 = vpop.permute.xlu0 %78
  %82 = vset.pattern.permute.xlu0 0
  %83 = vperm.xlu0 %82, %v69
  %v84 = vpop.permute.xlu0 %83
  %87 = vset.pattern.permute.xlu0 0
  %88 = vperm.xlu0 %87, %v70
  %v89 = vpop.permute.xlu0 %88
  %v95 = vunpack.c.l.b16 %v15
  %v96 = vunpack.c.h.b16 %v15
  %v97 = vunpack.c.l.b16 %v16
  %v98 = vunpack.c.h.b16 %v16
  %v99 = vunpack.c.l.b16 %v17
  %v100 = vunpack.c.h.b16 %v17
  %v101 = vunpack.c.l.b16 %v18
  %v102 = vunpack.c.h.b16 %v18
  %v103 = vpack.c.b16 %v97, %v95
  %v104 = vpack.c.b16 %v98, %v96
  %v105 = vpack.c.b16 %v101, %v99
  %v106 = vpack.c.b16 %v102, %v100
  %v157 = vunpack.c.l.b16 %v19
  %v158 = vunpack.c.h.b16 %v19
  %v159 = vunpack.c.l.b16 %v20
  %v160 = vunpack.c.l.b16 %v21
  %v161 = vunpack.c.h.b16 %v21
  %v162 = vunpack.c.l.b16 %v22
  %v163 = vunpack.c.l.b16 %v23
  %v164 = vunpack.c.h.b16 %v23
  %v165 = vunpack.c.l.b16 %v24
  %v166 = vunpack.c.l.b16 %v25
  %v167 = vunpack.c.h.b16 %v25
  %v168 = vunpack.c.l.b16 %v26
  %v169 = vunpack.c.l.b16 %v27
  %v170 = vunpack.c.h.b16 %v27
  %v171 = vunpack.c.l.b16 %v28
  %v172 = vunpack.c.l.b16 %v29
  %v173 = vunpack.c.h.b16 %v29
  %v174 = vunpack.c.l.b16 %v30
  %v175 = vunpack.c.l.b16 %v31
  %v176 = vunpack.c.h.b16 %v31
  %v177 = vunpack.c.l.b16 %v32
  %v178 = vunpack.c.l.b16 %v33
  %v179 = vunpack.c.h.b16 %v33
  %v180 = vunpack.c.l.b16 %v34
  %v181 = vunpack.c.l.b16 %v35
  %v182 = vunpack.c.h.b16 %v35
  %v183 = vunpack.c.l.b16 %v36
  %v184 = vunpack.c.l.b16 %v37
  %v185 = vunpack.c.h.b16 %v37
  %v186 = vunpack.c.l.b16 %v38
  %v187 = vunpack.c.l.b16 %v39
  %v188 = vunpack.c.h.b16 %v39
  %v189 = vunpack.c.l.b16 %v40
  %v190 = vunpack.c.l.b16 %v41
  %v191 = vunpack.c.h.b16 %v41
  %v192 = vunpack.c.l.b16 %v42
  %v193 = vunpack.c.l.b16 %v43
  %v194 = vunpack.c.h.b16 %v43
  %v195 = vunpack.c.l.b16 %v44
  %v196 = vunpack.c.l.b16 %v45
  %v197 = vunpack.c.h.b16 %v45
  %v198 = vunpack.c.l.b16 %v46
  %v199 = vunpack.c.l.b16 %v47
  %v200 = vunpack.c.h.b16 %v47
  %v201 = vunpack.c.l.b16 %v48
  %v202 = vunpack.c.l.b16 %v49
  %v203 = vunpack.c.h.b16 %v49
  %v204 = vunpack.c.l.b16 %v50
  %v205 = vunpack.c.l.b16 %v51
  %v206 = vunpack.c.h.b16 %v51
  %v207 = vunpack.c.l.b16 %v52
  %v208 = vunpack.c.l.b16 %v53
  %v209 = vunpack.c.h.b16 %v53
  %v210 = vunpack.c.l.b16 %v54
  %v211 = vunpack.c.l.b16 %v55
  %v212 = vunpack.c.h.b16 %v55
  %v213 = vunpack.c.l.b16 %v56
  %v214 = vunpack.c.l.b16 %v57
  %v215 = vunpack.c.h.b16 %v57
  %v216 = vunpack.c.l.b16 %v58
  %v217 = vunpack.c.l.b16 %v59
  %v218 = vunpack.c.h.b16 %v59
  %v219 = vunpack.c.l.b16 %v60
  %v220 = vunpack.c.l.b16 %v61
  %v221 = vunpack.c.h.b16 %v61
  %v222 = vunpack.c.l.b16 %v62
  %v223 = vunpack.c.l.b16 %v63
  %v224 = vunpack.c.h.b16 %v63
  %v225 = vunpack.c.l.b16 %v64
  %v226 = vunpack.c.l.b16 %v65
  %v227 = vunpack.c.h.b16 %v65
  %v228 = vunpack.c.l.b16 %v66
  %v229 = vpack.c.b16 %v160, %v157
  %v230 = vpack.c.b16 %v161, %v158
  %v231 = vpack.c.b16 %v162, %v159
  %v232 = vpack.c.b16 %v166, %v163
  %v233 = vpack.c.b16 %v167, %v164
  %v234 = vpack.c.b16 %v168, %v165
  %v235 = vpack.c.b16 %v172, %v169
  %v236 = vpack.c.b16 %v173, %v170
  %v237 = vpack.c.b16 %v174, %v171
  %v238 = vpack.c.b16 %v178, %v175
  %v239 = vpack.c.b16 %v179, %v176
  %v240 = vpack.c.b16 %v180, %v177
  %v241 = vpack.c.b16 %v184, %v181
  %v242 = vpack.c.b16 %v185, %v182
  %v243 = vpack.c.b16 %v186, %v183
  %v244 = vpack.c.b16 %v190, %v187
  %v245 = vpack.c.b16 %v191, %v188
  %v246 = vpack.c.b16 %v192, %v189
  %v247 = vpack.c.b16 %v196, %v193
  %v248 = vpack.c.b16 %v197, %v194
  %v249 = vpack.c.b16 %v198, %v195
  %v250 = vpack.c.b16 %v202, %v199
  %v251 = vpack.c.b16 %v203, %v200
  %v252 = vpack.c.b16 %v204, %v201
  %v253 = vpack.c.b16 %v208, %v205
  %v254 = vpack.c.b16 %v209, %v206
  %v255 = vpack.c.b16 %v210, %v207
  %v256 = vpack.c.b16 %v214, %v211
  %v257 = vpack.c.b16 %v215, %v212
  %v258 = vpack.c.b16 %v216, %v213
  %v259 = vpack.c.b16 %v220, %v217
  %v260 = vpack.c.b16 %v221, %v218
  %v261 = vpack.c.b16 %v222, %v219
  %v262 = vpack.c.b16 %v226, %v223
  %v263 = vpack.c.b16 %v227, %v224
  %v264 = vpack.c.b16 %v228, %v225
  %vm301 = vcmask 523264
  %v303 = vsel %vm301, %v104, 0
  %v306 = vsel %vm301, %v106, 0
  %308 = vmatprep.subr.bf16.mxu0 %v230
  %309 = vmatpush1.bf16.msra.mxu0 %v229
  %310 = vmatprep.subr.bf16.mxu0 %v233
  %311 = vmatpush1.bf16.msra.mxu0 %v232
  %312 = vmatprep.subr.bf16.mxu0 %v236
  %313 = vmatpush1.bf16.msra.mxu0 %v235
  %314 = vmatprep.subr.bf16.mxu0 %v239
  %315 = vmatpush1.bf16.msra.mxu0 %v238
  %316 = vmatprep.subr.bf16.mxu0 %v242
  %317 = vmatpush1.bf16.msra.mxu0 %v241
  %318 = vmatprep.subr.bf16.mxu0 %v245
  %319 = vmatpush1.bf16.msra.mxu0 %v244
  %320 = vmatprep.subr.bf16.mxu0 %v248
  %321 = vmatpush1.bf16.msra.mxu0 %v247
  %322 = vmatprep.subr.bf16.mxu0 %v251
  %323 = vmatpush1.bf16.msra.mxu0 %v250
  %324 = vmatprep.subr.bf16.mxu0 %v254
  %325 = vmatpush1.bf16.msra.mxu0 %v253
  %326 = vmatprep.subr.bf16.mxu0 %v257
  %327 = vmatpush1.bf16.msra.mxu0 %v256
  %328 = vmatprep.subr.bf16.mxu0 %v260
  %329 = vmatpush1.bf16.msra.mxu0 %v259
  %330 = vmatprep.subr.bf16.mxu0 %v263
  %331 = vmatpush1.bf16.msra.mxu0 %v262
  %332 = vmatprep.subr.bf16.mxu0 0
  %333 = vmatpush1.bf16.msra.mxu0 0
  %334 = vmatprep.subr.bf16.mxu0 0
  %335 = vmatpush1.bf16.msra.mxu0 0
  %336 = vmatprep.subr.bf16.mxu0 0
  %337 = vmatpush1.bf16.msra.mxu0 0
  %338 = vmatprep.subr.bf16.mxu0 0
  %339 = vmatpush1.bf16.msra.mxu0 0
  %340 = vmatprep.mubr.bf16.mxu0 %v303
  %341 = vmatmul.mubr.bf16.gmra.mrb[0].mxu0 %v103
  %v342 = vpop.f32.mrb[0].mxu0
  %v343 = vadd.f32 %v74, %v342
  %v344 = vpop.f32.mrb[0].mxu0
  %v345 = vadd.f32 %v74, %v344
  %v346 = vpop.f32.mrb[0].mxu0
  %v347 = vadd.f32 %v79, %v346
  %v348 = vpop.f32.mrb[0].mxu0
  %v349 = vadd.f32 %v79, %v348
  %350 = vmatprep.mubr.bf16.mxu0 %v306
  %351 = vmatmul.mubr.bf16.gmra.mrb[0].mxu0 %v105
  %v352 = vpop.f32.mrb[0].mxu0
  %v353 = vadd.f32 %v84, %v352
  %v354 = vpop.f32.mrb[0].mxu0
  %v355 = vadd.f32 %v84, %v354
  %v356 = vpop.f32.mrb[0].mxu0
  %v357 = vadd.f32 %v89, %v356
  %v358 = vpop.f32.mrb[0].mxu0
  %v359 = vadd.f32 %v89, %v358
  %360 = vdwg.mxu0
  %361 = vmatprep.subr.bf16.mxu0 0
  %362 = vmatpush1.bf16.msra.mxu0 %v231
  %363 = vmatprep.subr.bf16.mxu0 0
  %364 = vmatpush1.bf16.msra.mxu0 %v234
  %365 = vmatprep.subr.bf16.mxu0 0
  %366 = vmatpush1.bf16.msra.mxu0 %v237
  %367 = vmatprep.subr.bf16.mxu0 0
  %368 = vmatpush1.bf16.msra.mxu0 %v240
  %369 = vmatprep.subr.bf16.mxu0 0
  %370 = vmatpush1.bf16.msra.mxu0 %v243
  %371 = vmatprep.subr.bf16.mxu0 0
  %372 = vmatpush1.bf16.msra.mxu0 %v246
  %373 = vmatprep.subr.bf16.mxu0 0
  %374 = vmatpush1.bf16.msra.mxu0 %v249
  %375 = vmatprep.subr.bf16.mxu0 0
  %376 = vmatpush1.bf16.msra.mxu0 %v252
  %377 = vmatprep.subr.bf16.mxu0 0
  %378 = vmatpush1.bf16.msra.mxu0 %v255
  %379 = vmatprep.subr.bf16.mxu0 0
  %380 = vmatpush1.bf16.msra.mxu0 %v258
  %381 = vmatprep.subr.bf16.mxu0 0
  %382 = vmatpush1.bf16.msra.mxu0 %v261
  %383 = vmatprep.subr.bf16.mxu0 0
  %384 = vmatpush1.bf16.msra.mxu0 %v264
  %385 = vmatprep.subr.bf16.mxu0 0
  %386 = vmatpush1.bf16.msra.mxu0 0
  %387 = vmatprep.subr.bf16.mxu0 0
  %388 = vmatpush1.bf16.msra.mxu0 0
  %389 = vmatprep.subr.bf16.mxu0 0
  %390 = vmatpush1.bf16.msra.mxu0 0
  %391 = vmatprep.subr.bf16.mxu0 0
  %392 = vmatpush1.bf16.msra.mxu0 0
  %393 = vmatprep.mubr.bf16.mxu0 %v303
  %394 = vmatmul.mubr.bf16.gmra.mrb[0].mxu0 %v103
  %v395 = vpop.f32.mrb[0].mxu0
  %v396 = vadd.f32 %v74, %v395
  %v397 = vpop.f32.mrb[0].mxu0
  %v398 = vpop.f32.mrb[0].mxu0
  %v399 = vadd.f32 %v79, %v398
  %v400 = vpop.f32.mrb[0].mxu0
  %401 = vmatprep.mubr.bf16.mxu0 %v306
  %402 = vmatmul.mubr.bf16.gmra.mrb[0].mxu0 %v105
  %v403 = vpop.f32.mrb[0].mxu0
  %v404 = vadd.f32 %v84, %v403
  %v405 = vpop.f32.mrb[0].mxu0
  %v406 = vpop.f32.mrb[0].mxu0
  %v407 = vadd.f32 %v89, %v406
  %v408 = vpop.f32.mrb[0].mxu0
  %409 = vdwg.mxu0
  %vm410 = vcmp.ge.f32.partialorder %v343, 0.0
  %vm411 = vcmp.ge.f32.partialorder %v345, 0.0
  %vm412 = vcmp.ge.f32.partialorder %v396, 0.0
  %vm413 = vcmp.ge.f32.partialorder %v347, 0.0
  %vm414 = vcmp.ge.f32.partialorder %v349, 0.0
  %vm415 = vcmp.ge.f32.partialorder %v399, 0.0
  %vm416 = vcmp.ge.f32.partialorder %v353, 0.0
  %vm417 = vcmp.ge.f32.partialorder %v355, 0.0
  %vm418 = vcmp.ge.f32.partialorder %v404, 0.0
  %vm419 = vcmp.ge.f32.partialorder %v357, 0.0
  %vm420 = vcmp.ge.f32.partialorder %v359, 0.0
  %vm421 = vcmp.ge.f32.partialorder %v407, 0.0
  %v422 = vmul.f32 %v343, 0.1
  %v423 = vmul.f32 %v345, 0.1
  %v424 = vmul.f32 %v396, 0.1
  %v425 = vmul.f32 %v347, 0.1
  %v426 = vmul.f32 %v349, 0.1
  %v427 = vmul.f32 %v399, 0.1
  %v428 = vmul.f32 %v353, 0.1
  %v429 = vmul.f32 %v355, 0.1
  %v430 = vmul.f32 %v404, 0.1
  %v431 = vmul.f32 %v357, 0.1
  %v432 = vmul.f32 %v359, 0.1
  %v433 = vmul.f32 %v407, 0.1
  %v434 = vsel %vm410, %v343, %v422
  %v435 = vsel %vm411, %v345, %v423
  %v436 = vsel %vm412, %v396, %v424
  %v437 = vsel %vm413, %v347, %v425
  %v438 = vsel %vm414, %v349, %v426
  %v439 = vsel %vm415, %v399, %v427
  %v440 = vsel %vm416, %v353, %v428
  %v441 = vsel %vm417, %v355, %v429
  %v442 = vsel %vm418, %v404, %v430
  %v443 = vsel %vm419, %v357, %v431
  %v444 = vsel %vm420, %v359, %v432
  %v445 = vsel %vm421, %v407, %v433
  %v446 = vpack.c.bf16 %v437, %v434
  %v447 = vpack.c.bf16 %v438, %v435
  %v448 = vpack.c.bf16 %v439, %v436
  %v449 = vpack.c.bf16 %v443, %v440
  %v450 = vpack.c.bf16 %v444, %v441
  %v451 = vpack.c.bf16 %v445, %v442
  %v458 = vunpack.c.l.b16 %v446
  %v459 = vunpack.c.l.b16 %v447
  %v460 = vunpack.c.l.b16 %v448
  %v461 = vunpack.c.h.b16 %v446
  %v462 = vunpack.c.h.b16 %v447
  %v463 = vunpack.c.h.b16 %v448
  %v464 = vunpack.c.l.b16 %v449
  %v465 = vunpack.c.l.b16 %v450
  %v466 = vunpack.c.l.b16 %v451
  %v467 = vunpack.c.h.b16 %v449
  %v468 = vunpack.c.h.b16 %v450
  %v469 = vunpack.c.h.b16 %v451
  %v470 = vpack.c.b16 %v459, %v458
  %v471 = vpack.c.b16 %v460, %v460
  %v472 = vpack.c.b16 %v462, %v461
  %v473 = vpack.c.b16 %v463, %v463
  %v474 = vpack.c.b16 %v465, %v464
  %v475 = vpack.c.b16 %v466, %v466
  %v476 = vpack.c.b16 %v468, %v467
  %v477 = vpack.c.b16 %v469, %v469
  %486 = vst [vmem:[%s3] sm:$0xff] %v470
  %vm487 = vcmask 257024
  %488 = vst.msk [vmem:[%s3 + $0x8] sm:$0xf] %vm487, %v471
  %489 = vst [vmem:[%s3 + $0xc] sm:$0xff] %v472
  %490 = vst.msk [vmem:[%s3 + $0x14] sm:$0xf] %vm487, %v473
  %491 = vst [vmem:[%s3 + $0x18] sm:$0xff] %v474
  %492 = vst.msk [vmem:[%s3 + $0x20] sm:$0xf] %vm487, %v475
  %493 = vst [vmem:[%s3 + $0x24] sm:$0xff] %v476
  %494 = vst.msk [vmem:[%s3 + $0x2c] sm:$0xf] %vm487, %v477
  // Predicated region
  $region14: #{discriminator_forward.7} parent=0 // pred_check
    _
  $region15: #{discriminator_forward.7} parent=0 // pred_check_branch
    %496 = sbr.rel (0) target = $region17
  $region16: #{discriminator_forward.7} parent=0 // pred_region
    _
  $region17: #{discriminator_forward.7} parent=0 // pred_fallthru
    _
  // Predicated region
  $region18: #{discriminator_forward.7} parent=0 // pred_check
    _
  $region19: #{discriminator_forward.7} parent=0 // pred_check_branch
    %498 = sbr.rel (0) target = $region21
  $region20: #{discriminator_forward.7} parent=0 // pred_region
    _
  $region21: #{discriminator_forward.7} parent=0 // pred_fallthru
    _

// kernel: discriminator_forward.8
$region0: #{discriminator_forward.8}
  #allocation0 [shape = 'u32[]', space=smem, size = 0x4, offset = 0x4, fixed_abs, tag = 'smem constant byte address 0x4 - core index']
  #allocation1 [shape = 'u32[144,128]{1,0:T(1,128)}', space=vmem, size = 0x12000, scoped, tag = 'internal scratch']
  %s0 = inlined_call_operand.vmem [shape: bf16[64,288], index: 0, kind: input, shape index: {}]
  %s1 = inlined_call_operand.vmem [shape: bf16[288,72], index: 1, kind: input, shape index: {}]
  %s2 = inlined_call_operand.vmem [shape: f32[64,1], index: 2, kind: input, shape index: {}]
  %s3 = inlined_call_operand.vmem [shape: bf16[64,72], index: 3, kind: output, shape index: {}]
  %s4 = sld [smem:[#allocation0]]
  $region22: #{discriminator_forward.8} parent=0
    _
  %s6 = ssub.s32 1, %s4
  %s7 = scalar_select 0, %s6, %s4
  // Predicated region
  $region2: #{discriminator_forward.8} parent=0 // pred_check
    _
  $region3: #{discriminator_forward.8} parent=0 // pred_check_branch
    %9 = sbr.rel (0) target = $region5
  $region4: #{discriminator_forward.8} parent=0 // pred_region
    _
  $region5: #{discriminator_forward.8} parent=0 // pred_fallthru
    _
  // Predicated region
  $region6: #{discriminator_forward.8} parent=0 // pred_check
    _
  $region7: #{discriminator_forward.8} parent=0 // pred_check_branch
    %11 = sbr.rel (0) target = $region9
  $region8: #{discriminator_forward.8} parent=0 // pred_region
    _
  $region9: #{discriminator_forward.8} parent=0 // pred_fallthru
    _
  // Predicated region
  $region10: #{discriminator_forward.8} parent=0 // pred_check
    _
  $region11: #{discriminator_forward.8} parent=0 // pred_check_branch
    %13 = sbr.rel (0) target = $region13
  $region12: #{discriminator_forward.8} parent=0 // pred_region
    _
  $region13: #{discriminator_forward.8} parent=0 // pred_fallthru
    _
  %v15 = vld [vmem:[%s0] sm:$0xff]
  %v16 = vld [vmem:[%s0 + $0x8] sm:$0xf]
  %v17 = vld [vmem:[%s0 + $0xc] sm:$0xff]
  %v18 = vld [vmem:[%s0 + $0x14] sm:$0xf]
  %v19 = vld [vmem:[%s0 + $0x18] sm:$0xff]
  %v20 = vld [vmem:[%s0 + $0x20] sm:$0xf]
  %v21 = vld [vmem:[%s0 + $0x24] sm:$0xff]
  %v22 = vld [vmem:[%s0 + $0x2c] sm:$0xf]
  %v23 = vld [vmem:[%s0 + $0x30] sm:$0xff]
  %v24 = vld [vmem:[%s0 + $0x38] sm:$0xf]
  %v25 = vld [vmem:[%s0 + $0x3c] sm:$0xff]
  %v26 = vld [vmem:[%s0 + $0x44] sm:$0xf]
  %v27 = vld [vmem:[%s0 + $0x48] sm:$0xff]
  %v28 = vld [vmem:[%s0 + $0x50] sm:$0xf]
  %v29 = vld [vmem:[%s0 + $0x54] sm:$0xff]
  %v30 = vld [vmem:[%s0 + $0x5c] sm:$0xf]
  %v31 = vld [vmem:[%s1] sm:$0xf]
  %v32 = vld [vmem:[%s1 + $0x4] sm:$0xf]
  %v33 = vld [vmem:[%s1 + $0x8] sm:$0xf]
  %v34 = vld [vmem:[%s1 + $0xc] sm:$0xf]
  %v35 = vld [vmem:[%s1 + $0x10] sm:$0xf]
  %v36 = vld [vmem:[%s1 + $0x14] sm:$0xf]
  %v37 = vld [vmem:[%s1 + $0x18] sm:$0xf]
  %v38 = vld [vmem:[%s1 + $0x1c] sm:$0xf]
  %v39 = vld [vmem:[%s1 + $0x20] sm:$0xf]
  %v40 = vld [vmem:[%s1 + $0x24] sm:$0xf]
  %v41 = vld [vmem:[%s1 + $0x28] sm:$0xf]
  %v42 = vld [vmem:[%s1 + $0x2c] sm:$0xf]
  %v43 = vld [vmem:[%s1 + $0x30] sm:$0xf]
  %v44 = vld [vmem:[%s1 + $0x34] sm:$0xf]
  %v45 = vld [vmem:[%s1 + $0x38] sm:$0xf]
  %v46 = vld [vmem:[%s1 + $0x3c] sm:$0xf]
  %v47 = vld [vmem:[%s1 + $0x40] sm:$0xf]
  %v48 = vld [vmem:[%s1 + $0x44] sm:$0xf]
  %v49 = vld [vmem:[%s1 + $0x48] sm:$0xf]
  %v50 = vld [vmem:[%s1 + $0x4c] sm:$0xf]
  %v51 = vld [vmem:[%s1 + $0x50] sm:$0xf]
  %v52 = vld [vmem:[%s1 + $0x54] sm:$0xf]
  %v53 = vld [vmem:[%s1 + $0x58] sm:$0xf]
  %v54 = vld [vmem:[%s1 + $0x5c] sm:$0xf]
  %v55 = vld [vmem:[%s1 + $0x60] sm:$0xf]
  %v56 = vld [vmem:[%s1 + $0x64] sm:$0xf]
  %v57 = vld [vmem:[%s1 + $0x68] sm:$0xf]
  %v58 = vld [vmem:[%s1 + $0x6c] sm:$0xf]
  %v59 = vld [vmem:[%s1 + $0x70] sm:$0xf]
  %v60 = vld [vmem:[%s1 + $0x74] sm:$0xf]
  %v61 = vld [vmem:[%s1 + $0x78] sm:$0xf]
  %v62 = vld [vmem:[%s1 + $0x7c] sm:$0xf]
  %v63 = vld [vmem:[%s1 + $0x80] sm:$0xf]
  %v64 = vld [vmem:[%s1 + $0x84] sm:$0xf]
  %v65 = vld [vmem:[%s1 + $0x88] sm:$0xf]
  %v66 = vld [vmem:[%s1 + $0x8c] sm:$0xf]
  %v67 = vld [vmem:[%s2] sm:$0xff]
  %v68 = vld [vmem:[%s2 + $0x8] sm:$0xff]
  %v69 = vld [vmem:[%s2 + $0x10] sm:$0xff]
  %v70 = vld [vmem:[%s2 + $0x18] sm:$0xff]
  %v71 = vld [vmem:[%s2 + $0x20] sm:$0xff]
  %v72 = vld [vmem:[%s2 + $0x28] sm:$0xff]
  %v73 = vld [vmem:[%s2 + $0x30] sm:$0xff]
  %v74 = vld [vmem:[%s2 + $0x38] sm:$0xff]
  %76 = vset.pattern.permute.xlu0 0
  %77 = vperm.xlu0 %76, %v67
  %v78 = vpop.permute.xlu0 %77
  %81 = vset.pattern.permute.xlu0 0
  %82 = vperm.xlu0 %81, %v68
  %v83 = vpop.permute.xlu0 %82
  %86 = vset.pattern.permute.xlu0 0
  %87 = vperm.xlu0 %86, %v69
  %v88 = vpop.permute.xlu0 %87
  %91 = vset.pattern.permute.xlu0 0
  %92 = vperm.xlu0 %91, %v70
  %v93 = vpop.permute.xlu0 %92
  %96 = vset.pattern.permute.xlu0 0
  %97 = vperm.xlu0 %96, %v71
  %v98 = vpop.permute.xlu0 %97
  %101 = vset.pattern.permute.xlu0 0
  %102 = vperm.xlu0 %101, %v72
  %v103 = vpop.permute.xlu0 %102
  %106 = vset.pattern.permute.xlu0 0
  %107 = vperm.xlu0 %106, %v73
  %v108 = vpop.permute.xlu0 %107
  %111 = vset.pattern.permute.xlu0 0
  %112 = vperm.xlu0 %111, %v74
  %v113 = vpop.permute.xlu0 %112
  %v131 = vunpack.c.l.b16 %v15
  %v132 = vunpack.c.h.b16 %v15
  %v133 = vunpack.c.l.b16 %v16
  %v134 = vunpack.c.l.b16 %v17
  %v135 = vunpack.c.h.b16 %v17
  %v136 = vunpack.c.l.b16 %v18
  %v137 = vunpack.c.l.b16 %v19
  %v138 = vunpack.c.h.b16 %v19
  %v139 = vunpack.c.l.b16 %v20
  %v140 = vunpack.c.l.b16 %v21
  %v141 = vunpack.c.h.b16 %v21
  %v142 = vunpack.c.l.b16 %v22
  %v143 = vunpack.c.l.b16 %v23
  %v144 = vunpack.c.h.b16 %v23
  %v145 = vunpack.c.l.b16 %v24
  %v146 = vunpack.c.l.b16 %v25
  %v147 = vunpack.c.h.b16 %v25
  %v148 = vunpack.c.l.b16 %v26
  %v149 = vunpack.c.l.b16 %v27
  %v150 = vunpack.c.h.b16 %v27
  %v151 = vunpack.c.l.b16 %v28
  %v152 = vunpack.c.l.b16 %v29
  %v153 = vunpack.c.h.b16 %v29
  %v154 = vunpack.c.l.b16 %v30
  %v155 = vpack.c.b16 %v134, %v131
  %v156 = vpack.c.b16 %v135, %v132
  %v157 = vpack.c.b16 %v136, %v133
  %v158 = vpack.c.b16 %v140, %v137
  %v159 = vpack.c.b16 %v141, %v138
  %v160 = vpack.c.b16 %v142, %v139
  %v161 = vpack.c.b16 %v146, %v143
  %v162 = vpack.c.b16 %v147, %v144
  %v163 = vpack.c.b16 %v148, %v145
  %v164 = vpack.c.b16 %v152, %v149
  %v165 = vpack.c.b16 %v153, %v150
  %v166 = vpack.c.b16 %v154, %v151
  %v211 = vunpack.c.l.b16 %v31
  %v212 = vunpack.c.l.b16 %v32
  %v213 = vunpack.c.l.b16 %v33
  %v214 = vunpack.c.l.b16 %v34
  %v215 = vunpack.c.l.b16 %v35
  %v216 = vunpack.c.l.b16 %v36
  %v217 = vunpack.c.l.b16 %v37
  %v218 = vunpack.c.l.b16 %v38
  %v219 = vunpack.c.l.b16 %v39
  %v220 = vunpack.c.l.b16 %v40
  %v221 = vunpack.c.l.b16 %v41
  %v222 = vunpack.c.l.b16 %v42
  %v223 = vunpack.c.l.b16 %v43
  %v224 = vunpack.c.l.b16 %v44
  %v225 = vunpack.c.l.b16 %v45
  %v226 = vunpack.c.l.b16 %v46
  %v227 = vunpack.c.l.b16 %v47
  %v228 = vunpack.c.l.b16 %v48
  %v229 = vunpack.c.l.b16 %v49
  %v230 = vunpack.c.l.b16 %v50
  %v231 = vunpack.c.l.b16 %v51
  %v232 = vunpack.c.l.b16 %v52
  %v233 = vunpack.c.l.b16 %v53
  %v234 = vunpack.c.l.b16 %v54
  %v235 = vunpack.c.l.b16 %v55
  %v236 = vunpack.c.l.b16 %v56
  %v237 = vunpack.c.l.b16 %v57
  %v238 = vunpack.c.l.b16 %v58
  %v239 = vunpack.c.l.b16 %v59
  %v240 = vunpack.c.l.b16 %v60
  %v241 = vunpack.c.l.b16 %v61
  %v242 = vunpack.c.l.b16 %v62
  %v243 = vunpack.c.l.b16 %v63
  %v244 = vunpack.c.l.b16 %v64
  %v245 = vunpack.c.l.b16 %v65
  %v246 = vunpack.c.l.b16 %v66
  %v247 = vpack.c.b16 %v212, %v211
  %v248 = vpack.c.b16 %v214, %v213
  %v249 = vpack.c.b16 %v216, %v215
  %v250 = vpack.c.b16 %v218, %v217
  %v251 = vpack.c.b16 %v220, %v219
  %v252 = vpack.c.b16 %v222, %v221
  %v253 = vpack.c.b16 %v224, %v223
  %v254 = vpack.c.b16 %v226, %v225
  %v255 = vpack.c.b16 %v228, %v227
  %v256 = vpack.c.b16 %v230, %v229
  %v257 = vpack.c.b16 %v232, %v231
  %v258 = vpack.c.b16 %v234, %v233
  %v259 = vpack.c.b16 %v236, %v235
  %v260 = vpack.c.b16 %v238, %v237
  %v261 = vpack.c.b16 %v240, %v239
  %v262 = vpack.c.b16 %v242, %v241
  %v263 = vpack.c.b16 %v244, %v243
  %v264 = vpack.c.b16 %v246, %v245
  %vm283 = vcmask 261120
  %v285 = vsel %vm283, %v157, 0
  %v288 = vsel %vm283, %v160, 0
  %v291 = vsel %vm283, %v163, 0
  %v294 = vsel %vm283, %v166, 0
  %296 = vmatprep.subr.bf16.mxu0 0
  %297 = vmatpush1.bf16.msra.mxu0 %v247
  %298 = vmatprep.subr.bf16.mxu0 0
  %299 = vmatpush1.bf16.msra.mxu0 %v248
  %300 = vmatprep.subr.bf16.mxu0 0
  %301 = vmatpush1.bf16.msra.mxu0 %v249
  %302 = vmatprep.subr.bf16.mxu0 0
  %303 = vmatpush1.bf16.msra.mxu0 %v250
  %304 = vmatprep.subr.bf16.mxu0 0
  %305 = vmatpush1.bf16.msra.mxu0 %v251
  %306 = vmatprep.subr.bf16.mxu0 0
  %307 = vmatpush1.bf16.msra.mxu0 %v252
  %308 = vmatprep.subr.bf16.mxu0 0
  %309 = vmatpush1.bf16.msra.mxu0 %v253
  %310 = vmatprep.subr.bf16.mxu0 0
  %311 = vmatpush1.bf16.msra.mxu0 %v254
  %312 = vmatprep.subr.bf16.mxu0 0
  %313 = vmatpush1.bf16.msra.mxu0 %v255
  %314 = vmatprep.subr.bf16.mxu0 0
  %315 = vmatpush1.bf16.msra.mxu0 %v256
  %316 = vmatprep.subr.bf16.mxu0 0
  %317 = vmatpush1.bf16.msra.mxu0 %v257
  %318 = vmatprep.subr.bf16.mxu0 0
  %319 = vmatpush1.bf16.msra.mxu0 %v258
  %320 = vmatprep.subr.bf16.mxu0 0
  %321 = vmatpush1.bf16.msra.mxu0 %v259
  %322 = vmatprep.subr.bf16.mxu0 0
  %323 = vmatpush1.bf16.msra.mxu0 %v260
  %324 = vmatprep.subr.bf16.mxu0 0
  %325 = vmatpush1.bf16.msra.mxu0 %v261
  %326 = vmatprep.subr.bf16.mxu0 0
  %327 = vmatpush1.bf16.msra.mxu0 %v262
  %328 = vmatprep.mubr.bf16.mxu0 %v156
  %329 = vmatmul.mubr.bf16.gmra.mrb[0].mxu0 %v155
  %v330 = vpop.f32.mrb[0].mxu0
  %v331 = vadd.f32 %v78, %v330
  %v332 = vpop.f32.mrb[0].mxu0
  %v333 = vpop.f32.mrb[0].mxu0
  %v334 = vadd.f32 %v83, %v333
  %v335 = vpop.f32.mrb[0].mxu0
  %336 = vmatprep.mubr.bf16.mxu0 %v159
  %337 = vmatmul.mubr.bf16.gmra.mrb[0].mxu0 %v158
  %v338 = vpop.f32.mrb[0].mxu0
  %v339 = vadd.f32 %v88, %v338
  %v340 = vpop.f32.mrb[0].mxu0
  %v341 = vpop.f32.mrb[0].mxu0
  %v342 = vadd.f32 %v93, %v341
  %v343 = vpop.f32.mrb[0].mxu0
  %344 = vmatprep.mubr.bf16.mxu0 %v162
  %345 = vmatmul.mubr.bf16.gmra.mrb[0].mxu0 %v161
  %v346 = vpop.f32.mrb[0].mxu0
  %v347 = vadd.f32 %v98, %v346
  %v348 = vpop.f32.mrb[0].mxu0
  %v349 = vpop.f32.mrb[0].mxu0
  %v350 = vadd.f32 %v103, %v349
  %v351 = vpop.f32.mrb[0].mxu0
  %352 = vmatprep.mubr.bf16.mxu0 %v165
  %353 = vmatmul.mubr.bf16.gmra.mrb[0].mxu0 %v164
  %v354 = vpop.f32.mrb[0].mxu0
  %v355 = vadd.f32 %v108, %v354
  %v356 = vpop.f32.mrb[0].mxu0
  %v357 = vpop.f32.mrb[0].mxu0
  %v358 = vadd.f32 %v113, %v357
  %v359 = vpop.f32.mrb[0].mxu0
  %360 = vdwg.mxu0
  %361 = vmatprep.subr.bf16.mxu0 0
  %362 = vmatpush1.bf16.msra.mxu0 %v263
  %363 = vmatprep.subr.bf16.mxu0 0
  %364 = vmatpush1.bf16.msra.mxu0 %v264
  %365 = vmatprep.subr.bf16.mxu0 0
  %366 = vmatpush1.bf16.msra.mxu0 0
  %367 = vmatprep.subr.bf16.mxu0 0
  %368 = vmatpush1.bf16.msra.mxu0 0
  %369 = vmatprep.subr.bf16.mxu0 0
  %370 = vmatpush1.bf16.msra.mxu0 0
  %371 = vmatprep.subr.bf16.mxu0 0
  %372 = vmatpush1.bf16.msra.mxu0 0
  %373 = vmatprep.subr.bf16.mxu0 0
  %374 = vmatpush1.bf16.msra.mxu0 0
  %375 = vmatprep.subr.bf16.mxu0 0
  %376 = vmatpush1.bf16.msra.mxu0 0
  %377 = vmatprep.subr.bf16.mxu0 0
  %378 = vmatpush1.bf16.msra.mxu0 0
  %379 = vmatprep.subr.bf16.mxu0 0
  %380 = vmatpush1.bf16.msra.mxu0 0
  %381 = vmatprep.subr.bf16.mxu0 0
  %382 = vmatpush1.bf16.msra.mxu0 0
  %383 = vmatprep.subr.bf16.mxu0 0
  %384 = vmatpush1.bf16.msra.mxu0 0
  %385 = vmatprep.subr.bf16.mxu0 0
  %386 = vmatpush1.bf16.msra.mxu0 0
  %387 = vmatprep.subr.bf16.mxu0 0
  %388 = vmatpush1.bf16.msra.mxu0 0
  %389 = vmatprep.subr.bf16.mxu0 0
  %390 = vmatpush1.bf16.msra.mxu0 0
  %391 = vmatprep.subr.bf16.mxu0 0
  %392 = vmatpush1.bf16.msra.mxu0 0
  %393 = vmatprep.mubr.bf16.mxu0 0
  %394 = vmatmul.mubr.bf16.gmra.mrb[0].mxu0 %v285
  %v395 = vpop.f32.mrb[0].mxu0
  %v396 = vadd.f32 %v331, %v395
  %v397 = vpop.f32.mrb[0].mxu0
  %v398 = vpop.f32.mrb[0].mxu0
  %v399 = vadd.f32 %v334, %v398
  %v400 = vpop.f32.mrb[0].mxu0
  %401 = vmatprep.mubr.bf16.mxu0 0
  %402 = vmatmul.mubr.bf16.gmra.mrb[0].mxu0 %v288
  %v403 = vpop.f32.mrb[0].mxu0
  %v404 = vadd.f32 %v339, %v403
  %v405 = vpop.f32.mrb[0].mxu0
  %v406 = vpop.f32.mrb[0].mxu0
  %v407 = vadd.f32 %v342, %v406
  %v408 = vpop.f32.mrb[0].mxu0
  %409 = vmatprep.mubr.bf16.mxu0 0
  %410 = vmatmul.mubr.bf16.gmra.mrb[0].mxu0 %v291
  %v411 = vpop.f32.mrb[0].mxu0
  %v412 = vadd.f32 %v347, %v411
  %v413 = vpop.f32.mrb[0].mxu0
  %v414 = vpop.f32.mrb[0].mxu0
  %v415 = vadd.f32 %v350, %v414
  %v416 = vpop.f32.mrb[0].mxu0
  %417 = vmatprep.mubr.bf16.mxu0 0
  %418 = vmatmul.mubr.bf16.gmra.mrb[0].mxu0 %v294
  %v419 = vpop.f32.mrb[0].mxu0
  %v420 = vadd.f32 %v355, %v419
  %v421 = vpop.f32.mrb[0].mxu0
  %v422 = vpop.f32.mrb[0].mxu0
  %v423 = vadd.f32 %v358, %v422
  %v424 = vpop.f32.mrb[0].mxu0
  %425 = vdwg.mxu0
  %vm426 = vcmp.ge.f32.partialorder %v396, 0.0
  %vm427 = vcmp.ge.f32.partialorder %v399, 0.0
  %vm428 = vcmp.ge.f32.partialorder %v404, 0.0
  %vm429 = vcmp.ge.f32.partialorder %v407, 0.0
  %vm430 = vcmp.ge.f32.partialorder %v412, 0.0
  %vm431 = vcmp.ge.f32.partialorder %v415, 0.0
  %vm432 = vcmp.ge.f32.partialorder %v420, 0.0
  %vm433 = vcmp.ge.f32.partialorder %v423, 0.0
  %v434 = vmul.f32 %v396, 0.1
  %v435 = vmul.f32 %v399, 0.1
  %v436 = vmul.f32 %v404, 0.1
  %v437 = vmul.f32 %v407, 0.1
  %v438 = vmul.f32 %v412, 0.1
  %v439 = vmul.f32 %v415, 0.1
  %v440 = vmul.f32 %v420, 0.1
  %v441 = vmul.f32 %v423, 0.1
  %v442 = vsel %vm426, %v396, %v434
  %v443 = vsel %vm427, %v399, %v435
  %v444 = vsel %vm428, %v404, %v436
  %v445 = vsel %vm429, %v407, %v437
  %v446 = vsel %vm430, %v412, %v438
  %v447 = vsel %vm431, %v415, %v439
  %v448 = vsel %vm432, %v420, %v440
  %v449 = vsel %vm433, %v423, %v441
  %v450 = vpack.c.bf16 %v443, %v442
  %v451 = vpack.c.bf16 %v445, %v444
  %v452 = vpack.c.bf16 %v447, %v446
  %v453 = vpack.c.bf16 %v449, %v448
  %v458 = vunpack.c.l.b16 %v450
  %v459 = vunpack.c.h.b16 %v450
  %v460 = vunpack.c.l.b16 %v451
  %v461 = vunpack.c.h.b16 %v451
  %v462 = vunpack.c.l.b16 %v452
  %v463 = vunpack.c.h.b16 %v452
  %v464 = vunpack.c.l.b16 %v453
  %v465 = vunpack.c.h.b16 %v453
  %v466 = vpack.c.b16 %v458, %v458
  %v467 = vpack.c.b16 %v459, %v459
  %v468 = vpack.c.b16 %v460, %v460
  %v469 = vpack.c.b16 %v461, %v461
  %v470 = vpack.c.b16 %v462, %v462
  %v471 = vpack.c.b16 %v463, %v463
  %v472 = vpack.c.b16 %v464, %v464
  %v473 = vpack.c.b16 %v465, %v465
  %vm482 = vcmask 584704
  %483 = vst.msk [vmem:[%s3] sm:$0xf] %vm482, %v466
  %484 = vst.msk [vmem:[%s3 + $0x4] sm:$0xf] %vm482, %v467
  %485 = vst.msk [vmem:[%s3 + $0x8] sm:$0xf] %vm482, %v468
  %486 = vst.msk [vmem:[%s3 + $0xc] sm:$0xf] %vm482, %v469
  %487 = vst.msk [vmem:[%s3 + $0x10] sm:$0xf] %vm482, %v470
  %488 = vst.msk [vmem:[%s3 + $0x14] sm:$0xf] %vm482, %v471
  %489 = vst.msk [vmem:[%s3 + $0x18] sm:$0xf] %vm482, %v472
  %490 = vst.msk [vmem:[%s3 + $0x1c] sm:$0xf] %vm482, %v473
  // Predicated region
  $region14: #{discriminator_forward.8} parent=0 // pred_check
    _
  $region15: #{discriminator_forward.8} parent=0 // pred_check_branch
    %492 = sbr.rel (0) target = $region17
  $region16: #{discriminator_forward.8} parent=0 // pred_region
    _
  $region17: #{discriminator_forward.8} parent=0 // pred_fallthru
    _
  // Predicated region
  $region18: #{discriminator_forward.8} parent=0 // pred_check
    _
  $region19: #{discriminator_forward.8} parent=0 // pred_check_branch
    %494 = sbr.rel (0) target = $region21
  $region20: #{discriminator_forward.8} parent=0 // pred_region
    _
  $region21: #{discriminator_forward.8} parent=0 // pred_fallthru
    _

// kernel: tile.9
$region0: #{tile.9}
  %s0 = inlined_call_operand.vmem [shape: bf16[128,2,9], index: 0, kind: input, shape index: {}]
  %s1 = inlined_call_operand.vmem [shape: bf16[128,18], index: 1, kind: output, shape index: {}]
  $region1: #{tile.9} parent=0
    #allocation0 [shape = 'u8[12288]{0}', space=vmem, size = 0x3000, scoped, tag = 'scoped mem for output reshape']
    #allocation1 [shape = 'u8[16384]{0}', space=vmem, size = 0x4000, scoped, tag = 'scoped mem for input reshape']
    %s3 = smul.u32 4, 2
    %s4 = sshllo.u32 0, %s3
    %s5 = smul.addr 4, 3
    %s6 = scalar_lea.vmem %s0, %s5
    %s7 = sshrl.u32 %s4, 1
    %s8 = sor.u32 %s4, %s7
    %s9 = sand.u32 %s8, 85
    %s10 = sshrl.u32 %s9, 1
    %s11 = sor.u32 %s9, %s10
    %s12 = sand.u32 51, %s11
    %s13 = sshrl.u32 %s12, 2
    %s14 = sor.u32 %s12, %s13
    %s15 = sand.u32 15, %s14
    %v16 = vld [vmem:[%s6] sm:%s15]
    %v17 = vunpack.c.l.bf16 %v16
    %v18 = vunpack.c.h.bf16 %v16
    %s19 = scalar_lea.vmem [#allocation1], 24
    %20 = vst [vmem:[%s19] sm:%s4] %v17
    %s21 = smul.addr 4, 2
    %s22 = scalar_lea.vmem %s0, %s21
    %s23 = sshrl.u32 %s4, 1
    %s24 = sor.u32 %s4, %s23
    %s25 = sand.u32 %s24, 85
    %s26 = sshrl.u32 %s25, 1
    %s27 = sor.u32 %s25, %s26
    %s28 = sand.u32 51, %s27
    %s29 = sshrl.u32 %s28, 2
    %s30 = sor.u32 %s28, %s29
    %s31 = sand.u32 15, %s30
    %v32 = vld [vmem:[%s22] sm:%s31]
    %v33 = vunpack.c.l.bf16 %v32
    %v34 = vunpack.c.h.bf16 %v32
    %s35 = scalar_lea.vmem [#allocation1], 16
    %36 = vst [vmem:[%s35] sm:%s4] %v33
    %s37 = scalar_lea.vmem %s0, 4
    %s38 = sshrl.u32 %s4, 1
    %s39 = sor.u32 %s4, %s38
    %s40 = sand.u32 %s39, 85
    %s41 = sshrl.u32 %s40, 1
    %s42 = sor.u32 %s40, %s41
    %s43 = sand.u32 51, %s42
    %s44 = sshrl.u32 %s43, 2
    %s45 = sor.u32 %s43, %s44
    %s46 = sand.u32 15, %s45
    %v47 = vld [vmem:[%s37] sm:%s46]
    %v48 = vunpack.c.l.bf16 %v47
    %v49 = vunpack.c.h.bf16 %v47
    %s50 = scalar_lea.vmem [#allocation1], 8
    %51 = vst [vmem:[%s50] sm:%s4] %v48
    %s52 = sshrl.u32 %s4, 1
    %s53 = sor.u32 %s4, %s52
    %s54 = sand.u32 %s53, 85
    %s55 = sshrl.u32 %s54, 1
    %s56 = sor.u32 %s54, %s55
    %s57 = sand.u32 51, %s56
    %s58 = sshrl.u32 %s57, 2
    %s59 = sor.u32 %s57, %s58
    %s60 = sand.u32 15, %s59
    %v61 = vld [vmem:[%s0] sm:%s60]
    %v62 = vunpack.c.l.bf16 %v61
    %v63 = vunpack.c.h.bf16 %v61
    %64 = vst [vmem:[#allocation1] sm:%s4] %v62
    %v65 = vld [vmem:[#allocation1] sm:$0xff]
    %66 = vst [vmem:[#allocation0] sm:$0xff] %v65
    %s67 = scalar_lea.vmem [#allocation1], 8
    %s68 = smov 3
    %v69 = vld [vmem:[%s67] ss:$8 sm:%s68]
    %s70 = scalar_lea.vmem [#allocation0], 8
    %71 = vst [vmem:[%s70] sm:$0x3] %v69
    %s72 = scalar_lea.vmem [#allocation1], 17
    %v73 = vld [vmem:[%s72] sm:$0xff]
    %s74 = scalar_lea.vmem [#allocation0], 10
    %75 = vst [vmem:[%s74] sm:$0xff] %v73
    %s77 = smul.u32 4, 2
    %s78 = sshllo.u32 0, %s77
    %s79 = sshrl.u32 %s77, 1
    %v80 = vld [vmem:[#allocation0] sm:%s78]
    %v81 = vpack.c.bf16 0.0, %v80
    %s82 = sshllo.u32 0, %s79
    %83 = vst [vmem:[%s1] sm:%s82] %v81
    %s84 = scalar_lea.vmem [#allocation0], 8
    %v85 = vld [vmem:[%s84] sm:%s78]
    %v86 = vpack.c.bf16 0.0, %v85
    %s87 = sshllo.u32 0, %s79
    %s88 = scalar_lea.vmem %s1, 4
    %89 = vst [vmem:[%s88] sm:%s87] %v86
    %s90 = scalar_lea.vmem [#allocation0], 16
    %v91 = vld [vmem:[%s90] sm:%s78]
    %v92 = vpack.c.bf16 0.0, %v91
    %s93 = sshllo.u32 0, %s79
    %s94 = smul.addr 4, 2
    %s95 = scalar_lea.vmem %s1, %s94
    %96 = vst [vmem:[%s95] sm:%s93] %v92

// kernel: discriminator_forward.9
$region0: #{discriminator_forward.9}
  #allocation0 [shape = 'u32[]', space=smem, size = 0x4, offset = 0x4, fixed_abs, tag = 'smem constant byte address 0x4 - core index']
  #allocation1 [shape = 'u32[144,128]{1,0:T(1,128)}', space=vmem, size = 0x12000, scoped, tag = 'internal scratch']
  #allocation2 [shape = 'f32[1,1]{1,0:T(1,128)S(1)}', space=vmem, size = 0x200, scoped, tag = 'scoped memory for discriminator_forward.9']
  %s0 = inlined_call_operand.vmem [shape: bf16[128,768], index: 0, kind: input, shape index: {}]
  %s1 = inlined_call_operand.vmem [shape: bf16[768,18], index: 1, kind: input, shape index: {}]
  %s2 = inlined_call_operand.vmem [shape: f32[128,1], index: 2, kind: input, shape index: {}]
  %s3 = inlined_call_operand.vmem [shape: bf16[128,18], index: 3, kind: input, shape index: {}]
  %s4 = inlined_call_operand.<no memory space> [shape: f32[1,1], index: 4, kind: input, shape index: {}]
  %s5 = inlined_call_operand.hbm [shape: f32[1,2], index: 5, kind: output, shape index: {}]
  %s6 = sld [smem:[#allocation0]]
  $region30: #{discriminator_forward.9} parent=0
    _
  %s8 = ssub.s32 1, %s6
  %s9 = scalar_select 0, %s8, %s6
  %v10 = vstv %s4
  %11 = vst [vmem:[#allocation2] sm:$0x1] %v10
  $region1: #{discriminator_forward.9} parent=0
    #allocation3 [shape = 'u8[512]{0}', space=vmem, size = 0x400, scoped, tag = 'output window, operand 0, single buffered']
    #allocation4 [shape = 's32[1]{0}', space=sflag, size = 0x4, scoped, tag = 'scoped memory for discriminator_forward.9']
    %12 = vsyncpa [#allocation4], 0
    // Predicated region
    $region2: #{discriminator_forward.9} parent=1 // pred_check
      _
    $region3: #{discriminator_forward.9} parent=1 // pred_check_branch
      %14 = sbr.rel (0) target = $region5
    $region4: #{discriminator_forward.9} parent=1 // pred_region
      _
    $region5: #{discriminator_forward.9} parent=1 // pred_fallthru
      _
    // Predicated region
    $region6: #{discriminator_forward.9} parent=1 // pred_check
      _
    $region7: #{discriminator_forward.9} parent=1 // pred_check_branch
      %16 = sbr.rel (0) target = $region9
    $region8: #{discriminator_forward.9} parent=1 // pred_region
      _
    $region9: #{discriminator_forward.9} parent=1 // pred_fallthru
      _
    // Predicated region
    $region10: #{discriminator_forward.9} parent=1 // pred_check
      _
    $region11: #{discriminator_forward.9} parent=1 // pred_check_branch
      %18 = sbr.rel (0) target = $region13
    $region12: #{discriminator_forward.9} parent=1 // pred_region
      _
    $region13: #{discriminator_forward.9} parent=1 // pred_fallthru
      _
    // Predicated region
    $region14: #{discriminator_forward.9} parent=1 // pred_check
      _
    $region15: #{discriminator_forward.9} parent=1 // pred_check_branch
      %20 = sbr.rel (0) target = $region17
    $region16: #{discriminator_forward.9} parent=1 // pred_region
      _
    $region17: #{discriminator_forward.9} parent=1 // pred_fallthru
      _
    // Predicated region
    $region18: #{discriminator_forward.9} parent=1 // pred_check
      _
    $region19: #{discriminator_forward.9} parent=1 // pred_check_branch
      %22 = sbr.rel (0) target = $region21
    $region20: #{discriminator_forward.9} parent=1 // pred_region
      _
    $region21: #{discriminator_forward.9} parent=1 // pred_fallthru
      _
    %v24 = vld [vmem:[%s0] sm:$0xff]
    %v25 = vld [vmem:[%s0 + $0x8] sm:$0xff]
    %v26 = vld [vmem:[%s0 + $0x10] sm:$0xff]
    %v27 = vld [vmem:[%s0 + $0x18] sm:$0xff]
    %v28 = vld [vmem:[%s0 + $0x20] sm:$0xff]
    %v29 = vld [vmem:[%s0 + $0x28] sm:$0xff]
    %v30 = vld [vmem:[%s0 + $0x30] sm:$0xff]
    %v31 = vld [vmem:[%s0 + $0x38] sm:$0xff]
    %v32 = vld [vmem:[%s0 + $0x40] sm:$0xff]
    %v33 = vld [vmem:[%s0 + $0x48] sm:$0xff]
    %v34 = vld [vmem:[%s0 + $0x50] sm:$0xff]
    %v35 = vld [vmem:[%s0 + $0x58] sm:$0xff]
    %v36 = vld [vmem:[%s0 + $0x60] sm:$0xff]
    %v37 = vld [vmem:[%s0 + $0x68] sm:$0xff]
    %v38 = vld [vmem:[%s0 + $0x70] sm:$0xff]
    %v39 = vld [vmem:[%s0 + $0x78] sm:$0xff]
    %v40 = vld [vmem:[%s0 + $0x80] sm:$0xff]
    %v41 = vld [vmem:[%s0 + $0x88] sm:$0xff]
    %v42 = vld [vmem:[%s0 + $0x90] sm:$0xff]
    %v43 = vld [vmem:[%s0 + $0x98] sm:$0xff]
    %v44 = vld [vmem:[%s0 + $0xa0] sm:$0xff]
    %v45 = vld [vmem:[%s0 + $0xa8] sm:$0xff]
    %v46 = vld [vmem:[%s0 + $0xb0] sm:$0xff]
    %v47 = vld [vmem:[%s0 + $0xb8] sm:$0xff]
    %v48 = vld [vmem:[%s0 + $0xc0] sm:$0xff]
    %v49 = vld [vmem:[%s0 + $0xc8] sm:$0xff]
    %v50 = vld [vmem:[%s0 + $0xd0] sm:$0xff]
    %v51 = vld [vmem:[%s0 + $0xd8] sm:$0xff]
    %v52 = vld [vmem:[%s0 + $0xe0] sm:$0xff]
    %v53 = vld [vmem:[%s0 + $0xe8] sm:$0xff]
    %v54 = vld [vmem:[%s0 + $0xf0] sm:$0xff]
    %v55 = vld [vmem:[%s0 + $0xf8] sm:$0xff]
    %v56 = vld [vmem:[%s0 + $0x100] sm:$0xff]
    %v57 = vld [vmem:[%s0 + $0x108] sm:$0xff]
    %v58 = vld [vmem:[%s0 + $0x110] sm:$0xff]
    %v59 = vld [vmem:[%s0 + $0x118] sm:$0xff]
    %v60 = vld [vmem:[%s0 + $0x120] sm:$0xff]
    %v61 = vld [vmem:[%s0 + $0x128] sm:$0xff]
    %v62 = vld [vmem:[%s0 + $0x130] sm:$0xff]
    %v63 = vld [vmem:[%s0 + $0x138] sm:$0xff]
    %v64 = vld [vmem:[%s0 + $0x140] sm:$0xff]
    %v65 = vld [vmem:[%s0 + $0x148] sm:$0xff]
    %v66 = vld [vmem:[%s0 + $0x150] sm:$0xff]
    %v67 = vld [vmem:[%s0 + $0x158] sm:$0xff]
    %v68 = vld [vmem:[%s0 + $0x160] sm:$0xff]
    %v69 = vld [vmem:[%s0 + $0x168] sm:$0xff]
    %v70 = vld [vmem:[%s0 + $0x170] sm:$0xff]
    %v71 = vld [vmem:[%s0 + $0x178] sm:$0xff]
    %v72 = vld [vmem:[%s1] sm:$0xf]
    %v73 = vld [vmem:[%s1 + $0x4] sm:$0xf]
    %v74 = vld [vmem:[%s1 + $0x8] sm:$0xf]
    %v75 = vld [vmem:[%s1 + $0xc] sm:$0xf]
    %v76 = vld [vmem:[%s1 + $0x10] sm:$0xf]
    %v77 = vld [vmem:[%s1 + $0x14] sm:$0xf]
    %v78 = vld [vmem:[%s1 + $0x18] sm:$0xf]
    %v79 = vld [vmem:[%s1 + $0x1c] sm:$0xf]
    %v80 = vld [vmem:[%s1 + $0x20] sm:$0xf]
    %v81 = vld [vmem:[%s1 + $0x24] sm:$0xf]
    %v82 = vld [vmem:[%s1 + $0x28] sm:$0xf]
    %v83 = vld [vmem:[%s1 + $0x2c] sm:$0xf]
    %v84 = vld [vmem:[%s1 + $0x30] sm:$0xf]
    %v85 = vld [vmem:[%s1 + $0x34] sm:$0xf]
    %v86 = vld [vmem:[%s1 + $0x38] sm:$0xf]
    %v87 = vld [vmem:[%s1 + $0x3c] sm:$0xf]
    %v88 = vld [vmem:[%s1 + $0x40] sm:$0xf]
    %v89 = vld [vmem:[%s1 + $0x44] sm:$0xf]
    %v90 = vld [vmem:[%s1 + $0x48] sm:$0xf]
    %v91 = vld [vmem:[%s1 + $0x4c] sm:$0xf]
    %v92 = vld [vmem:[%s1 + $0x50] sm:$0xf]
    %v93 = vld [vmem:[%s1 + $0x54] sm:$0xf]
    %v94 = vld [vmem:[%s1 + $0x58] sm:$0xf]
    %v95 = vld [vmem:[%s1 + $0x5c] sm:$0xf]
    %v96 = vld [vmem:[%s1 + $0x60] sm:$0xf]
    %v97 = vld [vmem:[%s1 + $0x64] sm:$0xf]
    %v98 = vld [vmem:[%s1 + $0x68] sm:$0xf]
    %v99 = vld [vmem:[%s1 + $0x6c] sm:$0xf]
    %v100 = vld [vmem:[%s1 + $0x70] sm:$0xf]
    %v101 = vld [vmem:[%s1 + $0x74] sm:$0xf]
    %v102 = vld [vmem:[%s1 + $0x78] sm:$0xf]
    %v103 = vld [vmem:[%s1 + $0x7c] sm:$0xf]
    %v104 = vld [vmem:[%s1 + $0x80] sm:$0xf]
    %v105 = vld [vmem:[%s1 + $0x84] sm:$0xf]
    %v106 = vld [vmem:[%s1 + $0x88] sm:$0xf]
    %v107 = vld [vmem:[%s1 + $0x8c] sm:$0xf]
    %v108 = vld [vmem:[%s1 + $0x90] sm:$0xf]
    %v109 = vld [vmem:[%s1 + $0x94] sm:$0xf]
    %v110 = vld [vmem:[%s1 + $0x98] sm:$0xf]
    %v111 = vld [vmem:[%s1 + $0x9c] sm:$0xf]
    %v112 = vld [vmem:[%s1 + $0xa0] sm:$0xf]
    %v113 = vld [vmem:[%s1 + $0xa4] sm:$0xf]
    %v114 = vld [vmem:[%s1 + $0xa8] sm:$0xf]
    %v115 = vld [vmem:[%s1 + $0xac] sm:$0xf]
    %v116 = vld [vmem:[%s1 + $0xb0] sm:$0xf]
    %v117 = vld [vmem:[%s1 + $0xb4] sm:$0xf]
    %v118 = vld [vmem:[%s1 + $0xb8] sm:$0xf]
    %v119 = vld [vmem:[%s1 + $0xbc] sm:$0xf]
    %v120 = vld [vmem:[%s1 + $0xc0] sm:$0xf]
    %v121 = vld [vmem:[%s1 + $0xc4] sm:$0xf]
    %v122 = vld [vmem:[%s1 + $0xc8] sm:$0xf]
    %v123 = vld [vmem:[%s1 + $0xcc] sm:$0xf]
    %v124 = vld [vmem:[%s1 + $0xd0] sm:$0xf]
    %v125 = vld [vmem:[%s1 + $0xd4] sm:$0xf]
    %v126 = vld [vmem:[%s1 + $0xd8] sm:$0xf]
    %v127 = vld [vmem:[%s1 + $0xdc] sm:$0xf]
    %v128 = vld [vmem:[%s1 + $0xe0] sm:$0xf]
    %v129 = vld [vmem:[%s1 + $0xe4] sm:$0xf]
    %v130 = vld [vmem:[%s1 + $0xe8] sm:$0xf]
    %v131 = vld [vmem:[%s1 + $0xec] sm:$0xf]
    %v132 = vld [vmem:[%s1 + $0xf0] sm:$0xf]
    %v133 = vld [vmem:[%s1 + $0xf4] sm:$0xf]
    %v134 = vld [vmem:[%s1 + $0xf8] sm:$0xf]
    %v135 = vld [vmem:[%s1 + $0xfc] sm:$0xf]
    %v136 = vld [vmem:[%s1 + $0x100] sm:$0xf]
    %v137 = vld [vmem:[%s1 + $0x104] sm:$0xf]
    %v138 = vld [vmem:[%s1 + $0x108] sm:$0xf]
    %v139 = vld [vmem:[%s1 + $0x10c] sm:$0xf]
    %v140 = vld [vmem:[%s1 + $0x110] sm:$0xf]
    %v141 = vld [vmem:[%s1 + $0x114] sm:$0xf]
    %v142 = vld [vmem:[%s1 + $0x118] sm:$0xf]
    %v143 = vld [vmem:[%s1 + $0x11c] sm:$0xf]
    %v144 = vld [vmem:[%s1 + $0x120] sm:$0xf]
    %v145 = vld [vmem:[%s1 + $0x124] sm:$0xf]
    %v146 = vld [vmem:[%s1 + $0x128] sm:$0xf]
    %v147 = vld [vmem:[%s1 + $0x12c] sm:$0xf]
    %v148 = vld [vmem:[%s1 + $0x130] sm:$0xf]
    %v149 = vld [vmem:[%s1 + $0x134] sm:$0xf]
    %v150 = vld [vmem:[%s1 + $0x138] sm:$0xf]
    %v151 = vld [vmem:[%s1 + $0x13c] sm:$0xf]
    %v152 = vld [vmem:[%s1 + $0x140] sm:$0xf]
    %v153 = vld [vmem:[%s1 + $0x144] sm:$0xf]
    %v154 = vld [vmem:[%s1 + $0x148] sm:$0xf]
    %v155 = vld [vmem:[%s1 + $0x14c] sm:$0xf]
    %v156 = vld [vmem:[%s1 + $0x150] sm:$0xf]
    %v157 = vld [vmem:[%s1 + $0x154] sm:$0xf]
    %v158 = vld [vmem:[%s1 + $0x158] sm:$0xf]
    %v159 = vld [vmem:[%s1 + $0x15c] sm:$0xf]
    %v160 = vld [vmem:[%s1 + $0x160] sm:$0xf]
    %v161 = vld [vmem:[%s1 + $0x164] sm:$0xf]
    %v162 = vld [vmem:[%s1 + $0x168] sm:$0xf]
    %v163 = vld [vmem:[%s1 + $0x16c] sm:$0xf]
    %v164 = vld [vmem:[%s1 + $0x170] sm:$0xf]
    %v165 = vld [vmem:[%s1 + $0x174] sm:$0xf]
    %v166 = vld [vmem:[%s1 + $0x178] sm:$0xf]
    %v167 = vld [vmem:[%s1 + $0x17c] sm:$0xf]
    %v168 = vld [vmem:[%s2] sm:$0xff]
    %v169 = vld [vmem:[%s2 + $0x8] sm:$0xff]
    %v170 = vld [vmem:[%s2 + $0x10] sm:$0xff]
    %v171 = vld [vmem:[%s2 + $0x18] sm:$0xff]
    %v172 = vld [vmem:[%s2 + $0x20] sm:$0xff]
    %v173 = vld [vmem:[%s2 + $0x28] sm:$0xff]
    %v174 = vld [vmem:[%s2 + $0x30] sm:$0xff]
    %v175 = vld [vmem:[%s2 + $0x38] sm:$0xff]
    %v176 = vld [vmem:[%s2 + $0x40] sm:$0xff]
    %v177 = vld [vmem:[%s2 + $0x48] sm:$0xff]
    %v178 = vld [vmem:[%s2 + $0x50] sm:$0xff]
    %v179 = vld [vmem:[%s2 + $0x58] sm:$0xff]
    %v180 = vld [vmem:[%s2 + $0x60] sm:$0xff]
    %v181 = vld [vmem:[%s2 + $0x68] sm:$0xff]
    %v182 = vld [vmem:[%s2 + $0x70] sm:$0xff]
    %v183 = vld [vmem:[%s2 + $0x78] sm:$0xff]
    %185 = vset.pattern.permute.xlu0 0
    %186 = vperm.xlu0 %185, %v168
    %v187 = vpop.permute.xlu0 %186
    %190 = vset.pattern.permute.xlu0 0
    %191 = vperm.xlu0 %190, %v169
    %v192 = vpop.permute.xlu0 %191
    %195 = vset.pattern.permute.xlu0 0
    %196 = vperm.xlu0 %195, %v170
    %v197 = vpop.permute.xlu0 %196
    %200 = vset.pattern.permute.xlu0 0
    %201 = vperm.xlu0 %200, %v171
    %v202 = vpop.permute.xlu0 %201
    %205 = vset.pattern.permute.xlu0 0
    %206 = vperm.xlu0 %205, %v172
    %v207 = vpop.permute.xlu0 %206
    %210 = vset.pattern.permute.xlu0 0
    %211 = vperm.xlu0 %210, %v173
    %v212 = vpop.permute.xlu0 %211
    %215 = vset.pattern.permute.xlu0 0
    %216 = vperm.xlu0 %215, %v174
    %v217 = vpop.permute.xlu0 %216
    %220 = vset.pattern.permute.xlu0 0
    %221 = vperm.xlu0 %220, %v175
    %v222 = vpop.permute.xlu0 %221
    %225 = vset.pattern.permute.xlu0 0
    %226 = vperm.xlu0 %225, %v176
    %v227 = vpop.permute.xlu0 %226
    %230 = vset.pattern.permute.xlu0 0
    %231 = vperm.xlu0 %230, %v177
    %v232 = vpop.permute.xlu0 %231
    %235 = vset.pattern.permute.xlu0 0
    %236 = vperm.xlu0 %235, %v178
    %v237 = vpop.permute.xlu0 %236
    %240 = vset.pattern.permute.xlu0 0
    %241 = vperm.xlu0 %240, %v179
    %v242 = vpop.permute.xlu0 %241
    %245 = vset.pattern.permute.xlu0 0
    %246 = vperm.xlu0 %245, %v180
    %v247 = vpop.permute.xlu0 %246
    %250 = vset.pattern.permute.xlu0 0
    %251 = vperm.xlu0 %250, %v181
    %v252 = vpop.permute.xlu0 %251
    %255 = vset.pattern.permute.xlu0 0
    %256 = vperm.xlu0 %255, %v182
    %v257 = vpop.permute.xlu0 %256
    %260 = vset.pattern.permute.xlu0 0
    %261 = vperm.xlu0 %260, %v183
    %v262 = vpop.permute.xlu0 %261
    %v312 = vunpack.c.l.b16 %v24
    %v313 = vunpack.c.h.b16 %v24
    %v314 = vunpack.c.l.b16 %v25
    %v315 = vunpack.c.h.b16 %v25
    %v316 = vunpack.c.l.b16 %v26
    %v317 = vunpack.c.h.b16 %v26
    %v318 = vunpack.c.l.b16 %v27
    %v319 = vunpack.c.h.b16 %v27
    %v320 = vunpack.c.l.b16 %v28
    %v321 = vunpack.c.h.b16 %v28
    %v322 = vunpack.c.l.b16 %v29
    %v323 = vunpack.c.h.b16 %v29
    %v324 = vunpack.c.l.b16 %v30
    %v325 = vunpack.c.h.b16 %v30
    %v326 = vunpack.c.l.b16 %v31
    %v327 = vunpack.c.h.b16 %v31
    %v328 = vunpack.c.l.b16 %v32
    %v329 = vunpack.c.h.b16 %v32
    %v330 = vunpack.c.l.b16 %v33
    %v331 = vunpack.c.h.b16 %v33
    %v332 = vunpack.c.l.b16 %v34
    %v333 = vunpack.c.h.b16 %v34
    %v334 = vunpack.c.l.b16 %v35
    %v335 = vunpack.c.h.b16 %v35
    %v336 = vunpack.c.l.b16 %v36
    %v337 = vunpack.c.h.b16 %v36
    %v338 = vunpack.c.l.b16 %v37
    %v339 = vunpack.c.h.b16 %v37
    %v340 = vunpack.c.l.b16 %v38
    %v341 = vunpack.c.h.b16 %v38
    %v342 = vunpack.c.l.b16 %v39
    %v343 = vunpack.c.h.b16 %v39
    %v344 = vunpack.c.l.b16 %v40
    %v345 = vunpack.c.h.b16 %v40
    %v346 = vunpack.c.l.b16 %v41
    %v347 = vunpack.c.h.b16 %v41
    %v348 = vunpack.c.l.b16 %v42
    %v349 = vunpack.c.h.b16 %v42
    %v350 = vunpack.c.l.b16 %v43
    %v351 = vunpack.c.h.b16 %v43
    %v352 = vunpack.c.l.b16 %v44
    %v353 = vunpack.c.h.b16 %v44
    %v354 = vunpack.c.l.b16 %v45
    %v355 = vunpack.c.h.b16 %v45
    %v356 = vunpack.c.l.b16 %v46
    %v357 = vunpack.c.h.b16 %v46
    %v358 = vunpack.c.l.b16 %v47
    %v359 = vunpack.c.h.b16 %v47
    %v360 = vunpack.c.l.b16 %v48
    %v361 = vunpack.c.h.b16 %v48
    %v362 = vunpack.c.l.b16 %v49
    %v363 = vunpack.c.h.b16 %v49
    %v364 = vunpack.c.l.b16 %v50
    %v365 = vunpack.c.h.b16 %v50
    %v366 = vunpack.c.l.b16 %v51
    %v367 = vunpack.c.h.b16 %v51
    %v368 = vunpack.c.l.b16 %v52
    %v369 = vunpack.c.h.b16 %v52
    %v370 = vunpack.c.l.b16 %v53
    %v371 = vunpack.c.h.b16 %v53
    %v372 = vunpack.c.l.b16 %v54
    %v373 = vunpack.c.h.b16 %v54
    %v374 = vunpack.c.l.b16 %v55
    %v375 = vunpack.c.h.b16 %v55
    %v376 = vunpack.c.l.b16 %v56
    %v377 = vunpack.c.h.b16 %v56
    %v378 = vunpack.c.l.b16 %v57
    %v379 = vunpack.c.h.b16 %v57
    %v380 = vunpack.c.l.b16 %v58
    %v381 = vunpack.c.h.b16 %v58
    %v382 = vunpack.c.l.b16 %v59
    %v383 = vunpack.c.h.b16 %v59
    %v384 = vunpack.c.l.b16 %v60
    %v385 = vunpack.c.h.b16 %v60
    %v386 = vunpack.c.l.b16 %v61
    %v387 = vunpack.c.h.b16 %v61
    %v388 = vunpack.c.l.b16 %v62
    %v389 = vunpack.c.h.b16 %v62
    %v390 = vunpack.c.l.b16 %v63
    %v391 = vunpack.c.h.b16 %v63
    %v392 = vunpack.c.l.b16 %v64
    %v393 = vunpack.c.h.b16 %v64
    %v394 = vunpack.c.l.b16 %v65
    %v395 = vunpack.c.h.b16 %v65
    %v396 = vunpack.c.l.b16 %v66
    %v397 = vunpack.c.h.b16 %v66
    %v398 = vunpack.c.l.b16 %v67
    %v399 = vunpack.c.h.b16 %v67
    %v400 = vunpack.c.l.b16 %v68
    %v401 = vunpack.c.h.b16 %v68
    %v402 = vunpack.c.l.b16 %v69
    %v403 = vunpack.c.h.b16 %v69
    %v404 = vunpack.c.l.b16 %v70
    %v405 = vunpack.c.h.b16 %v70
    %v406 = vunpack.c.l.b16 %v71
    %v407 = vunpack.c.h.b16 %v71
    %v408 = vpack.c.b16 %v318, %v312
    %v409 = vpack.c.b16 %v319, %v313
    %v410 = vpack.c.b16 %v320, %v314
    %v411 = vpack.c.b16 %v321, %v315
    %v412 = vpack.c.b16 %v322, %v316
    %v413 = vpack.c.b16 %v323, %v317
    %v414 = vpack.c.b16 %v330, %v324
    %v415 = vpack.c.b16 %v331, %v325
    %v416 = vpack.c.b16 %v332, %v326
    %v417 = vpack.c.b16 %v333, %v327
    %v418 = vpack.c.b16 %v334, %v328
    %v419 = vpack.c.b16 %v335, %v329
    %v420 = vpack.c.b16 %v342, %v336
    %v421 = vpack.c.b16 %v343, %v337
    %v422 = vpack.c.b16 %v344, %v338
    %v423 = vpack.c.b16 %v345, %v339
    %v424 = vpack.c.b16 %v346, %v340
    %v425 = vpack.c.b16 %v347, %v341
    %v426 = vpack.c.b16 %v354, %v348
    %v427 = vpack.c.b16 %v355, %v349
    %v428 = vpack.c.b16 %v356, %v350
    %v429 = vpack.c.b16 %v357, %v351
    %v430 = vpack.c.b16 %v358, %v352
    %v431 = vpack.c.b16 %v359, %v353
    %v432 = vpack.c.b16 %v366, %v360
    %v433 = vpack.c.b16 %v367, %v361
    %v434 = vpack.c.b16 %v368, %v362
    %v435 = vpack.c.b16 %v369, %v363
    %v436 = vpack.c.b16 %v370, %v364
    %v437 = vpack.c.b16 %v371, %v365
    %v438 = vpack.c.b16 %v378, %v372
    %v439 = vpack.c.b16 %v379, %v373
    %v440 = vpack.c.b16 %v380, %v374
    %v441 = vpack.c.b16 %v381, %v375
    %v442 = vpack.c.b16 %v382, %v376
    %v443 = vpack.c.b16 %v383, %v377
    %v444 = vpack.c.b16 %v390, %v384
    %v445 = vpack.c.b16 %v391, %v385
    %v446 = vpack.c.b16 %v392, %v386
    %v447 = vpack.c.b16 %v393, %v387
    %v448 = vpack.c.b16 %v394, %v388
    %v449 = vpack.c.b16 %v395, %v389
    %v450 = vpack.c.b16 %v402, %v396
    %v451 = vpack.c.b16 %v403, %v397
    %v452 = vpack.c.b16 %v404, %v398
    %v453 = vpack.c.b16 %v405, %v399
    %v454 = vpack.c.b16 %v406, %v400
    %v455 = vpack.c.b16 %v407, %v401
    %v600 = vunpack.c.l.b16 %v72
    %v601 = vunpack.c.l.b16 %v73
    %v602 = vunpack.c.l.b16 %v74
    %v603 = vunpack.c.l.b16 %v75
    %v604 = vunpack.c.l.b16 %v76
    %v605 = vunpack.c.l.b16 %v77
    %v606 = vunpack.c.l.b16 %v78
    %v607 = vunpack.c.l.b16 %v79
    %v608 = vunpack.c.l.b16 %v80
    %v609 = vunpack.c.l.b16 %v81
    %v610 = vunpack.c.l.b16 %v82
    %v611 = vunpack.c.l.b16 %v83
    %v612 = vunpack.c.l.b16 %v84
    %v613 = vunpack.c.l.b16 %v85
    %v614 = vunpack.c.l.b16 %v86
    %v615 = vunpack.c.l.b16 %v87
    %v616 = vunpack.c.l.b16 %v88
    %v617 = vunpack.c.l.b16 %v89
    %v618 = vunpack.c.l.b16 %v90
    %v619 = vunpack.c.l.b16 %v91
    %v620 = vunpack.c.l.b16 %v92
    %v621 = vunpack.c.l.b16 %v93
    %v622 = vunpack.c.l.b16 %v94
    %v623 = vunpack.c.l.b16 %v95
    %v624 = vunpack.c.l.b16 %v96
    %v625 = vunpack.c.l.b16 %v97
    %v626 = vunpack.c.l.b16 %v98
    %v627 = vunpack.c.l.b16 %v99
    %v628 = vunpack.c.l.b16 %v100
    %v629 = vunpack.c.l.b16 %v101
    %v630 = vunpack.c.l.b16 %v102
    %v631 = vunpack.c.l.b16 %v103
    %v632 = vunpack.c.l.b16 %v104
    %v633 = vunpack.c.l.b16 %v105
    %v634 = vunpack.c.l.b16 %v106
    %v635 = vunpack.c.l.b16 %v107
    %v636 = vunpack.c.l.b16 %v108
    %v637 = vunpack.c.l.b16 %v109
    %v638 = vunpack.c.l.b16 %v110
    %v639 = vunpack.c.l.b16 %v111
    %v640 = vunpack.c.l.b16 %v112
    %v641 = vunpack.c.l.b16 %v113
    %v642 = vunpack.c.l.b16 %v114
    %v643 = vunpack.c.l.b16 %v115
    %v644 = vunpack.c.l.b16 %v116
    %v645 = vunpack.c.l.b16 %v117
    %v646 = vunpack.c.l.b16 %v118
    %v647 = vunpack.c.l.b16 %v119
    %v648 = vunpack.c.l.b16 %v120
    %v649 = vunpack.c.l.b16 %v121
    %v650 = vunpack.c.l.b16 %v122
    %v651 = vunpack.c.l.b16 %v123
    %v652 = vunpack.c.l.b16 %v124
    %v653 = vunpack.c.l.b16 %v125
    %v654 = vunpack.c.l.b16 %v126
    %v655 = vunpack.c.l.b16 %v127
    %v656 = vunpack.c.l.b16 %v128
    %v657 = vunpack.c.l.b16 %v129
    %v658 = vunpack.c.l.b16 %v130
    %v659 = vunpack.c.l.b16 %v131
    %v660 = vunpack.c.l.b16 %v132
    %v661 = vunpack.c.l.b16 %v133
    %v662 = vunpack.c.l.b16 %v134
    %v663 = vunpack.c.l.b16 %v135
    %v664 = vunpack.c.l.b16 %v136
    %v665 = vunpack.c.l.b16 %v137
    %v666 = vunpack.c.l.b16 %v138
    %v667 = vunpack.c.l.b16 %v139
    %v668 = vunpack.c.l.b16 %v140
    %v669 = vunpack.c.l.b16 %v141
    %v670 = vunpack.c.l.b16 %v142
    %v671 = vunpack.c.l.b16 %v143
    %v672 = vunpack.c.l.b16 %v144
    %v673 = vunpack.c.l.b16 %v145
    %v674 = vunpack.c.l.b16 %v146
    %v675 = vunpack.c.l.b16 %v147
    %v676 = vunpack.c.l.b16 %v148
    %v677 = vunpack.c.l.b16 %v149
    %v678 = vunpack.c.l.b16 %v150
    %v679 = vunpack.c.l.b16 %v151
    %v680 = vunpack.c.l.b16 %v152
    %v681 = vunpack.c.l.b16 %v153
    %v682 = vunpack.c.l.b16 %v154
    %v683 = vunpack.c.l.b16 %v155
    %v684 = vunpack.c.l.b16 %v156
    %v685 = vunpack.c.l.b16 %v157
    %v686 = vunpack.c.l.b16 %v158
    %v687 = vunpack.c.l.b16 %v159
    %v688 = vunpack.c.l.b16 %v160
    %v689 = vunpack.c.l.b16 %v161
    %v690 = vunpack.c.l.b16 %v162
    %v691 = vunpack.c.l.b16 %v163
    %v692 = vunpack.c.l.b16 %v164
    %v693 = vunpack.c.l.b16 %v165
    %v694 = vunpack.c.l.b16 %v166
    %v695 = vunpack.c.l.b16 %v167
    %v696 = vpack.c.b16 %v601, %v600
    %v697 = vpack.c.b16 %v603, %v602
    %v698 = vpack.c.b16 %v605, %v604
    %v699 = vpack.c.b16 %v607, %v606
    %v700 = vpack.c.b16 %v609, %v608
    %v701 = vpack.c.b16 %v611, %v610
    %v702 = vpack.c.b16 %v613, %v612
    %v703 = vpack.c.b16 %v615, %v614
    %v704 = vpack.c.b16 %v617, %v616
    %v705 = vpack.c.b16 %v619, %v618
    %v706 = vpack.c.b16 %v621, %v620
    %v707 = vpack.c.b16 %v623, %v622
    %v708 = vpack.c.b16 %v625, %v624
    %v709 = vpack.c.b16 %v627, %v626
    %v710 = vpack.c.b16 %v629, %v628
    %v711 = vpack.c.b16 %v631, %v630
    %v712 = vpack.c.b16 %v633, %v632
    %v713 = vpack.c.b16 %v635, %v634
    %v714 = vpack.c.b16 %v637, %v636
    %v715 = vpack.c.b16 %v639, %v638
    %v716 = vpack.c.b16 %v641, %v640
    %v717 = vpack.c.b16 %v643, %v642
    %v718 = vpack.c.b16 %v645, %v644
    %v719 = vpack.c.b16 %v647, %v646
    %v720 = vpack.c.b16 %v649, %v648
    %v721 = vpack.c.b16 %v651, %v650
    %v722 = vpack.c.b16 %v653, %v652
    %v723 = vpack.c.b16 %v655, %v654
    %v724 = vpack.c.b16 %v657, %v656
    %v725 = vpack.c.b16 %v659, %v658
    %v726 = vpack.c.b16 %v661, %v660
    %v727 = vpack.c.b16 %v663, %v662
    %v728 = vpack.c.b16 %v665, %v664
    %v729 = vpack.c.b16 %v667, %v666
    %v730 = vpack.c.b16 %v669, %v668
    %v731 = vpack.c.b16 %v671, %v670
    %v732 = vpack.c.b16 %v673, %v672
    %v733 = vpack.c.b16 %v675, %v674
    %v734 = vpack.c.b16 %v677, %v676
    %v735 = vpack.c.b16 %v679, %v678
    %v736 = vpack.c.b16 %v681, %v680
    %v737 = vpack.c.b16 %v683, %v682
    %v738 = vpack.c.b16 %v685, %v684
    %v739 = vpack.c.b16 %v687, %v686
    %v740 = vpack.c.b16 %v689, %v688
    %v741 = vpack.c.b16 %v691, %v690
    %v742 = vpack.c.b16 %v693, %v692
    %v743 = vpack.c.b16 %v695, %v694
    %792 = vmatprep.subr.bf16.mxu0 0
    %793 = vmatpush1.bf16.msra.mxu0 %v696
    %794 = vmatprep.subr.bf16.mxu0 0
    %795 = vmatpush1.bf16.msra.mxu0 %v697
    %796 = vmatprep.subr.bf16.mxu0 0
    %797 = vmatpush1.bf16.msra.mxu0 %v698
    %798 = vmatprep.subr.bf16.mxu0 0
    %799 = vmatpush1.bf16.msra.mxu0 %v699
    %800 = vmatprep.subr.bf16.mxu0 0
    %801 = vmatpush1.bf16.msra.mxu0 %v700
    %802 = vmatprep.subr.bf16.mxu0 0
    %803 = vmatpush1.bf16.msra.mxu0 %v701
    %804 = vmatprep.subr.bf16.mxu0 0
    %805 = vmatpush1.bf16.msra.mxu0 %v702
    %806 = vmatprep.subr.bf16.mxu0 0
    %807 = vmatpush1.bf16.msra.mxu0 %v703
    %808 = vmatprep.subr.bf16.mxu0 0
    %809 = vmatpush1.bf16.msra.mxu0 %v704
    %810 = vmatprep.subr.bf16.mxu0 0
    %811 = vmatpush1.bf16.msra.mxu0 %v705
    %812 = vmatprep.subr.bf16.mxu0 0
    %813 = vmatpush1.bf16.msra.mxu0 %v706
    %814 = vmatprep.subr.bf16.mxu0 0
    %815 = vmatpush1.bf16.msra.mxu0 %v707
    %816 = vmatprep.subr.bf16.mxu0 0
    %817 = vmatpush1.bf16.msra.mxu0 %v708
    %818 = vmatprep.subr.bf16.mxu0 0
    %819 = vmatpush1.bf16.msra.mxu0 %v709
    %820 = vmatprep.subr.bf16.mxu0 0
    %821 = vmatpush1.bf16.msra.mxu0 %v710
    %822 = vmatprep.subr.bf16.mxu0 0
    %823 = vmatpush1.bf16.msra.mxu0 %v711
    %824 = vmatprep.mubr.bf16.mxu0 %v409
    %825 = vmatmul.mubr.bf16.gmra.mrb[0].mxu0 %v408
    %v826 = vpop.f32.mrb[0].mxu0
    %v827 = vadd.f32 %v187, %v826
    %v828 = vpop.f32.mrb[0].mxu0
    %v829 = vpop.f32.mrb[0].mxu0
    %v830 = vadd.f32 %v192, %v829
    %v831 = vpop.f32.mrb[0].mxu0
    %832 = vmatprep.mubr.bf16.mxu0 %v415
    %833 = vmatmul.mubr.bf16.gmra.mrb[0].mxu0 %v414
    %v834 = vpop.f32.mrb[0].mxu0
    %v835 = vadd.f32 %v197, %v834
    %v836 = vpop.f32.mrb[0].mxu0
    %v837 = vpop.f32.mrb[0].mxu0
    %v838 = vadd.f32 %v202, %v837
    %v839 = vpop.f32.mrb[0].mxu0
    %840 = vmatprep.mubr.bf16.mxu0 %v421
    %841 = vmatmul.mubr.bf16.gmra.mrb[0].mxu0 %v420
    %v842 = vpop.f32.mrb[0].mxu0
    %v843 = vadd.f32 %v207, %v842
    %v844 = vpop.f32.mrb[0].mxu0
    %v845 = vpop.f32.mrb[0].mxu0
    %v846 = vadd.f32 %v212, %v845
    %v847 = vpop.f32.mrb[0].mxu0
    %848 = vmatprep.mubr.bf16.mxu0 %v427
    %849 = vmatmul.mubr.bf16.gmra.mrb[0].mxu0 %v426
    %v850 = vpop.f32.mrb[0].mxu0
    %v851 = vadd.f32 %v217, %v850
    %v852 = vpop.f32.mrb[0].mxu0
    %v853 = vpop.f32.mrb[0].mxu0
    %v854 = vadd.f32 %v222, %v853
    %v855 = vpop.f32.mrb[0].mxu0
    %856 = vmatprep.mubr.bf16.mxu0 %v433
    %857 = vmatmul.mubr.bf16.gmra.mrb[0].mxu0 %v432
    %v858 = vpop.f32.mrb[0].mxu0
    %v859 = vadd.f32 %v227, %v858
    %v860 = vpop.f32.mrb[0].mxu0
    %v861 = vpop.f32.mrb[0].mxu0
    %v862 = vadd.f32 %v232, %v861
    %v863 = vpop.f32.mrb[0].mxu0
    %864 = vmatprep.mubr.bf16.mxu0 %v439
    %865 = vmatmul.mubr.bf16.gmra.mrb[0].mxu0 %v438
    %v866 = vpop.f32.mrb[0].mxu0
    %v867 = vadd.f32 %v237, %v866
    %v868 = vpop.f32.mrb[0].mxu0
    %v869 = vpop.f32.mrb[0].mxu0
    %v870 = vadd.f32 %v242, %v869
    %v871 = vpop.f32.mrb[0].mxu0
    %872 = vmatprep.mubr.bf16.mxu0 %v445
    %873 = vmatmul.mubr.bf16.gmra.mrb[0].mxu0 %v444
    %v874 = vpop.f32.mrb[0].mxu0
    %v875 = vadd.f32 %v247, %v874
    %v876 = vpop.f32.mrb[0].mxu0
    %v877 = vpop.f32.mrb[0].mxu0
    %v878 = vadd.f32 %v252, %v877
    %v879 = vpop.f32.mrb[0].mxu0
    %880 = vmatprep.mubr.bf16.mxu0 %v451
    %881 = vmatmul.mubr.bf16.gmra.mrb[0].mxu0 %v450
    %v882 = vpop.f32.mrb[0].mxu0
    %v883 = vadd.f32 %v257, %v882
    %v884 = vpop.f32.mrb[0].mxu0
    %v885 = vpop.f32.mrb[0].mxu0
    %v886 = vadd.f32 %v262, %v885
    %v887 = vpop.f32.mrb[0].mxu0
    %888 = vdwg.mxu0
    %889 = vmatprep.subr.bf16.mxu0 0
    %890 = vmatpush1.bf16.msra.mxu0 %v712
    %891 = vmatprep.subr.bf16.mxu0 0
    %892 = vmatpush1.bf16.msra.mxu0 %v713
    %893 = vmatprep.subr.bf16.mxu0 0
    %894 = vmatpush1.bf16.msra.mxu0 %v714
    %895 = vmatprep.subr.bf16.mxu0 0
    %896 = vmatpush1.bf16.msra.mxu0 %v715
    %897 = vmatprep.subr.bf16.mxu0 0
    %898 = vmatpush1.bf16.msra.mxu0 %v716
    %899 = vmatprep.subr.bf16.mxu0 0
    %900 = vmatpush1.bf16.msra.mxu0 %v717
    %901 = vmatprep.subr.bf16.mxu0 0
    %902 = vmatpush1.bf16.msra.mxu0 %v718
    %903 = vmatprep.subr.bf16.mxu0 0
    %904 = vmatpush1.bf16.msra.mxu0 %v719
    %905 = vmatprep.subr.bf16.mxu0 0
    %906 = vmatpush1.bf16.msra.mxu0 %v720
    %907 = vmatprep.subr.bf16.mxu0 0
    %908 = vmatpush1.bf16.msra.mxu0 %v721
    %909 = vmatprep.subr.bf16.mxu0 0
    %910 = vmatpush1.bf16.msra.mxu0 %v722
    %911 = vmatprep.subr.bf16.mxu0 0
    %912 = vmatpush1.bf16.msra.mxu0 %v723
    %913 = vmatprep.subr.bf16.mxu0 0
    %914 = vmatpush1.bf16.msra.mxu0 %v724
    %915 = vmatprep.subr.bf16.mxu0 0
    %916 = vmatpush1.bf16.msra.mxu0 %v725
    %917 = vmatprep.subr.bf16.mxu0 0
    %918 = vmatpush1.bf16.msra.mxu0 %v726
    %919 = vmatprep.subr.bf16.mxu0 0
    %920 = vmatpush1.bf16.msra.mxu0 %v727
    %921 = vmatprep.mubr.bf16.mxu0 %v411
    %922 = vmatmul.mubr.bf16.gmra.mrb[0].mxu0 %v410
    %v923 = vpop.f32.mrb[0].mxu0
    %v924 = vadd.f32 %v827, %v923
    %v925 = vpop.f32.mrb[0].mxu0
    %v926 = vpop.f32.mrb[0].mxu0
    %v927 = vadd.f32 %v830, %v926
    %v928 = vpop.f32.mrb[0].mxu0
    %929 = vmatprep.mubr.bf16.mxu0 %v417
    %930 = vmatmul.mubr.bf16.gmra.mrb[0].mxu0 %v416
    %v931 = vpop.f32.mrb[0].mxu0
    %v932 = vadd.f32 %v835, %v931
    %v933 = vpop.f32.mrb[0].mxu0
    %v934 = vpop.f32.mrb[0].mxu0
    %v935 = vadd.f32 %v838, %v934
    %v936 = vpop.f32.mrb[0].mxu0
    %937 = vmatprep.mubr.bf16.mxu0 %v423
    %938 = vmatmul.mubr.bf16.gmra.mrb[0].mxu0 %v422
    %v939 = vpop.f32.mrb[0].mxu0
    %v940 = vadd.f32 %v843, %v939
    %v941 = vpop.f32.mrb[0].mxu0
    %v942 = vpop.f32.mrb[0].mxu0
    %v943 = vadd.f32 %v846, %v942
    %v944 = vpop.f32.mrb[0].mxu0
    %945 = vmatprep.mubr.bf16.mxu0 %v429
    %946 = vmatmul.mubr.bf16.gmra.mrb[0].mxu0 %v428
    %v947 = vpop.f32.mrb[0].mxu0
    %v948 = vadd.f32 %v851, %v947
    %v949 = vpop.f32.mrb[0].mxu0
    %v950 = vpop.f32.mrb[0].mxu0
    %v951 = vadd.f32 %v854, %v950
    %v952 = vpop.f32.mrb[0].mxu0
    %953 = vmatprep.mubr.bf16.mxu0 %v435
    %954 = vmatmul.mubr.bf16.gmra.mrb[0].mxu0 %v434
    %v955 = vpop.f32.mrb[0].mxu0
    %v956 = vadd.f32 %v859, %v955
    %v957 = vpop.f32.mrb[0].mxu0
    %v958 = vpop.f32.mrb[0].mxu0
    %v959 = vadd.f32 %v862, %v958
    %v960 = vpop.f32.mrb[0].mxu0
    %961 = vmatprep.mubr.bf16.mxu0 %v441
    %962 = vmatmul.mubr.bf16.gmra.mrb[0].mxu0 %v440
    %v963 = vpop.f32.mrb[0].mxu0
    %v964 = vadd.f32 %v867, %v963
    %v965 = vpop.f32.mrb[0].mxu0
    %v966 = vpop.f32.mrb[0].mxu0
    %v967 = vadd.f32 %v870, %v966
    %v968 = vpop.f32.mrb[0].mxu0
    %969 = vmatprep.mubr.bf16.mxu0 %v447
    %970 = vmatmul.mubr.bf16.gmra.mrb[0].mxu0 %v446
    %v971 = vpop.f32.mrb[0].mxu0
    %v972 = vadd.f32 %v875, %v971
    %v973 = vpop.f32.mrb[0].mxu0
    %v974 = vpop.f32.mrb[0].mxu0
    %v975 = vadd.f32 %v878, %v974
    %v976 = vpop.f32.mrb[0].mxu0
    %977 = vmatprep.mubr.bf16.mxu0 %v453
    %978 = vmatmul.mubr.bf16.gmra.mrb[0].mxu0 %v452
    %v979 = vpop.f32.mrb[0].mxu0
    %v980 = vadd.f32 %v883, %v979
    %v981 = vpop.f32.mrb[0].mxu0
    %v982 = vpop.f32.mrb[0].mxu0
    %v983 = vadd.f32 %v886, %v982
    %v984 = vpop.f32.mrb[0].mxu0
    %985 = vdwg.mxu0
    %986 = vmatprep.subr.bf16.mxu0 0
    %987 = vmatpush1.bf16.msra.mxu0 %v728
    %988 = vmatprep.subr.bf16.mxu0 0
    %989 = vmatpush1.bf16.msra.mxu0 %v729
    %990 = vmatprep.subr.bf16.mxu0 0
    %991 = vmatpush1.bf16.msra.mxu0 %v730
    %992 = vmatprep.subr.bf16.mxu0 0
    %993 = vmatpush1.bf16.msra.mxu0 %v731
    %994 = vmatprep.subr.bf16.mxu0 0
    %995 = vmatpush1.bf16.msra.mxu0 %v732
    %996 = vmatprep.subr.bf16.mxu0 0
    %997 = vmatpush1.bf16.msra.mxu0 %v733
    %998 = vmatprep.subr.bf16.mxu0 0
    %999 = vmatpush1.bf16.msra.mxu0 %v734
    %1000 = vmatprep.subr.bf16.mxu0 0
    %1001 = vmatpush1.bf16.msra.mxu0 %v735
    %1002 = vmatprep.subr.bf16.mxu0 0
    %1003 = vmatpush1.bf16.msra.mxu0 %v736
    %1004 = vmatprep.subr.bf16.mxu0 0
    %1005 = vmatpush1.bf16.msra.mxu0 %v737
    %1006 = vmatprep.subr.bf16.mxu0 0
    %1007 = vmatpush1.bf16.msra.mxu0 %v738
    %1008 = vmatprep.subr.bf16.mxu0 0
    %1009 = vmatpush1.bf16.msra.mxu0 %v739
    %1010 = vmatprep.subr.bf16.mxu0 0
    %1011 = vmatpush1.bf16.msra.mxu0 %v740
    %1012 = vmatprep.subr.bf16.mxu0 0
    %1013 = vmatpush1.bf16.msra.mxu0 %v741
    %1014 = vmatprep.subr.bf16.mxu0 0
    %1015 = vmatpush1.bf16.msra.mxu0 %v742
    %1016 = vmatprep.subr.bf16.mxu0 0
    %1017 = vmatpush1.bf16.msra.mxu0 %v743
    %1018 = vmatprep.mubr.bf16.mxu0 %v413
    %1019 = vmatmul.mubr.bf16.gmra.mrb[0].mxu0 %v412
    %v1020 = vpop.f32.mrb[0].mxu0
    %v1021 = vadd.f32 %v924, %v1020
    %v1022 = vpop.f32.mrb[0].mxu0
    %v1023 = vpop.f32.mrb[0].mxu0
    %v1024 = vadd.f32 %v927, %v1023
    %v1025 = vpop.f32.mrb[0].mxu0
    %1026 = vmatprep.mubr.bf16.mxu0 %v419
    %1027 = vmatmul.mubr.bf16.gmra.mrb[0].mxu0 %v418
    %v1028 = vpop.f32.mrb[0].mxu0
    %v1029 = vadd.f32 %v932, %v1028
    %v1030 = vpop.f32.mrb[0].mxu0
    %v1031 = vpop.f32.mrb[0].mxu0
    %v1032 = vadd.f32 %v935, %v1031
    %v1033 = vpop.f32.mrb[0].mxu0
    %1034 = vmatprep.mubr.bf16.mxu0 %v425
    %1035 = vmatmul.mubr.bf16.gmra.mrb[0].mxu0 %v424
    %v1036 = vpop.f32.mrb[0].mxu0
    %v1037 = vadd.f32 %v940, %v1036
    %v1038 = vpop.f32.mrb[0].mxu0
    %v1039 = vpop.f32.mrb[0].mxu0
    %v1040 = vadd.f32 %v943, %v1039
    %v1041 = vpop.f32.mrb[0].mxu0
    %1042 = vmatprep.mubr.bf16.mxu0 %v431
    %1043 = vmatmul.mubr.bf16.gmra.mrb[0].mxu0 %v430
    %v1044 = vpop.f32.mrb[0].mxu0
    %v1045 = vadd.f32 %v948, %v1044
    %v1046 = vpop.f32.mrb[0].mxu0
    %v1047 = vpop.f32.mrb[0].mxu0
    %v1048 = vadd.f32 %v951, %v1047
    %v1049 = vpop.f32.mrb[0].mxu0
    %1050 = vmatprep.mubr.bf16.mxu0 %v437
    %1051 = vmatmul.mubr.bf16.gmra.mrb[0].mxu0 %v436
    %v1052 = vpop.f32.mrb[0].mxu0
    %v1053 = vadd.f32 %v956, %v1052
    %v1054 = vpop.f32.mrb[0].mxu0
    %v1055 = vpop.f32.mrb[0].mxu0
    %v1056 = vadd.f32 %v959, %v1055
    %v1057 = vpop.f32.mrb[0].mxu0
    %1058 = vmatprep.mubr.bf16.mxu0 %v443
    %1059 = vmatmul.mubr.bf16.gmra.mrb[0].mxu0 %v442
    %v1060 = vpop.f32.mrb[0].mxu0
    %v1061 = vadd.f32 %v964, %v1060
    %v1062 = vpop.f32.mrb[0].mxu0
    %v1063 = vpop.f32.mrb[0].mxu0
    %v1064 = vadd.f32 %v967, %v1063
    %v1065 = vpop.f32.mrb[0].mxu0
    %1066 = vmatprep.mubr.bf16.mxu0 %v449
    %1067 = vmatmul.mubr.bf16.gmra.mrb[0].mxu0 %v448
    %v1068 = vpop.f32.mrb[0].mxu0
    %v1069 = vadd.f32 %v972, %v1068
    %v1070 = vpop.f32.mrb[0].mxu0
    %v1071 = vpop.f32.mrb[0].mxu0
    %v1072 = vadd.f32 %v975, %v1071
    %v1073 = vpop.f32.mrb[0].mxu0
    %1074 = vmatprep.mubr.bf16.mxu0 %v455
    %1075 = vmatmul.mubr.bf16.gmra.mrb[0].mxu0 %v454
    %v1076 = vpop.f32.mrb[0].mxu0
    %v1077 = vadd.f32 %v980, %v1076
    %v1078 = vpop.f32.mrb[0].mxu0
    %v1079 = vpop.f32.mrb[0].mxu0
    %v1080 = vadd.f32 %v983, %v1079
    %v1081 = vpop.f32.mrb[0].mxu0
    %1082 = vdwg.mxu0
    %vm1083 = vcmp.ge.f32.partialorder %v1021, 0.0
    %vm1084 = vcmp.ge.f32.partialorder %v1024, 0.0
    %vm1085 = vcmp.ge.f32.partialorder %v1029, 0.0
    %vm1086 = vcmp.ge.f32.partialorder %v1032, 0.0
    %vm1087 = vcmp.ge.f32.partialorder %v1037, 0.0
    %vm1088 = vcmp.ge.f32.partialorder %v1040, 0.0
    %vm1089 = vcmp.ge.f32.partialorder %v1045, 0.0
    %vm1090 = vcmp.ge.f32.partialorder %v1048, 0.0
    %vm1091 = vcmp.ge.f32.partialorder %v1053, 0.0
    %vm1092 = vcmp.ge.f32.partialorder %v1056, 0.0
    %vm1093 = vcmp.ge.f32.partialorder %v1061, 0.0
    %vm1094 = vcmp.ge.f32.partialorder %v1064, 0.0
    %vm1095 = vcmp.ge.f32.partialorder %v1069, 0.0
    %vm1096 = vcmp.ge.f32.partialorder %v1072, 0.0
    %vm1097 = vcmp.ge.f32.partialorder %v1077, 0.0
    %vm1098 = vcmp.ge.f32.partialorder %v1080, 0.0
    %v1099 = vmul.f32 %v1021, 0.1
    %v1100 = vmul.f32 %v1024, 0.1
    %v1101 = vmul.f32 %v1029, 0.1
    %v1102 = vmul.f32 %v1032, 0.1
    %v1103 = vmul.f32 %v1037, 0.1
    %v1104 = vmul.f32 %v1040, 0.1
    %v1105 = vmul.f32 %v1045, 0.1
    %v1106 = vmul.f32 %v1048, 0.1
    %v1107 = vmul.f32 %v1053, 0.1
    %v1108 = vmul.f32 %v1056, 0.1
    %v1109 = vmul.f32 %v1061, 0.1
    %v1110 = vmul.f32 %v1064, 0.1
    %v1111 = vmul.f32 %v1069, 0.1
    %v1112 = vmul.f32 %v1072, 0.1
    %v1113 = vmul.f32 %v1077, 0.1
    %v1114 = vmul.f32 %v1080, 0.1
    %v1115 = vsel %vm1083, %v1021, %v1099
    %v1116 = vsel %vm1084, %v1024, %v1100
    %v1117 = vsel %vm1085, %v1029, %v1101
    %v1118 = vsel %vm1086, %v1032, %v1102
    %v1119 = vsel %vm1087, %v1037, %v1103
    %v1120 = vsel %vm1088, %v1040, %v1104
    %v1121 = vsel %vm1089, %v1045, %v1105
    %v1122 = vsel %vm1090, %v1048, %v1106
    %v1123 = vsel %vm1091, %v1053, %v1107
    %v1124 = vsel %vm1092, %v1056, %v1108
    %v1125 = vsel %vm1093, %v1061, %v1109
    %v1126 = vsel %vm1094, %v1064, %v1110
    %v1127 = vsel %vm1095, %v1069, %v1111
    %v1128 = vsel %vm1096, %v1072, %v1112
    %v1129 = vsel %vm1097, %v1077, %v1113
    %v1130 = vsel %vm1098, %v1080, %v1114
    %v1131 = vpack.c.bf16 %v1116, %v1115
    %v1132 = vpack.c.bf16 %v1118, %v1117
    %v1133 = vpack.c.bf16 %v1120, %v1119
    %v1134 = vpack.c.bf16 %v1122, %v1121
    %v1135 = vpack.c.bf16 %v1124, %v1123
    %v1136 = vpack.c.bf16 %v1126, %v1125
    %v1137 = vpack.c.bf16 %v1128, %v1127
    %v1138 = vpack.c.bf16 %v1130, %v1129
    %v1139 = vunpack.c.l.bf16 %v1131
    %v1140 = vunpack.c.h.bf16 %v1131
    %v1141 = vunpack.c.l.bf16 %v1132
    %v1142 = vunpack.c.h.bf16 %v1132
    %v1143 = vunpack.c.l.bf16 %v1133
    %v1144 = vunpack.c.h.bf16 %v1133
    %v1145 = vunpack.c.l.bf16 %v1134
    %v1146 = vunpack.c.h.bf16 %v1134
    %v1147 = vunpack.c.l.bf16 %v1135
    %v1148 = vunpack.c.h.bf16 %v1135
    %v1149 = vunpack.c.l.bf16 %v1136
    %v1150 = vunpack.c.h.bf16 %v1136
    %v1151 = vunpack.c.l.bf16 %v1137
    %v1152 = vunpack.c.h.bf16 %v1137
    %v1153 = vunpack.c.l.bf16 %v1138
    %v1154 = vunpack.c.h.bf16 %v1138
    %v1155 = vld [vmem:[%s3] sm:$0xf]
    %v1156 = vld [vmem:[%s3 + $0x4] sm:$0xf]
    %v1157 = vld [vmem:[%s3 + $0x8] sm:$0xf]
    %v1158 = vld [vmem:[%s3 + $0xc] sm:$0xf]
    %v1159 = vld [vmem:[%s3 + $0x10] sm:$0xf]
    %v1160 = vld [vmem:[%s3 + $0x14] sm:$0xf]
    %v1161 = vld [vmem:[%s3 + $0x18] sm:$0xf]
    %v1162 = vld [vmem:[%s3 + $0x1c] sm:$0xf]
    %v1163 = vld [vmem:[%s3 + $0x20] sm:$0xf]
    %v1164 = vld [vmem:[%s3 + $0x24] sm:$0xf]
    %v1165 = vld [vmem:[%s3 + $0x28] sm:$0xf]
    %v1166 = vld [vmem:[%s3 + $0x2c] sm:$0xf]
    %v1167 = vld [vmem:[%s3 + $0x30] sm:$0xf]
    %v1168 = vld [vmem:[%s3 + $0x34] sm:$0xf]
    %v1169 = vld [vmem:[%s3 + $0x38] sm:$0xf]
    %v1170 = vld [vmem:[%s3 + $0x3c] sm:$0xf]
    %v1171 = vunpack.c.l.bf16 %v1155
    %v1172 = vunpack.c.l.bf16 %v1156
    %v1173 = vunpack.c.l.bf16 %v1157
    %v1174 = vunpack.c.l.bf16 %v1158
    %v1175 = vunpack.c.l.bf16 %v1159
    %v1176 = vunpack.c.l.bf16 %v1160
    %v1177 = vunpack.c.l.bf16 %v1161
    %v1178 = vunpack.c.l.bf16 %v1162
    %v1179 = vunpack.c.l.bf16 %v1163
    %v1180 = vunpack.c.l.bf16 %v1164
    %v1181 = vunpack.c.l.bf16 %v1165
    %v1182 = vunpack.c.l.bf16 %v1166
    %v1183 = vunpack.c.l.bf16 %v1167
    %v1184 = vunpack.c.l.bf16 %v1168
    %v1185 = vunpack.c.l.bf16 %v1169
    %v1186 = vunpack.c.l.bf16 %v1170
    %v1187 = vmul.f32 %v1139, %v1171
    %v1188 = vmul.f32 %v1140, %v1172
    %v1189 = vmul.f32 %v1141, %v1173
    %v1190 = vmul.f32 %v1142, %v1174
    %v1191 = vmul.f32 %v1143, %v1175
    %v1192 = vmul.f32 %v1144, %v1176
    %v1193 = vmul.f32 %v1145, %v1177
    %v1194 = vmul.f32 %v1146, %v1178
    %v1195 = vmul.f32 %v1147, %v1179
    %v1196 = vmul.f32 %v1148, %v1180
    %v1197 = vmul.f32 %v1149, %v1181
    %v1198 = vmul.f32 %v1150, %v1182
    %v1199 = vmul.f32 %v1151, %v1183
    %v1200 = vmul.f32 %v1152, %v1184
    %v1201 = vmul.f32 %v1153, %v1185
    %v1202 = vmul.f32 %v1154, %v1186
    %vm1203 = vcmask 146432
    %v1204 = vsel %vm1203, %v1187, 0.0
    %v1205 = vsel %vm1203, %v1188, 0.0
    %v1206 = vadd.f32 %v1204, %v1205
    %v1207 = vsel %vm1203, %v1189, 0.0
    %v1208 = vadd.f32 %v1206, %v1207
    %v1209 = vsel %vm1203, %v1190, 0.0
    %v1210 = vadd.f32 %v1208, %v1209
    %v1211 = vsel %vm1203, %v1191, 0.0
    %v1212 = vadd.f32 %v1210, %v1211
    %v1213 = vsel %vm1203, %v1192, 0.0
    %v1214 = vadd.f32 %v1212, %v1213
    %v1215 = vsel %vm1203, %v1193, 0.0
    %v1216 = vadd.f32 %v1214, %v1215
    %v1217 = vsel %vm1203, %v1194, 0.0
    %v1218 = vadd.f32 %v1216, %v1217
    %v1219 = vsel %vm1203, %v1195, 0.0
    %v1220 = vadd.f32 %v1218, %v1219
    %v1221 = vsel %vm1203, %v1196, 0.0
    %v1222 = vadd.f32 %v1220, %v1221
    %v1223 = vsel %vm1203, %v1197, 0.0
    %v1224 = vadd.f32 %v1222, %v1223
    %v1225 = vsel %vm1203, %v1198, 0.0
    %v1226 = vadd.f32 %v1224, %v1225
    %v1227 = vsel %vm1203, %v1199, 0.0
    %v1228 = vadd.f32 %v1226, %v1227
    %v1229 = vsel %vm1203, %v1200, 0.0
    %v1230 = vadd.f32 %v1228, %v1229
    %v1231 = vsel %vm1203, %v1201, 0.0
    %v1232 = vadd.f32 %v1230, %v1231
    %v1233 = vsel %vm1203, %v1202, 0.0
    %v1234 = vadd.f32 %v1232, %v1233
    %v1235 = vrot.slane %v1234, 4
    %v1236 = vadd.f32 %v1234, %v1235
    %v1237 = vrot.slane %v1236, 2
    %v1238 = vadd.f32 %v1236, %v1237
    %v1239 = vrot.slane %v1238, 1
    %v1240 = vadd.f32 %v1238, %v1239
    %v1241 = vlaneseq
    %v1242 = vshrl.u32 %v1241, 7
    %v1243 = vadd.s32 %v1242, 8
    %v1244 = vadd.s32 %v1242, 16
    %v1245 = vlaneseq
    %v1246 = vand.u32 %v1245, 127
    %v1247 = vmul.u32 %v1246, 9
    %vm1248 = vcmp.ge.s32.totalorder %v1242, %v1247
    %vm1249 = vcmp.ge.s32.totalorder %v1243, %v1247
    %vm1250 = vcmp.ge.s32.totalorder %v1244, %v1247
    %v1251 = vadd.s32 %v1247, 9
    %vm1252 = vcmp.lt.s32.totalorder %v1242, %v1251
    %vm1253 = vcmp.lt.s32.totalorder %v1243, %v1251
    %vm1254 = vcmp.lt.s32.totalorder %v1244, %v1251
    %vm1255 = vmand %vm1248, %vm1252
    %vm1256 = vmand %vm1249, %vm1253
    %vm1257 = vmand %vm1250, %vm1254
    %v1258 = vsel %vm1255, 1, 0
    %v1259 = vsel %vm1256, 1, 0
    %v1260 = vsel %vm1257, 1, 0
    %v1261 = vcvt.s32.f32 %v1258
    %v1262 = vcvt.s32.f32 %v1259
    %v1263 = vcvt.s32.f32 %v1260
    %v1264 = vld [vmem:[#allocation2] sm:$0x1]
    %1266 = vset.pattern.permute.xlu0 0
    %1267 = vperm.xlu0 %1266, %v1264
    %v1268 = vpop.permute.xlu0 %1267
    %v1270 = vlaneseq
    %v1271 = vshrl.u32 %v1270, 7
    %v1272 = vsub.s32 0, %v1271
    %v1273 = vrot.slane %v1268, %v1272
    %v1275 = vsel %vm1203, %v1240, 0
    %vm1277 = vcmask 1041408
    %v1279 = vsel %vm1277, %v1263, 0
    %1281 = vmatprep.subr.mxu0 0.0
    %1282 = vmatpush1.msra.mxu0 %v1261
    %1283 = vmatprep.subr.mxu0 0.0
    %1284 = vmatpush1.msra.mxu0 %v1262
    %1285 = vmatprep.subr.mxu0 0.0
    %1286 = vmatpush1.msra.mxu0 %v1279
    %1287 = vmatprep.subr.mxu0 0.0
    %1288 = vmatpush1.msra.mxu0 0.0
    %1289 = vmatprep.subr.mxu0 0.0
    %1290 = vmatpush1.msra.mxu0 0.0
    %1291 = vmatprep.subr.mxu0 0.0
    %1292 = vmatpush1.msra.mxu0 0.0
    %1293 = vmatprep.subr.mxu0 0.0
    %1294 = vmatpush1.msra.mxu0 0.0
    %1295 = vmatprep.subr.mxu0 0.0
    %1296 = vmatpush1.msra.mxu0 0.0
    %1297 = vmatprep.subr.mxu0 0.0
    %1298 = vmatpush1.msra.mxu0 0.0
    %1299 = vmatprep.subr.mxu0 0.0
    %1300 = vmatpush1.msra.mxu0 0.0
    %1301 = vmatprep.subr.mxu0 0.0
    %1302 = vmatpush1.msra.mxu0 0.0
    %1303 = vmatprep.subr.mxu0 0.0
    %1304 = vmatpush1.msra.mxu0 0.0
    %1305 = vmatprep.subr.mxu0 0.0
    %1306 = vmatpush1.msra.mxu0 0.0
    %1307 = vmatprep.subr.mxu0 0.0
    %1308 = vmatpush1.msra.mxu0 0.0
    %1309 = vmatprep.subr.mxu0 0.0
    %1310 = vmatpush1.msra.mxu0 0.0
    %1311 = vmatprep.subr.mxu0 0.0
    %1312 = vmatpush1.msra.mxu0 0.0
    %1313 = vmatprep.subr.mxu0 0.0
    %1314 = vmatpush1.msra.mxu0 0.0
    %1315 = vmatprep.subr.mxu0 0.0
    %1316 = vmatpush1.msra.mxu0 0.0
    %1317 = vmatprep.subr.mxu0 0.0
    %1318 = vmatpush1.msra.mxu0 0.0
    %1319 = vmatprep.subr.mxu0 0.0
    %1320 = vmatpush1.msra.mxu0 0.0
    %1321 = vmatprep.subr.mxu0 0.0
    %1322 = vmatpush1.msra.mxu0 0.0
    %1323 = vmatprep.subr.mxu0 0.0
    %1324 = vmatpush1.msra.mxu0 0.0
    %1325 = vmatprep.subr.mxu0 0.0
    %1326 = vmatpush1.msra.mxu0 0.0
    %1327 = vmatprep.subr.mxu0 0.0
    %1328 = vmatpush1.msra.mxu0 0.0
    %1329 = vmatprep.subr.mxu0 0.0
    %1330 = vmatpush1.msra.mxu0 0.0
    %1331 = vmatprep.subr.mxu0 0.0
    %1332 = vmatpush1.msra.mxu0 0.0
    %1333 = vmatprep.subr.mxu0 0.0
    %1334 = vmatpush1.msra.mxu0 0.0
    %1335 = vmatprep.subr.mxu0 0.0
    %1336 = vmatpush1.msra.mxu0 0.0
    %1337 = vmatprep.subr.mxu0 0.0
    %1338 = vmatpush1.msra.mxu0 0.0
    %1339 = vmatprep.subr.mxu0 0.0
    %1340 = vmatpush1.msra.mxu0 0.0
    %1341 = vmatprep.subr.mxu0 0.0
    %1342 = vmatpush1.msra.mxu0 0.0
    %1343 = vmatprep.subr.mxu0 0.0
    %1344 = vmatpush1.msra.mxu0 0.0
    %1345 = vmatprep.mubr.f32.mxu0 0.0
    %1346 = vmatmul.mubr.f32.gmra.mrb[0].mxu0 %v1275
    %v1347 = vpop.f32.mrb[0].mxu0
    %v1348 = vadd.f32 %v1273, %v1347
    %v1349 = vpop.f32.mrb[0].mxu0
    %1350 = vdwg.mxu0
    %v1351 = vsub.f32 0.0, %v1348
    %v1352 = vmul.f32 %v1351, 1.442695
    %v1353 = vpow.pop %v1352
    %v1354 = vadd.f32 %v1353, 1.0
    %v1355 = vrcp.pop %v1354
    %v1356 = vmul.f32 1.0, %v1355
    %vm1357 = vcmask 8192
    %1358 = vst.msk [vmem:[#allocation3] sm:$0x1] %vm1357, %v1356
    // Predicated region
    $region22: #{discriminator_forward.9} parent=1 // pred_check
      _
    $region23: #{discriminator_forward.9} parent=1 // pred_check_branch
      %1360 = sbr.rel (0) target = $region25
    $region24: #{discriminator_forward.9} parent=1 // pred_region
      %s1362 = ssub.s32 16, 16
      %1363 = vsyncadd [#allocation4], %s1362
      %s1365 = sshll.u32 [#allocation3], 4
      %s1366 = int_to_ptr.vmem [resolvable:$true] %s1365
      %1368 = dma.vmem_to_hbm [thread:$0]  %s1366, 16, %s5, [#allocation4]
    $region25: #{discriminator_forward.9} parent=1 // pred_fallthru
      _
    // Predicated region
    $region26: #{discriminator_forward.9} parent=1 // pred_check
      _
    $region27: #{discriminator_forward.9} parent=1 // pred_check_branch
      %1370 = sbr.rel (0) target = $region29
    $region28: #{discriminator_forward.9} parent=1 // pred_region
      %1371 = dma.done [#allocation4], 16
    $region29: #{discriminator_forward.9} parent=1 // pred_fallthru
      _
    %1372 = vsyncpa [#allocation4], 1

</llo_original>
